<compile_context>
chip_gen: v7x
topology: tpu7x:2x2x1
jax: 0.10.0
libtpu: 0.0.40
codegen_flags: <defaults>
</compile_context>

<pallas_src>
import jax
import jax.numpy as jnp
from jax.experimental import pallas as pl
from jax.experimental.pallas import tpu as pltpu


# ---------------- fused Pallas kernel ----------------

def _make_reduction_a_kernel(H, W, Cin, Ck, Cl, Ctot):
    HW = H * W
    f32 = jnp.float32
    bf16 = jnp.bfloat16
    COL0 = 8  # column offset of real data in the pad-1 scratch (8-aligned stores)

    def kernel(x_ref,          # (H+2, W+2, Cin)   bf16  input, zero-padded bottom/right
               wb2_ref,        # (3, 3, Cin, Ctot) bf16  block2 weights (BN folded, widened)
               sb2_ref,        # (1, Ctot)         f32
               w3a_ref,        # (Cin, Ck)         bf16
               s3a_ref,        # (1, Ck)           f32
               w3b_ref,        # (3, 3, Ck, Cl)    bf16
               s3b_ref,        # (1, Cl)           f32
               w3c_ref,        # (3, 3, Cl, Ctot)  bf16  block3c weights (BN folded, widened)
               s3c_ref,        # (1, Ctot)         f32
               emb_ref,        # (Cin, Ctot)       bf16  0/1 channel placement for the pool
               o_ref,          # (H, W, Ctot)      f32   dense stride-1 output grid
               y3a_ref,        # scratch (H+2, W+COL0+1, Ck) f32  zero-padded b3a output
               z_ref):         # scratch (H+2, W+2, Cl)      f32  zero-padded b3b output
        # ---- block3.a : 1x1 conv + BN + ReLU (full resolution) -----------------
        x0 = x_ref[pl.ds(0, H), pl.ds(0, W), :]                     # (H, W, Cin) bf16
        x0_2d = x0.reshape(HW, Cin)
        y3a = jnp.maximum(
            jnp.dot(x0_2d, w3a_ref[...], preferred_element_type=f32)
            + s3a_ref[...], 0.0)                                    # (HW, Ck) f32

        # stash with a 1-pixel zero border (conv padding=1); stores stay 8-aligned
        y3a_ref[...] = jnp.zeros_like(y3a_ref)
        y3a_ref[pl.ds(1, H), pl.ds(COL0, W), :] = y3a.reshape(H, W, Ck)

        # ---- block3.b : 3x3 stride-1 pad-1 conv + BN + ReLU --------------------
        acc_b = jnp.zeros((HW, Cl), f32)
        for dy in range(3):
            for dx in range(3):
                blk = y3a_ref[pl.ds(dy, H), pl.ds(COL0 - 1 + dx, W), :]
                acc_b = acc_b + jnp.dot(blk.reshape(HW, Ck).astype(bf16),
                                        w3b_ref[dy, dx],
                                        preferred_element_type=f32)
        z = jnp.maximum(acc_b + s3b_ref[...], 0.0)                  # (HW, Cl) f32

        z_ref[...] = jnp.zeros_like(z_ref)
        z_ref[pl.ds(0, H), pl.ds(0, W), :] = z.reshape(H, W, Cl)

        # ---- block2 (3x3/s2) and block3.c (3x3/s2), densely; their widened
        #      weights write into disjoint channel ranges of one accumulator ----
        acc = jnp.zeros((HW, Ctot), f32)
        for dy in range(3):
            for dx in range(3):
                xblk = x_ref[pl.ds(dy, H), pl.ds(dx, W), :]
                zblk = z_ref[pl.ds(dy, H), pl.ds(dx, W), :]
                acc = acc + jnp.dot(xblk.reshape(HW, Cin), wb2_ref[dy, dx],
                                    preferred_element_type=f32)
                acc = acc + jnp.dot(zblk.reshape(HW, Cl).astype(bf16),
                                    w3c_ref[dy, dx],
                                    preferred_element_type=f32)
        conv_out = jnp.maximum(acc + (sb2_ref[...] + s3c_ref[...]), 0.0)

        # ---- block1 : 3x3/s2 maxpool (densely, no activation) ------------------
        mp = x0_2d.astype(f32)
        for dy in range(3):
            for dx in range(3):
                if dy == 0 and dx == 0:
                    continue
                blk = x_ref[pl.ds(dy, H), pl.ds(dx, W), :]
                mp = jnp.maximum(mp, blk.reshape(HW, Cin).astype(f32))
        # place pool channels at concat offset 0 via a 0/1 selection matmul (exact)
        pool_out = jnp.dot(mp.astype(bf16), emb_ref[...], preferred_element_type=f32)

        # single lane-dense, pre-concatenated store
        o_ref[...] = (conv_out + pool_out).reshape(H, W, Ctot)

    return kernel


# ---------------- parameter folding / wrapper ----------------

def _fold_bn(p, eps=1e-5):
    scale = p["gamma"] / jnp.sqrt(p["var"] + eps)
    shift = (p["b"] - p["mean"]) * scale + p["beta"]
    return p["w"] * scale, shift


def reduction_a(x_nchw, params, *, eps=1e-5):
    """Forward pass of Inception-V4 ReductionA."""
    # TODO(synk): BatchNorm is applied in eval mode (running stats); training-mode
    #             batch statistics are not implemented.
    x = jnp.transpose(x_nchw, (0, 2, 3, 1))                         # NCHW -> NHWC
    N, H, W, Cin = x.shape
    # in-kernel (H, W, C) <-> (H*W, C) reshapes require a bf16-tile-aligned W
    assert W % 16 == 0 and H >= 3 and W >= 3

    wb2, sb2 = _fold_bn(params["b2"], eps)       # (3,3,Cin,Cn), (Cn,)
    w3a, s3a = _fold_bn(params["b3a"], eps)      # (1,1,Cin,Ck), (Ck,)
    w3b, s3b = _fold_bn(params["b3b"], eps)      # (3,3,Ck,Cl), (Cl,)
    w3c, s3c = _fold_bn(params["b3c"], eps)      # (3,3,Cl,Cm), (Cm,)
    Cn, Ck, Cl, Cm = wb2.shape[-1], w3a.shape[-1], w3b.shape[-1], w3c.shape[-1]
    Ctot = Cin + Cn + Cm                         # torch.cat([pool, block2, block3])

    def widen(w, s, off, co):
        w_wide = jnp.zeros(w.shape[:-1] + (Ctot,), w.dtype).at[..., off:off + co].set(w)
        s_wide = jnp.zeros((1, Ctot), jnp.float32).at[0, off:off + co].set(s)
        return w_wide, s_wide

    wb2w, sb2w = widen(wb2, sb2, Cin, Cn)
    w3cw, s3cw = widen(w3c, s3c, Cin + Cn, Cm)
    emb = jnp.eye(Cin, Ctot, dtype=jnp.float32)  # maxpool channel placement

    bf16 = jnp.bfloat16
    xpad = jnp.pad(x.astype(bf16), ((0, 0), (0, 2), (0, 2), (0, 0)))

    kernel = _make_reduction_a_kernel(H, W, Cin, Ck, Cl, Ctot)
    out_dense = pl.pallas_call(
        kernel,
        out_shape=jax.ShapeDtypeStruct((N, H, W, Ctot), jnp.float32),
        grid=(N,),
        in_specs=[
            pl.BlockSpec((None, H + 2, W + 2, Cin), lambda n: (n, 0, 0, 0)),
            pl.BlockSpec((3, 3, Cin, Ctot), lambda n: (0, 0, 0, 0)),
            pl.BlockSpec((1, Ctot), lambda n: (0, 0)),
            pl.BlockSpec((Cin, Ck), lambda n: (0, 0)),
            pl.BlockSpec((1, Ck), lambda n: (0, 0)),
            pl.BlockSpec((3, 3, Ck, Cl), lambda n: (0, 0, 0, 0)),
            pl.BlockSpec((1, Cl), lambda n: (0, 0)),
            pl.BlockSpec((3, 3, Cl, Ctot), lambda n: (0, 0, 0, 0)),
            pl.BlockSpec((1, Ctot), lambda n: (0, 0)),
            pl.BlockSpec((Cin, Ctot), lambda n: (0, 0)),
        ],
        out_specs=pl.BlockSpec((None, H, W, Ctot), lambda n: (n, 0, 0, 0)),
        scratch_shapes=[
            pltpu.VMEM((H + 2, W + 9, Ck), jnp.float32),   # padded b3a output
            pltpu.VMEM((H + 2, W + 2, Cl), jnp.float32),   # padded b3b output
        ],
        compiler_params=pltpu.CompilerParams(dimension_semantics=("parallel",)),
    )(
        xpad,
        wb2w.astype(bf16), sb2w,
        w3a.reshape(Cin, Ck).astype(bf16), s3a.reshape(1, Ck),
        w3b.astype(bf16), s3b.reshape(1, Cl),
        w3cw.astype(bf16), s3cw,
        emb.astype(bf16),
    )

    # keep only the stride-2 valid positions, then back to NCHW
    Ho = (H - 3) // 2 + 1
    Wo = (W - 3) // 2 + 1
    out = out_dense[:, : 2 * Ho : 2, : 2 * Wo : 2, :]
    return jnp.transpose(out, (0, 3, 1, 2))


# ---------------- pure-JAX reference (for the self-check) ----------------

def _reference(x_nchw, params, eps=1e-5):
    x = jnp.transpose(x_nchw, (0, 2, 3, 1))

    def conv_bn_relu(v, p, stride, padding):
        scale = p["gamma"] / jnp.sqrt(p["var"] + eps)
        shift = (p["b"] - p["mean"]) * scale + p["beta"]
        y = jax.lax.conv_general_dilated(
            v, p["w"], window_strides=(stride, stride),
            padding=[(padding, padding), (padding, padding)],
            dimension_numbers=("NHWC", "HWIO", "NHWC"))
        return jnp.maximum(y * scale + shift, 0.0)

    x1 = jax.lax.reduce_window(x, -jnp.inf, jax.lax.max,
                               (1, 3, 3, 1), (1, 2, 2, 1), "VALID")
    x2 = conv_bn_relu(x, params["b2"], 2, 0)
    y = conv_bn_relu(x, params["b3a"], 1, 0)
    y = conv_bn_relu(y, params["b3b"], 1, 1)
    x3 = conv_bn_relu(y, params["b3c"], 2, 0)
    out = jnp.concatenate([x1, x2, x3], axis=-1)
    return jnp.transpose(out, (0, 3, 1, 2))


def init_conv_bn(key, cin, cout, ksize):
    kw_, kb_, kg_, kbe_ = jax.random.split(key, 4)
    return dict(
        w=0.1 * jax.random.normal(kw_, (ksize, ksize, cin, cout), jnp.float32),
        b=0.1 * jax.random.normal(kb_, (cout,), jnp.float32),
        gamma=1.0 + 0.1 * jax.random.normal(kg_, (cout,), jnp.float32),
        beta=0.1 * jax.random.normal(kbe_, (cout,), jnp.float32),
        mean=jnp.zeros((cout,), jnp.float32),
        var=jnp.ones((cout,), jnp.float32),
    )


if __name__ == "__main__":
    key = jax.random.PRNGKey(0)
    in_c, k, l, m, n = 4, 8, 8, 16, 16
    k_x, k1, k2, k3, k4 = jax.random.split(key, 5)
    x = jax.random.normal(k_x, (2, in_c, 16, 16), jnp.float32)      # NCHW like PyTorch
    params = {
        "b2": init_conv_bn(k1, in_c, n, 3),
        "b3a": init_conv_bn(k2, in_c, k, 1),
        "b3b": init_conv_bn(k3, k, l, 3),
        "b3c": init_conv_bn(k4, l, m, 3),
    }
    out = jax.jit(reduction_a)(x, params)
    out = jax.block_until_ready(out)
    assert out.shape == (2, in_c + n + m, 7, 7), out.shape

    ref = _reference(x, params)
    err = float(jnp.max(jnp.abs(out - ref)))
    assert err < 1e-1, f"max abs error vs reference: {err}"   # bf16 MXU tolerance
    print("KERNEL_OK")
</pallas_src>

<mosaic_0001>
module attributes {stable_mosaic.version = 11 : i64} {
  func.func @kernel(%arg0: i32, %arg1: memref<1x18x18x4xbf16, #tpu.memory_space<vmem>>, %arg2: memref<3x3x4x36xbf16, #tpu.memory_space<vmem>>, %arg3: memref<1x36xf32, #tpu.memory_space<vmem>>, %arg4: memref<4x8xbf16, #tpu.memory_space<vmem>>, %arg5: memref<1x8xf32, #tpu.memory_space<vmem>>, %arg6: memref<3x3x8x8xbf16, #tpu.memory_space<vmem>>, %arg7: memref<1x8xf32, #tpu.memory_space<vmem>>, %arg8: memref<3x3x8x36xbf16, #tpu.memory_space<vmem>>, %arg9: memref<1x36xf32, #tpu.memory_space<vmem>>, %arg10: memref<4x36xbf16, #tpu.memory_space<vmem>>, %arg11: memref<1x16x16x36xf32, #tpu.memory_space<vmem>>, %arg12: memref<18x25x8xf32, #tpu.memory_space<vmem>>, %arg13: memref<18x18x8xf32, #tpu.memory_space<vmem>>) attributes {dimension_semantics = [#tpu.dimension_semantics<parallel>], iteration_bounds = array<i64: 2>, scalar_prefetch = 0 : i64, scratch_operands = 2 : i64, tpu.core_type = #tpu.core_type<tc>, window_params = [{transform_indices = @transform_0, window_bounds = array<i64: 1, 18, 18, 4>}, {pipeline_mode = #tpu.pipeline_mode<synchronous>, transform_indices = @transform_1, window_bounds = array<i64: 3, 3, 4, 36>}, {pipeline_mode = #tpu.pipeline_mode<synchronous>, transform_indices = @transform_2, window_bounds = array<i64: 1, 36>}, {pipeline_mode = #tpu.pipeline_mode<synchronous>, transform_indices = @transform_3, window_bounds = array<i64: 4, 8>}, {pipeline_mode = #tpu.pipeline_mode<synchronous>, transform_indices = @transform_4, window_bounds = array<i64: 1, 8>}, {pipeline_mode = #tpu.pipeline_mode<synchronous>, transform_indices = @transform_5, window_bounds = array<i64: 3, 3, 8, 8>}, {pipeline_mode = #tpu.pipeline_mode<synchronous>, transform_indices = @transform_6, window_bounds = array<i64: 1, 8>}, {pipeline_mode = #tpu.pipeline_mode<synchronous>, transform_indices = @transform_7, window_bounds = array<i64: 3, 3, 8, 36>}, {pipeline_mode = #tpu.pipeline_mode<synchronous>, transform_indices = @transform_8, window_bounds = array<i64: 1, 36>}, {pipeline_mode = #tpu.pipeline_mode<synchronous>, transform_indices = @transform_9, window_bounds = array<i64: 4, 36>}, {transform_indices = @transform_10, window_bounds = array<i64: 1, 16, 16, 36>}]} {
    %c0 = arith.constant 0 : index
    %c0_0 = arith.constant 0 : index
    %c0_1 = arith.constant 0 : index
    %c0_2 = arith.constant 0 : index
    %0 = vector.load %arg1[%c0, %c0_0, %c0_1, %c0_2] : memref<1x18x18x4xbf16, #tpu.memory_space<vmem>>, vector<1x16x16x4xbf16>
    %1 = vector.shape_cast %0 : vector<1x16x16x4xbf16> to vector<16x16x4xbf16>
    %2 = vector.shape_cast %1 : vector<16x16x4xbf16> to vector<256x4xbf16>
    %c0_3 = arith.constant 0 : index
    %c0_4 = arith.constant 0 : index
    %3 = vector.load %arg4[%c0_3, %c0_4] : memref<4x8xbf16, #tpu.memory_space<vmem>>, vector<4x8xbf16>
    %cst = arith.constant dense<0.000000e+00> : vector<256x8xf32>
    %4 = tpu.matmul %2, %3, %cst {dimension_numbers = #tpu.dot_dimension_numbers<[1], [0], [0], [1], [0, 0, 1, 1], [], []>} : vector<256x4xbf16>, vector<4x8xbf16>, vector<256x8xf32> -> vector<256x8xf32>
    %c0_5 = arith.constant 0 : index
    %c0_6 = arith.constant 0 : index
    %5 = vector.load %arg5[%c0_5, %c0_6] : memref<1x8xf32, #tpu.memory_space<vmem>>, vector<1x8xf32>
    %6 = vector.broadcast %5 : vector<1x8xf32> to vector<256x8xf32>
    %7 = arith.addf %4, %6 : vector<256x8xf32>
    %cst_7 = arith.constant 0.000000e+00 : f32
    %8 = vector.broadcast %cst_7 : f32 to vector<256x8xf32>
    %9 = arith.maximumf %7, %8 : vector<256x8xf32>
    %cst_8 = arith.constant 0.000000e+00 : f32
    %10 = vector.broadcast %cst_8 : f32 to vector<18x25x8xf32>
    %c0_9 = arith.constant 0 : index
    %c0_10 = arith.constant 0 : index
    %c0_11 = arith.constant 0 : index
    %11 = vector.load %arg12[%c0_9, %c0_10, %c0_11] : memref<18x25x8xf32, #tpu.memory_space<vmem>>, vector<18x25x8xf32>
    tpu.vector_store %arg12[%c0_9, %c0_10, %c0_11], %10 {strides = array<i32>} : memref<18x25x8xf32, #tpu.memory_space<vmem>>, vector<18x25x8xf32>,
    %12 = vector.shape_cast %9 : vector<256x8xf32> to vector<16x16x8xf32>
    %c1 = arith.constant 1 : index
    %c8 = arith.constant 8 : index
    %c0_12 = arith.constant 0 : index
    %13 = vector.load %arg12[%c1, %c8, %c0_12] : memref<18x25x8xf32, #tpu.memory_space<vmem>>, vector<16x16x8xf32>
    tpu.vector_store %arg12[%c1, %c8, %c0_12], %12 {strides = array<i32>} : memref<18x25x8xf32, #tpu.memory_space<vmem>>, vector<16x16x8xf32>,
    %cst_13 = arith.constant 0.000000e+00 : f32
    %14 = vector.broadcast %cst_13 : f32 to vector<256x8xf32>
    %c0_14 = arith.constant 0 : index
    %c7 = arith.constant 7 : index
    %c0_15 = arith.constant 0 : index
    %15 = vector.load %arg12[%c0_14, %c7, %c0_15] : memref<18x25x8xf32, #tpu.memory_space<vmem>>, vector<16x16x8xf32>
    %16 = vector.shape_cast %15 : vector<16x16x8xf32> to vector<256x8xf32>
    %17 = arith.truncf %16 : vector<256x8xf32> to vector<256x8xbf16>
    %c0_16 = arith.constant 0 : index
    %c0_17 = arith.constant 0 : index
    %c0_18 = arith.constant 0 : index
    %c0_19 = arith.constant 0 : index
    %18 = vector.load %arg6[%c0_16, %c0_17, %c0_18, %c0_19] : memref<3x3x8x8xbf16, #tpu.memory_space<vmem>>, vector<1x1x8x8xbf16>
    %19 = vector.shape_cast %18 : vector<1x1x8x8xbf16> to vector<8x8xbf16>
    %cst_20 = arith.constant dense<0.000000e+00> : vector<256x8xf32>
    %20 = tpu.matmul %17, %19, %cst_20 {dimension_numbers = #tpu.dot_dimension_numbers<[1], [0], [0], [1], [0, 0, 1, 1], [], []>} : vector<256x8xbf16>, vector<8x8xbf16>, vector<256x8xf32> -> vector<256x8xf32>
    %21 = arith.addf %14, %20 : vector<256x8xf32>
    %c0_21 = arith.constant 0 : index
    %c8_22 = arith.constant 8 : index
    %c0_23 = arith.constant 0 : index
    %22 = vector.load %arg12[%c0_21, %c8_22, %c0_23] : memref<18x25x8xf32, #tpu.memory_space<vmem>>, vector<16x16x8xf32>
    %23 = vector.shape_cast %22 : vector<16x16x8xf32> to vector<256x8xf32>
    %24 = arith.truncf %23 : vector<256x8xf32> to vector<256x8xbf16>
    %c0_24 = arith.constant 0 : index
    %c1_25 = arith.constant 1 : index
    %c0_26 = arith.constant 0 : index
    %c0_27 = arith.constant 0 : index
    %25 = vector.load %arg6[%c0_24, %c1_25, %c0_26, %c0_27] : memref<3x3x8x8xbf16, #tpu.memory_space<vmem>>, vector<1x1x8x8xbf16>
    %26 = vector.shape_cast %25 : vector<1x1x8x8xbf16> to vector<8x8xbf16>
    %cst_28 = arith.constant dense<0.000000e+00> : vector<256x8xf32>
    %27 = tpu.matmul %24, %26, %cst_28 {dimension_numbers = #tpu.dot_dimension_numbers<[1], [0], [0], [1], [0, 0, 1, 1], [], []>} : vector<256x8xbf16>, vector<8x8xbf16>, vector<256x8xf32> -> vector<256x8xf32>
    %28 = arith.addf %21, %27 : vector<256x8xf32>
    %c0_29 = arith.constant 0 : index
    %c9 = arith.constant 9 : index
    %c0_30 = arith.constant 0 : index
    %29 = vector.load %arg12[%c0_29, %c9, %c0_30] : memref<18x25x8xf32, #tpu.memory_space<vmem>>, vector<16x16x8xf32>
    %30 = vector.shape_cast %29 : vector<16x16x8xf32> to vector<256x8xf32>
    %31 = arith.truncf %30 : vector<256x8xf32> to vector<256x8xbf16>
    %c0_31 = arith.constant 0 : index
    %c2 = arith.constant 2 : index
    %c0_32 = arith.constant 0 : index
    %c0_33 = arith.constant 0 : index
    %32 = vector.load %arg6[%c0_31, %c2, %c0_32, %c0_33] : memref<3x3x8x8xbf16, #tpu.memory_space<vmem>>, vector<1x1x8x8xbf16>
    %33 = vector.shape_cast %32 : vector<1x1x8x8xbf16> to vector<8x8xbf16>
    %cst_34 = arith.constant dense<0.000000e+00> : vector<256x8xf32>
    %34 = tpu.matmul %31, %33, %cst_34 {dimension_numbers = #tpu.dot_dimension_numbers<[1], [0], [0], [1], [0, 0, 1, 1], [], []>} : vector<256x8xbf16>, vector<8x8xbf16>, vector<256x8xf32> -> vector<256x8xf32>
    %35 = arith.addf %28, %34 : vector<256x8xf32>
    %c1_35 = arith.constant 1 : index
    %c7_36 = arith.constant 7 : index
    %c0_37 = arith.constant 0 : index
    %36 = vector.load %arg12[%c1_35, %c7_36, %c0_37] : memref<18x25x8xf32, #tpu.memory_space<vmem>>, vector<16x16x8xf32>
    %37 = vector.shape_cast %36 : vector<16x16x8xf32> to vector<256x8xf32>
    %38 = arith.truncf %37 : vector<256x8xf32> to vector<256x8xbf16>
    %c1_38 = arith.constant 1 : index
    %c0_39 = arith.constant 0 : index
    %c0_40 = arith.constant 0 : index
    %c0_41 = arith.constant 0 : index
    %39 = vector.load %arg6[%c1_38, %c0_39, %c0_40, %c0_41] : memref<3x3x8x8xbf16, #tpu.memory_space<vmem>>, vector<1x1x8x8xbf16>
    %40 = vector.shape_cast %39 : vector<1x1x8x8xbf16> to vector<8x8xbf16>
    %cst_42 = arith.constant dense<0.000000e+00> : vector<256x8xf32>
    %41 = tpu.matmul %38, %40, %cst_42 {dimension_numbers = #tpu.dot_dimension_numbers<[1], [0], [0], [1], [0, 0, 1, 1], [], []>} : vector<256x8xbf16>, vector<8x8xbf16>, vector<256x8xf32> -> vector<256x8xf32>
    %42 = arith.addf %35, %41 : vector<256x8xf32>
    %c1_43 = arith.constant 1 : index
    %c8_44 = arith.constant 8 : index
    %c0_45 = arith.constant 0 : index
    %43 = vector.load %arg12[%c1_43, %c8_44, %c0_45] : memref<18x25x8xf32, #tpu.memory_space<vmem>>, vector<16x16x8xf32>
    %44 = vector.shape_cast %43 : vector<16x16x8xf32> to vector<256x8xf32>
    %45 = arith.truncf %44 : vector<256x8xf32> to vector<256x8xbf16>
    %c1_46 = arith.constant 1 : index
    %c1_47 = arith.constant 1 : index
    %c0_48 = arith.constant 0 : index
    %c0_49 = arith.constant 0 : index
    %46 = vector.load %arg6[%c1_46, %c1_47, %c0_48, %c0_49] : memref<3x3x8x8xbf16, #tpu.memory_space<vmem>>, vector<1x1x8x8xbf16>
    %47 = vector.shape_cast %46 : vector<1x1x8x8xbf16> to vector<8x8xbf16>
    %cst_50 = arith.constant dense<0.000000e+00> : vector<256x8xf32>
    %48 = tpu.matmul %45, %47, %cst_50 {dimension_numbers = #tpu.dot_dimension_numbers<[1], [0], [0], [1], [0, 0, 1, 1], [], []>} : vector<256x8xbf16>, vector<8x8xbf16>, vector<256x8xf32> -> vector<256x8xf32>
    %49 = arith.addf %42, %48 : vector<256x8xf32>
    %c1_51 = arith.constant 1 : index
    %c9_52 = arith.constant 9 : index
    %c0_53 = arith.constant 0 : index
    %50 = vector.load %arg12[%c1_51, %c9_52, %c0_53] : memref<18x25x8xf32, #tpu.memory_space<vmem>>, vector<16x16x8xf32>
    %51 = vector.shape_cast %50 : vector<16x16x8xf32> to vector<256x8xf32>
    %52 = arith.truncf %51 : vector<256x8xf32> to vector<256x8xbf16>
    %c1_54 = arith.constant 1 : index
    %c2_55 = arith.constant 2 : index
    %c0_56 = arith.constant 0 : index
    %c0_57 = arith.constant 0 : index
    %53 = vector.load %arg6[%c1_54, %c2_55, %c0_56, %c0_57] : memref<3x3x8x8xbf16, #tpu.memory_space<vmem>>, vector<1x1x8x8xbf16>
    %54 = vector.shape_cast %53 : vector<1x1x8x8xbf16> to vector<8x8xbf16>
    %cst_58 = arith.constant dense<0.000000e+00> : vector<256x8xf32>
    %55 = tpu.matmul %52, %54, %cst_58 {dimension_numbers = #tpu.dot_dimension_numbers<[1], [0], [0], [1], [0, 0, 1, 1], [], []>} : vector<256x8xbf16>, vector<8x8xbf16>, vector<256x8xf32> -> vector<256x8xf32>
    %56 = arith.addf %49, %55 : vector<256x8xf32>
    %c2_59 = arith.constant 2 : index
    %c7_60 = arith.constant 7 : index
    %c0_61 = arith.constant 0 : index
    %57 = vector.load %arg12[%c2_59, %c7_60, %c0_61] : memref<18x25x8xf32, #tpu.memory_space<vmem>>, vector<16x16x8xf32>
    %58 = vector.shape_cast %57 : vector<16x16x8xf32> to vector<256x8xf32>
    %59 = arith.truncf %58 : vector<256x8xf32> to vector<256x8xbf16>
    %c2_62 = arith.constant 2 : index
    %c0_63 = arith.constant 0 : index
    %c0_64 = arith.constant 0 : index
    %c0_65 = arith.constant 0 : index
    %60 = vector.load %arg6[%c2_62, %c0_63, %c0_64, %c0_65] : memref<3x3x8x8xbf16, #tpu.memory_space<vmem>>, vector<1x1x8x8xbf16>
    %61 = vector.shape_cast %60 : vector<1x1x8x8xbf16> to vector<8x8xbf16>
    %cst_66 = arith.constant dense<0.000000e+00> : vector<256x8xf32>
    %62 = tpu.matmul %59, %61, %cst_66 {dimension_numbers = #tpu.dot_dimension_numbers<[1], [0], [0], [1], [0, 0, 1, 1], [], []>} : vector<256x8xbf16>, vector<8x8xbf16>, vector<256x8xf32> -> vector<256x8xf32>
    %63 = arith.addf %56, %62 : vector<256x8xf32>
    %c2_67 = arith.constant 2 : index
    %c8_68 = arith.constant 8 : index
    %c0_69 = arith.constant 0 : index
    %64 = vector.load %arg12[%c2_67, %c8_68, %c0_69] : memref<18x25x8xf32, #tpu.memory_space<vmem>>, vector<16x16x8xf32>
    %65 = vector.shape_cast %64 : vector<16x16x8xf32> to vector<256x8xf32>
    %66 = arith.truncf %65 : vector<256x8xf32> to vector<256x8xbf16>
    %c2_70 = arith.constant 2 : index
    %c1_71 = arith.constant 1 : index
    %c0_72 = arith.constant 0 : index
    %c0_73 = arith.constant 0 : index
    %67 = vector.load %arg6[%c2_70, %c1_71, %c0_72, %c0_73] : memref<3x3x8x8xbf16, #tpu.memory_space<vmem>>, vector<1x1x8x8xbf16>
    %68 = vector.shape_cast %67 : vector<1x1x8x8xbf16> to vector<8x8xbf16>
    %cst_74 = arith.constant dense<0.000000e+00> : vector<256x8xf32>
    %69 = tpu.matmul %66, %68, %cst_74 {dimension_numbers = #tpu.dot_dimension_numbers<[1], [0], [0], [1], [0, 0, 1, 1], [], []>} : vector<256x8xbf16>, vector<8x8xbf16>, vector<256x8xf32> -> vector<256x8xf32>
    %70 = arith.addf %63, %69 : vector<256x8xf32>
    %c2_75 = arith.constant 2 : index
    %c9_76 = arith.constant 9 : index
    %c0_77 = arith.constant 0 : index
    %71 = vector.load %arg12[%c2_75, %c9_76, %c0_77] : memref<18x25x8xf32, #tpu.memory_space<vmem>>, vector<16x16x8xf32>
    %72 = vector.shape_cast %71 : vector<16x16x8xf32> to vector<256x8xf32>
    %73 = arith.truncf %72 : vector<256x8xf32> to vector<256x8xbf16>
    %c2_78 = arith.constant 2 : index
    %c2_79 = arith.constant 2 : index
    %c0_80 = arith.constant 0 : index
    %c0_81 = arith.constant 0 : index
    %74 = vector.load %arg6[%c2_78, %c2_79, %c0_80, %c0_81] : memref<3x3x8x8xbf16, #tpu.memory_space<vmem>>, vector<1x1x8x8xbf16>
    %75 = vector.shape_cast %74 : vector<1x1x8x8xbf16> to vector<8x8xbf16>
    %cst_82 = arith.constant dense<0.000000e+00> : vector<256x8xf32>
    %76 = tpu.matmul %73, %75, %cst_82 {dimension_numbers = #tpu.dot_dimension_numbers<[1], [0], [0], [1], [0, 0, 1, 1], [], []>} : vector<256x8xbf16>, vector<8x8xbf16>, vector<256x8xf32> -> vector<256x8xf32>
    %77 = arith.addf %70, %76 : vector<256x8xf32>
    %c0_83 = arith.constant 0 : index
    %c0_84 = arith.constant 0 : index
    %78 = vector.load %arg7[%c0_83, %c0_84] : memref<1x8xf32, #tpu.memory_space<vmem>>, vector<1x8xf32>
    %79 = vector.broadcast %78 : vector<1x8xf32> to vector<256x8xf32>
    %80 = arith.addf %77, %79 : vector<256x8xf32>
    %cst_85 = arith.constant 0.000000e+00 : f32
    %81 = vector.broadcast %cst_85 : f32 to vector<256x8xf32>
    %82 = arith.maximumf %80, %81 : vector<256x8xf32>
    %cst_86 = arith.constant 0.000000e+00 : f32
    %83 = vector.broadcast %cst_86 : f32 to vector<18x18x8xf32>
    %c0_87 = arith.constant 0 : index
    %c0_88 = arith.constant 0 : index
    %c0_89 = arith.constant 0 : index
    %84 = vector.load %arg13[%c0_87, %c0_88, %c0_89] : memref<18x18x8xf32, #tpu.memory_space<vmem>>, vector<18x18x8xf32>
    tpu.vector_store %arg13[%c0_87, %c0_88, %c0_89], %83 {strides = array<i32>} : memref<18x18x8xf32, #tpu.memory_space<vmem>>, vector<18x18x8xf32>,
    %85 = vector.shape_cast %82 : vector<256x8xf32> to vector<16x16x8xf32>
    %c0_90 = arith.constant 0 : index
    %c0_91 = arith.constant 0 : index
    %c0_92 = arith.constant 0 : index
    %86 = vector.load %arg13[%c0_90, %c0_91, %c0_92] : memref<18x18x8xf32, #tpu.memory_space<vmem>>, vector<16x16x8xf32>
    tpu.vector_store %arg13[%c0_90, %c0_91, %c0_92], %85 {strides = array<i32>} : memref<18x18x8xf32, #tpu.memory_space<vmem>>, vector<16x16x8xf32>,
    %cst_93 = arith.constant 0.000000e+00 : f32
    %87 = vector.broadcast %cst_93 : f32 to vector<256x36xf32>
    %c0_94 = arith.constant 0 : index
    %c0_95 = arith.constant 0 : index
    %c0_96 = arith.constant 0 : index
    %c0_97 = arith.constant 0 : index
    %88 = vector.load %arg1[%c0_94, %c0_95, %c0_96, %c0_97] : memref<1x18x18x4xbf16, #tpu.memory_space<vmem>>, vector<1x16x16x4xbf16>
    %89 = vector.shape_cast %88 : vector<1x16x16x4xbf16> to vector<16x16x4xbf16>
    %c0_98 = arith.constant 0 : index
    %c0_99 = arith.constant 0 : index
    %c0_100 = arith.constant 0 : index
    %90 = vector.load %arg13[%c0_98, %c0_99, %c0_100] : memref<18x18x8xf32, #tpu.memory_space<vmem>>, vector<16x16x8xf32>
    %91 = vector.shape_cast %89 : vector<16x16x4xbf16> to vector<256x4xbf16>
    %c0_101 = arith.constant 0 : index
    %c0_102 = arith.constant 0 : index
    %c0_103 = arith.constant 0 : index
    %c0_104 = arith.constant 0 : index
    %92 = vector.load %arg2[%c0_101, %c0_102, %c0_103, %c0_104] : memref<3x3x4x36xbf16, #tpu.memory_space<vmem>>, vector<1x1x4x36xbf16>
    %93 = vector.shape_cast %92 : vector<1x1x4x36xbf16> to vector<4x36xbf16>
    %cst_105 = arith.constant dense<0.000000e+00> : vector<256x36xf32>
    %94 = tpu.matmul %91, %93, %cst_105 {dimension_numbers = #tpu.dot_dimension_numbers<[1], [0], [0], [1], [0, 0, 1, 1], [], []>} : vector<256x4xbf16>, vector<4x36xbf16>, vector<256x36xf32> -> vector<256x36xf32>
    %95 = arith.addf %87, %94 : vector<256x36xf32>
    %96 = vector.shape_cast %90 : vector<16x16x8xf32> to vector<256x8xf32>
    %97 = arith.truncf %96 : vector<256x8xf32> to vector<256x8xbf16>
    %c0_106 = arith.constant 0 : index
    %c0_107 = arith.constant 0 : index
    %c0_108 = arith.constant 0 : index
    %c0_109 = arith.constant 0 : index
    %98 = vector.load %arg8[%c0_106, %c0_107, %c0_108, %c0_109] : memref<3x3x8x36xbf16, #tpu.memory_space<vmem>>, vector<1x1x8x36xbf16>
    %99 = vector.shape_cast %98 : vector<1x1x8x36xbf16> to vector<8x36xbf16>
    %cst_110 = arith.constant dense<0.000000e+00> : vector<256x36xf32>
    %100 = tpu.matmul %97, %99, %cst_110 {dimension_numbers = #tpu.dot_dimension_numbers<[1], [0], [0], [1], [0, 0, 1, 1], [], []>} : vector<256x8xbf16>, vector<8x36xbf16>, vector<256x36xf32> -> vector<256x36xf32>
    %101 = arith.addf %95, %100 : vector<256x36xf32>
    %c0_111 = arith.constant 0 : index
    %c0_112 = arith.constant 0 : index
    %c1_113 = arith.constant 1 : index
    %c0_114 = arith.constant 0 : index
    %102 = vector.load %arg1[%c0_111, %c0_112, %c1_113, %c0_114] : memref<1x18x18x4xbf16, #tpu.memory_space<vmem>>, vector<1x16x16x4xbf16>
    %103 = vector.shape_cast %102 : vector<1x16x16x4xbf16> to vector<16x16x4xbf16>
    %c0_115 = arith.constant 0 : index
    %c1_116 = arith.constant 1 : index
    %c0_117 = arith.constant 0 : index
    %104 = vector.load %arg13[%c0_115, %c1_116, %c0_117] : memref<18x18x8xf32, #tpu.memory_space<vmem>>, vector<16x16x8xf32>
    %105 = vector.shape_cast %103 : vector<16x16x4xbf16> to vector<256x4xbf16>
    %c0_118 = arith.constant 0 : index
    %c1_119 = arith.constant 1 : index
    %c0_120 = arith.constant 0 : index
    %c0_121 = arith.constant 0 : index
    %106 = vector.load %arg2[%c0_118, %c1_119, %c0_120, %c0_121] : memref<3x3x4x36xbf16, #tpu.memory_space<vmem>>, vector<1x1x4x36xbf16>
    %107 = vector.shape_cast %106 : vector<1x1x4x36xbf16> to vector<4x36xbf16>
    %cst_122 = arith.constant dense<0.000000e+00> : vector<256x36xf32>
    %108 = tpu.matmul %105, %107, %cst_122 {dimension_numbers = #tpu.dot_dimension_numbers<[1], [0], [0], [1], [0, 0, 1, 1], [], []>} : vector<256x4xbf16>, vector<4x36xbf16>, vector<256x36xf32> -> vector<256x36xf32>
    %109 = arith.addf %101, %108 : vector<256x36xf32>
    %110 = vector.shape_cast %104 : vector<16x16x8xf32> to vector<256x8xf32>
    %111 = arith.truncf %110 : vector<256x8xf32> to vector<256x8xbf16>
    %c0_123 = arith.constant 0 : index
    %c1_124 = arith.constant 1 : index
    %c0_125 = arith.constant 0 : index
    %c0_126 = arith.constant 0 : index
    %112 = vector.load %arg8[%c0_123, %c1_124, %c0_125, %c0_126] : memref<3x3x8x36xbf16, #tpu.memory_space<vmem>>, vector<1x1x8x36xbf16>
    %113 = vector.shape_cast %112 : vector<1x1x8x36xbf16> to vector<8x36xbf16>
    %cst_127 = arith.constant dense<0.000000e+00> : vector<256x36xf32>
    %114 = tpu.matmul %111, %113, %cst_127 {dimension_numbers = #tpu.dot_dimension_numbers<[1], [0], [0], [1], [0, 0, 1, 1], [], []>} : vector<256x8xbf16>, vector<8x36xbf16>, vector<256x36xf32> -> vector<256x36xf32>
    %115 = arith.addf %109, %114 : vector<256x36xf32>
    %c0_128 = arith.constant 0 : index
    %c0_129 = arith.constant 0 : index
    %c2_130 = arith.constant 2 : index
    %c0_131 = arith.constant 0 : index
    %116 = vector.load %arg1[%c0_128, %c0_129, %c2_130, %c0_131] : memref<1x18x18x4xbf16, #tpu.memory_space<vmem>>, vector<1x16x16x4xbf16>
    %117 = vector.shape_cast %116 : vector<1x16x16x4xbf16> to vector<16x16x4xbf16>
    %c0_132 = arith.constant 0 : index
    %c2_133 = arith.constant 2 : index
    %c0_134 = arith.constant 0 : index
    %118 = vector.load %arg13[%c0_132, %c2_133, %c0_134] : memref<18x18x8xf32, #tpu.memory_space<vmem>>, vector<16x16x8xf32>
    %119 = vector.shape_cast %117 : vector<16x16x4xbf16> to vector<256x4xbf16>
    %c0_135 = arith.constant 0 : index
    %c2_136 = arith.constant 2 : index
    %c0_137 = arith.constant 0 : index
    %c0_138 = arith.constant 0 : index
    %120 = vector.load %arg2[%c0_135, %c2_136, %c0_137, %c0_138] : memref<3x3x4x36xbf16, #tpu.memory_space<vmem>>, vector<1x1x4x36xbf16>
    %121 = vector.shape_cast %120 : vector<1x1x4x36xbf16> to vector<4x36xbf16>
    %cst_139 = arith.constant dense<0.000000e+00> : vector<256x36xf32>
    %122 = tpu.matmul %119, %121, %cst_139 {dimension_numbers = #tpu.dot_dimension_numbers<[1], [0], [0], [1], [0, 0, 1, 1], [], []>} : vector<256x4xbf16>, vector<4x36xbf16>, vector<256x36xf32> -> vector<256x36xf32>
    %123 = arith.addf %115, %122 : vector<256x36xf32>
    %124 = vector.shape_cast %118 : vector<16x16x8xf32> to vector<256x8xf32>
    %125 = arith.truncf %124 : vector<256x8xf32> to vector<256x8xbf16>
    %c0_140 = arith.constant 0 : index
    %c2_141 = arith.constant 2 : index
    %c0_142 = arith.constant 0 : index
    %c0_143 = arith.constant 0 : index
    %126 = vector.load %arg8[%c0_140, %c2_141, %c0_142, %c0_143] : memref<3x3x8x36xbf16, #tpu.memory_space<vmem>>, vector<1x1x8x36xbf16>
    %127 = vector.shape_cast %126 : vector<1x1x8x36xbf16> to vector<8x36xbf16>
    %cst_144 = arith.constant dense<0.000000e+00> : vector<256x36xf32>
    %128 = tpu.matmul %125, %127, %cst_144 {dimension_numbers = #tpu.dot_dimension_numbers<[1], [0], [0], [1], [0, 0, 1, 1], [], []>} : vector<256x8xbf16>, vector<8x36xbf16>, vector<256x36xf32> -> vector<256x36xf32>
    %129 = arith.addf %123, %128 : vector<256x36xf32>
    %c0_145 = arith.constant 0 : index
    %c1_146 = arith.constant 1 : index
    %c0_147 = arith.constant 0 : index
    %c0_148 = arith.constant 0 : index
    %130 = vector.load %arg1[%c0_145, %c1_146, %c0_147, %c0_148] : memref<1x18x18x4xbf16, #tpu.memory_space<vmem>>, vector<1x16x16x4xbf16>
    %131 = vector.shape_cast %130 : vector<1x16x16x4xbf16> to vector<16x16x4xbf16>
    %c1_149 = arith.constant 1 : index
    %c0_150 = arith.constant 0 : index
    %c0_151 = arith.constant 0 : index
    %132 = vector.load %arg13[%c1_149, %c0_150, %c0_151] : memref<18x18x8xf32, #tpu.memory_space<vmem>>, vector<16x16x8xf32>
    %133 = vector.shape_cast %131 : vector<16x16x4xbf16> to vector<256x4xbf16>
    %c1_152 = arith.constant 1 : index
    %c0_153 = arith.constant 0 : index
    %c0_154 = arith.constant 0 : index
    %c0_155 = arith.constant 0 : index
    %134 = vector.load %arg2[%c1_152, %c0_153, %c0_154, %c0_155] : memref<3x3x4x36xbf16, #tpu.memory_space<vmem>>, vector<1x1x4x36xbf16>
    %135 = vector.shape_cast %134 : vector<1x1x4x36xbf16> to vector<4x36xbf16>
    %cst_156 = arith.constant dense<0.000000e+00> : vector<256x36xf32>
    %136 = tpu.matmul %133, %135, %cst_156 {dimension_numbers = #tpu.dot_dimension_numbers<[1], [0], [0], [1], [0, 0, 1, 1], [], []>} : vector<256x4xbf16>, vector<4x36xbf16>, vector<256x36xf32> -> vector<256x36xf32>
    %137 = arith.addf %129, %136 : vector<256x36xf32>
    %138 = vector.shape_cast %132 : vector<16x16x8xf32> to vector<256x8xf32>
    %139 = arith.truncf %138 : vector<256x8xf32> to vector<256x8xbf16>
    %c1_157 = arith.constant 1 : index
    %c0_158 = arith.constant 0 : index
    %c0_159 = arith.constant 0 : index
    %c0_160 = arith.constant 0 : index
    %140 = vector.load %arg8[%c1_157, %c0_158, %c0_159, %c0_160] : memref<3x3x8x36xbf16, #tpu.memory_space<vmem>>, vector<1x1x8x36xbf16>
    %141 = vector.shape_cast %140 : vector<1x1x8x36xbf16> to vector<8x36xbf16>
    %cst_161 = arith.constant dense<0.000000e+00> : vector<256x36xf32>
    %142 = tpu.matmul %139, %141, %cst_161 {dimension_numbers = #tpu.dot_dimension_numbers<[1], [0], [0], [1], [0, 0, 1, 1], [], []>} : vector<256x8xbf16>, vector<8x36xbf16>, vector<256x36xf32> -> vector<256x36xf32>
    %143 = arith.addf %137, %142 : vector<256x36xf32>
    %c0_162 = arith.constant 0 : index
    %c1_163 = arith.constant 1 : index
    %c1_164 = arith.constant 1 : index
    %c0_165 = arith.constant 0 : index
    %144 = vector.load %arg1[%c0_162, %c1_163, %c1_164, %c0_165] : memref<1x18x18x4xbf16, #tpu.memory_space<vmem>>, vector<1x16x16x4xbf16>
    %145 = vector.shape_cast %144 : vector<1x16x16x4xbf16> to vector<16x16x4xbf16>
    %c1_166 = arith.constant 1 : index
    %c1_167 = arith.constant 1 : index
    %c0_168 = arith.constant 0 : index
    %146 = vector.load %arg13[%c1_166, %c1_167, %c0_168] : memref<18x18x8xf32, #tpu.memory_space<vmem>>, vector<16x16x8xf32>
    %147 = vector.shape_cast %145 : vector<16x16x4xbf16> to vector<256x4xbf16>
    %c1_169 = arith.constant 1 : index
    %c1_170 = arith.constant 1 : index
    %c0_171 = arith.constant 0 : index
    %c0_172 = arith.constant 0 : index
    %148 = vector.load %arg2[%c1_169, %c1_170, %c0_171, %c0_172] : memref<3x3x4x36xbf16, #tpu.memory_space<vmem>>, vector<1x1x4x36xbf16>
    %149 = vector.shape_cast %148 : vector<1x1x4x36xbf16> to vector<4x36xbf16>
    %cst_173 = arith.constant dense<0.000000e+00> : vector<256x36xf32>
    %150 = tpu.matmul %147, %149, %cst_173 {dimension_numbers = #tpu.dot_dimension_numbers<[1], [0], [0], [1], [0, 0, 1, 1], [], []>} : vector<256x4xbf16>, vector<4x36xbf16>, vector<256x36xf32> -> vector<256x36xf32>
    %151 = arith.addf %143, %150 : vector<256x36xf32>
    %152 = vector.shape_cast %146 : vector<16x16x8xf32> to vector<256x8xf32>
    %153 = arith.truncf %152 : vector<256x8xf32> to vector<256x8xbf16>
    %c1_174 = arith.constant 1 : index
    %c1_175 = arith.constant 1 : index
    %c0_176 = arith.constant 0 : index
    %c0_177 = arith.constant 0 : index
    %154 = vector.load %arg8[%c1_174, %c1_175, %c0_176, %c0_177] : memref<3x3x8x36xbf16, #tpu.memory_space<vmem>>, vector<1x1x8x36xbf16>
    %155 = vector.shape_cast %154 : vector<1x1x8x36xbf16> to vector<8x36xbf16>
    %cst_178 = arith.constant dense<0.000000e+00> : vector<256x36xf32>
    %156 = tpu.matmul %153, %155, %cst_178 {dimension_numbers = #tpu.dot_dimension_numbers<[1], [0], [0], [1], [0, 0, 1, 1], [], []>} : vector<256x8xbf16>, vector<8x36xbf16>, vector<256x36xf32> -> vector<256x36xf32>
    %157 = arith.addf %151, %156 : vector<256x36xf32>
    %c0_179 = arith.constant 0 : index
    %c1_180 = arith.constant 1 : index
    %c2_181 = arith.constant 2 : index
    %c0_182 = arith.constant 0 : index
    %158 = vector.load %arg1[%c0_179, %c1_180, %c2_181, %c0_182] : memref<1x18x18x4xbf16, #tpu.memory_space<vmem>>, vector<1x16x16x4xbf16>
    %159 = vector.shape_cast %158 : vector<1x16x16x4xbf16> to vector<16x16x4xbf16>
    %c1_183 = arith.constant 1 : index
    %c2_184 = arith.constant 2 : index
    %c0_185 = arith.constant 0 : index
    %160 = vector.load %arg13[%c1_183, %c2_184, %c0_185] : memref<18x18x8xf32, #tpu.memory_space<vmem>>, vector<16x16x8xf32>
    %161 = vector.shape_cast %159 : vector<16x16x4xbf16> to vector<256x4xbf16>
    %c1_186 = arith.constant 1 : index
    %c2_187 = arith.constant 2 : index
    %c0_188 = arith.constant 0 : index
    %c0_189 = arith.constant 0 : index
    %162 = vector.load %arg2[%c1_186, %c2_187, %c0_188, %c0_189] : memref<3x3x4x36xbf16, #tpu.memory_space<vmem>>, vector<1x1x4x36xbf16>
    %163 = vector.shape_cast %162 : vector<1x1x4x36xbf16> to vector<4x36xbf16>
    %cst_190 = arith.constant dense<0.000000e+00> : vector<256x36xf32>
    %164 = tpu.matmul %161, %163, %cst_190 {dimension_numbers = #tpu.dot_dimension_numbers<[1], [0], [0], [1], [0, 0, 1, 1], [], []>} : vector<256x4xbf16>, vector<4x36xbf16>, vector<256x36xf32> -> vector<256x36xf32>
    %165 = arith.addf %157, %164 : vector<256x36xf32>
    %166 = vector.shape_cast %160 : vector<16x16x8xf32> to vector<256x8xf32>
    %167 = arith.truncf %166 : vector<256x8xf32> to vector<256x8xbf16>
    %c1_191 = arith.constant 1 : index
    %c2_192 = arith.constant 2 : index
    %c0_193 = arith.constant 0 : index
    %c0_194 = arith.constant 0 : index
    %168 = vector.load %arg8[%c1_191, %c2_192, %c0_193, %c0_194] : memref<3x3x8x36xbf16, #tpu.memory_space<vmem>>, vector<1x1x8x36xbf16>
    %169 = vector.shape_cast %168 : vector<1x1x8x36xbf16> to vector<8x36xbf16>
    %cst_195 = arith.constant dense<0.000000e+00> : vector<256x36xf32>
    %170 = tpu.matmul %167, %169, %cst_195 {dimension_numbers = #tpu.dot_dimension_numbers<[1], [0], [0], [1], [0, 0, 1, 1], [], []>} : vector<256x8xbf16>, vector<8x36xbf16>, vector<256x36xf32> -> vector<256x36xf32>
    %171 = arith.addf %165, %170 : vector<256x36xf32>
    %c0_196 = arith.constant 0 : index
    %c2_197 = arith.constant 2 : index
    %c0_198 = arith.constant 0 : index
    %c0_199 = arith.constant 0 : index
    %172 = vector.load %arg1[%c0_196, %c2_197, %c0_198, %c0_199] : memref<1x18x18x4xbf16, #tpu.memory_space<vmem>>, vector<1x16x16x4xbf16>
    %173 = vector.shape_cast %172 : vector<1x16x16x4xbf16> to vector<16x16x4xbf16>
    %c2_200 = arith.constant 2 : index
    %c0_201 = arith.constant 0 : index
    %c0_202 = arith.constant 0 : index
    %174 = vector.load %arg13[%c2_200, %c0_201, %c0_202] : memref<18x18x8xf32, #tpu.memory_space<vmem>>, vector<16x16x8xf32>
    %175 = vector.shape_cast %173 : vector<16x16x4xbf16> to vector<256x4xbf16>
    %c2_203 = arith.constant 2 : index
    %c0_204 = arith.constant 0 : index
    %c0_205 = arith.constant 0 : index
    %c0_206 = arith.constant 0 : index
    %176 = vector.load %arg2[%c2_203, %c0_204, %c0_205, %c0_206] : memref<3x3x4x36xbf16, #tpu.memory_space<vmem>>, vector<1x1x4x36xbf16>
    %177 = vector.shape_cast %176 : vector<1x1x4x36xbf16> to vector<4x36xbf16>
    %cst_207 = arith.constant dense<0.000000e+00> : vector<256x36xf32>
    %178 = tpu.matmul %175, %177, %cst_207 {dimension_numbers = #tpu.dot_dimension_numbers<[1], [0], [0], [1], [0, 0, 1, 1], [], []>} : vector<256x4xbf16>, vector<4x36xbf16>, vector<256x36xf32> -> vector<256x36xf32>
    %179 = arith.addf %171, %178 : vector<256x36xf32>
    %180 = vector.shape_cast %174 : vector<16x16x8xf32> to vector<256x8xf32>
    %181 = arith.truncf %180 : vector<256x8xf32> to vector<256x8xbf16>
    %c2_208 = arith.constant 2 : index
    %c0_209 = arith.constant 0 : index
    %c0_210 = arith.constant 0 : index
    %c0_211 = arith.constant 0 : index
    %182 = vector.load %arg8[%c2_208, %c0_209, %c0_210, %c0_211] : memref<3x3x8x36xbf16, #tpu.memory_space<vmem>>, vector<1x1x8x36xbf16>
    %183 = vector.shape_cast %182 : vector<1x1x8x36xbf16> to vector<8x36xbf16>
    %cst_212 = arith.constant dense<0.000000e+00> : vector<256x36xf32>
    %184 = tpu.matmul %181, %183, %cst_212 {dimension_numbers = #tpu.dot_dimension_numbers<[1], [0], [0], [1], [0, 0, 1, 1], [], []>} : vector<256x8xbf16>, vector<8x36xbf16>, vector<256x36xf32> -> vector<256x36xf32>
    %185 = arith.addf %179, %184 : vector<256x36xf32>
    %c0_213 = arith.constant 0 : index
    %c2_214 = arith.constant 2 : index
    %c1_215 = arith.constant 1 : index
    %c0_216 = arith.constant 0 : index
    %186 = vector.load %arg1[%c0_213, %c2_214, %c1_215, %c0_216] : memref<1x18x18x4xbf16, #tpu.memory_space<vmem>>, vector<1x16x16x4xbf16>
    %187 = vector.shape_cast %186 : vector<1x16x16x4xbf16> to vector<16x16x4xbf16>
    %c2_217 = arith.constant 2 : index
    %c1_218 = arith.constant 1 : index
    %c0_219 = arith.constant 0 : index
    %188 = vector.load %arg13[%c2_217, %c1_218, %c0_219] : memref<18x18x8xf32, #tpu.memory_space<vmem>>, vector<16x16x8xf32>
    %189 = vector.shape_cast %187 : vector<16x16x4xbf16> to vector<256x4xbf16>
    %c2_220 = arith.constant 2 : index
    %c1_221 = arith.constant 1 : index
    %c0_222 = arith.constant 0 : index
    %c0_223 = arith.constant 0 : index
    %190 = vector.load %arg2[%c2_220, %c1_221, %c0_222, %c0_223] : memref<3x3x4x36xbf16, #tpu.memory_space<vmem>>, vector<1x1x4x36xbf16>
    %191 = vector.shape_cast %190 : vector<1x1x4x36xbf16> to vector<4x36xbf16>
    %cst_224 = arith.constant dense<0.000000e+00> : vector<256x36xf32>
    %192 = tpu.matmul %189, %191, %cst_224 {dimension_numbers = #tpu.dot_dimension_numbers<[1], [0], [0], [1], [0, 0, 1, 1], [], []>} : vector<256x4xbf16>, vector<4x36xbf16>, vector<256x36xf32> -> vector<256x36xf32>
    %193 = arith.addf %185, %192 : vector<256x36xf32>
    %194 = vector.shape_cast %188 : vector<16x16x8xf32> to vector<256x8xf32>
    %195 = arith.truncf %194 : vector<256x8xf32> to vector<256x8xbf16>
    %c2_225 = arith.constant 2 : index
    %c1_226 = arith.constant 1 : index
    %c0_227 = arith.constant 0 : index
    %c0_228 = arith.constant 0 : index
    %196 = vector.load %arg8[%c2_225, %c1_226, %c0_227, %c0_228] : memref<3x3x8x36xbf16, #tpu.memory_space<vmem>>, vector<1x1x8x36xbf16>
    %197 = vector.shape_cast %196 : vector<1x1x8x36xbf16> to vector<8x36xbf16>
    %cst_229 = arith.constant dense<0.000000e+00> : vector<256x36xf32>
    %198 = tpu.matmul %195, %197, %cst_229 {dimension_numbers = #tpu.dot_dimension_numbers<[1], [0], [0], [1], [0, 0, 1, 1], [], []>} : vector<256x8xbf16>, vector<8x36xbf16>, vector<256x36xf32> -> vector<256x36xf32>
    %199 = arith.addf %193, %198 : vector<256x36xf32>
    %c0_230 = arith.constant 0 : index
    %c2_231 = arith.constant 2 : index
    %c2_232 = arith.constant 2 : index
    %c0_233 = arith.constant 0 : index
    %200 = vector.load %arg1[%c0_230, %c2_231, %c2_232, %c0_233] : memref<1x18x18x4xbf16, #tpu.memory_space<vmem>>, vector<1x16x16x4xbf16>
    %201 = vector.shape_cast %200 : vector<1x16x16x4xbf16> to vector<16x16x4xbf16>
    %c2_234 = arith.constant 2 : index
    %c2_235 = arith.constant 2 : index
    %c0_236 = arith.constant 0 : index
    %202 = vector.load %arg13[%c2_234, %c2_235, %c0_236] : memref<18x18x8xf32, #tpu.memory_space<vmem>>, vector<16x16x8xf32>
    %203 = vector.shape_cast %201 : vector<16x16x4xbf16> to vector<256x4xbf16>
    %c2_237 = arith.constant 2 : index
    %c2_238 = arith.constant 2 : index
    %c0_239 = arith.constant 0 : index
    %c0_240 = arith.constant 0 : index
    %204 = vector.load %arg2[%c2_237, %c2_238, %c0_239, %c0_240] : memref<3x3x4x36xbf16, #tpu.memory_space<vmem>>, vector<1x1x4x36xbf16>
    %205 = vector.shape_cast %204 : vector<1x1x4x36xbf16> to vector<4x36xbf16>
    %cst_241 = arith.constant dense<0.000000e+00> : vector<256x36xf32>
    %206 = tpu.matmul %203, %205, %cst_241 {dimension_numbers = #tpu.dot_dimension_numbers<[1], [0], [0], [1], [0, 0, 1, 1], [], []>} : vector<256x4xbf16>, vector<4x36xbf16>, vector<256x36xf32> -> vector<256x36xf32>
    %207 = arith.addf %199, %206 : vector<256x36xf32>
    %208 = vector.shape_cast %202 : vector<16x16x8xf32> to vector<256x8xf32>
    %209 = arith.truncf %208 : vector<256x8xf32> to vector<256x8xbf16>
    %c2_242 = arith.constant 2 : index
    %c2_243 = arith.constant 2 : index
    %c0_244 = arith.constant 0 : index
    %c0_245 = arith.constant 0 : index
    %210 = vector.load %arg8[%c2_242, %c2_243, %c0_244, %c0_245] : memref<3x3x8x36xbf16, #tpu.memory_space<vmem>>, vector<1x1x8x36xbf16>
    %211 = vector.shape_cast %210 : vector<1x1x8x36xbf16> to vector<8x36xbf16>
    %cst_246 = arith.constant dense<0.000000e+00> : vector<256x36xf32>
    %212 = tpu.matmul %209, %211, %cst_246 {dimension_numbers = #tpu.dot_dimension_numbers<[1], [0], [0], [1], [0, 0, 1, 1], [], []>} : vector<256x8xbf16>, vector<8x36xbf16>, vector<256x36xf32> -> vector<256x36xf32>
    %213 = arith.addf %207, %212 : vector<256x36xf32>
    %c0_247 = arith.constant 0 : index
    %c0_248 = arith.constant 0 : index
    %214 = vector.load %arg3[%c0_247, %c0_248] : memref<1x36xf32, #tpu.memory_space<vmem>>, vector<1x36xf32>
    %c0_249 = arith.constant 0 : index
    %c0_250 = arith.constant 0 : index
    %215 = vector.load %arg9[%c0_249, %c0_250] : memref<1x36xf32, #tpu.memory_space<vmem>>, vector<1x36xf32>
    %216 = arith.addf %214, %215 : vector<1x36xf32>
    %217 = vector.broadcast %216 : vector<1x36xf32> to vector<256x36xf32>
    %218 = arith.addf %213, %217 : vector<256x36xf32>
    %cst_251 = arith.constant 0.000000e+00 : f32
    %219 = vector.broadcast %cst_251 : f32 to vector<256x36xf32>
    %220 = arith.maximumf %218, %219 : vector<256x36xf32>
    %221 = arith.extf %2 : vector<256x4xbf16> to vector<256x4xf32>
    %c0_252 = arith.constant 0 : index
    %c0_253 = arith.constant 0 : index
    %c1_254 = arith.constant 1 : index
    %c0_255 = arith.constant 0 : index
    %222 = vector.load %arg1[%c0_252, %c0_253, %c1_254, %c0_255] : memref<1x18x18x4xbf16, #tpu.memory_space<vmem>>, vector<1x16x16x4xbf16>
    %223 = vector.shape_cast %222 : vector<1x16x16x4xbf16> to vector<16x16x4xbf16>
    %224 = vector.shape_cast %223 : vector<16x16x4xbf16> to vector<256x4xbf16>
    %225 = arith.extf %224 : vector<256x4xbf16> to vector<256x4xf32>
    %226 = arith.maximumf %221, %225 : vector<256x4xf32>
    %c0_256 = arith.constant 0 : index
    %c0_257 = arith.constant 0 : index
    %c2_258 = arith.constant 2 : index
    %c0_259 = arith.constant 0 : index
    %227 = vector.load %arg1[%c0_256, %c0_257, %c2_258, %c0_259] : memref<1x18x18x4xbf16, #tpu.memory_space<vmem>>, vector<1x16x16x4xbf16>
    %228 = vector.shape_cast %227 : vector<1x16x16x4xbf16> to vector<16x16x4xbf16>
    %229 = vector.shape_cast %228 : vector<16x16x4xbf16> to vector<256x4xbf16>
    %230 = arith.extf %229 : vector<256x4xbf16> to vector<256x4xf32>
    %231 = arith.maximumf %226, %230 : vector<256x4xf32>
    %c0_260 = arith.constant 0 : index
    %c1_261 = arith.constant 1 : index
    %c0_262 = arith.constant 0 : index
    %c0_263 = arith.constant 0 : index
    %232 = vector.load %arg1[%c0_260, %c1_261, %c0_262, %c0_263] : memref<1x18x18x4xbf16, #tpu.memory_space<vmem>>, vector<1x16x16x4xbf16>
    %233 = vector.shape_cast %232 : vector<1x16x16x4xbf16> to vector<16x16x4xbf16>
    %234 = vector.shape_cast %233 : vector<16x16x4xbf16> to vector<256x4xbf16>
    %235 = arith.extf %234 : vector<256x4xbf16> to vector<256x4xf32>
    %236 = arith.maximumf %231, %235 : vector<256x4xf32>
    %c0_264 = arith.constant 0 : index
    %c1_265 = arith.constant 1 : index
    %c1_266 = arith.constant 1 : index
    %c0_267 = arith.constant 0 : index
    %237 = vector.load %arg1[%c0_264, %c1_265, %c1_266, %c0_267] : memref<1x18x18x4xbf16, #tpu.memory_space<vmem>>, vector<1x16x16x4xbf16>
    %238 = vector.shape_cast %237 : vector<1x16x16x4xbf16> to vector<16x16x4xbf16>
    %239 = vector.shape_cast %238 : vector<16x16x4xbf16> to vector<256x4xbf16>
    %240 = arith.extf %239 : vector<256x4xbf16> to vector<256x4xf32>
    %241 = arith.maximumf %236, %240 : vector<256x4xf32>
    %c0_268 = arith.constant 0 : index
    %c1_269 = arith.constant 1 : index
    %c2_270 = arith.constant 2 : index
    %c0_271 = arith.constant 0 : index
    %242 = vector.load %arg1[%c0_268, %c1_269, %c2_270, %c0_271] : memref<1x18x18x4xbf16, #tpu.memory_space<vmem>>, vector<1x16x16x4xbf16>
    %243 = vector.shape_cast %242 : vector<1x16x16x4xbf16> to vector<16x16x4xbf16>
    %244 = vector.shape_cast %243 : vector<16x16x4xbf16> to vector<256x4xbf16>
    %245 = arith.extf %244 : vector<256x4xbf16> to vector<256x4xf32>
    %246 = arith.maximumf %241, %245 : vector<256x4xf32>
    %c0_272 = arith.constant 0 : index
    %c2_273 = arith.constant 2 : index
    %c0_274 = arith.constant 0 : index
    %c0_275 = arith.constant 0 : index
    %247 = vector.load %arg1[%c0_272, %c2_273, %c0_274, %c0_275] : memref<1x18x18x4xbf16, #tpu.memory_space<vmem>>, vector<1x16x16x4xbf16>
    %248 = vector.shape_cast %247 : vector<1x16x16x4xbf16> to vector<16x16x4xbf16>
    %249 = vector.shape_cast %248 : vector<16x16x4xbf16> to vector<256x4xbf16>
    %250 = arith.extf %249 : vector<256x4xbf16> to vector<256x4xf32>
    %251 = arith.maximumf %246, %250 : vector<256x4xf32>
    %c0_276 = arith.constant 0 : index
    %c2_277 = arith.constant 2 : index
    %c1_278 = arith.constant 1 : index
    %c0_279 = arith.constant 0 : index
    %252 = vector.load %arg1[%c0_276, %c2_277, %c1_278, %c0_279] : memref<1x18x18x4xbf16, #tpu.memory_space<vmem>>, vector<1x16x16x4xbf16>
    %253 = vector.shape_cast %252 : vector<1x16x16x4xbf16> to vector<16x16x4xbf16>
    %254 = vector.shape_cast %253 : vector<16x16x4xbf16> to vector<256x4xbf16>
    %255 = arith.extf %254 : vector<256x4xbf16> to vector<256x4xf32>
    %256 = arith.maximumf %251, %255 : vector<256x4xf32>
    %c0_280 = arith.constant 0 : index
    %c2_281 = arith.constant 2 : index
    %c2_282 = arith.constant 2 : index
    %c0_283 = arith.constant 0 : index
    %257 = vector.load %arg1[%c0_280, %c2_281, %c2_282, %c0_283] : memref<1x18x18x4xbf16, #tpu.memory_space<vmem>>, vector<1x16x16x4xbf16>
    %258 = vector.shape_cast %257 : vector<1x16x16x4xbf16> to vector<16x16x4xbf16>
    %259 = vector.shape_cast %258 : vector<16x16x4xbf16> to vector<256x4xbf16>
    %260 = arith.extf %259 : vector<256x4xbf16> to vector<256x4xf32>
    %261 = arith.maximumf %256, %260 : vector<256x4xf32>
    %262 = arith.truncf %261 : vector<256x4xf32> to vector<256x4xbf16>
    %c0_284 = arith.constant 0 : index
    %c0_285 = arith.constant 0 : index
    %263 = vector.load %arg10[%c0_284, %c0_285] : memref<4x36xbf16, #tpu.memory_space<vmem>>, vector<4x36xbf16>
    %cst_286 = arith.constant dense<0.000000e+00> : vector<256x36xf32>
    %264 = tpu.matmul %262, %263, %cst_286 {dimension_numbers = #tpu.dot_dimension_numbers<[1], [0], [0], [1], [0, 0, 1, 1], [], []>} : vector<256x4xbf16>, vector<4x36xbf16>, vector<256x36xf32> -> vector<256x36xf32>
    %265 = arith.addf %220, %264 : vector<256x36xf32>
    %266 = vector.shape_cast %265 : vector<256x36xf32> to vector<16x16x36xf32>
    %c0_287 = arith.constant 0 : index
    %c0_288 = arith.constant 0 : index
    %c0_289 = arith.constant 0 : index
    %c0_290 = arith.constant 0 : index
    %267 = vector.load %arg11[%c0_287, %c0_288, %c0_289, %c0_290] : memref<1x16x16x36xf32, #tpu.memory_space<vmem>>, vector<1x16x16x36xf32>
    %268 = vector.shape_cast %267 : vector<1x16x16x36xf32> to vector<16x16x36xf32>
    %269 = vector.shape_cast %266 : vector<16x16x36xf32> to vector<1x16x16x36xf32>
    tpu.vector_store %arg11[%c0_287, %c0_288, %c0_289, %c0_290], %269 {strides = array<i32>} : memref<1x16x16x36xf32, #tpu.memory_space<vmem>>, vector<1x16x16x36xf32>,
    return
  }
  func.func @transform_0(%arg0: i32) -> (i32, i32, i32, i32) {
    %c0_i32 = arith.constant 0 : i32
    %c0_i32_0 = arith.constant 0 : i32
    %c0_i32_1 = arith.constant 0 : i32
    %c0_i32_2 = arith.constant 0 : i32
    return %arg0, %c0_i32, %c0_i32_0, %c0_i32_1 : i32, i32, i32, i32
  }
  func.func @transform_1(%arg0: i32) -> (i32, i32, i32, i32) {
    %c0_i32 = arith.constant 0 : i32
    %c0_i32_0 = arith.constant 0 : i32
    %c0_i32_1 = arith.constant 0 : i32
    %c0_i32_2 = arith.constant 0 : i32
    %c0_i32_3 = arith.constant 0 : i32
    return %c0_i32, %c0_i32_0, %c0_i32_1, %c0_i32_2 : i32, i32, i32, i32
  }
  func.func @transform_2(%arg0: i32) -> (i32, i32) {
    %c0_i32 = arith.constant 0 : i32
    %c0_i32_0 = arith.constant 0 : i32
    %c0_i32_1 = arith.constant 0 : i32
    return %c0_i32, %c0_i32_0 : i32, i32
  }
  func.func @transform_3(%arg0: i32) -> (i32, i32) {
    %c0_i32 = arith.constant 0 : i32
    %c0_i32_0 = arith.constant 0 : i32
    %c0_i32_1 = arith.constant 0 : i32
    return %c0_i32, %c0_i32_0 : i32, i32
  }
  func.func @transform_4(%arg0: i32) -> (i32, i32) {
    %c0_i32 = arith.constant 0 : i32
    %c0_i32_0 = arith.constant 0 : i32
    %c0_i32_1 = arith.constant 0 : i32
    return %c0_i32, %c0_i32_0 : i32, i32
  }
  func.func @transform_5(%arg0: i32) -> (i32, i32, i32, i32) {
    %c0_i32 = arith.constant 0 : i32
    %c0_i32_0 = arith.constant 0 : i32
    %c0_i32_1 = arith.constant 0 : i32
    %c0_i32_2 = arith.constant 0 : i32
    %c0_i32_3 = arith.constant 0 : i32
    return %c0_i32, %c0_i32_0, %c0_i32_1, %c0_i32_2 : i32, i32, i32, i32
  }
  func.func @transform_6(%arg0: i32) -> (i32, i32) {
    %c0_i32 = arith.constant 0 : i32
    %c0_i32_0 = arith.constant 0 : i32
    %c0_i32_1 = arith.constant 0 : i32
    return %c0_i32, %c0_i32_0 : i32, i32
  }
  func.func @transform_7(%arg0: i32) -> (i32, i32, i32, i32) {
    %c0_i32 = arith.constant 0 : i32
    %c0_i32_0 = arith.constant 0 : i32
    %c0_i32_1 = arith.constant 0 : i32
    %c0_i32_2 = arith.constant 0 : i32
    %c0_i32_3 = arith.constant 0 : i32
    return %c0_i32, %c0_i32_0, %c0_i32_1, %c0_i32_2 : i32, i32, i32, i32
  }
  func.func @transform_8(%arg0: i32) -> (i32, i32) {
    %c0_i32 = arith.constant 0 : i32
    %c0_i32_0 = arith.constant 0 : i32
    %c0_i32_1 = arith.constant 0 : i32
    return %c0_i32, %c0_i32_0 : i32, i32
  }
  func.func @transform_9(%arg0: i32) -> (i32, i32) {
    %c0_i32 = arith.constant 0 : i32
    %c0_i32_0 = arith.constant 0 : i32
    %c0_i32_1 = arith.constant 0 : i32
    return %c0_i32, %c0_i32_0 : i32, i32
  }
  func.func @transform_10(%arg0: i32) -> (i32, i32, i32, i32) {
    %c0_i32 = arith.constant 0 : i32
    %c0_i32_0 = arith.constant 0 : i32
    %c0_i32_1 = arith.constant 0 : i32
    %c0_i32_2 = arith.constant 0 : i32
    return %arg0, %c0_i32, %c0_i32_0, %c0_i32_1 : i32, i32, i32, i32
  }
}

</mosaic_0001>

<llo_original>
// kernel: reduction_a.1
$region0: #{reduction_a.1}
  #allocation0 [shape = 'u32[]', space=smem, size = 0x4, offset = 0x4, fixed_abs, tag = 'smem constant byte address 0x4 - core index']
  #allocation1 [shape = 'u32[144,128]{1,0:T(1,128)}', space=vmem, size = 0x12000, scoped, tag = 'internal scratch']
  #allocation2 [shape = 'f32[18,25,8]{2,1,0:T(8,128)}', space=vmem, size = 0x48000, scoped, tag = 'scratch operand']
  #allocation3 [shape = 'f32[18,18,8]{2,1,0:T(8,128)}', space=vmem, size = 0x36000, scoped, tag = 'scratch operand']
  %s0 = inlined_call_operand.vmem [shape: bf16[2,18,18,4], index: 0, kind: input, shape index: {}]
  %s1 = inlined_call_operand.vmem [shape: bf16[3,3,4,36], index: 1, kind: input, shape index: {}]
  %s2 = inlined_call_operand.vmem [shape: f32[1,36], index: 2, kind: input, shape index: {}]
  %s3 = inlined_call_operand.vmem [shape: bf16[4,8], index: 3, kind: input, shape index: {}]
  %s4 = inlined_call_operand.vmem [shape: f32[1,8], index: 4, kind: input, shape index: {}]
  %s5 = inlined_call_operand.vmem [shape: bf16[3,3,8,8], index: 5, kind: input, shape index: {}]
  %s6 = inlined_call_operand.vmem [shape: f32[1,8], index: 6, kind: input, shape index: {}]
  %s7 = inlined_call_operand.vmem [shape: bf16[3,3,8,36], index: 7, kind: input, shape index: {}]
  %s8 = inlined_call_operand.vmem [shape: f32[1,36], index: 8, kind: input, shape index: {}]
  %s9 = inlined_call_operand.vmem [shape: bf16[4,36], index: 9, kind: input, shape index: {}]
  %s10 = inlined_call_operand.vmem [shape: f32[2,16,16,36], index: 10, kind: output, shape index: {}]
  %s11 = sld [smem:[#allocation0]]
  $region73: #{reduction_a.1} parent=0
    _
  %s13 = ssub.s32 1, %s11
  %s14 = scalar_select 0, %s13, %s11
  loop: start=0, step=1, limit=4
  $region2: #{reduction_a.1} parent=0 // loop_pre_header
    _
  $region3: #{reduction_a.1} parent=0 // loop_header
    %s16 = sphi 0, %s20
    %p17 = scmp.ge.s32.totalorder %s16, 4
    %s26 = sphi 0, %s28
    %s29 = sphi 0, %s26
    %s30 = sphi 0, %s29
    %s46 = sphi 0, %s30
    %s50 = sphi 0, %s50
    %s52 = sphi 0, %s50
    %s53 = sphi 0, %s52
    %s67 = sphi 0, %s53
    %s71 = sphi 0, %s71
    %s73 = sphi 0, %s71
    %s74 = sphi 0, %s73
    %s88 = sphi 0, %s74
    %s92 = sphi 0, %s92
    %s94 = sphi 0, %s92
    %s95 = sphi 0, %s94
    %s109 = sphi 0, %s95
    %s113 = sphi 0, %s113
    %s115 = sphi 0, %s113
    %s116 = sphi 0, %s115
    %s130 = sphi 0, %s116
    %s134 = sphi 0, %s134
    %s136 = sphi 0, %s134
    %s137 = sphi 0, %s136
    %s151 = sphi 0, %s137
    %s155 = sphi 0, %s155
    %s157 = sphi 0, %s155
    %s158 = sphi 0, %s157
    %s172 = sphi 0, %s158
    %s176 = sphi 0, %s176
    %s178 = sphi 0, %s176
    %s179 = sphi 0, %s178
    %s193 = sphi 0, %s179
    %s197 = sphi 0, %s197
    %s199 = sphi 0, %s197
    %s200 = sphi 0, %s199
    %s214 = sphi 0, %s200
    %s218 = sphi 0, %s218
    %s220 = sphi 0, %s218
    %s221 = sphi 0, %s220
    %s235 = sphi 0, %s221
    %s241 = sphi 0, %s243
    %s244 = sphi 0, %s241
    %s245 = sphi 0, %s244
    %s261 = sphi 0, %s245
  $region4: #{reduction_a.1} parent=0 // loop_header_branch
    %19 = sbr.rel (%p17) target = $region8
  $region5: #{reduction_a.1} parent=0 // loop_body
    %s21 = ssub.s32 %s16, 1
    %s22 = ssub.s32 %s16, 2
    %s23 = sadd.s32 %s16, 1
    %s24 = ssub.s32 %s16, %s23
    %p25 = scmp.eq.s32.totalorder %s24, 0
    %s27 = sadd.s32 %s26, 1
    %s28 = scalar_select %p25, %s26, %s27
    %p31 = pneg %p25
    %p32 = scmp.eq.s32.totalorder %s16, 1
    %p33 = por %p31, %p32
    %p34 = scmp.ne.s32.totalorder %s26, %s29
    %p35 = scmp.eq.s32.totalorder %s16, 0
    %p36 = por %p34, %p35
    %p37 = scmp.ne.s32.totalorder %s26, %s29
    %p38 = scmp.eq.s32.totalorder %s21, 1
    %p39 = por %p37, %p38
    %p40 = scmp.ne.s32.totalorder %s29, %s30
    %p41 = scmp.eq.s32.totalorder %s21, 0
    %p42 = por %p40, %p41
    %p43 = scmp.ne.s32.totalorder %s29, %s30
    %p44 = scmp.eq.s32.totalorder %s22, 1
    %p45 = por %p43, %p44
    %p47 = scmp.ne.s32.totalorder %s30, %s46
    %p48 = scmp.eq.s32.totalorder %s22, 0
    %p49 = por %p47, %p48
    %s51 = sadd.s32 %s50, 1
    %p54 = scmp.eq.s32.totalorder %s16, 1
    %p55 = scmp.ne.s32.totalorder %s50, %s52
    %p56 = scmp.eq.s32.totalorder %s16, 0
    %p57 = por %p55, %p56
    %p58 = scmp.ne.s32.totalorder %s50, %s52
    %p59 = scmp.eq.s32.totalorder %s21, 1
    %p60 = por %p58, %p59
    %p61 = scmp.ne.s32.totalorder %s52, %s53
    %p62 = scmp.eq.s32.totalorder %s21, 0
    %p63 = por %p61, %p62
    %p64 = scmp.ne.s32.totalorder %s52, %s53
    %p65 = scmp.eq.s32.totalorder %s22, 1
    %p66 = por %p64, %p65
    %p68 = scmp.ne.s32.totalorder %s53, %s67
    %p69 = scmp.eq.s32.totalorder %s22, 0
    %p70 = por %p68, %p69
    %s72 = sadd.s32 %s71, 1
    %p75 = scmp.eq.s32.totalorder %s16, 1
    %p76 = scmp.ne.s32.totalorder %s71, %s73
    %p77 = scmp.eq.s32.totalorder %s16, 0
    %p78 = por %p76, %p77
    %p79 = scmp.ne.s32.totalorder %s71, %s73
    %p80 = scmp.eq.s32.totalorder %s21, 1
    %p81 = por %p79, %p80
    %p82 = scmp.ne.s32.totalorder %s73, %s74
    %p83 = scmp.eq.s32.totalorder %s21, 0
    %p84 = por %p82, %p83
    %p85 = scmp.ne.s32.totalorder %s73, %s74
    %p86 = scmp.eq.s32.totalorder %s22, 1
    %p87 = por %p85, %p86
    %p89 = scmp.ne.s32.totalorder %s74, %s88
    %p90 = scmp.eq.s32.totalorder %s22, 0
    %p91 = por %p89, %p90
    %s93 = sadd.s32 %s92, 1
    %p96 = scmp.eq.s32.totalorder %s16, 1
    %p97 = scmp.ne.s32.totalorder %s92, %s94
    %p98 = scmp.eq.s32.totalorder %s16, 0
    %p99 = por %p97, %p98
    %p100 = scmp.ne.s32.totalorder %s92, %s94
    %p101 = scmp.eq.s32.totalorder %s21, 1
    %p102 = por %p100, %p101
    %p103 = scmp.ne.s32.totalorder %s94, %s95
    %p104 = scmp.eq.s32.totalorder %s21, 0
    %p105 = por %p103, %p104
    %p106 = scmp.ne.s32.totalorder %s94, %s95
    %p107 = scmp.eq.s32.totalorder %s22, 1
    %p108 = por %p106, %p107
    %p110 = scmp.ne.s32.totalorder %s95, %s109
    %p111 = scmp.eq.s32.totalorder %s22, 0
    %p112 = por %p110, %p111
    %s114 = sadd.s32 %s113, 1
    %p117 = scmp.eq.s32.totalorder %s16, 1
    %p118 = scmp.ne.s32.totalorder %s113, %s115
    %p119 = scmp.eq.s32.totalorder %s16, 0
    %p120 = por %p118, %p119
    %p121 = scmp.ne.s32.totalorder %s113, %s115
    %p122 = scmp.eq.s32.totalorder %s21, 1
    %p123 = por %p121, %p122
    %p124 = scmp.ne.s32.totalorder %s115, %s116
    %p125 = scmp.eq.s32.totalorder %s21, 0
    %p126 = por %p124, %p125
    %p127 = scmp.ne.s32.totalorder %s115, %s116
    %p128 = scmp.eq.s32.totalorder %s22, 1
    %p129 = por %p127, %p128
    %p131 = scmp.ne.s32.totalorder %s116, %s130
    %p132 = scmp.eq.s32.totalorder %s22, 0
    %p133 = por %p131, %p132
    %s135 = sadd.s32 %s134, 1
    %p138 = scmp.eq.s32.totalorder %s16, 1
    %p139 = scmp.ne.s32.totalorder %s134, %s136
    %p140 = scmp.eq.s32.totalorder %s16, 0
    %p141 = por %p139, %p140
    %p142 = scmp.ne.s32.totalorder %s134, %s136
    %p143 = scmp.eq.s32.totalorder %s21, 1
    %p144 = por %p142, %p143
    %p145 = scmp.ne.s32.totalorder %s136, %s137
    %p146 = scmp.eq.s32.totalorder %s21, 0
    %p147 = por %p145, %p146
    %p148 = scmp.ne.s32.totalorder %s136, %s137
    %p149 = scmp.eq.s32.totalorder %s22, 1
    %p150 = por %p148, %p149
    %p152 = scmp.ne.s32.totalorder %s137, %s151
    %p153 = scmp.eq.s32.totalorder %s22, 0
    %p154 = por %p152, %p153
    %s156 = sadd.s32 %s155, 1
    %p159 = scmp.eq.s32.totalorder %s16, 1
    %p160 = scmp.ne.s32.totalorder %s155, %s157
    %p161 = scmp.eq.s32.totalorder %s16, 0
    %p162 = por %p160, %p161
    %p163 = scmp.ne.s32.totalorder %s155, %s157
    %p164 = scmp.eq.s32.totalorder %s21, 1
    %p165 = por %p163, %p164
    %p166 = scmp.ne.s32.totalorder %s157, %s158
    %p167 = scmp.eq.s32.totalorder %s21, 0
    %p168 = por %p166, %p167
    %p169 = scmp.ne.s32.totalorder %s157, %s158
    %p170 = scmp.eq.s32.totalorder %s22, 1
    %p171 = por %p169, %p170
    %p173 = scmp.ne.s32.totalorder %s158, %s172
    %p174 = scmp.eq.s32.totalorder %s22, 0
    %p175 = por %p173, %p174
    %s177 = sadd.s32 %s176, 1
    %p180 = scmp.eq.s32.totalorder %s16, 1
    %p181 = scmp.ne.s32.totalorder %s176, %s178
    %p182 = scmp.eq.s32.totalorder %s16, 0
    %p183 = por %p181, %p182
    %p184 = scmp.ne.s32.totalorder %s176, %s178
    %p185 = scmp.eq.s32.totalorder %s21, 1
    %p186 = por %p184, %p185
    %p187 = scmp.ne.s32.totalorder %s178, %s179
    %p188 = scmp.eq.s32.totalorder %s21, 0
    %p189 = por %p187, %p188
    %p190 = scmp.ne.s32.totalorder %s178, %s179
    %p191 = scmp.eq.s32.totalorder %s22, 1
    %p192 = por %p190, %p191
    %p194 = scmp.ne.s32.totalorder %s179, %s193
    %p195 = scmp.eq.s32.totalorder %s22, 0
    %p196 = por %p194, %p195
    %s198 = sadd.s32 %s197, 1
    %p201 = scmp.eq.s32.totalorder %s16, 1
    %p202 = scmp.ne.s32.totalorder %s197, %s199
    %p203 = scmp.eq.s32.totalorder %s16, 0
    %p204 = por %p202, %p203
    %p205 = scmp.ne.s32.totalorder %s197, %s199
    %p206 = scmp.eq.s32.totalorder %s21, 1
    %p207 = por %p205, %p206
    %p208 = scmp.ne.s32.totalorder %s199, %s200
    %p209 = scmp.eq.s32.totalorder %s21, 0
    %p210 = por %p208, %p209
    %p211 = scmp.ne.s32.totalorder %s199, %s200
    %p212 = scmp.eq.s32.totalorder %s22, 1
    %p213 = por %p211, %p212
    %p215 = scmp.ne.s32.totalorder %s200, %s214
    %p216 = scmp.eq.s32.totalorder %s22, 0
    %p217 = por %p215, %p216
    %s219 = sadd.s32 %s218, 1
    %p222 = scmp.eq.s32.totalorder %s16, 1
    %p223 = scmp.ne.s32.totalorder %s218, %s220
    %p224 = scmp.eq.s32.totalorder %s16, 0
    %p225 = por %p223, %p224
    %p226 = scmp.ne.s32.totalorder %s218, %s220
    %p227 = scmp.eq.s32.totalorder %s21, 1
    %p228 = por %p226, %p227
    %p229 = scmp.ne.s32.totalorder %s220, %s221
    %p230 = scmp.eq.s32.totalorder %s21, 0
    %p231 = por %p229, %p230
    %p232 = scmp.ne.s32.totalorder %s220, %s221
    %p233 = scmp.eq.s32.totalorder %s22, 1
    %p234 = por %p232, %p233
    %p236 = scmp.ne.s32.totalorder %s221, %s235
    %p237 = scmp.eq.s32.totalorder %s22, 0
    %p238 = por %p236, %p237
    %s239 = ssub.s32 %s16, %s23
    %p240 = scmp.eq.s32.totalorder %s239, 0
    %s242 = sadd.s32 %s241, 1
    %s243 = scalar_select %p240, %s241, %s242
    %p246 = pneg %p240
    %p247 = scmp.eq.s32.totalorder %s16, 1
    %p248 = por %p246, %p247
    %p249 = scmp.ne.s32.totalorder %s241, %s244
    %p250 = scmp.eq.s32.totalorder %s16, 0
    %p251 = por %p249, %p250
    %p252 = scmp.ne.s32.totalorder %s241, %s244
    %p253 = scmp.eq.s32.totalorder %s21, 1
    %p254 = por %p252, %p253
    %p255 = scmp.ne.s32.totalorder %s244, %s245
    %p256 = scmp.eq.s32.totalorder %s21, 0
    %p257 = por %p255, %p256
    %p258 = scmp.ne.s32.totalorder %s244, %s245
    %p259 = scmp.eq.s32.totalorder %s22, 1
    %p260 = por %p258, %p259
    %p262 = scmp.ne.s32.totalorder %s245, %s261
    %p263 = scmp.eq.s32.totalorder %s22, 0
    %p264 = por %p262, %p263
    %p265 = scmp.le.s32.totalorder 1, %s16
    %p266 = scmp.lt.s32.totalorder %s16, 3
    %p267 = pnand %p265, %p266
    %p268 = pneg %p267
    // Predicated region
    $region9: #{reduction_a.1} parent=5 // pred_check
      _
    $region10: #{reduction_a.1} parent=5 // pred_check_branch
      %270 = sbr.rel (%p267) target = $region12
    $region11: #{reduction_a.1} parent=5 // pred_region
      %s271 = ssub.s32 %s16, 1
      // Predicated region
      $region13: #{reduction_a.1} parent=11 // pred_check
        %p272 = pneg %p63
      $region14: #{reduction_a.1} parent=11 // pred_check_branch
        %274 = sbr.rel (%p272) target = $region16
      $region15: #{reduction_a.1} parent=11 // pred_region
        _
      $region16: #{reduction_a.1} parent=11 // pred_fallthru
        _
      // Predicated region
      $region17: #{reduction_a.1} parent=11 // pred_check
        %p275 = pneg %p84
      $region18: #{reduction_a.1} parent=11 // pred_check_branch
        %277 = sbr.rel (%p275) target = $region20
      $region19: #{reduction_a.1} parent=11 // pred_region
        _
      $region20: #{reduction_a.1} parent=11 // pred_fallthru
        _
      // Predicated region
      $region21: #{reduction_a.1} parent=11 // pred_check
        %p278 = pneg %p105
      $region22: #{reduction_a.1} parent=11 // pred_check_branch
        %280 = sbr.rel (%p278) target = $region24
      $region23: #{reduction_a.1} parent=11 // pred_region
        _
      $region24: #{reduction_a.1} parent=11 // pred_fallthru
        _
      // Predicated region
      $region25: #{reduction_a.1} parent=11 // pred_check
        %p281 = pneg %p126
      $region26: #{reduction_a.1} parent=11 // pred_check_branch
        %283 = sbr.rel (%p281) target = $region28
      $region27: #{reduction_a.1} parent=11 // pred_region
        _
      $region28: #{reduction_a.1} parent=11 // pred_fallthru
        _
      // Predicated region
      $region29: #{reduction_a.1} parent=11 // pred_check
        %p284 = pneg %p147
      $region30: #{reduction_a.1} parent=11 // pred_check_branch
        %286 = sbr.rel (%p284) target = $region32
      $region31: #{reduction_a.1} parent=11 // pred_region
        _
      $region32: #{reduction_a.1} parent=11 // pred_fallthru
        _
      // Predicated region
      $region33: #{reduction_a.1} parent=11 // pred_check
        %p287 = pneg %p168
      $region34: #{reduction_a.1} parent=11 // pred_check_branch
        %289 = sbr.rel (%p287) target = $region36
      $region35: #{reduction_a.1} parent=11 // pred_region
        _
      $region36: #{reduction_a.1} parent=11 // pred_fallthru
        _
      // Predicated region
      $region37: #{reduction_a.1} parent=11 // pred_check
        %p290 = pneg %p189
      $region38: #{reduction_a.1} parent=11 // pred_check_branch
        %292 = sbr.rel (%p290) target = $region40
      $region39: #{reduction_a.1} parent=11 // pred_region
        _
      $region40: #{reduction_a.1} parent=11 // pred_fallthru
        _
      // Predicated region
      $region41: #{reduction_a.1} parent=11 // pred_check
        %p293 = pneg %p210
      $region42: #{reduction_a.1} parent=11 // pred_check_branch
        %295 = sbr.rel (%p293) target = $region44
      $region43: #{reduction_a.1} parent=11 // pred_region
        _
      $region44: #{reduction_a.1} parent=11 // pred_fallthru
        _
      // Predicated region
      $region45: #{reduction_a.1} parent=11 // pred_check
        %p296 = pneg %p231
      $region46: #{reduction_a.1} parent=11 // pred_check_branch
        %298 = sbr.rel (%p296) target = $region48
      $region47: #{reduction_a.1} parent=11 // pred_region
        _
      $region48: #{reduction_a.1} parent=11 // pred_fallthru
        _
    $region12: #{reduction_a.1} parent=5 // pred_fallthru
      _
    %p299 = scmp.lt.s32.totalorder %s16, 2
    // Predicated region
    $region49: #{reduction_a.1} parent=5 // pred_check
      %p300 = pneg %p299
    $region50: #{reduction_a.1} parent=5 // pred_check_branch
      %302 = sbr.rel (%p300) target = $region52
    $region51: #{reduction_a.1} parent=5 // pred_region
      // Predicated region
      $region53: #{reduction_a.1} parent=51 // pred_check
        %p303 = pneg %p36
      $region54: #{reduction_a.1} parent=51 // pred_check_branch
        %305 = sbr.rel (%p303) target = $region56
      $region55: #{reduction_a.1} parent=51 // pred_region
        %p306 = scmp.lt.s32.totalorder %s16, 1
        %s307 = scalar_select %p306, %s16, 1
        %s308 = smul.addr %s307, 54
        %s309 = smul.addr %s308, 4
        %s310 = scalar_lea.vmem %s0, %s309
      $region56: #{reduction_a.1} parent=51 // pred_fallthru
        _
    $region52: #{reduction_a.1} parent=5 // pred_fallthru
      _
    %p311 = scmp.le.s32.totalorder 1, %s16
    %p312 = scmp.lt.s32.totalorder %s16, 3
    %p313 = pnand %p311, %p312
    %p314 = pneg %p313
    // Predicated region
    $region57: #{reduction_a.1} parent=5 // pred_check
      _
    $region58: #{reduction_a.1} parent=5 // pred_check_branch
      %316 = sbr.rel (%p313) target = $region60
    $region59: #{reduction_a.1} parent=5 // pred_region
      %s317 = ssub.s32 %s16, 1
      %p318 = scmp.lt.s32.totalorder %s21, 1
      %s319 = scalar_select %p318, %s21, 1
      %s320 = smul.addr %s319, 54
      %s321 = smul.addr %s320, 4
      %s322 = scalar_lea.vmem %s0, %s321
      %p323 = pneg %p42
      %p324 = pneg %p39
      %p325 = pneg %p63
      %p326 = pneg %p60
      %p327 = pneg %p84
      %p328 = pneg %p81
      %p329 = pneg %p105
      %p330 = pneg %p102
      %p331 = pneg %p126
      %p332 = pneg %p123
      %p333 = pneg %p147
      %p334 = pneg %p144
      %p335 = pneg %p168
      %p336 = pneg %p165
      %p337 = pneg %p189
      %p338 = pneg %p186
      %p339 = pneg %p210
      %p340 = pneg %p207
      %p341 = pneg %p231
      %p342 = pneg %p228
      %p343 = pneg %p257
      %p344 = pneg %p254
      %p345 = scmp.lt.s32.totalorder %s21, 1
      %s346 = scalar_select %p345, %s21, 1
      %s347 = smul.addr %s346, 32
      %s348 = smul.addr %s347, 8
      %s349 = scalar_lea.vmem %s10, %s348
      %p350 = scmp.lt.s32.totalorder %s21, 1
      %s351 = scalar_select %p350, %s21, 1
      %s352 = smul.addr %s351, 54
      %s353 = smul.addr %s352, 4
      %s354 = scalar_lea.vmem %s0, %s353
      %p355 = scmp.lt.s32.totalorder %s21, 1
      %s356 = scalar_select %p355, %s21, 1
      %s357 = smul.addr %s356, 32
      %s358 = smul.addr %s357, 8
      %s359 = scalar_lea.vmem %s10, %s358
      %v361 = vld [vmem:[%s354] sm:$0xf]
      %v362 = vld [vmem:[%s354 + $0x4] sm:$0xf]
      %v363 = vld [vmem:[%s354 + $0xc] sm:$0xf]
      %v364 = vld [vmem:[%s354 + $0x10] sm:$0xf]
      %v365 = vld [vmem:[%s354 + $0x18] sm:$0xf]
      %v366 = vld [vmem:[%s354 + $0x1c] sm:$0xf]
      %v367 = vld [vmem:[%s354 + $0x24] sm:$0xf]
      %v368 = vld [vmem:[%s354 + $0x28] sm:$0xf]
      %v369 = vld [vmem:[%s354 + $0x30] sm:$0xf]
      %v370 = vld [vmem:[%s354 + $0x34] sm:$0xf]
      %v371 = vld [vmem:[%s354 + $0x3c] sm:$0xf]
      %v372 = vld [vmem:[%s354 + $0x40] sm:$0xf]
      %v373 = vld [vmem:[%s354 + $0x48] sm:$0xf]
      %v374 = vld [vmem:[%s354 + $0x4c] sm:$0xf]
      %v375 = vld [vmem:[%s354 + $0x54] sm:$0xf]
      %v376 = vld [vmem:[%s354 + $0x58] sm:$0xf]
      %v377 = vld [vmem:[%s354 + $0x60] sm:$0xf]
      %v378 = vld [vmem:[%s354 + $0x64] sm:$0xf]
      %v379 = vld [vmem:[%s354 + $0x6c] sm:$0xf]
      %v380 = vld [vmem:[%s354 + $0x70] sm:$0xf]
      %v381 = vld [vmem:[%s354 + $0x78] sm:$0xf]
      %v382 = vld [vmem:[%s354 + $0x7c] sm:$0xf]
      %v383 = vld [vmem:[%s354 + $0x84] sm:$0xf]
      %v384 = vld [vmem:[%s354 + $0x88] sm:$0xf]
      %v385 = vld [vmem:[%s354 + $0x90] sm:$0xf]
      %v386 = vld [vmem:[%s354 + $0x94] sm:$0xf]
      %v387 = vld [vmem:[%s354 + $0x9c] sm:$0xf]
      %v388 = vld [vmem:[%s354 + $0xa0] sm:$0xf]
      %v389 = vld [vmem:[%s354 + $0xa8] sm:$0xf]
      %v390 = vld [vmem:[%s354 + $0xac] sm:$0xf]
      %v391 = vld [vmem:[%s354 + $0xb4] sm:$0xf]
      %v392 = vld [vmem:[%s354 + $0xb8] sm:$0xf]
      %v393 = vld [vmem:[%s3] sm:$0x3]
      %v394 = vld [vmem:[%s4] sm:$0x1]
      %v396 = vlaneseq
      %v397 = vshrl.u32 %v396, 7
      %v398 = vsub.s32 0, %v397
      %v399 = vrot.slane %v394, %v398
      %v433 = vunpack.c.l.b16 %v361
      %v434 = vunpack.c.l.b16 %v362
      %v435 = vunpack.c.l.b16 %v363
      %v436 = vunpack.c.l.b16 %v364
      %v437 = vunpack.c.l.b16 %v365
      %v438 = vunpack.c.l.b16 %v366
      %v439 = vunpack.c.l.b16 %v367
      %v440 = vunpack.c.l.b16 %v368
      %v441 = vunpack.c.l.b16 %v369
      %v442 = vunpack.c.l.b16 %v370
      %v443 = vunpack.c.l.b16 %v371
      %v444 = vunpack.c.l.b16 %v372
      %v445 = vunpack.c.l.b16 %v373
      %v446 = vunpack.c.l.b16 %v374
      %v447 = vunpack.c.l.b16 %v375
      %v448 = vunpack.c.l.b16 %v376
      %v449 = vunpack.c.l.b16 %v377
      %v450 = vunpack.c.l.b16 %v378
      %v451 = vunpack.c.l.b16 %v379
      %v452 = vunpack.c.l.b16 %v380
      %v453 = vunpack.c.l.b16 %v381
      %v454 = vunpack.c.l.b16 %v382
      %v455 = vunpack.c.l.b16 %v383
      %v456 = vunpack.c.l.b16 %v384
      %v457 = vunpack.c.l.b16 %v385
      %v458 = vunpack.c.l.b16 %v386
      %v459 = vunpack.c.l.b16 %v387
      %v460 = vunpack.c.l.b16 %v388
      %v461 = vunpack.c.l.b16 %v389
      %v462 = vunpack.c.l.b16 %v390
      %v463 = vunpack.c.l.b16 %v391
      %v464 = vunpack.c.l.b16 %v392
      %v465 = vpack.c.b16 %v434, %v433
      %v466 = vpack.c.b16 %v436, %v435
      %v467 = vpack.c.b16 %v438, %v437
      %v468 = vpack.c.b16 %v440, %v439
      %v469 = vpack.c.b16 %v442, %v441
      %v470 = vpack.c.b16 %v444, %v443
      %v471 = vpack.c.b16 %v446, %v445
      %v472 = vpack.c.b16 %v448, %v447
      %v473 = vpack.c.b16 %v450, %v449
      %v474 = vpack.c.b16 %v452, %v451
      %v475 = vpack.c.b16 %v454, %v453
      %v476 = vpack.c.b16 %v456, %v455
      %v477 = vpack.c.b16 %v458, %v457
      %v478 = vpack.c.b16 %v460, %v459
      %v479 = vpack.c.b16 %v462, %v461
      %v480 = vpack.c.b16 %v464, %v463
      %vm481 = vcmask 31744
      %v483 = vsel %vm481, %v465, 0
      %v486 = vsel %vm481, %v466, 0
      %v489 = vsel %vm481, %v467, 0
      %v492 = vsel %vm481, %v468, 0
      %v495 = vsel %vm481, %v469, 0
      %v498 = vsel %vm481, %v470, 0
      %v501 = vsel %vm481, %v471, 0
      %v504 = vsel %vm481, %v472, 0
      %v507 = vsel %vm481, %v473, 0
      %v510 = vsel %vm481, %v474, 0
      %v513 = vsel %vm481, %v475, 0
      %v516 = vsel %vm481, %v476, 0
      %v519 = vsel %vm481, %v477, 0
      %v522 = vsel %vm481, %v478, 0
      %v525 = vsel %vm481, %v479, 0
      %v528 = vsel %vm481, %v480, 0
      %vm530 = vcmask 1041408
      %v532 = vsel %vm530, %v393, 0
      %534 = vmatprep.subr.bf16.mxu0 0
      %535 = vmatpush1.bf16.msra.mxu0 %v532
      %536 = vmatprep.subr.bf16.mxu0 0
      %537 = vmatpush1.bf16.msra.mxu0 0
      %538 = vmatprep.subr.bf16.mxu0 0
      %539 = vmatpush1.bf16.msra.mxu0 0
      %540 = vmatprep.subr.bf16.mxu0 0
      %541 = vmatpush1.bf16.msra.mxu0 0
      %542 = vmatprep.subr.bf16.mxu0 0
      %543 = vmatpush1.bf16.msra.mxu0 0
      %544 = vmatprep.subr.bf16.mxu0 0
      %545 = vmatpush1.bf16.msra.mxu0 0
      %546 = vmatprep.subr.bf16.mxu0 0
      %547 = vmatpush1.bf16.msra.mxu0 0
      %548 = vmatprep.subr.bf16.mxu0 0
      %549 = vmatpush1.bf16.msra.mxu0 0
      %550 = vmatprep.subr.bf16.mxu0 0
      %551 = vmatpush1.bf16.msra.mxu0 0
      %552 = vmatprep.subr.bf16.mxu0 0
      %553 = vmatpush1.bf16.msra.mxu0 0
      %554 = vmatprep.subr.bf16.mxu0 0
      %555 = vmatpush1.bf16.msra.mxu0 0
      %556 = vmatprep.subr.bf16.mxu0 0
      %557 = vmatpush1.bf16.msra.mxu0 0
      %558 = vmatprep.subr.bf16.mxu0 0
      %559 = vmatpush1.bf16.msra.mxu0 0
      %560 = vmatprep.subr.bf16.mxu0 0
      %561 = vmatpush1.bf16.msra.mxu0 0
      %562 = vmatprep.subr.bf16.mxu0 0
      %563 = vmatpush1.bf16.msra.mxu0 0
      %564 = vmatprep.subr.bf16.mxu0 0
      %565 = vmatpush1.bf16.msra.mxu0 0
      %566 = vmatprep.mubr.bf16.mxu0 0
      %567 = vmatmul.mubr.bf16.gmra.mrb[0].mxu0 %v483
      %v568 = vpop.f32.mrb[0].mxu0
      %v569 = vadd.f32 %v399, %v568
      %v570 = vpop.f32.mrb[0].mxu0
      %v571 = vpop.f32.mrb[0].mxu0
      %v572 = vadd.f32 %v399, %v571
      %v573 = vpop.f32.mrb[0].mxu0
      %574 = vmatprep.mubr.bf16.mxu0 0
      %575 = vmatmul.mubr.bf16.gmra.mrb[0].mxu0 %v486
      %v576 = vpop.f32.mrb[0].mxu0
      %v577 = vadd.f32 %v399, %v576
      %v578 = vpop.f32.mrb[0].mxu0
      %v579 = vpop.f32.mrb[0].mxu0
      %v580 = vadd.f32 %v399, %v579
      %v581 = vpop.f32.mrb[0].mxu0
      %582 = vmatprep.mubr.bf16.mxu0 0
      %583 = vmatmul.mubr.bf16.gmra.mrb[0].mxu0 %v489
      %v584 = vpop.f32.mrb[0].mxu0
      %v585 = vadd.f32 %v399, %v584
      %v586 = vpop.f32.mrb[0].mxu0
      %v587 = vpop.f32.mrb[0].mxu0
      %v588 = vadd.f32 %v399, %v587
      %v589 = vpop.f32.mrb[0].mxu0
      %590 = vmatprep.mubr.bf16.mxu0 0
      %591 = vmatmul.mubr.bf16.gmra.mrb[0].mxu0 %v492
      %v592 = vpop.f32.mrb[0].mxu0
      %v593 = vadd.f32 %v399, %v592
      %v594 = vpop.f32.mrb[0].mxu0
      %v595 = vpop.f32.mrb[0].mxu0
      %v596 = vadd.f32 %v399, %v595
      %v597 = vpop.f32.mrb[0].mxu0
      %598 = vmatprep.mubr.bf16.mxu0 0
      %599 = vmatmul.mubr.bf16.gmra.mrb[0].mxu0 %v495
      %v600 = vpop.f32.mrb[0].mxu0
      %v601 = vadd.f32 %v399, %v600
      %v602 = vpop.f32.mrb[0].mxu0
      %v603 = vpop.f32.mrb[0].mxu0
      %v604 = vadd.f32 %v399, %v603
      %v605 = vpop.f32.mrb[0].mxu0
      %606 = vmatprep.mubr.bf16.mxu0 0
      %607 = vmatmul.mubr.bf16.gmra.mrb[0].mxu0 %v498
      %v608 = vpop.f32.mrb[0].mxu0
      %v609 = vadd.f32 %v399, %v608
      %v610 = vpop.f32.mrb[0].mxu0
      %v611 = vpop.f32.mrb[0].mxu0
      %v612 = vadd.f32 %v399, %v611
      %v613 = vpop.f32.mrb[0].mxu0
      %614 = vmatprep.mubr.bf16.mxu0 0
      %615 = vmatmul.mubr.bf16.gmra.mrb[0].mxu0 %v501
      %v616 = vpop.f32.mrb[0].mxu0
      %v617 = vadd.f32 %v399, %v616
      %v618 = vpop.f32.mrb[0].mxu0
      %v619 = vpop.f32.mrb[0].mxu0
      %v620 = vadd.f32 %v399, %v619
      %v621 = vpop.f32.mrb[0].mxu0
      %622 = vmatprep.mubr.bf16.mxu0 0
      %623 = vmatmul.mubr.bf16.gmra.mrb[0].mxu0 %v504
      %v624 = vpop.f32.mrb[0].mxu0
      %v625 = vadd.f32 %v399, %v624
      %v626 = vpop.f32.mrb[0].mxu0
      %v627 = vpop.f32.mrb[0].mxu0
      %v628 = vadd.f32 %v399, %v627
      %v629 = vpop.f32.mrb[0].mxu0
      %630 = vmatprep.mubr.bf16.mxu0 0
      %631 = vmatmul.mubr.bf16.gmra.mrb[0].mxu0 %v507
      %v632 = vpop.f32.mrb[0].mxu0
      %v633 = vadd.f32 %v399, %v632
      %v634 = vpop.f32.mrb[0].mxu0
      %v635 = vpop.f32.mrb[0].mxu0
      %v636 = vadd.f32 %v399, %v635
      %v637 = vpop.f32.mrb[0].mxu0
      %638 = vmatprep.mubr.bf16.mxu0 0
      %639 = vmatmul.mubr.bf16.gmra.mrb[0].mxu0 %v510
      %v640 = vpop.f32.mrb[0].mxu0
      %v641 = vadd.f32 %v399, %v640
      %v642 = vpop.f32.mrb[0].mxu0
      %v643 = vpop.f32.mrb[0].mxu0
      %v644 = vadd.f32 %v399, %v643
      %v645 = vpop.f32.mrb[0].mxu0
      %646 = vmatprep.mubr.bf16.mxu0 0
      %647 = vmatmul.mubr.bf16.gmra.mrb[0].mxu0 %v513
      %v648 = vpop.f32.mrb[0].mxu0
      %v649 = vadd.f32 %v399, %v648
      %v650 = vpop.f32.mrb[0].mxu0
      %v651 = vpop.f32.mrb[0].mxu0
      %v652 = vadd.f32 %v399, %v651
      %v653 = vpop.f32.mrb[0].mxu0
      %654 = vmatprep.mubr.bf16.mxu0 0
      %655 = vmatmul.mubr.bf16.gmra.mrb[0].mxu0 %v516
      %v656 = vpop.f32.mrb[0].mxu0
      %v657 = vadd.f32 %v399, %v656
      %v658 = vpop.f32.mrb[0].mxu0
      %v659 = vpop.f32.mrb[0].mxu0
      %v660 = vadd.f32 %v399, %v659
      %v661 = vpop.f32.mrb[0].mxu0
      %662 = vmatprep.mubr.bf16.mxu0 0
      %663 = vmatmul.mubr.bf16.gmra.mrb[0].mxu0 %v519
      %v664 = vpop.f32.mrb[0].mxu0
      %v665 = vadd.f32 %v399, %v664
      %v666 = vpop.f32.mrb[0].mxu0
      %v667 = vpop.f32.mrb[0].mxu0
      %v668 = vadd.f32 %v399, %v667
      %v669 = vpop.f32.mrb[0].mxu0
      %670 = vmatprep.mubr.bf16.mxu0 0
      %671 = vmatmul.mubr.bf16.gmra.mrb[0].mxu0 %v522
      %v672 = vpop.f32.mrb[0].mxu0
      %v673 = vadd.f32 %v399, %v672
      %v674 = vpop.f32.mrb[0].mxu0
      %v675 = vpop.f32.mrb[0].mxu0
      %v676 = vadd.f32 %v399, %v675
      %v677 = vpop.f32.mrb[0].mxu0
      %678 = vmatprep.mubr.bf16.mxu0 0
      %679 = vmatmul.mubr.bf16.gmra.mrb[0].mxu0 %v525
      %v680 = vpop.f32.mrb[0].mxu0
      %v681 = vadd.f32 %v399, %v680
      %v682 = vpop.f32.mrb[0].mxu0
      %v683 = vpop.f32.mrb[0].mxu0
      %v684 = vadd.f32 %v399, %v683
      %v685 = vpop.f32.mrb[0].mxu0
      %686 = vmatprep.mubr.bf16.mxu0 0
      %687 = vmatmul.mubr.bf16.gmra.mrb[0].mxu0 %v528
      %v688 = vpop.f32.mrb[0].mxu0
      %v689 = vadd.f32 %v399, %v688
      %v690 = vpop.f32.mrb[0].mxu0
      %v691 = vpop.f32.mrb[0].mxu0
      %v692 = vadd.f32 %v399, %v691
      %v693 = vpop.f32.mrb[0].mxu0
      %694 = vdwg.mxu0
      %v695 = vmax.f32 %v569, 0.0
      %v696 = vmax.f32 %v572, 0.0
      %v697 = vmax.f32 %v577, 0.0
      %v698 = vmax.f32 %v580, 0.0
      %v699 = vmax.f32 %v585, 0.0
      %v700 = vmax.f32 %v588, 0.0
      %v701 = vmax.f32 %v593, 0.0
      %v702 = vmax.f32 %v596, 0.0
      %v703 = vmax.f32 %v601, 0.0
      %v704 = vmax.f32 %v604, 0.0
      %v705 = vmax.f32 %v609, 0.0
      %v706 = vmax.f32 %v612, 0.0
      %v707 = vmax.f32 %v617, 0.0
      %v708 = vmax.f32 %v620, 0.0
      %v709 = vmax.f32 %v625, 0.0
      %v710 = vmax.f32 %v628, 0.0
      %v711 = vmax.f32 %v633, 0.0
      %v712 = vmax.f32 %v636, 0.0
      %v713 = vmax.f32 %v641, 0.0
      %v714 = vmax.f32 %v644, 0.0
      %v715 = vmax.f32 %v649, 0.0
      %v716 = vmax.f32 %v652, 0.0
      %v717 = vmax.f32 %v657, 0.0
      %v718 = vmax.f32 %v660, 0.0
      %v719 = vmax.f32 %v665, 0.0
      %v720 = vmax.f32 %v668, 0.0
      %v721 = vmax.f32 %v673, 0.0
      %v722 = vmax.f32 %v676, 0.0
      %v723 = vmax.f32 %v681, 0.0
      %v724 = vmax.f32 %v684, 0.0
      %v725 = vmax.f32 %v689, 0.0
      %v726 = vmax.f32 %v692, 0.0
      %vm727 = vcmask 64512
      %728 = vst.msk [vmem:[#allocation2] sm:$0xff] %vm727, 0.0
      %729 = vst.msk [vmem:[#allocation2 + $0x8] sm:$0xff] %vm727, 0.0
      %730 = vst.msk [vmem:[#allocation2 + $0x10] sm:$0xff] %vm727, 0.0
      %vm731 = vcmask 57344
      %732 = vst.msk [vmem:[#allocation2 + $0x18] sm:$0x1] %vm731, 0.0
      %733 = vst.msk [vmem:[#allocation2 + $0x20] sm:$0xff] %vm727, 0.0
      %734 = vst.msk [vmem:[#allocation2 + $0x28] sm:$0xff] %vm727, 0.0
      %735 = vst.msk [vmem:[#allocation2 + $0x30] sm:$0xff] %vm727, 0.0
      %736 = vst.msk [vmem:[#allocation2 + $0x38] sm:$0x1] %vm731, 0.0
      %737 = vst.msk [vmem:[#allocation2 + $0x40] sm:$0xff] %vm727, 0.0
      %738 = vst.msk [vmem:[#allocation2 + $0x48] sm:$0xff] %vm727, 0.0
      %739 = vst.msk [vmem:[#allocation2 + $0x50] sm:$0xff] %vm727, 0.0
      %740 = vst.msk [vmem:[#allocation2 + $0x58] sm:$0x1] %vm731, 0.0
      %741 = vst.msk [vmem:[#allocation2 + $0x60] sm:$0xff] %vm727, 0.0
      %742 = vst.msk [vmem:[#allocation2 + $0x68] sm:$0xff] %vm727, 0.0
      %743 = vst.msk [vmem:[#allocation2 + $0x70] sm:$0xff] %vm727, 0.0
      %744 = vst.msk [vmem:[#allocation2 + $0x78] sm:$0x1] %vm731, 0.0
      %745 = vst.msk [vmem:[#allocation2 + $0x80] sm:$0xff] %vm727, 0.0
      %746 = vst.msk [vmem:[#allocation2 + $0x88] sm:$0xff] %vm727, 0.0
      %747 = vst.msk [vmem:[#allocation2 + $0x90] sm:$0xff] %vm727, 0.0
      %748 = vst.msk [vmem:[#allocation2 + $0x98] sm:$0x1] %vm731, 0.0
      %749 = vst.msk [vmem:[#allocation2 + $0xa0] sm:$0xff] %vm727, 0.0
      %750 = vst.msk [vmem:[#allocation2 + $0xa8] sm:$0xff] %vm727, 0.0
      %751 = vst.msk [vmem:[#allocation2 + $0xb0] sm:$0xff] %vm727, 0.0
      %752 = vst.msk [vmem:[#allocation2 + $0xb8] sm:$0x1] %vm731, 0.0
      %753 = vst.msk [vmem:[#allocation2 + $0xc0] sm:$0xff] %vm727, 0.0
      %754 = vst.msk [vmem:[#allocation2 + $0xc8] sm:$0xff] %vm727, 0.0
      %755 = vst.msk [vmem:[#allocation2 + $0xd0] sm:$0xff] %vm727, 0.0
      %756 = vst.msk [vmem:[#allocation2 + $0xd8] sm:$0x1] %vm731, 0.0
      %757 = vst.msk [vmem:[#allocation2 + $0xe0] sm:$0xff] %vm727, 0.0
      %758 = vst.msk [vmem:[#allocation2 + $0xe8] sm:$0xff] %vm727, 0.0
      %759 = vst.msk [vmem:[#allocation2 + $0xf0] sm:$0xff] %vm727, 0.0
      %760 = vst.msk [vmem:[#allocation2 + $0xf8] sm:$0x1] %vm731, 0.0
      %761 = vst.msk [vmem:[#allocation2 + $0x100] sm:$0xff] %vm727, 0.0
      %762 = vst.msk [vmem:[#allocation2 + $0x108] sm:$0xff] %vm727, 0.0
      %763 = vst.msk [vmem:[#allocation2 + $0x110] sm:$0xff] %vm727, 0.0
      %764 = vst.msk [vmem:[#allocation2 + $0x118] sm:$0x1] %vm731, 0.0
      %765 = vst.msk [vmem:[#allocation2 + $0x120] sm:$0xff] %vm727, 0.0
      %766 = vst.msk [vmem:[#allocation2 + $0x128] sm:$0xff] %vm727, 0.0
      %767 = vst.msk [vmem:[#allocation2 + $0x130] sm:$0xff] %vm727, 0.0
      %768 = vst.msk [vmem:[#allocation2 + $0x138] sm:$0x1] %vm731, 0.0
      %769 = vst.msk [vmem:[#allocation2 + $0x140] sm:$0xff] %vm727, 0.0
      %770 = vst.msk [vmem:[#allocation2 + $0x148] sm:$0xff] %vm727, 0.0
      %771 = vst.msk [vmem:[#allocation2 + $0x150] sm:$0xff] %vm727, 0.0
      %772 = vst.msk [vmem:[#allocation2 + $0x158] sm:$0x1] %vm731, 0.0
      %773 = vst.msk [vmem:[#allocation2 + $0x160] sm:$0xff] %vm727, 0.0
      %774 = vst.msk [vmem:[#allocation2 + $0x168] sm:$0xff] %vm727, 0.0
      %775 = vst.msk [vmem:[#allocation2 + $0x170] sm:$0xff] %vm727, 0.0
      %776 = vst.msk [vmem:[#allocation2 + $0x178] sm:$0x1] %vm731, 0.0
      %777 = vst.msk [vmem:[#allocation2 + $0x180] sm:$0xff] %vm727, 0.0
      %778 = vst.msk [vmem:[#allocation2 + $0x188] sm:$0xff] %vm727, 0.0
      %779 = vst.msk [vmem:[#allocation2 + $0x190] sm:$0xff] %vm727, 0.0
      %780 = vst.msk [vmem:[#allocation2 + $0x198] sm:$0x1] %vm731, 0.0
      %781 = vst.msk [vmem:[#allocation2 + $0x1a0] sm:$0xff] %vm727, 0.0
      %782 = vst.msk [vmem:[#allocation2 + $0x1a8] sm:$0xff] %vm727, 0.0
      %783 = vst.msk [vmem:[#allocation2 + $0x1b0] sm:$0xff] %vm727, 0.0
      %784 = vst.msk [vmem:[#allocation2 + $0x1b8] sm:$0x1] %vm731, 0.0
      %785 = vst.msk [vmem:[#allocation2 + $0x1c0] sm:$0xff] %vm727, 0.0
      %786 = vst.msk [vmem:[#allocation2 + $0x1c8] sm:$0xff] %vm727, 0.0
      %787 = vst.msk [vmem:[#allocation2 + $0x1d0] sm:$0xff] %vm727, 0.0
      %788 = vst.msk [vmem:[#allocation2 + $0x1d8] sm:$0x1] %vm731, 0.0
      %789 = vst.msk [vmem:[#allocation2 + $0x1e0] sm:$0xff] %vm727, 0.0
      %790 = vst.msk [vmem:[#allocation2 + $0x1e8] sm:$0xff] %vm727, 0.0
      %791 = vst.msk [vmem:[#allocation2 + $0x1f0] sm:$0xff] %vm727, 0.0
      %792 = vst.msk [vmem:[#allocation2 + $0x1f8] sm:$0x1] %vm731, 0.0
      %793 = vst.msk [vmem:[#allocation2 + $0x200] sm:$0xff] %vm727, 0.0
      %794 = vst.msk [vmem:[#allocation2 + $0x208] sm:$0xff] %vm727, 0.0
      %795 = vst.msk [vmem:[#allocation2 + $0x210] sm:$0xff] %vm727, 0.0
      %796 = vst.msk [vmem:[#allocation2 + $0x218] sm:$0x1] %vm731, 0.0
      %797 = vst.msk [vmem:[#allocation2 + $0x220] sm:$0xff] %vm727, 0.0
      %798 = vst.msk [vmem:[#allocation2 + $0x228] sm:$0xff] %vm727, 0.0
      %799 = vst.msk [vmem:[#allocation2 + $0x230] sm:$0xff] %vm727, 0.0
      %800 = vst.msk [vmem:[#allocation2 + $0x238] sm:$0x1] %vm731, 0.0
      %s801 = scalar_lea.vmem [#allocation2], 32
      %802 = vst.msk [vmem:[%s801 + $0x8] sm:$0xff] %vm727, %v695
      %803 = vst.msk [vmem:[%s801 + $0x10] sm:$0xff] %vm727, %v696
      %804 = vst.msk [vmem:[%s801 + $0x28] sm:$0xff] %vm727, %v697
      %805 = vst.msk [vmem:[%s801 + $0x30] sm:$0xff] %vm727, %v698
      %806 = vst.msk [vmem:[%s801 + $0x48] sm:$0xff] %vm727, %v699
      %807 = vst.msk [vmem:[%s801 + $0x50] sm:$0xff] %vm727, %v700
      %808 = vst.msk [vmem:[%s801 + $0x68] sm:$0xff] %vm727, %v701
      %809 = vst.msk [vmem:[%s801 + $0x70] sm:$0xff] %vm727, %v702
      %810 = vst.msk [vmem:[%s801 + $0x88] sm:$0xff] %vm727, %v703
      %811 = vst.msk [vmem:[%s801 + $0x90] sm:$0xff] %vm727, %v704
      %812 = vst.msk [vmem:[%s801 + $0xa8] sm:$0xff] %vm727, %v705
      %813 = vst.msk [vmem:[%s801 + $0xb0] sm:$0xff] %vm727, %v706
      %814 = vst.msk [vmem:[%s801 + $0xc8] sm:$0xff] %vm727, %v707
      %815 = vst.msk [vmem:[%s801 + $0xd0] sm:$0xff] %vm727, %v708
      %816 = vst.msk [vmem:[%s801 + $0xe8] sm:$0xff] %vm727, %v709
      %817 = vst.msk [vmem:[%s801 + $0xf0] sm:$0xff] %vm727, %v710
      %818 = vst.msk [vmem:[%s801 + $0x108] sm:$0xff] %vm727, %v711
      %819 = vst.msk [vmem:[%s801 + $0x110] sm:$0xff] %vm727, %v712
      %820 = vst.msk [vmem:[%s801 + $0x128] sm:$0xff] %vm727, %v713
      %821 = vst.msk [vmem:[%s801 + $0x130] sm:$0xff] %vm727, %v714
      %822 = vst.msk [vmem:[%s801 + $0x148] sm:$0xff] %vm727, %v715
      %823 = vst.msk [vmem:[%s801 + $0x150] sm:$0xff] %vm727, %v716
      %824 = vst.msk [vmem:[%s801 + $0x168] sm:$0xff] %vm727, %v717
      %825 = vst.msk [vmem:[%s801 + $0x170] sm:$0xff] %vm727, %v718
      %826 = vst.msk [vmem:[%s801 + $0x188] sm:$0xff] %vm727, %v719
      %827 = vst.msk [vmem:[%s801 + $0x190] sm:$0xff] %vm727, %v720
      %828 = vst.msk [vmem:[%s801 + $0x1a8] sm:$0xff] %vm727, %v721
      %829 = vst.msk [vmem:[%s801 + $0x1b0] sm:$0xff] %vm727, %v722
      %830 = vst.msk [vmem:[%s801 + $0x1c8] sm:$0xff] %vm727, %v723
      %831 = vst.msk [vmem:[%s801 + $0x1d0] sm:$0xff] %vm727, %v724
      %832 = vst.msk [vmem:[%s801 + $0x1e8] sm:$0xff] %vm727, %v725
      %833 = vst.msk [vmem:[%s801 + $0x1f0] sm:$0xff] %vm727, %v726
      %v834 = vld [vmem:[#allocation2 + $0x7] sm:$0xff]
      %v835 = vld [vmem:[#allocation2 + $0xf] sm:$0xff]
      %v836 = vld [vmem:[#allocation2 + $0x27] sm:$0xff]
      %v837 = vld [vmem:[#allocation2 + $0x2f] sm:$0xff]
      %v838 = vld [vmem:[#allocation2 + $0x47] sm:$0xff]
      %v839 = vld [vmem:[#allocation2 + $0x4f] sm:$0xff]
      %v840 = vld [vmem:[#allocation2 + $0x67] sm:$0xff]
      %v841 = vld [vmem:[#allocation2 + $0x6f] sm:$0xff]
      %v842 = vld [vmem:[#allocation2 + $0x87] sm:$0xff]
      %v843 = vld [vmem:[#allocation2 + $0x8f] sm:$0xff]
      %v844 = vld [vmem:[#allocation2 + $0xa7] sm:$0xff]
      %v845 = vld [vmem:[#allocation2 + $0xaf] sm:$0xff]
      %v846 = vld [vmem:[#allocation2 + $0xc7] sm:$0xff]
      %v847 = vld [vmem:[#allocation2 + $0xcf] sm:$0xff]
      %v848 = vld [vmem:[#allocation2 + $0xe7] sm:$0xff]
      %v849 = vld [vmem:[#allocation2 + $0xef] sm:$0xff]
      %v850 = vld [vmem:[#allocation2 + $0x107] sm:$0xff]
      %v851 = vld [vmem:[#allocation2 + $0x10f] sm:$0xff]
      %v852 = vld [vmem:[#allocation2 + $0x127] sm:$0xff]
      %v853 = vld [vmem:[#allocation2 + $0x12f] sm:$0xff]
      %v854 = vld [vmem:[#allocation2 + $0x147] sm:$0xff]
      %v855 = vld [vmem:[#allocation2 + $0x14f] sm:$0xff]
      %v856 = vld [vmem:[#allocation2 + $0x167] sm:$0xff]
      %v857 = vld [vmem:[#allocation2 + $0x16f] sm:$0xff]
      %v858 = vld [vmem:[#allocation2 + $0x187] sm:$0xff]
      %v859 = vld [vmem:[#allocation2 + $0x18f] sm:$0xff]
      %v860 = vld [vmem:[#allocation2 + $0x1a7] sm:$0xff]
      %v861 = vld [vmem:[#allocation2 + $0x1af] sm:$0xff]
      %v862 = vld [vmem:[#allocation2 + $0x1c7] sm:$0xff]
      %v863 = vld [vmem:[#allocation2 + $0x1cf] sm:$0xff]
      %v864 = vld [vmem:[#allocation2 + $0x1e7] sm:$0xff]
      %v865 = vld [vmem:[#allocation2 + $0x1ef] sm:$0xff]
      %v866 = vpack.c.bf16 %v835, %v834
      %v867 = vpack.c.bf16 %v837, %v836
      %v868 = vpack.c.bf16 %v839, %v838
      %v869 = vpack.c.bf16 %v841, %v840
      %v870 = vpack.c.bf16 %v843, %v842
      %v871 = vpack.c.bf16 %v845, %v844
      %v872 = vpack.c.bf16 %v847, %v846
      %v873 = vpack.c.bf16 %v849, %v848
      %v874 = vpack.c.bf16 %v851, %v850
      %v875 = vpack.c.bf16 %v853, %v852
      %v876 = vpack.c.bf16 %v855, %v854
      %v877 = vpack.c.bf16 %v857, %v856
      %v878 = vpack.c.bf16 %v859, %v858
      %v879 = vpack.c.bf16 %v861, %v860
      %v880 = vpack.c.bf16 %v863, %v862
      %v881 = vpack.c.bf16 %v865, %v864
      %v882 = vld [vmem:[%s5] sm:$0xf]
      %v883 = vld [vmem:[#allocation2 + $0x8] sm:$0xff]
      %v884 = vld [vmem:[#allocation2 + $0x10] sm:$0xff]
      %v885 = vld [vmem:[#allocation2 + $0x28] sm:$0xff]
      %v886 = vld [vmem:[#allocation2 + $0x30] sm:$0xff]
      %v887 = vld [vmem:[#allocation2 + $0x48] sm:$0xff]
      %v888 = vld [vmem:[#allocation2 + $0x50] sm:$0xff]
      %v889 = vld [vmem:[#allocation2 + $0x68] sm:$0xff]
      %v890 = vld [vmem:[#allocation2 + $0x70] sm:$0xff]
      %v891 = vld [vmem:[#allocation2 + $0x88] sm:$0xff]
      %v892 = vld [vmem:[#allocation2 + $0x90] sm:$0xff]
      %v893 = vld [vmem:[#allocation2 + $0xa8] sm:$0xff]
      %v894 = vld [vmem:[#allocation2 + $0xb0] sm:$0xff]
      %v895 = vld [vmem:[#allocation2 + $0xc8] sm:$0xff]
      %v896 = vld [vmem:[#allocation2 + $0xd0] sm:$0xff]
      %v897 = vld [vmem:[#allocation2 + $0xe8] sm:$0xff]
      %v898 = vld [vmem:[#allocation2 + $0xf0] sm:$0xff]
      %v899 = vld [vmem:[#allocation2 + $0x108] sm:$0xff]
      %v900 = vld [vmem:[#allocation2 + $0x110] sm:$0xff]
      %v901 = vld [vmem:[#allocation2 + $0x128] sm:$0xff]
      %v902 = vld [vmem:[#allocation2 + $0x130] sm:$0xff]
      %v903 = vld [vmem:[#allocation2 + $0x148] sm:$0xff]
      %v904 = vld [vmem:[#allocation2 + $0x150] sm:$0xff]
      %v905 = vld [vmem:[#allocation2 + $0x168] sm:$0xff]
      %v906 = vld [vmem:[#allocation2 + $0x170] sm:$0xff]
      %v907 = vld [vmem:[#allocation2 + $0x188] sm:$0xff]
      %v908 = vld [vmem:[#allocation2 + $0x190] sm:$0xff]
      %v909 = vld [vmem:[#allocation2 + $0x1a8] sm:$0xff]
      %v910 = vld [vmem:[#allocation2 + $0x1b0] sm:$0xff]
      %v911 = vld [vmem:[#allocation2 + $0x1c8] sm:$0xff]
      %v912 = vld [vmem:[#allocation2 + $0x1d0] sm:$0xff]
      %v913 = vld [vmem:[#allocation2 + $0x1e8] sm:$0xff]
      %v914 = vld [vmem:[#allocation2 + $0x1f0] sm:$0xff]
      %v915 = vpack.c.bf16 %v884, %v883
      %v916 = vpack.c.bf16 %v886, %v885
      %v917 = vpack.c.bf16 %v888, %v887
      %v918 = vpack.c.bf16 %v890, %v889
      %v919 = vpack.c.bf16 %v892, %v891
      %v920 = vpack.c.bf16 %v894, %v893
      %v921 = vpack.c.bf16 %v896, %v895
      %v922 = vpack.c.bf16 %v898, %v897
      %v923 = vpack.c.bf16 %v900, %v899
      %v924 = vpack.c.bf16 %v902, %v901
      %v925 = vpack.c.bf16 %v904, %v903
      %v926 = vpack.c.bf16 %v906, %v905
      %v927 = vpack.c.bf16 %v908, %v907
      %v928 = vpack.c.bf16 %v910, %v909
      %v929 = vpack.c.bf16 %v912, %v911
      %v930 = vpack.c.bf16 %v914, %v913
      %s931 = scalar_lea.vmem %s5, 4
      %v932 = vld [vmem:[%s931] sm:$0xf]
      %v934 = vsel %vm727, %v915, 0
      %v937 = vsel %vm727, %v916, 0
      %v940 = vsel %vm727, %v917, 0
      %v943 = vsel %vm727, %v918, 0
      %v946 = vsel %vm727, %v919, 0
      %v949 = vsel %vm727, %v920, 0
      %v952 = vsel %vm727, %v921, 0
      %v955 = vsel %vm727, %v922, 0
      %v958 = vsel %vm727, %v923, 0
      %v961 = vsel %vm727, %v924, 0
      %v964 = vsel %vm727, %v925, 0
      %v967 = vsel %vm727, %v926, 0
      %v970 = vsel %vm727, %v927, 0
      %v973 = vsel %vm727, %v928, 0
      %v976 = vsel %vm727, %v929, 0
      %v979 = vsel %vm727, %v930, 0
      %vm981 = vcmask 1043456
      %v983 = vsel %vm981, %v932, 0
      %985 = vmatprep.subr.bf16.mxu0 0
      %986 = vmatpush1.bf16.msra.mxu0 %v983
      %987 = vmatprep.subr.bf16.mxu0 0
      %988 = vmatpush1.bf16.msra.mxu0 0
      %989 = vmatprep.subr.bf16.mxu0 0
      %990 = vmatpush1.bf16.msra.mxu0 0
      %991 = vmatprep.subr.bf16.mxu0 0
      %992 = vmatpush1.bf16.msra.mxu0 0
      %993 = vmatprep.subr.bf16.mxu0 0
      %994 = vmatpush1.bf16.msra.mxu0 0
      %995 = vmatprep.subr.bf16.mxu0 0
      %996 = vmatpush1.bf16.msra.mxu0 0
      %997 = vmatprep.subr.bf16.mxu0 0
      %998 = vmatpush1.bf16.msra.mxu0 0
      %999 = vmatprep.subr.bf16.mxu0 0
      %1000 = vmatpush1.bf16.msra.mxu0 0
      %1001 = vmatprep.subr.bf16.mxu0 0
      %1002 = vmatpush1.bf16.msra.mxu0 0
      %1003 = vmatprep.subr.bf16.mxu0 0
      %1004 = vmatpush1.bf16.msra.mxu0 0
      %1005 = vmatprep.subr.bf16.mxu0 0
      %1006 = vmatpush1.bf16.msra.mxu0 0
      %1007 = vmatprep.subr.bf16.mxu0 0
      %1008 = vmatpush1.bf16.msra.mxu0 0
      %1009 = vmatprep.subr.bf16.mxu0 0
      %1010 = vmatpush1.bf16.msra.mxu0 0
      %1011 = vmatprep.subr.bf16.mxu0 0
      %1012 = vmatpush1.bf16.msra.mxu0 0
      %1013 = vmatprep.subr.bf16.mxu0 0
      %1014 = vmatpush1.bf16.msra.mxu0 0
      %1015 = vmatprep.subr.bf16.mxu0 0
      %1016 = vmatpush1.bf16.msra.mxu0 0
      %1017 = vmatprep.mubr.bf16.mxu0 0
      %1018 = vmatmul.mubr.bf16.gmra.mrb[0].mxu0 %v934
      %v1019 = vpop.f32.mrb[0].mxu0
      %v1020 = vadd.f32 0.0, %v1019
      %v1021 = vpop.f32.mrb[0].mxu0
      %v1022 = vpop.f32.mrb[0].mxu0
      %v1023 = vadd.f32 0.0, %v1022
      %v1024 = vpop.f32.mrb[0].mxu0
      %1025 = vmatprep.mubr.bf16.mxu0 0
      %1026 = vmatmul.mubr.bf16.gmra.mrb[0].mxu0 %v937
      %v1027 = vpop.f32.mrb[0].mxu0
      %v1028 = vadd.f32 0.0, %v1027
      %v1029 = vpop.f32.mrb[0].mxu0
      %v1030 = vpop.f32.mrb[0].mxu0
      %v1031 = vadd.f32 0.0, %v1030
      %v1032 = vpop.f32.mrb[0].mxu0
      %1033 = vmatprep.mubr.bf16.mxu0 0
      %1034 = vmatmul.mubr.bf16.gmra.mrb[0].mxu0 %v940
      %v1035 = vpop.f32.mrb[0].mxu0
      %v1036 = vadd.f32 0.0, %v1035
      %v1037 = vpop.f32.mrb[0].mxu0
      %v1038 = vpop.f32.mrb[0].mxu0
      %v1039 = vadd.f32 0.0, %v1038
      %v1040 = vpop.f32.mrb[0].mxu0
      %1041 = vmatprep.mubr.bf16.mxu0 0
      %1042 = vmatmul.mubr.bf16.gmra.mrb[0].mxu0 %v943
      %v1043 = vpop.f32.mrb[0].mxu0
      %v1044 = vadd.f32 0.0, %v1043
      %v1045 = vpop.f32.mrb[0].mxu0
      %v1046 = vpop.f32.mrb[0].mxu0
      %v1047 = vadd.f32 0.0, %v1046
      %v1048 = vpop.f32.mrb[0].mxu0
      %1049 = vmatprep.mubr.bf16.mxu0 0
      %1050 = vmatmul.mubr.bf16.gmra.mrb[0].mxu0 %v946
      %v1051 = vpop.f32.mrb[0].mxu0
      %v1052 = vadd.f32 0.0, %v1051
      %v1053 = vpop.f32.mrb[0].mxu0
      %v1054 = vpop.f32.mrb[0].mxu0
      %v1055 = vadd.f32 0.0, %v1054
      %v1056 = vpop.f32.mrb[0].mxu0
      %1057 = vmatprep.mubr.bf16.mxu0 0
      %1058 = vmatmul.mubr.bf16.gmra.mrb[0].mxu0 %v949
      %v1059 = vpop.f32.mrb[0].mxu0
      %v1060 = vadd.f32 0.0, %v1059
      %v1061 = vpop.f32.mrb[0].mxu0
      %v1062 = vpop.f32.mrb[0].mxu0
      %v1063 = vadd.f32 0.0, %v1062
      %v1064 = vpop.f32.mrb[0].mxu0
      %1065 = vmatprep.mubr.bf16.mxu0 0
      %1066 = vmatmul.mubr.bf16.gmra.mrb[0].mxu0 %v952
      %v1067 = vpop.f32.mrb[0].mxu0
      %v1068 = vadd.f32 0.0, %v1067
      %v1069 = vpop.f32.mrb[0].mxu0
      %v1070 = vpop.f32.mrb[0].mxu0
      %v1071 = vadd.f32 0.0, %v1070
      %v1072 = vpop.f32.mrb[0].mxu0
      %1073 = vmatprep.mubr.bf16.mxu0 0
      %1074 = vmatmul.mubr.bf16.gmra.mrb[0].mxu0 %v955
      %v1075 = vpop.f32.mrb[0].mxu0
      %v1076 = vadd.f32 0.0, %v1075
      %v1077 = vpop.f32.mrb[0].mxu0
      %v1078 = vpop.f32.mrb[0].mxu0
      %v1079 = vadd.f32 0.0, %v1078
      %v1080 = vpop.f32.mrb[0].mxu0
      %1081 = vmatprep.mubr.bf16.mxu0 0
      %1082 = vmatmul.mubr.bf16.gmra.mrb[0].mxu0 %v958
      %v1083 = vpop.f32.mrb[0].mxu0
      %v1084 = vadd.f32 0.0, %v1083
      %v1085 = vpop.f32.mrb[0].mxu0
      %v1086 = vpop.f32.mrb[0].mxu0
      %v1087 = vadd.f32 0.0, %v1086
      %v1088 = vpop.f32.mrb[0].mxu0
      %1089 = vmatprep.mubr.bf16.mxu0 0
      %1090 = vmatmul.mubr.bf16.gmra.mrb[0].mxu0 %v961
      %v1091 = vpop.f32.mrb[0].mxu0
      %v1092 = vadd.f32 0.0, %v1091
      %v1093 = vpop.f32.mrb[0].mxu0
      %v1094 = vpop.f32.mrb[0].mxu0
      %v1095 = vadd.f32 0.0, %v1094
      %v1096 = vpop.f32.mrb[0].mxu0
      %1097 = vmatprep.mubr.bf16.mxu0 0
      %1098 = vmatmul.mubr.bf16.gmra.mrb[0].mxu0 %v964
      %v1099 = vpop.f32.mrb[0].mxu0
      %v1100 = vadd.f32 0.0, %v1099
      %v1101 = vpop.f32.mrb[0].mxu0
      %v1102 = vpop.f32.mrb[0].mxu0
      %v1103 = vadd.f32 0.0, %v1102
      %v1104 = vpop.f32.mrb[0].mxu0
      %1105 = vmatprep.mubr.bf16.mxu0 0
      %1106 = vmatmul.mubr.bf16.gmra.mrb[0].mxu0 %v967
      %v1107 = vpop.f32.mrb[0].mxu0
      %v1108 = vadd.f32 0.0, %v1107
      %v1109 = vpop.f32.mrb[0].mxu0
      %v1110 = vpop.f32.mrb[0].mxu0
      %v1111 = vadd.f32 0.0, %v1110
      %v1112 = vpop.f32.mrb[0].mxu0
      %1113 = vmatprep.mubr.bf16.mxu0 0
      %1114 = vmatmul.mubr.bf16.gmra.mrb[0].mxu0 %v970
      %v1115 = vpop.f32.mrb[0].mxu0
      %v1116 = vadd.f32 0.0, %v1115
      %v1117 = vpop.f32.mrb[0].mxu0
      %v1118 = vpop.f32.mrb[0].mxu0
      %v1119 = vadd.f32 0.0, %v1118
      %v1120 = vpop.f32.mrb[0].mxu0
      %1121 = vmatprep.mubr.bf16.mxu0 0
      %1122 = vmatmul.mubr.bf16.gmra.mrb[0].mxu0 %v973
      %v1123 = vpop.f32.mrb[0].mxu0
      %v1124 = vadd.f32 0.0, %v1123
      %v1125 = vpop.f32.mrb[0].mxu0
      %v1126 = vpop.f32.mrb[0].mxu0
      %v1127 = vadd.f32 0.0, %v1126
      %v1128 = vpop.f32.mrb[0].mxu0
      %1129 = vmatprep.mubr.bf16.mxu0 0
      %1130 = vmatmul.mubr.bf16.gmra.mrb[0].mxu0 %v976
      %v1131 = vpop.f32.mrb[0].mxu0
      %v1132 = vadd.f32 0.0, %v1131
      %v1133 = vpop.f32.mrb[0].mxu0
      %v1134 = vpop.f32.mrb[0].mxu0
      %v1135 = vadd.f32 0.0, %v1134
      %v1136 = vpop.f32.mrb[0].mxu0
      %1137 = vmatprep.mubr.bf16.mxu0 0
      %1138 = vmatmul.mubr.bf16.gmra.mrb[0].mxu0 %v979
      %v1139 = vpop.f32.mrb[0].mxu0
      %v1140 = vadd.f32 0.0, %v1139
      %v1141 = vpop.f32.mrb[0].mxu0
      %v1142 = vpop.f32.mrb[0].mxu0
      %v1143 = vadd.f32 0.0, %v1142
      %v1144 = vpop.f32.mrb[0].mxu0
      %1145 = vdwg.mxu0
      %v1147 = vsel %vm727, %v866, 0
      %v1150 = vsel %vm727, %v867, 0
      %v1153 = vsel %vm727, %v868, 0
      %v1156 = vsel %vm727, %v869, 0
      %v1159 = vsel %vm727, %v870, 0
      %v1162 = vsel %vm727, %v871, 0
      %v1165 = vsel %vm727, %v872, 0
      %v1168 = vsel %vm727, %v873, 0
      %v1171 = vsel %vm727, %v874, 0
      %v1174 = vsel %vm727, %v875, 0
      %v1177 = vsel %vm727, %v876, 0
      %v1180 = vsel %vm727, %v877, 0
      %v1183 = vsel %vm727, %v878, 0
      %v1186 = vsel %vm727, %v879, 0
      %v1189 = vsel %vm727, %v880, 0
      %v1192 = vsel %vm727, %v881, 0
      %v1195 = vsel %vm981, %v882, 0
      %1197 = vmatprep.subr.bf16.mxu0 0
      %1198 = vmatpush1.bf16.msra.mxu0 %v1195
      %1199 = vmatprep.subr.bf16.mxu0 0
      %1200 = vmatpush1.bf16.msra.mxu0 0
      %1201 = vmatprep.subr.bf16.mxu0 0
      %1202 = vmatpush1.bf16.msra.mxu0 0
      %1203 = vmatprep.subr.bf16.mxu0 0
      %1204 = vmatpush1.bf16.msra.mxu0 0
      %1205 = vmatprep.subr.bf16.mxu0 0
      %1206 = vmatpush1.bf16.msra.mxu0 0
      %1207 = vmatprep.subr.bf16.mxu0 0
      %1208 = vmatpush1.bf16.msra.mxu0 0
      %1209 = vmatprep.subr.bf16.mxu0 0
      %1210 = vmatpush1.bf16.msra.mxu0 0
      %1211 = vmatprep.subr.bf16.mxu0 0
      %1212 = vmatpush1.bf16.msra.mxu0 0
      %1213 = vmatprep.subr.bf16.mxu0 0
      %1214 = vmatpush1.bf16.msra.mxu0 0
      %1215 = vmatprep.subr.bf16.mxu0 0
      %1216 = vmatpush1.bf16.msra.mxu0 0
      %1217 = vmatprep.subr.bf16.mxu0 0
      %1218 = vmatpush1.bf16.msra.mxu0 0
      %1219 = vmatprep.subr.bf16.mxu0 0
      %1220 = vmatpush1.bf16.msra.mxu0 0
      %1221 = vmatprep.subr.bf16.mxu0 0
      %1222 = vmatpush1.bf16.msra.mxu0 0
      %1223 = vmatprep.subr.bf16.mxu0 0
      %1224 = vmatpush1.bf16.msra.mxu0 0
      %1225 = vmatprep.subr.bf16.mxu0 0
      %1226 = vmatpush1.bf16.msra.mxu0 0
      %1227 = vmatprep.subr.bf16.mxu0 0
      %1228 = vmatpush1.bf16.msra.mxu0 0
      %1229 = vmatprep.mubr.bf16.mxu0 0
      %1230 = vmatmul.mubr.bf16.gmra.mrb[0].mxu0 %v1147
      %v1231 = vpop.f32.mrb[0].mxu0
      %v1232 = vadd.f32 %v1020, %v1231
      %v1233 = vpop.f32.mrb[0].mxu0
      %v1234 = vpop.f32.mrb[0].mxu0
      %v1235 = vadd.f32 %v1023, %v1234
      %v1236 = vpop.f32.mrb[0].mxu0
      %1237 = vmatprep.mubr.bf16.mxu0 0
      %1238 = vmatmul.mubr.bf16.gmra.mrb[0].mxu0 %v1150
      %v1239 = vpop.f32.mrb[0].mxu0
      %v1240 = vadd.f32 %v1028, %v1239
      %v1241 = vpop.f32.mrb[0].mxu0
      %v1242 = vpop.f32.mrb[0].mxu0
      %v1243 = vadd.f32 %v1031, %v1242
      %v1244 = vpop.f32.mrb[0].mxu0
      %1245 = vmatprep.mubr.bf16.mxu0 0
      %1246 = vmatmul.mubr.bf16.gmra.mrb[0].mxu0 %v1153
      %v1247 = vpop.f32.mrb[0].mxu0
      %v1248 = vadd.f32 %v1036, %v1247
      %v1249 = vpop.f32.mrb[0].mxu0
      %v1250 = vpop.f32.mrb[0].mxu0
      %v1251 = vadd.f32 %v1039, %v1250
      %v1252 = vpop.f32.mrb[0].mxu0
      %1253 = vmatprep.mubr.bf16.mxu0 0
      %1254 = vmatmul.mubr.bf16.gmra.mrb[0].mxu0 %v1156
      %v1255 = vpop.f32.mrb[0].mxu0
      %v1256 = vadd.f32 %v1044, %v1255
      %v1257 = vpop.f32.mrb[0].mxu0
      %v1258 = vpop.f32.mrb[0].mxu0
      %v1259 = vadd.f32 %v1047, %v1258
      %v1260 = vpop.f32.mrb[0].mxu0
      %1261 = vmatprep.mubr.bf16.mxu0 0
      %1262 = vmatmul.mubr.bf16.gmra.mrb[0].mxu0 %v1159
      %v1263 = vpop.f32.mrb[0].mxu0
      %v1264 = vadd.f32 %v1052, %v1263
      %v1265 = vpop.f32.mrb[0].mxu0
      %v1266 = vpop.f32.mrb[0].mxu0
      %v1267 = vadd.f32 %v1055, %v1266
      %v1268 = vpop.f32.mrb[0].mxu0
      %1269 = vmatprep.mubr.bf16.mxu0 0
      %1270 = vmatmul.mubr.bf16.gmra.mrb[0].mxu0 %v1162
      %v1271 = vpop.f32.mrb[0].mxu0
      %v1272 = vadd.f32 %v1060, %v1271
      %v1273 = vpop.f32.mrb[0].mxu0
      %v1274 = vpop.f32.mrb[0].mxu0
      %v1275 = vadd.f32 %v1063, %v1274
      %v1276 = vpop.f32.mrb[0].mxu0
      %1277 = vmatprep.mubr.bf16.mxu0 0
      %1278 = vmatmul.mubr.bf16.gmra.mrb[0].mxu0 %v1165
      %v1279 = vpop.f32.mrb[0].mxu0
      %v1280 = vadd.f32 %v1068, %v1279
      %v1281 = vpop.f32.mrb[0].mxu0
      %v1282 = vpop.f32.mrb[0].mxu0
      %v1283 = vadd.f32 %v1071, %v1282
      %v1284 = vpop.f32.mrb[0].mxu0
      %1285 = vmatprep.mubr.bf16.mxu0 0
      %1286 = vmatmul.mubr.bf16.gmra.mrb[0].mxu0 %v1168
      %v1287 = vpop.f32.mrb[0].mxu0
      %v1288 = vadd.f32 %v1076, %v1287
      %v1289 = vpop.f32.mrb[0].mxu0
      %v1290 = vpop.f32.mrb[0].mxu0
      %v1291 = vadd.f32 %v1079, %v1290
      %v1292 = vpop.f32.mrb[0].mxu0
      %1293 = vmatprep.mubr.bf16.mxu0 0
      %1294 = vmatmul.mubr.bf16.gmra.mrb[0].mxu0 %v1171
      %v1295 = vpop.f32.mrb[0].mxu0
      %v1296 = vadd.f32 %v1084, %v1295
      %v1297 = vpop.f32.mrb[0].mxu0
      %v1298 = vpop.f32.mrb[0].mxu0
      %v1299 = vadd.f32 %v1087, %v1298
      %v1300 = vpop.f32.mrb[0].mxu0
      %1301 = vmatprep.mubr.bf16.mxu0 0
      %1302 = vmatmul.mubr.bf16.gmra.mrb[0].mxu0 %v1174
      %v1303 = vpop.f32.mrb[0].mxu0
      %v1304 = vadd.f32 %v1092, %v1303
      %v1305 = vpop.f32.mrb[0].mxu0
      %v1306 = vpop.f32.mrb[0].mxu0
      %v1307 = vadd.f32 %v1095, %v1306
      %v1308 = vpop.f32.mrb[0].mxu0
      %1309 = vmatprep.mubr.bf16.mxu0 0
      %1310 = vmatmul.mubr.bf16.gmra.mrb[0].mxu0 %v1177
      %v1311 = vpop.f32.mrb[0].mxu0
      %v1312 = vadd.f32 %v1100, %v1311
      %v1313 = vpop.f32.mrb[0].mxu0
      %v1314 = vpop.f32.mrb[0].mxu0
      %v1315 = vadd.f32 %v1103, %v1314
      %v1316 = vpop.f32.mrb[0].mxu0
      %1317 = vmatprep.mubr.bf16.mxu0 0
      %1318 = vmatmul.mubr.bf16.gmra.mrb[0].mxu0 %v1180
      %v1319 = vpop.f32.mrb[0].mxu0
      %v1320 = vadd.f32 %v1108, %v1319
      %v1321 = vpop.f32.mrb[0].mxu0
      %v1322 = vpop.f32.mrb[0].mxu0
      %v1323 = vadd.f32 %v1111, %v1322
      %v1324 = vpop.f32.mrb[0].mxu0
      %1325 = vmatprep.mubr.bf16.mxu0 0
      %1326 = vmatmul.mubr.bf16.gmra.mrb[0].mxu0 %v1183
      %v1327 = vpop.f32.mrb[0].mxu0
      %v1328 = vadd.f32 %v1116, %v1327
      %v1329 = vpop.f32.mrb[0].mxu0
      %v1330 = vpop.f32.mrb[0].mxu0
      %v1331 = vadd.f32 %v1119, %v1330
      %v1332 = vpop.f32.mrb[0].mxu0
      %1333 = vmatprep.mubr.bf16.mxu0 0
      %1334 = vmatmul.mubr.bf16.gmra.mrb[0].mxu0 %v1186
      %v1335 = vpop.f32.mrb[0].mxu0
      %v1336 = vadd.f32 %v1124, %v1335
      %v1337 = vpop.f32.mrb[0].mxu0
      %v1338 = vpop.f32.mrb[0].mxu0
      %v1339 = vadd.f32 %v1127, %v1338
      %v1340 = vpop.f32.mrb[0].mxu0
      %1341 = vmatprep.mubr.bf16.mxu0 0
      %1342 = vmatmul.mubr.bf16.gmra.mrb[0].mxu0 %v1189
      %v1343 = vpop.f32.mrb[0].mxu0
      %v1344 = vadd.f32 %v1132, %v1343
      %v1345 = vpop.f32.mrb[0].mxu0
      %v1346 = vpop.f32.mrb[0].mxu0
      %v1347 = vadd.f32 %v1135, %v1346
      %v1348 = vpop.f32.mrb[0].mxu0
      %1349 = vmatprep.mubr.bf16.mxu0 0
      %1350 = vmatmul.mubr.bf16.gmra.mrb[0].mxu0 %v1192
      %v1351 = vpop.f32.mrb[0].mxu0
      %v1352 = vadd.f32 %v1140, %v1351
      %v1353 = vpop.f32.mrb[0].mxu0
      %v1354 = vpop.f32.mrb[0].mxu0
      %v1355 = vadd.f32 %v1143, %v1354
      %v1356 = vpop.f32.mrb[0].mxu0
      %1357 = vdwg.mxu0
      %v1358 = vld [vmem:[#allocation2 + $0x9] sm:$0xff]
      %v1359 = vld [vmem:[#allocation2 + $0x11] sm:$0xff]
      %v1360 = vld [vmem:[#allocation2 + $0x29] sm:$0xff]
      %v1361 = vld [vmem:[#allocation2 + $0x31] sm:$0xff]
      %v1362 = vld [vmem:[#allocation2 + $0x49] sm:$0xff]
      %v1363 = vld [vmem:[#allocation2 + $0x51] sm:$0xff]
      %v1364 = vld [vmem:[#allocation2 + $0x69] sm:$0xff]
      %v1365 = vld [vmem:[#allocation2 + $0x71] sm:$0xff]
      %v1366 = vld [vmem:[#allocation2 + $0x89] sm:$0xff]
      %v1367 = vld [vmem:[#allocation2 + $0x91] sm:$0xff]
      %v1368 = vld [vmem:[#allocation2 + $0xa9] sm:$0xff]
      %v1369 = vld [vmem:[#allocation2 + $0xb1] sm:$0xff]
      %v1370 = vld [vmem:[#allocation2 + $0xc9] sm:$0xff]
      %v1371 = vld [vmem:[#allocation2 + $0xd1] sm:$0xff]
      %v1372 = vld [vmem:[#allocation2 + $0xe9] sm:$0xff]
      %v1373 = vld [vmem:[#allocation2 + $0xf1] sm:$0xff]
      %v1374 = vld [vmem:[#allocation2 + $0x109] sm:$0xff]
      %v1375 = vld [vmem:[#allocation2 + $0x111] sm:$0xff]
      %v1376 = vld [vmem:[#allocation2 + $0x129] sm:$0xff]
      %v1377 = vld [vmem:[#allocation2 + $0x131] sm:$0xff]
      %v1378 = vld [vmem:[#allocation2 + $0x149] sm:$0xff]
      %v1379 = vld [vmem:[#allocation2 + $0x151] sm:$0xff]
      %v1380 = vld [vmem:[#allocation2 + $0x169] sm:$0xff]
      %v1381 = vld [vmem:[#allocation2 + $0x171] sm:$0xff]
      %v1382 = vld [vmem:[#allocation2 + $0x189] sm:$0xff]
      %v1383 = vld [vmem:[#allocation2 + $0x191] sm:$0xff]
      %v1384 = vld [vmem:[#allocation2 + $0x1a9] sm:$0xff]
      %v1385 = vld [vmem:[#allocation2 + $0x1b1] sm:$0xff]
      %v1386 = vld [vmem:[#allocation2 + $0x1c9] sm:$0xff]
      %v1387 = vld [vmem:[#allocation2 + $0x1d1] sm:$0xff]
      %v1388 = vld [vmem:[#allocation2 + $0x1e9] sm:$0xff]
      %v1389 = vld [vmem:[#allocation2 + $0x1f1] sm:$0xff]
      %v1390 = vpack.c.bf16 %v1359, %v1358
      %v1391 = vpack.c.bf16 %v1361, %v1360
      %v1392 = vpack.c.bf16 %v1363, %v1362
      %v1393 = vpack.c.bf16 %v1365, %v1364
      %v1394 = vpack.c.bf16 %v1367, %v1366
      %v1395 = vpack.c.bf16 %v1369, %v1368
      %v1396 = vpack.c.bf16 %v1371, %v1370
      %v1397 = vpack.c.bf16 %v1373, %v1372
      %v1398 = vpack.c.bf16 %v1375, %v1374
      %v1399 = vpack.c.bf16 %v1377, %v1376
      %v1400 = vpack.c.bf16 %v1379, %v1378
      %v1401 = vpack.c.bf16 %v1381, %v1380
      %v1402 = vpack.c.bf16 %v1383, %v1382
      %v1403 = vpack.c.bf16 %v1385, %v1384
      %v1404 = vpack.c.bf16 %v1387, %v1386
      %v1405 = vpack.c.bf16 %v1389, %v1388
      %s1406 = scalar_lea.vmem %s5, 8
      %v1407 = vld [vmem:[%s1406] sm:$0xf]
      %v1409 = vsel %vm727, %v1390, 0
      %v1412 = vsel %vm727, %v1391, 0
      %v1415 = vsel %vm727, %v1392, 0
      %v1418 = vsel %vm727, %v1393, 0
      %v1421 = vsel %vm727, %v1394, 0
      %v1424 = vsel %vm727, %v1395, 0
      %v1427 = vsel %vm727, %v1396, 0
      %v1430 = vsel %vm727, %v1397, 0
      %v1433 = vsel %vm727, %v1398, 0
      %v1436 = vsel %vm727, %v1399, 0
      %v1439 = vsel %vm727, %v1400, 0
      %v1442 = vsel %vm727, %v1401, 0
      %v1445 = vsel %vm727, %v1402, 0
      %v1448 = vsel %vm727, %v1403, 0
      %v1451 = vsel %vm727, %v1404, 0
      %v1454 = vsel %vm727, %v1405, 0
      %v1457 = vsel %vm981, %v1407, 0
      %1459 = vmatprep.subr.bf16.mxu0 0
      %1460 = vmatpush1.bf16.msra.mxu0 %v1457
      %1461 = vmatprep.subr.bf16.mxu0 0
      %1462 = vmatpush1.bf16.msra.mxu0 0
      %1463 = vmatprep.subr.bf16.mxu0 0
      %1464 = vmatpush1.bf16.msra.mxu0 0
      %1465 = vmatprep.subr.bf16.mxu0 0
      %1466 = vmatpush1.bf16.msra.mxu0 0
      %1467 = vmatprep.subr.bf16.mxu0 0
      %1468 = vmatpush1.bf16.msra.mxu0 0
      %1469 = vmatprep.subr.bf16.mxu0 0
      %1470 = vmatpush1.bf16.msra.mxu0 0
      %1471 = vmatprep.subr.bf16.mxu0 0
      %1472 = vmatpush1.bf16.msra.mxu0 0
      %1473 = vmatprep.subr.bf16.mxu0 0
      %1474 = vmatpush1.bf16.msra.mxu0 0
      %1475 = vmatprep.subr.bf16.mxu0 0
      %1476 = vmatpush1.bf16.msra.mxu0 0
      %1477 = vmatprep.subr.bf16.mxu0 0
      %1478 = vmatpush1.bf16.msra.mxu0 0
      %1479 = vmatprep.subr.bf16.mxu0 0
      %1480 = vmatpush1.bf16.msra.mxu0 0
      %1481 = vmatprep.subr.bf16.mxu0 0
      %1482 = vmatpush1.bf16.msra.mxu0 0
      %1483 = vmatprep.subr.bf16.mxu0 0
      %1484 = vmatpush1.bf16.msra.mxu0 0
      %1485 = vmatprep.subr.bf16.mxu0 0
      %1486 = vmatpush1.bf16.msra.mxu0 0
      %1487 = vmatprep.subr.bf16.mxu0 0
      %1488 = vmatpush1.bf16.msra.mxu0 0
      %1489 = vmatprep.subr.bf16.mxu0 0
      %1490 = vmatpush1.bf16.msra.mxu0 0
      %1491 = vmatprep.mubr.bf16.mxu0 0
      %1492 = vmatmul.mubr.bf16.gmra.mrb[0].mxu0 %v1409
      %v1493 = vpop.f32.mrb[0].mxu0
      %v1494 = vadd.f32 0.0, %v1493
      %v1495 = vpop.f32.mrb[0].mxu0
      %v1496 = vpop.f32.mrb[0].mxu0
      %v1497 = vadd.f32 0.0, %v1496
      %v1498 = vpop.f32.mrb[0].mxu0
      %1499 = vmatprep.mubr.bf16.mxu0 0
      %1500 = vmatmul.mubr.bf16.gmra.mrb[0].mxu0 %v1412
      %v1501 = vpop.f32.mrb[0].mxu0
      %v1502 = vadd.f32 0.0, %v1501
      %v1503 = vpop.f32.mrb[0].mxu0
      %v1504 = vpop.f32.mrb[0].mxu0
      %v1505 = vadd.f32 0.0, %v1504
      %v1506 = vpop.f32.mrb[0].mxu0
      %1507 = vmatprep.mubr.bf16.mxu0 0
      %1508 = vmatmul.mubr.bf16.gmra.mrb[0].mxu0 %v1415
      %v1509 = vpop.f32.mrb[0].mxu0
      %v1510 = vadd.f32 0.0, %v1509
      %v1511 = vpop.f32.mrb[0].mxu0
      %v1512 = vpop.f32.mrb[0].mxu0
      %v1513 = vadd.f32 0.0, %v1512
      %v1514 = vpop.f32.mrb[0].mxu0
      %1515 = vmatprep.mubr.bf16.mxu0 0
      %1516 = vmatmul.mubr.bf16.gmra.mrb[0].mxu0 %v1418
      %v1517 = vpop.f32.mrb[0].mxu0
      %v1518 = vadd.f32 0.0, %v1517
      %v1519 = vpop.f32.mrb[0].mxu0
      %v1520 = vpop.f32.mrb[0].mxu0
      %v1521 = vadd.f32 0.0, %v1520
      %v1522 = vpop.f32.mrb[0].mxu0
      %1523 = vmatprep.mubr.bf16.mxu0 0
      %1524 = vmatmul.mubr.bf16.gmra.mrb[0].mxu0 %v1421
      %v1525 = vpop.f32.mrb[0].mxu0
      %v1526 = vadd.f32 0.0, %v1525
      %v1527 = vpop.f32.mrb[0].mxu0
      %v1528 = vpop.f32.mrb[0].mxu0
      %v1529 = vadd.f32 0.0, %v1528
      %v1530 = vpop.f32.mrb[0].mxu0
      %1531 = vmatprep.mubr.bf16.mxu0 0
      %1532 = vmatmul.mubr.bf16.gmra.mrb[0].mxu0 %v1424
      %v1533 = vpop.f32.mrb[0].mxu0
      %v1534 = vadd.f32 0.0, %v1533
      %v1535 = vpop.f32.mrb[0].mxu0
      %v1536 = vpop.f32.mrb[0].mxu0
      %v1537 = vadd.f32 0.0, %v1536
      %v1538 = vpop.f32.mrb[0].mxu0
      %1539 = vmatprep.mubr.bf16.mxu0 0
      %1540 = vmatmul.mubr.bf16.gmra.mrb[0].mxu0 %v1427
      %v1541 = vpop.f32.mrb[0].mxu0
      %v1542 = vadd.f32 0.0, %v1541
      %v1543 = vpop.f32.mrb[0].mxu0
      %v1544 = vpop.f32.mrb[0].mxu0
      %v1545 = vadd.f32 0.0, %v1544
      %v1546 = vpop.f32.mrb[0].mxu0
      %1547 = vmatprep.mubr.bf16.mxu0 0
      %1548 = vmatmul.mubr.bf16.gmra.mrb[0].mxu0 %v1430
      %v1549 = vpop.f32.mrb[0].mxu0
      %v1550 = vadd.f32 0.0, %v1549
      %v1551 = vpop.f32.mrb[0].mxu0
      %v1552 = vpop.f32.mrb[0].mxu0
      %v1553 = vadd.f32 0.0, %v1552
      %v1554 = vpop.f32.mrb[0].mxu0
      %1555 = vmatprep.mubr.bf16.mxu0 0
      %1556 = vmatmul.mubr.bf16.gmra.mrb[0].mxu0 %v1433
      %v1557 = vpop.f32.mrb[0].mxu0
      %v1558 = vadd.f32 0.0, %v1557
      %v1559 = vpop.f32.mrb[0].mxu0
      %v1560 = vpop.f32.mrb[0].mxu0
      %v1561 = vadd.f32 0.0, %v1560
      %v1562 = vpop.f32.mrb[0].mxu0
      %1563 = vmatprep.mubr.bf16.mxu0 0
      %1564 = vmatmul.mubr.bf16.gmra.mrb[0].mxu0 %v1436
      %v1565 = vpop.f32.mrb[0].mxu0
      %v1566 = vadd.f32 0.0, %v1565
      %v1567 = vpop.f32.mrb[0].mxu0
      %v1568 = vpop.f32.mrb[0].mxu0
      %v1569 = vadd.f32 0.0, %v1568
      %v1570 = vpop.f32.mrb[0].mxu0
      %1571 = vmatprep.mubr.bf16.mxu0 0
      %1572 = vmatmul.mubr.bf16.gmra.mrb[0].mxu0 %v1439
      %v1573 = vpop.f32.mrb[0].mxu0
      %v1574 = vadd.f32 0.0, %v1573
      %v1575 = vpop.f32.mrb[0].mxu0
      %v1576 = vpop.f32.mrb[0].mxu0
      %v1577 = vadd.f32 0.0, %v1576
      %v1578 = vpop.f32.mrb[0].mxu0
      %1579 = vmatprep.mubr.bf16.mxu0 0
      %1580 = vmatmul.mubr.bf16.gmra.mrb[0].mxu0 %v1442
      %v1581 = vpop.f32.mrb[0].mxu0
      %v1582 = vadd.f32 0.0, %v1581
      %v1583 = vpop.f32.mrb[0].mxu0
      %v1584 = vpop.f32.mrb[0].mxu0
      %v1585 = vadd.f32 0.0, %v1584
      %v1586 = vpop.f32.mrb[0].mxu0
      %1587 = vmatprep.mubr.bf16.mxu0 0
      %1588 = vmatmul.mubr.bf16.gmra.mrb[0].mxu0 %v1445
      %v1589 = vpop.f32.mrb[0].mxu0
      %v1590 = vadd.f32 0.0, %v1589
      %v1591 = vpop.f32.mrb[0].mxu0
      %v1592 = vpop.f32.mrb[0].mxu0
      %v1593 = vadd.f32 0.0, %v1592
      %v1594 = vpop.f32.mrb[0].mxu0
      %1595 = vmatprep.mubr.bf16.mxu0 0
      %1596 = vmatmul.mubr.bf16.gmra.mrb[0].mxu0 %v1448
      %v1597 = vpop.f32.mrb[0].mxu0
      %v1598 = vadd.f32 0.0, %v1597
      %v1599 = vpop.f32.mrb[0].mxu0
      %v1600 = vpop.f32.mrb[0].mxu0
      %v1601 = vadd.f32 0.0, %v1600
      %v1602 = vpop.f32.mrb[0].mxu0
      %1603 = vmatprep.mubr.bf16.mxu0 0
      %1604 = vmatmul.mubr.bf16.gmra.mrb[0].mxu0 %v1451
      %v1605 = vpop.f32.mrb[0].mxu0
      %v1606 = vadd.f32 0.0, %v1605
      %v1607 = vpop.f32.mrb[0].mxu0
      %v1608 = vpop.f32.mrb[0].mxu0
      %v1609 = vadd.f32 0.0, %v1608
      %v1610 = vpop.f32.mrb[0].mxu0
      %1611 = vmatprep.mubr.bf16.mxu0 0
      %1612 = vmatmul.mubr.bf16.gmra.mrb[0].mxu0 %v1454
      %v1613 = vpop.f32.mrb[0].mxu0
      %v1614 = vadd.f32 0.0, %v1613
      %v1615 = vpop.f32.mrb[0].mxu0
      %v1616 = vpop.f32.mrb[0].mxu0
      %v1617 = vadd.f32 0.0, %v1616
      %v1618 = vpop.f32.mrb[0].mxu0
      %1619 = vdwg.mxu0
      %v1620 = vadd.f32 %v1232, %v1494
      %v1621 = vadd.f32 %v1235, %v1497
      %v1622 = vadd.f32 %v1240, %v1502
      %v1623 = vadd.f32 %v1243, %v1505
      %v1624 = vadd.f32 %v1248, %v1510
      %v1625 = vadd.f32 %v1251, %v1513
      %v1626 = vadd.f32 %v1256, %v1518
      %v1627 = vadd.f32 %v1259, %v1521
      %v1628 = vadd.f32 %v1264, %v1526
      %v1629 = vadd.f32 %v1267, %v1529
      %v1630 = vadd.f32 %v1272, %v1534
      %v1631 = vadd.f32 %v1275, %v1537
      %v1632 = vadd.f32 %v1280, %v1542
      %v1633 = vadd.f32 %v1283, %v1545
      %v1634 = vadd.f32 %v1288, %v1550
      %v1635 = vadd.f32 %v1291, %v1553
      %v1636 = vadd.f32 %v1296, %v1558
      %v1637 = vadd.f32 %v1299, %v1561
      %v1638 = vadd.f32 %v1304, %v1566
      %v1639 = vadd.f32 %v1307, %v1569
      %v1640 = vadd.f32 %v1312, %v1574
      %v1641 = vadd.f32 %v1315, %v1577
      %v1642 = vadd.f32 %v1320, %v1582
      %v1643 = vadd.f32 %v1323, %v1585
      %v1644 = vadd.f32 %v1328, %v1590
      %v1645 = vadd.f32 %v1331, %v1593
      %v1646 = vadd.f32 %v1336, %v1598
      %v1647 = vadd.f32 %v1339, %v1601
      %v1648 = vadd.f32 %v1344, %v1606
      %v1649 = vadd.f32 %v1347, %v1609
      %v1650 = vadd.f32 %v1352, %v1614
      %v1651 = vadd.f32 %v1355, %v1617
      %v1652 = vld [vmem:[%s801 + $0x7] sm:$0xff]
      %v1653 = vld [vmem:[%s801 + $0xf] sm:$0xff]
      %v1654 = vld [vmem:[%s801 + $0x27] sm:$0xff]
      %v1655 = vld [vmem:[%s801 + $0x2f] sm:$0xff]
      %v1656 = vld [vmem:[%s801 + $0x47] sm:$0xff]
      %v1657 = vld [vmem:[%s801 + $0x4f] sm:$0xff]
      %v1658 = vld [vmem:[%s801 + $0x67] sm:$0xff]
      %v1659 = vld [vmem:[%s801 + $0x6f] sm:$0xff]
      %v1660 = vld [vmem:[%s801 + $0x87] sm:$0xff]
      %v1661 = vld [vmem:[%s801 + $0x8f] sm:$0xff]
      %v1662 = vld [vmem:[%s801 + $0xa7] sm:$0xff]
      %v1663 = vld [vmem:[%s801 + $0xaf] sm:$0xff]
      %v1664 = vld [vmem:[%s801 + $0xc7] sm:$0xff]
      %v1665 = vld [vmem:[%s801 + $0xcf] sm:$0xff]
      %v1666 = vld [vmem:[%s801 + $0xe7] sm:$0xff]
      %v1667 = vld [vmem:[%s801 + $0xef] sm:$0xff]
      %v1668 = vld [vmem:[%s801 + $0x107] sm:$0xff]
      %v1669 = vld [vmem:[%s801 + $0x10f] sm:$0xff]
      %v1670 = vld [vmem:[%s801 + $0x127] sm:$0xff]
      %v1671 = vld [vmem:[%s801 + $0x12f] sm:$0xff]
      %v1672 = vld [vmem:[%s801 + $0x147] sm:$0xff]
      %v1673 = vld [vmem:[%s801 + $0x14f] sm:$0xff]
      %v1674 = vld [vmem:[%s801 + $0x167] sm:$0xff]
      %v1675 = vld [vmem:[%s801 + $0x16f] sm:$0xff]
      %v1676 = vld [vmem:[%s801 + $0x187] sm:$0xff]
      %v1677 = vld [vmem:[%s801 + $0x18f] sm:$0xff]
      %v1678 = vld [vmem:[%s801 + $0x1a7] sm:$0xff]
      %v1679 = vld [vmem:[%s801 + $0x1af] sm:$0xff]
      %v1680 = vld [vmem:[%s801 + $0x1c7] sm:$0xff]
      %v1681 = vld [vmem:[%s801 + $0x1cf] sm:$0xff]
      %v1682 = vld [vmem:[%s801 + $0x1e7] sm:$0xff]
      %v1683 = vld [vmem:[%s801 + $0x1ef] sm:$0xff]
      %v1684 = vpack.c.bf16 %v1653, %v1652
      %v1685 = vpack.c.bf16 %v1655, %v1654
      %v1686 = vpack.c.bf16 %v1657, %v1656
      %v1687 = vpack.c.bf16 %v1659, %v1658
      %v1688 = vpack.c.bf16 %v1661, %v1660
      %v1689 = vpack.c.bf16 %v1663, %v1662
      %v1690 = vpack.c.bf16 %v1665, %v1664
      %v1691 = vpack.c.bf16 %v1667, %v1666
      %v1692 = vpack.c.bf16 %v1669, %v1668
      %v1693 = vpack.c.bf16 %v1671, %v1670
      %v1694 = vpack.c.bf16 %v1673, %v1672
      %v1695 = vpack.c.bf16 %v1675, %v1674
      %v1696 = vpack.c.bf16 %v1677, %v1676
      %v1697 = vpack.c.bf16 %v1679, %v1678
      %v1698 = vpack.c.bf16 %v1681, %v1680
      %v1699 = vpack.c.bf16 %v1683, %v1682
      %s1700 = scalar_lea.vmem %s5, 12
      %v1701 = vld [vmem:[%s1700] sm:$0xf]
      %v1703 = vsel %vm727, %v1684, 0
      %v1706 = vsel %vm727, %v1685, 0
      %v1709 = vsel %vm727, %v1686, 0
      %v1712 = vsel %vm727, %v1687, 0
      %v1715 = vsel %vm727, %v1688, 0
      %v1718 = vsel %vm727, %v1689, 0
      %v1721 = vsel %vm727, %v1690, 0
      %v1724 = vsel %vm727, %v1691, 0
      %v1727 = vsel %vm727, %v1692, 0
      %v1730 = vsel %vm727, %v1693, 0
      %v1733 = vsel %vm727, %v1694, 0
      %v1736 = vsel %vm727, %v1695, 0
      %v1739 = vsel %vm727, %v1696, 0
      %v1742 = vsel %vm727, %v1697, 0
      %v1745 = vsel %vm727, %v1698, 0
      %v1748 = vsel %vm727, %v1699, 0
      %v1751 = vsel %vm981, %v1701, 0
      %1753 = vmatprep.subr.bf16.mxu0 0
      %1754 = vmatpush1.bf16.msra.mxu0 %v1751
      %1755 = vmatprep.subr.bf16.mxu0 0
      %1756 = vmatpush1.bf16.msra.mxu0 0
      %1757 = vmatprep.subr.bf16.mxu0 0
      %1758 = vmatpush1.bf16.msra.mxu0 0
      %1759 = vmatprep.subr.bf16.mxu0 0
      %1760 = vmatpush1.bf16.msra.mxu0 0
      %1761 = vmatprep.subr.bf16.mxu0 0
      %1762 = vmatpush1.bf16.msra.mxu0 0
      %1763 = vmatprep.subr.bf16.mxu0 0
      %1764 = vmatpush1.bf16.msra.mxu0 0
      %1765 = vmatprep.subr.bf16.mxu0 0
      %1766 = vmatpush1.bf16.msra.mxu0 0
      %1767 = vmatprep.subr.bf16.mxu0 0
      %1768 = vmatpush1.bf16.msra.mxu0 0
      %1769 = vmatprep.subr.bf16.mxu0 0
      %1770 = vmatpush1.bf16.msra.mxu0 0
      %1771 = vmatprep.subr.bf16.mxu0 0
      %1772 = vmatpush1.bf16.msra.mxu0 0
      %1773 = vmatprep.subr.bf16.mxu0 0
      %1774 = vmatpush1.bf16.msra.mxu0 0
      %1775 = vmatprep.subr.bf16.mxu0 0
      %1776 = vmatpush1.bf16.msra.mxu0 0
      %1777 = vmatprep.subr.bf16.mxu0 0
      %1778 = vmatpush1.bf16.msra.mxu0 0
      %1779 = vmatprep.subr.bf16.mxu0 0
      %1780 = vmatpush1.bf16.msra.mxu0 0
      %1781 = vmatprep.subr.bf16.mxu0 0
      %1782 = vmatpush1.bf16.msra.mxu0 0
      %1783 = vmatprep.subr.bf16.mxu0 0
      %1784 = vmatpush1.bf16.msra.mxu0 0
      %1785 = vmatprep.mubr.bf16.mxu0 0
      %1786 = vmatmul.mubr.bf16.gmra.mrb[0].mxu0 %v1703
      %v1787 = vpop.f32.mrb[0].mxu0
      %v1788 = vadd.f32 0.0, %v1787
      %v1789 = vpop.f32.mrb[0].mxu0
      %v1790 = vpop.f32.mrb[0].mxu0
      %v1791 = vadd.f32 0.0, %v1790
      %v1792 = vpop.f32.mrb[0].mxu0
      %1793 = vmatprep.mubr.bf16.mxu0 0
      %1794 = vmatmul.mubr.bf16.gmra.mrb[0].mxu0 %v1706
      %v1795 = vpop.f32.mrb[0].mxu0
      %v1796 = vadd.f32 0.0, %v1795
      %v1797 = vpop.f32.mrb[0].mxu0
      %v1798 = vpop.f32.mrb[0].mxu0
      %v1799 = vadd.f32 0.0, %v1798
      %v1800 = vpop.f32.mrb[0].mxu0
      %1801 = vmatprep.mubr.bf16.mxu0 0
      %1802 = vmatmul.mubr.bf16.gmra.mrb[0].mxu0 %v1709
      %v1803 = vpop.f32.mrb[0].mxu0
      %v1804 = vadd.f32 0.0, %v1803
      %v1805 = vpop.f32.mrb[0].mxu0
      %v1806 = vpop.f32.mrb[0].mxu0
      %v1807 = vadd.f32 0.0, %v1806
      %v1808 = vpop.f32.mrb[0].mxu0
      %1809 = vmatprep.mubr.bf16.mxu0 0
      %1810 = vmatmul.mubr.bf16.gmra.mrb[0].mxu0 %v1712
      %v1811 = vpop.f32.mrb[0].mxu0
      %v1812 = vadd.f32 0.0, %v1811
      %v1813 = vpop.f32.mrb[0].mxu0
      %v1814 = vpop.f32.mrb[0].mxu0
      %v1815 = vadd.f32 0.0, %v1814
      %v1816 = vpop.f32.mrb[0].mxu0
      %1817 = vmatprep.mubr.bf16.mxu0 0
      %1818 = vmatmul.mubr.bf16.gmra.mrb[0].mxu0 %v1715
      %v1819 = vpop.f32.mrb[0].mxu0
      %v1820 = vadd.f32 0.0, %v1819
      %v1821 = vpop.f32.mrb[0].mxu0
      %v1822 = vpop.f32.mrb[0].mxu0
      %v1823 = vadd.f32 0.0, %v1822
      %v1824 = vpop.f32.mrb[0].mxu0
      %1825 = vmatprep.mubr.bf16.mxu0 0
      %1826 = vmatmul.mubr.bf16.gmra.mrb[0].mxu0 %v1718
      %v1827 = vpop.f32.mrb[0].mxu0
      %v1828 = vadd.f32 0.0, %v1827
      %v1829 = vpop.f32.mrb[0].mxu0
      %v1830 = vpop.f32.mrb[0].mxu0
      %v1831 = vadd.f32 0.0, %v1830
      %v1832 = vpop.f32.mrb[0].mxu0
      %1833 = vmatprep.mubr.bf16.mxu0 0
      %1834 = vmatmul.mubr.bf16.gmra.mrb[0].mxu0 %v1721
      %v1835 = vpop.f32.mrb[0].mxu0
      %v1836 = vadd.f32 0.0, %v1835
      %v1837 = vpop.f32.mrb[0].mxu0
      %v1838 = vpop.f32.mrb[0].mxu0
      %v1839 = vadd.f32 0.0, %v1838
      %v1840 = vpop.f32.mrb[0].mxu0
      %1841 = vmatprep.mubr.bf16.mxu0 0
      %1842 = vmatmul.mubr.bf16.gmra.mrb[0].mxu0 %v1724
      %v1843 = vpop.f32.mrb[0].mxu0
      %v1844 = vadd.f32 0.0, %v1843
      %v1845 = vpop.f32.mrb[0].mxu0
      %v1846 = vpop.f32.mrb[0].mxu0
      %v1847 = vadd.f32 0.0, %v1846
      %v1848 = vpop.f32.mrb[0].mxu0
      %1849 = vmatprep.mubr.bf16.mxu0 0
      %1850 = vmatmul.mubr.bf16.gmra.mrb[0].mxu0 %v1727
      %v1851 = vpop.f32.mrb[0].mxu0
      %v1852 = vadd.f32 0.0, %v1851
      %v1853 = vpop.f32.mrb[0].mxu0
      %v1854 = vpop.f32.mrb[0].mxu0
      %v1855 = vadd.f32 0.0, %v1854
      %v1856 = vpop.f32.mrb[0].mxu0
      %1857 = vmatprep.mubr.bf16.mxu0 0
      %1858 = vmatmul.mubr.bf16.gmra.mrb[0].mxu0 %v1730
      %v1859 = vpop.f32.mrb[0].mxu0
      %v1860 = vadd.f32 0.0, %v1859
      %v1861 = vpop.f32.mrb[0].mxu0
      %v1862 = vpop.f32.mrb[0].mxu0
      %v1863 = vadd.f32 0.0, %v1862
      %v1864 = vpop.f32.mrb[0].mxu0
      %1865 = vmatprep.mubr.bf16.mxu0 0
      %1866 = vmatmul.mubr.bf16.gmra.mrb[0].mxu0 %v1733
      %v1867 = vpop.f32.mrb[0].mxu0
      %v1868 = vadd.f32 0.0, %v1867
      %v1869 = vpop.f32.mrb[0].mxu0
      %v1870 = vpop.f32.mrb[0].mxu0
      %v1871 = vadd.f32 0.0, %v1870
      %v1872 = vpop.f32.mrb[0].mxu0
      %1873 = vmatprep.mubr.bf16.mxu0 0
      %1874 = vmatmul.mubr.bf16.gmra.mrb[0].mxu0 %v1736
      %v1875 = vpop.f32.mrb[0].mxu0
      %v1876 = vadd.f32 0.0, %v1875
      %v1877 = vpop.f32.mrb[0].mxu0
      %v1878 = vpop.f32.mrb[0].mxu0
      %v1879 = vadd.f32 0.0, %v1878
      %v1880 = vpop.f32.mrb[0].mxu0
      %1881 = vmatprep.mubr.bf16.mxu0 0
      %1882 = vmatmul.mubr.bf16.gmra.mrb[0].mxu0 %v1739
      %v1883 = vpop.f32.mrb[0].mxu0
      %v1884 = vadd.f32 0.0, %v1883
      %v1885 = vpop.f32.mrb[0].mxu0
      %v1886 = vpop.f32.mrb[0].mxu0
      %v1887 = vadd.f32 0.0, %v1886
      %v1888 = vpop.f32.mrb[0].mxu0
      %1889 = vmatprep.mubr.bf16.mxu0 0
      %1890 = vmatmul.mubr.bf16.gmra.mrb[0].mxu0 %v1742
      %v1891 = vpop.f32.mrb[0].mxu0
      %v1892 = vadd.f32 0.0, %v1891
      %v1893 = vpop.f32.mrb[0].mxu0
      %v1894 = vpop.f32.mrb[0].mxu0
      %v1895 = vadd.f32 0.0, %v1894
      %v1896 = vpop.f32.mrb[0].mxu0
      %1897 = vmatprep.mubr.bf16.mxu0 0
      %1898 = vmatmul.mubr.bf16.gmra.mrb[0].mxu0 %v1745
      %v1899 = vpop.f32.mrb[0].mxu0
      %v1900 = vadd.f32 0.0, %v1899
      %v1901 = vpop.f32.mrb[0].mxu0
      %v1902 = vpop.f32.mrb[0].mxu0
      %v1903 = vadd.f32 0.0, %v1902
      %v1904 = vpop.f32.mrb[0].mxu0
      %1905 = vmatprep.mubr.bf16.mxu0 0
      %1906 = vmatmul.mubr.bf16.gmra.mrb[0].mxu0 %v1748
      %v1907 = vpop.f32.mrb[0].mxu0
      %v1908 = vadd.f32 0.0, %v1907
      %v1909 = vpop.f32.mrb[0].mxu0
      %v1910 = vpop.f32.mrb[0].mxu0
      %v1911 = vadd.f32 0.0, %v1910
      %v1912 = vpop.f32.mrb[0].mxu0
      %1913 = vdwg.mxu0
      %v1914 = vadd.f32 %v1620, %v1788
      %v1915 = vadd.f32 %v1621, %v1791
      %v1916 = vadd.f32 %v1622, %v1796
      %v1917 = vadd.f32 %v1623, %v1799
      %v1918 = vadd.f32 %v1624, %v1804
      %v1919 = vadd.f32 %v1625, %v1807
      %v1920 = vadd.f32 %v1626, %v1812
      %v1921 = vadd.f32 %v1627, %v1815
      %v1922 = vadd.f32 %v1628, %v1820
      %v1923 = vadd.f32 %v1629, %v1823
      %v1924 = vadd.f32 %v1630, %v1828
      %v1925 = vadd.f32 %v1631, %v1831
      %v1926 = vadd.f32 %v1632, %v1836
      %v1927 = vadd.f32 %v1633, %v1839
      %v1928 = vadd.f32 %v1634, %v1844
      %v1929 = vadd.f32 %v1635, %v1847
      %v1930 = vadd.f32 %v1636, %v1852
      %v1931 = vadd.f32 %v1637, %v1855
      %v1932 = vadd.f32 %v1638, %v1860
      %v1933 = vadd.f32 %v1639, %v1863
      %v1934 = vadd.f32 %v1640, %v1868
      %v1935 = vadd.f32 %v1641, %v1871
      %v1936 = vadd.f32 %v1642, %v1876
      %v1937 = vadd.f32 %v1643, %v1879
      %v1938 = vadd.f32 %v1644, %v1884
      %v1939 = vadd.f32 %v1645, %v1887
      %v1940 = vadd.f32 %v1646, %v1892
      %v1941 = vadd.f32 %v1647, %v1895
      %v1942 = vadd.f32 %v1648, %v1900
      %v1943 = vadd.f32 %v1649, %v1903
      %v1944 = vadd.f32 %v1650, %v1908
      %v1945 = vadd.f32 %v1651, %v1911
      %v1946 = vld [vmem:[%s801 + $0x8] sm:$0xff]
      %v1947 = vld [vmem:[%s801 + $0x10] sm:$0xff]
      %v1948 = vld [vmem:[%s801 + $0x28] sm:$0xff]
      %v1949 = vld [vmem:[%s801 + $0x30] sm:$0xff]
      %v1950 = vld [vmem:[%s801 + $0x48] sm:$0xff]
      %v1951 = vld [vmem:[%s801 + $0x50] sm:$0xff]
      %v1952 = vld [vmem:[%s801 + $0x68] sm:$0xff]
      %v1953 = vld [vmem:[%s801 + $0x70] sm:$0xff]
      %v1954 = vld [vmem:[%s801 + $0x88] sm:$0xff]
      %v1955 = vld [vmem:[%s801 + $0x90] sm:$0xff]
      %v1956 = vld [vmem:[%s801 + $0xa8] sm:$0xff]
      %v1957 = vld [vmem:[%s801 + $0xb0] sm:$0xff]
      %v1958 = vld [vmem:[%s801 + $0xc8] sm:$0xff]
      %v1959 = vld [vmem:[%s801 + $0xd0] sm:$0xff]
      %v1960 = vld [vmem:[%s801 + $0xe8] sm:$0xff]
      %v1961 = vld [vmem:[%s801 + $0xf0] sm:$0xff]
      %v1962 = vld [vmem:[%s801 + $0x108] sm:$0xff]
      %v1963 = vld [vmem:[%s801 + $0x110] sm:$0xff]
      %v1964 = vld [vmem:[%s801 + $0x128] sm:$0xff]
      %v1965 = vld [vmem:[%s801 + $0x130] sm:$0xff]
      %v1966 = vld [vmem:[%s801 + $0x148] sm:$0xff]
      %v1967 = vld [vmem:[%s801 + $0x150] sm:$0xff]
      %v1968 = vld [vmem:[%s801 + $0x168] sm:$0xff]
      %v1969 = vld [vmem:[%s801 + $0x170] sm:$0xff]
      %v1970 = vld [vmem:[%s801 + $0x188] sm:$0xff]
      %v1971 = vld [vmem:[%s801 + $0x190] sm:$0xff]
      %v1972 = vld [vmem:[%s801 + $0x1a8] sm:$0xff]
      %v1973 = vld [vmem:[%s801 + $0x1b0] sm:$0xff]
      %v1974 = vld [vmem:[%s801 + $0x1c8] sm:$0xff]
      %v1975 = vld [vmem:[%s801 + $0x1d0] sm:$0xff]
      %v1976 = vld [vmem:[%s801 + $0x1e8] sm:$0xff]
      %v1977 = vld [vmem:[%s801 + $0x1f0] sm:$0xff]
      %v1978 = vpack.c.bf16 %v1947, %v1946
      %v1979 = vpack.c.bf16 %v1949, %v1948
      %v1980 = vpack.c.bf16 %v1951, %v1950
      %v1981 = vpack.c.bf16 %v1953, %v1952
      %v1982 = vpack.c.bf16 %v1955, %v1954
      %v1983 = vpack.c.bf16 %v1957, %v1956
      %v1984 = vpack.c.bf16 %v1959, %v1958
      %v1985 = vpack.c.bf16 %v1961, %v1960
      %v1986 = vpack.c.bf16 %v1963, %v1962
      %v1987 = vpack.c.bf16 %v1965, %v1964
      %v1988 = vpack.c.bf16 %v1967, %v1966
      %v1989 = vpack.c.bf16 %v1969, %v1968
      %v1990 = vpack.c.bf16 %v1971, %v1970
      %v1991 = vpack.c.bf16 %v1973, %v1972
      %v1992 = vpack.c.bf16 %v1975, %v1974
      %v1993 = vpack.c.bf16 %v1977, %v1976
      %s1994 = scalar_lea.vmem %s5, 16
      %v1995 = vld [vmem:[%s1994] sm:$0xf]
      %v1997 = vsel %vm727, %v1978, 0
      %v2000 = vsel %vm727, %v1979, 0
      %v2003 = vsel %vm727, %v1980, 0
      %v2006 = vsel %vm727, %v1981, 0
      %v2009 = vsel %vm727, %v1982, 0
      %v2012 = vsel %vm727, %v1983, 0
      %v2015 = vsel %vm727, %v1984, 0
      %v2018 = vsel %vm727, %v1985, 0
      %v2021 = vsel %vm727, %v1986, 0
      %v2024 = vsel %vm727, %v1987, 0
      %v2027 = vsel %vm727, %v1988, 0
      %v2030 = vsel %vm727, %v1989, 0
      %v2033 = vsel %vm727, %v1990, 0
      %v2036 = vsel %vm727, %v1991, 0
      %v2039 = vsel %vm727, %v1992, 0
      %v2042 = vsel %vm727, %v1993, 0
      %v2045 = vsel %vm981, %v1995, 0
      %2047 = vmatprep.subr.bf16.mxu0 0
      %2048 = vmatpush1.bf16.msra.mxu0 %v2045
      %2049 = vmatprep.subr.bf16.mxu0 0
      %2050 = vmatpush1.bf16.msra.mxu0 0
      %2051 = vmatprep.subr.bf16.mxu0 0
      %2052 = vmatpush1.bf16.msra.mxu0 0
      %2053 = vmatprep.subr.bf16.mxu0 0
      %2054 = vmatpush1.bf16.msra.mxu0 0
      %2055 = vmatprep.subr.bf16.mxu0 0
      %2056 = vmatpush1.bf16.msra.mxu0 0
      %2057 = vmatprep.subr.bf16.mxu0 0
      %2058 = vmatpush1.bf16.msra.mxu0 0
      %2059 = vmatprep.subr.bf16.mxu0 0
      %2060 = vmatpush1.bf16.msra.mxu0 0
      %2061 = vmatprep.subr.bf16.mxu0 0
      %2062 = vmatpush1.bf16.msra.mxu0 0
      %2063 = vmatprep.subr.bf16.mxu0 0
      %2064 = vmatpush1.bf16.msra.mxu0 0
      %2065 = vmatprep.subr.bf16.mxu0 0
      %2066 = vmatpush1.bf16.msra.mxu0 0
      %2067 = vmatprep.subr.bf16.mxu0 0
      %2068 = vmatpush1.bf16.msra.mxu0 0
      %2069 = vmatprep.subr.bf16.mxu0 0
      %2070 = vmatpush1.bf16.msra.mxu0 0
      %2071 = vmatprep.subr.bf16.mxu0 0
      %2072 = vmatpush1.bf16.msra.mxu0 0
      %2073 = vmatprep.subr.bf16.mxu0 0
      %2074 = vmatpush1.bf16.msra.mxu0 0
      %2075 = vmatprep.subr.bf16.mxu0 0
      %2076 = vmatpush1.bf16.msra.mxu0 0
      %2077 = vmatprep.subr.bf16.mxu0 0
      %2078 = vmatpush1.bf16.msra.mxu0 0
      %2079 = vmatprep.mubr.bf16.mxu0 0
      %2080 = vmatmul.mubr.bf16.gmra.mrb[0].mxu0 %v1997
      %v2081 = vpop.f32.mrb[0].mxu0
      %v2082 = vadd.f32 0.0, %v2081
      %v2083 = vpop.f32.mrb[0].mxu0
      %v2084 = vpop.f32.mrb[0].mxu0
      %v2085 = vadd.f32 0.0, %v2084
      %v2086 = vpop.f32.mrb[0].mxu0
      %2087 = vmatprep.mubr.bf16.mxu0 0
      %2088 = vmatmul.mubr.bf16.gmra.mrb[0].mxu0 %v2000
      %v2089 = vpop.f32.mrb[0].mxu0
      %v2090 = vadd.f32 0.0, %v2089
      %v2091 = vpop.f32.mrb[0].mxu0
      %v2092 = vpop.f32.mrb[0].mxu0
      %v2093 = vadd.f32 0.0, %v2092
      %v2094 = vpop.f32.mrb[0].mxu0
      %2095 = vmatprep.mubr.bf16.mxu0 0
      %2096 = vmatmul.mubr.bf16.gmra.mrb[0].mxu0 %v2003
      %v2097 = vpop.f32.mrb[0].mxu0
      %v2098 = vadd.f32 0.0, %v2097
      %v2099 = vpop.f32.mrb[0].mxu0
      %v2100 = vpop.f32.mrb[0].mxu0
      %v2101 = vadd.f32 0.0, %v2100
      %v2102 = vpop.f32.mrb[0].mxu0
      %2103 = vmatprep.mubr.bf16.mxu0 0
      %2104 = vmatmul.mubr.bf16.gmra.mrb[0].mxu0 %v2006
      %v2105 = vpop.f32.mrb[0].mxu0
      %v2106 = vadd.f32 0.0, %v2105
      %v2107 = vpop.f32.mrb[0].mxu0
      %v2108 = vpop.f32.mrb[0].mxu0
      %v2109 = vadd.f32 0.0, %v2108
      %v2110 = vpop.f32.mrb[0].mxu0
      %2111 = vmatprep.mubr.bf16.mxu0 0
      %2112 = vmatmul.mubr.bf16.gmra.mrb[0].mxu0 %v2009
      %v2113 = vpop.f32.mrb[0].mxu0
      %v2114 = vadd.f32 0.0, %v2113
      %v2115 = vpop.f32.mrb[0].mxu0
      %v2116 = vpop.f32.mrb[0].mxu0
      %v2117 = vadd.f32 0.0, %v2116
      %v2118 = vpop.f32.mrb[0].mxu0
      %2119 = vmatprep.mubr.bf16.mxu0 0
      %2120 = vmatmul.mubr.bf16.gmra.mrb[0].mxu0 %v2012
      %v2121 = vpop.f32.mrb[0].mxu0
      %v2122 = vadd.f32 0.0, %v2121
      %v2123 = vpop.f32.mrb[0].mxu0
      %v2124 = vpop.f32.mrb[0].mxu0
      %v2125 = vadd.f32 0.0, %v2124
      %v2126 = vpop.f32.mrb[0].mxu0
      %2127 = vmatprep.mubr.bf16.mxu0 0
      %2128 = vmatmul.mubr.bf16.gmra.mrb[0].mxu0 %v2015
      %v2129 = vpop.f32.mrb[0].mxu0
      %v2130 = vadd.f32 0.0, %v2129
      %v2131 = vpop.f32.mrb[0].mxu0
      %v2132 = vpop.f32.mrb[0].mxu0
      %v2133 = vadd.f32 0.0, %v2132
      %v2134 = vpop.f32.mrb[0].mxu0
      %2135 = vmatprep.mubr.bf16.mxu0 0
      %2136 = vmatmul.mubr.bf16.gmra.mrb[0].mxu0 %v2018
      %v2137 = vpop.f32.mrb[0].mxu0
      %v2138 = vadd.f32 0.0, %v2137
      %v2139 = vpop.f32.mrb[0].mxu0
      %v2140 = vpop.f32.mrb[0].mxu0
      %v2141 = vadd.f32 0.0, %v2140
      %v2142 = vpop.f32.mrb[0].mxu0
      %2143 = vmatprep.mubr.bf16.mxu0 0
      %2144 = vmatmul.mubr.bf16.gmra.mrb[0].mxu0 %v2021
      %v2145 = vpop.f32.mrb[0].mxu0
      %v2146 = vadd.f32 0.0, %v2145
      %v2147 = vpop.f32.mrb[0].mxu0
      %v2148 = vpop.f32.mrb[0].mxu0
      %v2149 = vadd.f32 0.0, %v2148
      %v2150 = vpop.f32.mrb[0].mxu0
      %2151 = vmatprep.mubr.bf16.mxu0 0
      %2152 = vmatmul.mubr.bf16.gmra.mrb[0].mxu0 %v2024
      %v2153 = vpop.f32.mrb[0].mxu0
      %v2154 = vadd.f32 0.0, %v2153
      %v2155 = vpop.f32.mrb[0].mxu0
      %v2156 = vpop.f32.mrb[0].mxu0
      %v2157 = vadd.f32 0.0, %v2156
      %v2158 = vpop.f32.mrb[0].mxu0
      %2159 = vmatprep.mubr.bf16.mxu0 0
      %2160 = vmatmul.mubr.bf16.gmra.mrb[0].mxu0 %v2027
      %v2161 = vpop.f32.mrb[0].mxu0
      %v2162 = vadd.f32 0.0, %v2161
      %v2163 = vpop.f32.mrb[0].mxu0
      %v2164 = vpop.f32.mrb[0].mxu0
      %v2165 = vadd.f32 0.0, %v2164
      %v2166 = vpop.f32.mrb[0].mxu0
      %2167 = vmatprep.mubr.bf16.mxu0 0
      %2168 = vmatmul.mubr.bf16.gmra.mrb[0].mxu0 %v2030
      %v2169 = vpop.f32.mrb[0].mxu0
      %v2170 = vadd.f32 0.0, %v2169
      %v2171 = vpop.f32.mrb[0].mxu0
      %v2172 = vpop.f32.mrb[0].mxu0
      %v2173 = vadd.f32 0.0, %v2172
      %v2174 = vpop.f32.mrb[0].mxu0
      %2175 = vmatprep.mubr.bf16.mxu0 0
      %2176 = vmatmul.mubr.bf16.gmra.mrb[0].mxu0 %v2033
      %v2177 = vpop.f32.mrb[0].mxu0
      %v2178 = vadd.f32 0.0, %v2177
      %v2179 = vpop.f32.mrb[0].mxu0
      %v2180 = vpop.f32.mrb[0].mxu0
      %v2181 = vadd.f32 0.0, %v2180
      %v2182 = vpop.f32.mrb[0].mxu0
      %2183 = vmatprep.mubr.bf16.mxu0 0
      %2184 = vmatmul.mubr.bf16.gmra.mrb[0].mxu0 %v2036
      %v2185 = vpop.f32.mrb[0].mxu0
      %v2186 = vadd.f32 0.0, %v2185
      %v2187 = vpop.f32.mrb[0].mxu0
      %v2188 = vpop.f32.mrb[0].mxu0
      %v2189 = vadd.f32 0.0, %v2188
      %v2190 = vpop.f32.mrb[0].mxu0
      %2191 = vmatprep.mubr.bf16.mxu0 0
      %2192 = vmatmul.mubr.bf16.gmra.mrb[0].mxu0 %v2039
      %v2193 = vpop.f32.mrb[0].mxu0
      %v2194 = vadd.f32 0.0, %v2193
      %v2195 = vpop.f32.mrb[0].mxu0
      %v2196 = vpop.f32.mrb[0].mxu0
      %v2197 = vadd.f32 0.0, %v2196
      %v2198 = vpop.f32.mrb[0].mxu0
      %2199 = vmatprep.mubr.bf16.mxu0 0
      %2200 = vmatmul.mubr.bf16.gmra.mrb[0].mxu0 %v2042
      %v2201 = vpop.f32.mrb[0].mxu0
      %v2202 = vadd.f32 0.0, %v2201
      %v2203 = vpop.f32.mrb[0].mxu0
      %v2204 = vpop.f32.mrb[0].mxu0
      %v2205 = vadd.f32 0.0, %v2204
      %v2206 = vpop.f32.mrb[0].mxu0
      %2207 = vdwg.mxu0
      %v2208 = vadd.f32 %v1914, %v2082
      %v2209 = vadd.f32 %v1915, %v2085
      %v2210 = vadd.f32 %v1916, %v2090
      %v2211 = vadd.f32 %v1917, %v2093
      %v2212 = vadd.f32 %v1918, %v2098
      %v2213 = vadd.f32 %v1919, %v2101
      %v2214 = vadd.f32 %v1920, %v2106
      %v2215 = vadd.f32 %v1921, %v2109
      %v2216 = vadd.f32 %v1922, %v2114
      %v2217 = vadd.f32 %v1923, %v2117
      %v2218 = vadd.f32 %v1924, %v2122
      %v2219 = vadd.f32 %v1925, %v2125
      %v2220 = vadd.f32 %v1926, %v2130
      %v2221 = vadd.f32 %v1927, %v2133
      %v2222 = vadd.f32 %v1928, %v2138
      %v2223 = vadd.f32 %v1929, %v2141
      %v2224 = vadd.f32 %v1930, %v2146
      %v2225 = vadd.f32 %v1931, %v2149
      %v2226 = vadd.f32 %v1932, %v2154
      %v2227 = vadd.f32 %v1933, %v2157
      %v2228 = vadd.f32 %v1934, %v2162
      %v2229 = vadd.f32 %v1935, %v2165
      %v2230 = vadd.f32 %v1936, %v2170
      %v2231 = vadd.f32 %v1937, %v2173
      %v2232 = vadd.f32 %v1938, %v2178
      %v2233 = vadd.f32 %v1939, %v2181
      %v2234 = vadd.f32 %v1940, %v2186
      %v2235 = vadd.f32 %v1941, %v2189
      %v2236 = vadd.f32 %v1942, %v2194
      %v2237 = vadd.f32 %v1943, %v2197
      %v2238 = vadd.f32 %v1944, %v2202
      %v2239 = vadd.f32 %v1945, %v2205
      %v2240 = vld [vmem:[%s801 + $0x9] sm:$0xff]
      %v2241 = vld [vmem:[%s801 + $0x11] sm:$0xff]
      %v2242 = vld [vmem:[%s801 + $0x29] sm:$0xff]
      %v2243 = vld [vmem:[%s801 + $0x31] sm:$0xff]
      %v2244 = vld [vmem:[%s801 + $0x49] sm:$0xff]
      %v2245 = vld [vmem:[%s801 + $0x51] sm:$0xff]
      %v2246 = vld [vmem:[%s801 + $0x69] sm:$0xff]
      %v2247 = vld [vmem:[%s801 + $0x71] sm:$0xff]
      %v2248 = vld [vmem:[%s801 + $0x89] sm:$0xff]
      %v2249 = vld [vmem:[%s801 + $0x91] sm:$0xff]
      %v2250 = vld [vmem:[%s801 + $0xa9] sm:$0xff]
      %v2251 = vld [vmem:[%s801 + $0xb1] sm:$0xff]
      %v2252 = vld [vmem:[%s801 + $0xc9] sm:$0xff]
      %v2253 = vld [vmem:[%s801 + $0xd1] sm:$0xff]
      %v2254 = vld [vmem:[%s801 + $0xe9] sm:$0xff]
      %v2255 = vld [vmem:[%s801 + $0xf1] sm:$0xff]
      %v2256 = vld [vmem:[%s801 + $0x109] sm:$0xff]
      %v2257 = vld [vmem:[%s801 + $0x111] sm:$0xff]
      %v2258 = vld [vmem:[%s801 + $0x129] sm:$0xff]
      %v2259 = vld [vmem:[%s801 + $0x131] sm:$0xff]
      %v2260 = vld [vmem:[%s801 + $0x149] sm:$0xff]
      %v2261 = vld [vmem:[%s801 + $0x151] sm:$0xff]
      %v2262 = vld [vmem:[%s801 + $0x169] sm:$0xff]
      %v2263 = vld [vmem:[%s801 + $0x171] sm:$0xff]
      %v2264 = vld [vmem:[%s801 + $0x189] sm:$0xff]
      %v2265 = vld [vmem:[%s801 + $0x191] sm:$0xff]
      %v2266 = vld [vmem:[%s801 + $0x1a9] sm:$0xff]
      %v2267 = vld [vmem:[%s801 + $0x1b1] sm:$0xff]
      %v2268 = vld [vmem:[%s801 + $0x1c9] sm:$0xff]
      %v2269 = vld [vmem:[%s801 + $0x1d1] sm:$0xff]
      %v2270 = vld [vmem:[%s801 + $0x1e9] sm:$0xff]
      %v2271 = vld [vmem:[%s801 + $0x1f1] sm:$0xff]
      %v2272 = vpack.c.bf16 %v2241, %v2240
      %v2273 = vpack.c.bf16 %v2243, %v2242
      %v2274 = vpack.c.bf16 %v2245, %v2244
      %v2275 = vpack.c.bf16 %v2247, %v2246
      %v2276 = vpack.c.bf16 %v2249, %v2248
      %v2277 = vpack.c.bf16 %v2251, %v2250
      %v2278 = vpack.c.bf16 %v2253, %v2252
      %v2279 = vpack.c.bf16 %v2255, %v2254
      %v2280 = vpack.c.bf16 %v2257, %v2256
      %v2281 = vpack.c.bf16 %v2259, %v2258
      %v2282 = vpack.c.bf16 %v2261, %v2260
      %v2283 = vpack.c.bf16 %v2263, %v2262
      %v2284 = vpack.c.bf16 %v2265, %v2264
      %v2285 = vpack.c.bf16 %v2267, %v2266
      %v2286 = vpack.c.bf16 %v2269, %v2268
      %v2287 = vpack.c.bf16 %v2271, %v2270
      %s2288 = scalar_lea.vmem %s5, 20
      %v2289 = vld [vmem:[%s2288] sm:$0xf]
      %v2291 = vsel %vm727, %v2272, 0
      %v2294 = vsel %vm727, %v2273, 0
      %v2297 = vsel %vm727, %v2274, 0
      %v2300 = vsel %vm727, %v2275, 0
      %v2303 = vsel %vm727, %v2276, 0
      %v2306 = vsel %vm727, %v2277, 0
      %v2309 = vsel %vm727, %v2278, 0
      %v2312 = vsel %vm727, %v2279, 0
      %v2315 = vsel %vm727, %v2280, 0
      %v2318 = vsel %vm727, %v2281, 0
      %v2321 = vsel %vm727, %v2282, 0
      %v2324 = vsel %vm727, %v2283, 0
      %v2327 = vsel %vm727, %v2284, 0
      %v2330 = vsel %vm727, %v2285, 0
      %v2333 = vsel %vm727, %v2286, 0
      %v2336 = vsel %vm727, %v2287, 0
      %v2339 = vsel %vm981, %v2289, 0
      %2341 = vmatprep.subr.bf16.mxu0 0
      %2342 = vmatpush1.bf16.msra.mxu0 %v2339
      %2343 = vmatprep.subr.bf16.mxu0 0
      %2344 = vmatpush1.bf16.msra.mxu0 0
      %2345 = vmatprep.subr.bf16.mxu0 0
      %2346 = vmatpush1.bf16.msra.mxu0 0
      %2347 = vmatprep.subr.bf16.mxu0 0
      %2348 = vmatpush1.bf16.msra.mxu0 0
      %2349 = vmatprep.subr.bf16.mxu0 0
      %2350 = vmatpush1.bf16.msra.mxu0 0
      %2351 = vmatprep.subr.bf16.mxu0 0
      %2352 = vmatpush1.bf16.msra.mxu0 0
      %2353 = vmatprep.subr.bf16.mxu0 0
      %2354 = vmatpush1.bf16.msra.mxu0 0
      %2355 = vmatprep.subr.bf16.mxu0 0
      %2356 = vmatpush1.bf16.msra.mxu0 0
      %2357 = vmatprep.subr.bf16.mxu0 0
      %2358 = vmatpush1.bf16.msra.mxu0 0
      %2359 = vmatprep.subr.bf16.mxu0 0
      %2360 = vmatpush1.bf16.msra.mxu0 0
      %2361 = vmatprep.subr.bf16.mxu0 0
      %2362 = vmatpush1.bf16.msra.mxu0 0
      %2363 = vmatprep.subr.bf16.mxu0 0
      %2364 = vmatpush1.bf16.msra.mxu0 0
      %2365 = vmatprep.subr.bf16.mxu0 0
      %2366 = vmatpush1.bf16.msra.mxu0 0
      %2367 = vmatprep.subr.bf16.mxu0 0
      %2368 = vmatpush1.bf16.msra.mxu0 0
      %2369 = vmatprep.subr.bf16.mxu0 0
      %2370 = vmatpush1.bf16.msra.mxu0 0
      %2371 = vmatprep.subr.bf16.mxu0 0
      %2372 = vmatpush1.bf16.msra.mxu0 0
      %2373 = vmatprep.mubr.bf16.mxu0 0
      %2374 = vmatmul.mubr.bf16.gmra.mrb[0].mxu0 %v2291
      %v2375 = vpop.f32.mrb[0].mxu0
      %v2376 = vadd.f32 0.0, %v2375
      %v2377 = vpop.f32.mrb[0].mxu0
      %v2378 = vpop.f32.mrb[0].mxu0
      %v2379 = vadd.f32 0.0, %v2378
      %v2380 = vpop.f32.mrb[0].mxu0
      %2381 = vmatprep.mubr.bf16.mxu0 0
      %2382 = vmatmul.mubr.bf16.gmra.mrb[0].mxu0 %v2294
      %v2383 = vpop.f32.mrb[0].mxu0
      %v2384 = vadd.f32 0.0, %v2383
      %v2385 = vpop.f32.mrb[0].mxu0
      %v2386 = vpop.f32.mrb[0].mxu0
      %v2387 = vadd.f32 0.0, %v2386
      %v2388 = vpop.f32.mrb[0].mxu0
      %2389 = vmatprep.mubr.bf16.mxu0 0
      %2390 = vmatmul.mubr.bf16.gmra.mrb[0].mxu0 %v2297
      %v2391 = vpop.f32.mrb[0].mxu0
      %v2392 = vadd.f32 0.0, %v2391
      %v2393 = vpop.f32.mrb[0].mxu0
      %v2394 = vpop.f32.mrb[0].mxu0
      %v2395 = vadd.f32 0.0, %v2394
      %v2396 = vpop.f32.mrb[0].mxu0
      %2397 = vmatprep.mubr.bf16.mxu0 0
      %2398 = vmatmul.mubr.bf16.gmra.mrb[0].mxu0 %v2300
      %v2399 = vpop.f32.mrb[0].mxu0
      %v2400 = vadd.f32 0.0, %v2399
      %v2401 = vpop.f32.mrb[0].mxu0
      %v2402 = vpop.f32.mrb[0].mxu0
      %v2403 = vadd.f32 0.0, %v2402
      %v2404 = vpop.f32.mrb[0].mxu0
      %2405 = vmatprep.mubr.bf16.mxu0 0
      %2406 = vmatmul.mubr.bf16.gmra.mrb[0].mxu0 %v2303
      %v2407 = vpop.f32.mrb[0].mxu0
      %v2408 = vadd.f32 0.0, %v2407
      %v2409 = vpop.f32.mrb[0].mxu0
      %v2410 = vpop.f32.mrb[0].mxu0
      %v2411 = vadd.f32 0.0, %v2410
      %v2412 = vpop.f32.mrb[0].mxu0
      %2413 = vmatprep.mubr.bf16.mxu0 0
      %2414 = vmatmul.mubr.bf16.gmra.mrb[0].mxu0 %v2306
      %v2415 = vpop.f32.mrb[0].mxu0
      %v2416 = vadd.f32 0.0, %v2415
      %v2417 = vpop.f32.mrb[0].mxu0
      %v2418 = vpop.f32.mrb[0].mxu0
      %v2419 = vadd.f32 0.0, %v2418
      %v2420 = vpop.f32.mrb[0].mxu0
      %2421 = vmatprep.mubr.bf16.mxu0 0
      %2422 = vmatmul.mubr.bf16.gmra.mrb[0].mxu0 %v2309
      %v2423 = vpop.f32.mrb[0].mxu0
      %v2424 = vadd.f32 0.0, %v2423
      %v2425 = vpop.f32.mrb[0].mxu0
      %v2426 = vpop.f32.mrb[0].mxu0
      %v2427 = vadd.f32 0.0, %v2426
      %v2428 = vpop.f32.mrb[0].mxu0
      %2429 = vmatprep.mubr.bf16.mxu0 0
      %2430 = vmatmul.mubr.bf16.gmra.mrb[0].mxu0 %v2312
      %v2431 = vpop.f32.mrb[0].mxu0
      %v2432 = vadd.f32 0.0, %v2431
      %v2433 = vpop.f32.mrb[0].mxu0
      %v2434 = vpop.f32.mrb[0].mxu0
      %v2435 = vadd.f32 0.0, %v2434
      %v2436 = vpop.f32.mrb[0].mxu0
      %2437 = vmatprep.mubr.bf16.mxu0 0
      %2438 = vmatmul.mubr.bf16.gmra.mrb[0].mxu0 %v2315
      %v2439 = vpop.f32.mrb[0].mxu0
      %v2440 = vadd.f32 0.0, %v2439
      %v2441 = vpop.f32.mrb[0].mxu0
      %v2442 = vpop.f32.mrb[0].mxu0
      %v2443 = vadd.f32 0.0, %v2442
      %v2444 = vpop.f32.mrb[0].mxu0
      %2445 = vmatprep.mubr.bf16.mxu0 0
      %2446 = vmatmul.mubr.bf16.gmra.mrb[0].mxu0 %v2318
      %v2447 = vpop.f32.mrb[0].mxu0
      %v2448 = vadd.f32 0.0, %v2447
      %v2449 = vpop.f32.mrb[0].mxu0
      %v2450 = vpop.f32.mrb[0].mxu0
      %v2451 = vadd.f32 0.0, %v2450
      %v2452 = vpop.f32.mrb[0].mxu0
      %2453 = vmatprep.mubr.bf16.mxu0 0
      %2454 = vmatmul.mubr.bf16.gmra.mrb[0].mxu0 %v2321
      %v2455 = vpop.f32.mrb[0].mxu0
      %v2456 = vadd.f32 0.0, %v2455
      %v2457 = vpop.f32.mrb[0].mxu0
      %v2458 = vpop.f32.mrb[0].mxu0
      %v2459 = vadd.f32 0.0, %v2458
      %v2460 = vpop.f32.mrb[0].mxu0
      %2461 = vmatprep.mubr.bf16.mxu0 0
      %2462 = vmatmul.mubr.bf16.gmra.mrb[0].mxu0 %v2324
      %v2463 = vpop.f32.mrb[0].mxu0
      %v2464 = vadd.f32 0.0, %v2463
      %v2465 = vpop.f32.mrb[0].mxu0
      %v2466 = vpop.f32.mrb[0].mxu0
      %v2467 = vadd.f32 0.0, %v2466
      %v2468 = vpop.f32.mrb[0].mxu0
      %2469 = vmatprep.mubr.bf16.mxu0 0
      %2470 = vmatmul.mubr.bf16.gmra.mrb[0].mxu0 %v2327
      %v2471 = vpop.f32.mrb[0].mxu0
      %v2472 = vadd.f32 0.0, %v2471
      %v2473 = vpop.f32.mrb[0].mxu0
      %v2474 = vpop.f32.mrb[0].mxu0
      %v2475 = vadd.f32 0.0, %v2474
      %v2476 = vpop.f32.mrb[0].mxu0
      %2477 = vmatprep.mubr.bf16.mxu0 0
      %2478 = vmatmul.mubr.bf16.gmra.mrb[0].mxu0 %v2330
      %v2479 = vpop.f32.mrb[0].mxu0
      %v2480 = vadd.f32 0.0, %v2479
      %v2481 = vpop.f32.mrb[0].mxu0
      %v2482 = vpop.f32.mrb[0].mxu0
      %v2483 = vadd.f32 0.0, %v2482
      %v2484 = vpop.f32.mrb[0].mxu0
      %2485 = vmatprep.mubr.bf16.mxu0 0
      %2486 = vmatmul.mubr.bf16.gmra.mrb[0].mxu0 %v2333
      %v2487 = vpop.f32.mrb[0].mxu0
      %v2488 = vadd.f32 0.0, %v2487
      %v2489 = vpop.f32.mrb[0].mxu0
      %v2490 = vpop.f32.mrb[0].mxu0
      %v2491 = vadd.f32 0.0, %v2490
      %v2492 = vpop.f32.mrb[0].mxu0
      %2493 = vmatprep.mubr.bf16.mxu0 0
      %2494 = vmatmul.mubr.bf16.gmra.mrb[0].mxu0 %v2336
      %v2495 = vpop.f32.mrb[0].mxu0
      %v2496 = vadd.f32 0.0, %v2495
      %v2497 = vpop.f32.mrb[0].mxu0
      %v2498 = vpop.f32.mrb[0].mxu0
      %v2499 = vadd.f32 0.0, %v2498
      %v2500 = vpop.f32.mrb[0].mxu0
      %2501 = vdwg.mxu0
      %v2502 = vadd.f32 %v2208, %v2376
      %v2503 = vadd.f32 %v2209, %v2379
      %v2504 = vadd.f32 %v2210, %v2384
      %v2505 = vadd.f32 %v2211, %v2387
      %v2506 = vadd.f32 %v2212, %v2392
      %v2507 = vadd.f32 %v2213, %v2395
      %v2508 = vadd.f32 %v2214, %v2400
      %v2509 = vadd.f32 %v2215, %v2403
      %v2510 = vadd.f32 %v2216, %v2408
      %v2511 = vadd.f32 %v2217, %v2411
      %v2512 = vadd.f32 %v2218, %v2416
      %v2513 = vadd.f32 %v2219, %v2419
      %v2514 = vadd.f32 %v2220, %v2424
      %v2515 = vadd.f32 %v2221, %v2427
      %v2516 = vadd.f32 %v2222, %v2432
      %v2517 = vadd.f32 %v2223, %v2435
      %v2518 = vadd.f32 %v2224, %v2440
      %v2519 = vadd.f32 %v2225, %v2443
      %v2520 = vadd.f32 %v2226, %v2448
      %v2521 = vadd.f32 %v2227, %v2451
      %v2522 = vadd.f32 %v2228, %v2456
      %v2523 = vadd.f32 %v2229, %v2459
      %v2524 = vadd.f32 %v2230, %v2464
      %v2525 = vadd.f32 %v2231, %v2467
      %v2526 = vadd.f32 %v2232, %v2472
      %v2527 = vadd.f32 %v2233, %v2475
      %v2528 = vadd.f32 %v2234, %v2480
      %v2529 = vadd.f32 %v2235, %v2483
      %v2530 = vadd.f32 %v2236, %v2488
      %v2531 = vadd.f32 %v2237, %v2491
      %v2532 = vadd.f32 %v2238, %v2496
      %v2533 = vadd.f32 %v2239, %v2499
      %s2534 = scalar_lea.vmem [#allocation2], 64
      %v2535 = vld [vmem:[%s2534 + $0x7] sm:$0xff]
      %v2536 = vld [vmem:[%s2534 + $0xf] sm:$0xff]
      %v2537 = vld [vmem:[%s2534 + $0x27] sm:$0xff]
      %v2538 = vld [vmem:[%s2534 + $0x2f] sm:$0xff]
      %v2539 = vld [vmem:[%s2534 + $0x47] sm:$0xff]
      %v2540 = vld [vmem:[%s2534 + $0x4f] sm:$0xff]
      %v2541 = vld [vmem:[%s2534 + $0x67] sm:$0xff]
      %v2542 = vld [vmem:[%s2534 + $0x6f] sm:$0xff]
      %v2543 = vld [vmem:[%s2534 + $0x87] sm:$0xff]
      %v2544 = vld [vmem:[%s2534 + $0x8f] sm:$0xff]
      %v2545 = vld [vmem:[%s2534 + $0xa7] sm:$0xff]
      %v2546 = vld [vmem:[%s2534 + $0xaf] sm:$0xff]
      %v2547 = vld [vmem:[%s2534 + $0xc7] sm:$0xff]
      %v2548 = vld [vmem:[%s2534 + $0xcf] sm:$0xff]
      %v2549 = vld [vmem:[%s2534 + $0xe7] sm:$0xff]
      %v2550 = vld [vmem:[%s2534 + $0xef] sm:$0xff]
      %v2551 = vld [vmem:[%s2534 + $0x107] sm:$0xff]
      %v2552 = vld [vmem:[%s2534 + $0x10f] sm:$0xff]
      %v2553 = vld [vmem:[%s2534 + $0x127] sm:$0xff]
      %v2554 = vld [vmem:[%s2534 + $0x12f] sm:$0xff]
      %v2555 = vld [vmem:[%s2534 + $0x147] sm:$0xff]
      %v2556 = vld [vmem:[%s2534 + $0x14f] sm:$0xff]
      %v2557 = vld [vmem:[%s2534 + $0x167] sm:$0xff]
      %v2558 = vld [vmem:[%s2534 + $0x16f] sm:$0xff]
      %v2559 = vld [vmem:[%s2534 + $0x187] sm:$0xff]
      %v2560 = vld [vmem:[%s2534 + $0x18f] sm:$0xff]
      %v2561 = vld [vmem:[%s2534 + $0x1a7] sm:$0xff]
      %v2562 = vld [vmem:[%s2534 + $0x1af] sm:$0xff]
      %v2563 = vld [vmem:[%s2534 + $0x1c7] sm:$0xff]
      %v2564 = vld [vmem:[%s2534 + $0x1cf] sm:$0xff]
      %v2565 = vld [vmem:[%s2534 + $0x1e7] sm:$0xff]
      %v2566 = vld [vmem:[%s2534 + $0x1ef] sm:$0xff]
      %v2567 = vpack.c.bf16 %v2536, %v2535
      %v2568 = vpack.c.bf16 %v2538, %v2537
      %v2569 = vpack.c.bf16 %v2540, %v2539
      %v2570 = vpack.c.bf16 %v2542, %v2541
      %v2571 = vpack.c.bf16 %v2544, %v2543
      %v2572 = vpack.c.bf16 %v2546, %v2545
      %v2573 = vpack.c.bf16 %v2548, %v2547
      %v2574 = vpack.c.bf16 %v2550, %v2549
      %v2575 = vpack.c.bf16 %v2552, %v2551
      %v2576 = vpack.c.bf16 %v2554, %v2553
      %v2577 = vpack.c.bf16 %v2556, %v2555
      %v2578 = vpack.c.bf16 %v2558, %v2557
      %v2579 = vpack.c.bf16 %v2560, %v2559
      %v2580 = vpack.c.bf16 %v2562, %v2561
      %v2581 = vpack.c.bf16 %v2564, %v2563
      %v2582 = vpack.c.bf16 %v2566, %v2565
      %s2583 = scalar_lea.vmem %s5, 24
      %v2584 = vld [vmem:[%s2583] sm:$0xf]
      %v2586 = vsel %vm727, %v2567, 0
      %v2589 = vsel %vm727, %v2568, 0
      %v2592 = vsel %vm727, %v2569, 0
      %v2595 = vsel %vm727, %v2570, 0
      %v2598 = vsel %vm727, %v2571, 0
      %v2601 = vsel %vm727, %v2572, 0
      %v2604 = vsel %vm727, %v2573, 0
      %v2607 = vsel %vm727, %v2574, 0
      %v2610 = vsel %vm727, %v2575, 0
      %v2613 = vsel %vm727, %v2576, 0
      %v2616 = vsel %vm727, %v2577, 0
      %v2619 = vsel %vm727, %v2578, 0
      %v2622 = vsel %vm727, %v2579, 0
      %v2625 = vsel %vm727, %v2580, 0
      %v2628 = vsel %vm727, %v2581, 0
      %v2631 = vsel %vm727, %v2582, 0
      %v2634 = vsel %vm981, %v2584, 0
      %2636 = vmatprep.subr.bf16.mxu0 0
      %2637 = vmatpush1.bf16.msra.mxu0 %v2634
      %2638 = vmatprep.subr.bf16.mxu0 0
      %2639 = vmatpush1.bf16.msra.mxu0 0
      %2640 = vmatprep.subr.bf16.mxu0 0
      %2641 = vmatpush1.bf16.msra.mxu0 0
      %2642 = vmatprep.subr.bf16.mxu0 0
      %2643 = vmatpush1.bf16.msra.mxu0 0
      %2644 = vmatprep.subr.bf16.mxu0 0
      %2645 = vmatpush1.bf16.msra.mxu0 0
      %2646 = vmatprep.subr.bf16.mxu0 0
      %2647 = vmatpush1.bf16.msra.mxu0 0
      %2648 = vmatprep.subr.bf16.mxu0 0
      %2649 = vmatpush1.bf16.msra.mxu0 0
      %2650 = vmatprep.subr.bf16.mxu0 0
      %2651 = vmatpush1.bf16.msra.mxu0 0
      %2652 = vmatprep.subr.bf16.mxu0 0
      %2653 = vmatpush1.bf16.msra.mxu0 0
      %2654 = vmatprep.subr.bf16.mxu0 0
      %2655 = vmatpush1.bf16.msra.mxu0 0
      %2656 = vmatprep.subr.bf16.mxu0 0
      %2657 = vmatpush1.bf16.msra.mxu0 0
      %2658 = vmatprep.subr.bf16.mxu0 0
      %2659 = vmatpush1.bf16.msra.mxu0 0
      %2660 = vmatprep.subr.bf16.mxu0 0
      %2661 = vmatpush1.bf16.msra.mxu0 0
      %2662 = vmatprep.subr.bf16.mxu0 0
      %2663 = vmatpush1.bf16.msra.mxu0 0
      %2664 = vmatprep.subr.bf16.mxu0 0
      %2665 = vmatpush1.bf16.msra.mxu0 0
      %2666 = vmatprep.subr.bf16.mxu0 0
      %2667 = vmatpush1.bf16.msra.mxu0 0
      %2668 = vmatprep.mubr.bf16.mxu0 0
      %2669 = vmatmul.mubr.bf16.gmra.mrb[0].mxu0 %v2586
      %v2670 = vpop.f32.mrb[0].mxu0
      %v2671 = vadd.f32 0.0, %v2670
      %v2672 = vpop.f32.mrb[0].mxu0
      %v2673 = vpop.f32.mrb[0].mxu0
      %v2674 = vadd.f32 0.0, %v2673
      %v2675 = vpop.f32.mrb[0].mxu0
      %2676 = vmatprep.mubr.bf16.mxu0 0
      %2677 = vmatmul.mubr.bf16.gmra.mrb[0].mxu0 %v2589
      %v2678 = vpop.f32.mrb[0].mxu0
      %v2679 = vadd.f32 0.0, %v2678
      %v2680 = vpop.f32.mrb[0].mxu0
      %v2681 = vpop.f32.mrb[0].mxu0
      %v2682 = vadd.f32 0.0, %v2681
      %v2683 = vpop.f32.mrb[0].mxu0
      %2684 = vmatprep.mubr.bf16.mxu0 0
      %2685 = vmatmul.mubr.bf16.gmra.mrb[0].mxu0 %v2592
      %v2686 = vpop.f32.mrb[0].mxu0
      %v2687 = vadd.f32 0.0, %v2686
      %v2688 = vpop.f32.mrb[0].mxu0
      %v2689 = vpop.f32.mrb[0].mxu0
      %v2690 = vadd.f32 0.0, %v2689
      %v2691 = vpop.f32.mrb[0].mxu0
      %2692 = vmatprep.mubr.bf16.mxu0 0
      %2693 = vmatmul.mubr.bf16.gmra.mrb[0].mxu0 %v2595
      %v2694 = vpop.f32.mrb[0].mxu0
      %v2695 = vadd.f32 0.0, %v2694
      %v2696 = vpop.f32.mrb[0].mxu0
      %v2697 = vpop.f32.mrb[0].mxu0
      %v2698 = vadd.f32 0.0, %v2697
      %v2699 = vpop.f32.mrb[0].mxu0
      %2700 = vmatprep.mubr.bf16.mxu0 0
      %2701 = vmatmul.mubr.bf16.gmra.mrb[0].mxu0 %v2598
      %v2702 = vpop.f32.mrb[0].mxu0
      %v2703 = vadd.f32 0.0, %v2702
      %v2704 = vpop.f32.mrb[0].mxu0
      %v2705 = vpop.f32.mrb[0].mxu0
      %v2706 = vadd.f32 0.0, %v2705
      %v2707 = vpop.f32.mrb[0].mxu0
      %2708 = vmatprep.mubr.bf16.mxu0 0
      %2709 = vmatmul.mubr.bf16.gmra.mrb[0].mxu0 %v2601
      %v2710 = vpop.f32.mrb[0].mxu0
      %v2711 = vadd.f32 0.0, %v2710
      %v2712 = vpop.f32.mrb[0].mxu0
      %v2713 = vpop.f32.mrb[0].mxu0
      %v2714 = vadd.f32 0.0, %v2713
      %v2715 = vpop.f32.mrb[0].mxu0
      %2716 = vmatprep.mubr.bf16.mxu0 0
      %2717 = vmatmul.mubr.bf16.gmra.mrb[0].mxu0 %v2604
      %v2718 = vpop.f32.mrb[0].mxu0
      %v2719 = vadd.f32 0.0, %v2718
      %v2720 = vpop.f32.mrb[0].mxu0
      %v2721 = vpop.f32.mrb[0].mxu0
      %v2722 = vadd.f32 0.0, %v2721
      %v2723 = vpop.f32.mrb[0].mxu0
      %2724 = vmatprep.mubr.bf16.mxu0 0
      %2725 = vmatmul.mubr.bf16.gmra.mrb[0].mxu0 %v2607
      %v2726 = vpop.f32.mrb[0].mxu0
      %v2727 = vadd.f32 0.0, %v2726
      %v2728 = vpop.f32.mrb[0].mxu0
      %v2729 = vpop.f32.mrb[0].mxu0
      %v2730 = vadd.f32 0.0, %v2729
      %v2731 = vpop.f32.mrb[0].mxu0
      %2732 = vmatprep.mubr.bf16.mxu0 0
      %2733 = vmatmul.mubr.bf16.gmra.mrb[0].mxu0 %v2610
      %v2734 = vpop.f32.mrb[0].mxu0
      %v2735 = vadd.f32 0.0, %v2734
      %v2736 = vpop.f32.mrb[0].mxu0
      %v2737 = vpop.f32.mrb[0].mxu0
      %v2738 = vadd.f32 0.0, %v2737
      %v2739 = vpop.f32.mrb[0].mxu0
      %2740 = vmatprep.mubr.bf16.mxu0 0
      %2741 = vmatmul.mubr.bf16.gmra.mrb[0].mxu0 %v2613
      %v2742 = vpop.f32.mrb[0].mxu0
      %v2743 = vadd.f32 0.0, %v2742
      %v2744 = vpop.f32.mrb[0].mxu0
      %v2745 = vpop.f32.mrb[0].mxu0
      %v2746 = vadd.f32 0.0, %v2745
      %v2747 = vpop.f32.mrb[0].mxu0
      %2748 = vmatprep.mubr.bf16.mxu0 0
      %2749 = vmatmul.mubr.bf16.gmra.mrb[0].mxu0 %v2616
      %v2750 = vpop.f32.mrb[0].mxu0
      %v2751 = vadd.f32 0.0, %v2750
      %v2752 = vpop.f32.mrb[0].mxu0
      %v2753 = vpop.f32.mrb[0].mxu0
      %v2754 = vadd.f32 0.0, %v2753
      %v2755 = vpop.f32.mrb[0].mxu0
      %2756 = vmatprep.mubr.bf16.mxu0 0
      %2757 = vmatmul.mubr.bf16.gmra.mrb[0].mxu0 %v2619
      %v2758 = vpop.f32.mrb[0].mxu0
      %v2759 = vadd.f32 0.0, %v2758
      %v2760 = vpop.f32.mrb[0].mxu0
      %v2761 = vpop.f32.mrb[0].mxu0
      %v2762 = vadd.f32 0.0, %v2761
      %v2763 = vpop.f32.mrb[0].mxu0
      %2764 = vmatprep.mubr.bf16.mxu0 0
      %2765 = vmatmul.mubr.bf16.gmra.mrb[0].mxu0 %v2622
      %v2766 = vpop.f32.mrb[0].mxu0
      %v2767 = vadd.f32 0.0, %v2766
      %v2768 = vpop.f32.mrb[0].mxu0
      %v2769 = vpop.f32.mrb[0].mxu0
      %v2770 = vadd.f32 0.0, %v2769
      %v2771 = vpop.f32.mrb[0].mxu0
      %2772 = vmatprep.mubr.bf16.mxu0 0
      %2773 = vmatmul.mubr.bf16.gmra.mrb[0].mxu0 %v2625
      %v2774 = vpop.f32.mrb[0].mxu0
      %v2775 = vadd.f32 0.0, %v2774
      %v2776 = vpop.f32.mrb[0].mxu0
      %v2777 = vpop.f32.mrb[0].mxu0
      %v2778 = vadd.f32 0.0, %v2777
      %v2779 = vpop.f32.mrb[0].mxu0
      %2780 = vmatprep.mubr.bf16.mxu0 0
      %2781 = vmatmul.mubr.bf16.gmra.mrb[0].mxu0 %v2628
      %v2782 = vpop.f32.mrb[0].mxu0
      %v2783 = vadd.f32 0.0, %v2782
      %v2784 = vpop.f32.mrb[0].mxu0
      %v2785 = vpop.f32.mrb[0].mxu0
      %v2786 = vadd.f32 0.0, %v2785
      %v2787 = vpop.f32.mrb[0].mxu0
      %2788 = vmatprep.mubr.bf16.mxu0 0
      %2789 = vmatmul.mubr.bf16.gmra.mrb[0].mxu0 %v2631
      %v2790 = vpop.f32.mrb[0].mxu0
      %v2791 = vadd.f32 0.0, %v2790
      %v2792 = vpop.f32.mrb[0].mxu0
      %v2793 = vpop.f32.mrb[0].mxu0
      %v2794 = vadd.f32 0.0, %v2793
      %v2795 = vpop.f32.mrb[0].mxu0
      %2796 = vdwg.mxu0
      %v2797 = vadd.f32 %v2502, %v2671
      %v2798 = vadd.f32 %v2503, %v2674
      %v2799 = vadd.f32 %v2504, %v2679
      %v2800 = vadd.f32 %v2505, %v2682
      %v2801 = vadd.f32 %v2506, %v2687
      %v2802 = vadd.f32 %v2507, %v2690
      %v2803 = vadd.f32 %v2508, %v2695
      %v2804 = vadd.f32 %v2509, %v2698
      %v2805 = vadd.f32 %v2510, %v2703
      %v2806 = vadd.f32 %v2511, %v2706
      %v2807 = vadd.f32 %v2512, %v2711
      %v2808 = vadd.f32 %v2513, %v2714
      %v2809 = vadd.f32 %v2514, %v2719
      %v2810 = vadd.f32 %v2515, %v2722
      %v2811 = vadd.f32 %v2516, %v2727
      %v2812 = vadd.f32 %v2517, %v2730
      %v2813 = vadd.f32 %v2518, %v2735
      %v2814 = vadd.f32 %v2519, %v2738
      %v2815 = vadd.f32 %v2520, %v2743
      %v2816 = vadd.f32 %v2521, %v2746
      %v2817 = vadd.f32 %v2522, %v2751
      %v2818 = vadd.f32 %v2523, %v2754
      %v2819 = vadd.f32 %v2524, %v2759
      %v2820 = vadd.f32 %v2525, %v2762
      %v2821 = vadd.f32 %v2526, %v2767
      %v2822 = vadd.f32 %v2527, %v2770
      %v2823 = vadd.f32 %v2528, %v2775
      %v2824 = vadd.f32 %v2529, %v2778
      %v2825 = vadd.f32 %v2530, %v2783
      %v2826 = vadd.f32 %v2531, %v2786
      %v2827 = vadd.f32 %v2532, %v2791
      %v2828 = vadd.f32 %v2533, %v2794
      %v2829 = vld [vmem:[%s2534 + $0x8] sm:$0xff]
      %v2830 = vld [vmem:[%s2534 + $0x10] sm:$0xff]
      %v2831 = vld [vmem:[%s2534 + $0x28] sm:$0xff]
      %v2832 = vld [vmem:[%s2534 + $0x30] sm:$0xff]
      %v2833 = vld [vmem:[%s2534 + $0x48] sm:$0xff]
      %v2834 = vld [vmem:[%s2534 + $0x50] sm:$0xff]
      %v2835 = vld [vmem:[%s2534 + $0x68] sm:$0xff]
      %v2836 = vld [vmem:[%s2534 + $0x70] sm:$0xff]
      %v2837 = vld [vmem:[%s2534 + $0x88] sm:$0xff]
      %v2838 = vld [vmem:[%s2534 + $0x90] sm:$0xff]
      %v2839 = vld [vmem:[%s2534 + $0xa8] sm:$0xff]
      %v2840 = vld [vmem:[%s2534 + $0xb0] sm:$0xff]
      %v2841 = vld [vmem:[%s2534 + $0xc8] sm:$0xff]
      %v2842 = vld [vmem:[%s2534 + $0xd0] sm:$0xff]
      %v2843 = vld [vmem:[%s2534 + $0xe8] sm:$0xff]
      %v2844 = vld [vmem:[%s2534 + $0xf0] sm:$0xff]
      %v2845 = vld [vmem:[%s2534 + $0x108] sm:$0xff]
      %v2846 = vld [vmem:[%s2534 + $0x110] sm:$0xff]
      %v2847 = vld [vmem:[%s2534 + $0x128] sm:$0xff]
      %v2848 = vld [vmem:[%s2534 + $0x130] sm:$0xff]
      %v2849 = vld [vmem:[%s2534 + $0x148] sm:$0xff]
      %v2850 = vld [vmem:[%s2534 + $0x150] sm:$0xff]
      %v2851 = vld [vmem:[%s2534 + $0x168] sm:$0xff]
      %v2852 = vld [vmem:[%s2534 + $0x170] sm:$0xff]
      %v2853 = vld [vmem:[%s2534 + $0x188] sm:$0xff]
      %v2854 = vld [vmem:[%s2534 + $0x190] sm:$0xff]
      %v2855 = vld [vmem:[%s2534 + $0x1a8] sm:$0xff]
      %v2856 = vld [vmem:[%s2534 + $0x1b0] sm:$0xff]
      %v2857 = vld [vmem:[%s2534 + $0x1c8] sm:$0xff]
      %v2858 = vld [vmem:[%s2534 + $0x1d0] sm:$0xff]
      %v2859 = vld [vmem:[%s2534 + $0x1e8] sm:$0xff]
      %v2860 = vld [vmem:[%s2534 + $0x1f0] sm:$0xff]
      %v2861 = vpack.c.bf16 %v2830, %v2829
      %v2862 = vpack.c.bf16 %v2832, %v2831
      %v2863 = vpack.c.bf16 %v2834, %v2833
      %v2864 = vpack.c.bf16 %v2836, %v2835
      %v2865 = vpack.c.bf16 %v2838, %v2837
      %v2866 = vpack.c.bf16 %v2840, %v2839
      %v2867 = vpack.c.bf16 %v2842, %v2841
      %v2868 = vpack.c.bf16 %v2844, %v2843
      %v2869 = vpack.c.bf16 %v2846, %v2845
      %v2870 = vpack.c.bf16 %v2848, %v2847
      %v2871 = vpack.c.bf16 %v2850, %v2849
      %v2872 = vpack.c.bf16 %v2852, %v2851
      %v2873 = vpack.c.bf16 %v2854, %v2853
      %v2874 = vpack.c.bf16 %v2856, %v2855
      %v2875 = vpack.c.bf16 %v2858, %v2857
      %v2876 = vpack.c.bf16 %v2860, %v2859
      %s2877 = scalar_lea.vmem %s5, 28
      %v2878 = vld [vmem:[%s2877] sm:$0xf]
      %v2880 = vsel %vm727, %v2861, 0
      %v2883 = vsel %vm727, %v2862, 0
      %v2886 = vsel %vm727, %v2863, 0
      %v2889 = vsel %vm727, %v2864, 0
      %v2892 = vsel %vm727, %v2865, 0
      %v2895 = vsel %vm727, %v2866, 0
      %v2898 = vsel %vm727, %v2867, 0
      %v2901 = vsel %vm727, %v2868, 0
      %v2904 = vsel %vm727, %v2869, 0
      %v2907 = vsel %vm727, %v2870, 0
      %v2910 = vsel %vm727, %v2871, 0
      %v2913 = vsel %vm727, %v2872, 0
      %v2916 = vsel %vm727, %v2873, 0
      %v2919 = vsel %vm727, %v2874, 0
      %v2922 = vsel %vm727, %v2875, 0
      %v2925 = vsel %vm727, %v2876, 0
      %v2928 = vsel %vm981, %v2878, 0
      %2930 = vmatprep.subr.bf16.mxu0 0
      %2931 = vmatpush1.bf16.msra.mxu0 %v2928
      %2932 = vmatprep.subr.bf16.mxu0 0
      %2933 = vmatpush1.bf16.msra.mxu0 0
      %2934 = vmatprep.subr.bf16.mxu0 0
      %2935 = vmatpush1.bf16.msra.mxu0 0
      %2936 = vmatprep.subr.bf16.mxu0 0
      %2937 = vmatpush1.bf16.msra.mxu0 0
      %2938 = vmatprep.subr.bf16.mxu0 0
      %2939 = vmatpush1.bf16.msra.mxu0 0
      %2940 = vmatprep.subr.bf16.mxu0 0
      %2941 = vmatpush1.bf16.msra.mxu0 0
      %2942 = vmatprep.subr.bf16.mxu0 0
      %2943 = vmatpush1.bf16.msra.mxu0 0
      %2944 = vmatprep.subr.bf16.mxu0 0
      %2945 = vmatpush1.bf16.msra.mxu0 0
      %2946 = vmatprep.subr.bf16.mxu0 0
      %2947 = vmatpush1.bf16.msra.mxu0 0
      %2948 = vmatprep.subr.bf16.mxu0 0
      %2949 = vmatpush1.bf16.msra.mxu0 0
      %2950 = vmatprep.subr.bf16.mxu0 0
      %2951 = vmatpush1.bf16.msra.mxu0 0
      %2952 = vmatprep.subr.bf16.mxu0 0
      %2953 = vmatpush1.bf16.msra.mxu0 0
      %2954 = vmatprep.subr.bf16.mxu0 0
      %2955 = vmatpush1.bf16.msra.mxu0 0
      %2956 = vmatprep.subr.bf16.mxu0 0
      %2957 = vmatpush1.bf16.msra.mxu0 0
      %2958 = vmatprep.subr.bf16.mxu0 0
      %2959 = vmatpush1.bf16.msra.mxu0 0
      %2960 = vmatprep.subr.bf16.mxu0 0
      %2961 = vmatpush1.bf16.msra.mxu0 0
      %2962 = vmatprep.mubr.bf16.mxu0 0
      %2963 = vmatmul.mubr.bf16.gmra.mrb[0].mxu0 %v2880
      %v2964 = vpop.f32.mrb[0].mxu0
      %v2965 = vadd.f32 0.0, %v2964
      %v2966 = vpop.f32.mrb[0].mxu0
      %v2967 = vpop.f32.mrb[0].mxu0
      %v2968 = vadd.f32 0.0, %v2967
      %v2969 = vpop.f32.mrb[0].mxu0
      %2970 = vmatprep.mubr.bf16.mxu0 0
      %2971 = vmatmul.mubr.bf16.gmra.mrb[0].mxu0 %v2883
      %v2972 = vpop.f32.mrb[0].mxu0
      %v2973 = vadd.f32 0.0, %v2972
      %v2974 = vpop.f32.mrb[0].mxu0
      %v2975 = vpop.f32.mrb[0].mxu0
      %v2976 = vadd.f32 0.0, %v2975
      %v2977 = vpop.f32.mrb[0].mxu0
      %2978 = vmatprep.mubr.bf16.mxu0 0
      %2979 = vmatmul.mubr.bf16.gmra.mrb[0].mxu0 %v2886
      %v2980 = vpop.f32.mrb[0].mxu0
      %v2981 = vadd.f32 0.0, %v2980
      %v2982 = vpop.f32.mrb[0].mxu0
      %v2983 = vpop.f32.mrb[0].mxu0
      %v2984 = vadd.f32 0.0, %v2983
      %v2985 = vpop.f32.mrb[0].mxu0
      %2986 = vmatprep.mubr.bf16.mxu0 0
      %2987 = vmatmul.mubr.bf16.gmra.mrb[0].mxu0 %v2889
      %v2988 = vpop.f32.mrb[0].mxu0
      %v2989 = vadd.f32 0.0, %v2988
      %v2990 = vpop.f32.mrb[0].mxu0
      %v2991 = vpop.f32.mrb[0].mxu0
      %v2992 = vadd.f32 0.0, %v2991
      %v2993 = vpop.f32.mrb[0].mxu0
      %2994 = vmatprep.mubr.bf16.mxu0 0
      %2995 = vmatmul.mubr.bf16.gmra.mrb[0].mxu0 %v2892
      %v2996 = vpop.f32.mrb[0].mxu0
      %v2997 = vadd.f32 0.0, %v2996
      %v2998 = vpop.f32.mrb[0].mxu0
      %v2999 = vpop.f32.mrb[0].mxu0
      %v3000 = vadd.f32 0.0, %v2999
      %v3001 = vpop.f32.mrb[0].mxu0
      %3002 = vmatprep.mubr.bf16.mxu0 0
      %3003 = vmatmul.mubr.bf16.gmra.mrb[0].mxu0 %v2895
      %v3004 = vpop.f32.mrb[0].mxu0
      %v3005 = vadd.f32 0.0, %v3004
      %v3006 = vpop.f32.mrb[0].mxu0
      %v3007 = vpop.f32.mrb[0].mxu0
      %v3008 = vadd.f32 0.0, %v3007
      %v3009 = vpop.f32.mrb[0].mxu0
      %3010 = vmatprep.mubr.bf16.mxu0 0
      %3011 = vmatmul.mubr.bf16.gmra.mrb[0].mxu0 %v2898
      %v3012 = vpop.f32.mrb[0].mxu0
      %v3013 = vadd.f32 0.0, %v3012
      %v3014 = vpop.f32.mrb[0].mxu0
      %v3015 = vpop.f32.mrb[0].mxu0
      %v3016 = vadd.f32 0.0, %v3015
      %v3017 = vpop.f32.mrb[0].mxu0
      %3018 = vmatprep.mubr.bf16.mxu0 0
      %3019 = vmatmul.mubr.bf16.gmra.mrb[0].mxu0 %v2901
      %v3020 = vpop.f32.mrb[0].mxu0
      %v3021 = vadd.f32 0.0, %v3020
      %v3022 = vpop.f32.mrb[0].mxu0
      %v3023 = vpop.f32.mrb[0].mxu0
      %v3024 = vadd.f32 0.0, %v3023
      %v3025 = vpop.f32.mrb[0].mxu0
      %3026 = vmatprep.mubr.bf16.mxu0 0
      %3027 = vmatmul.mubr.bf16.gmra.mrb[0].mxu0 %v2904
      %v3028 = vpop.f32.mrb[0].mxu0
      %v3029 = vadd.f32 0.0, %v3028
      %v3030 = vpop.f32.mrb[0].mxu0
      %v3031 = vpop.f32.mrb[0].mxu0
      %v3032 = vadd.f32 0.0, %v3031
      %v3033 = vpop.f32.mrb[0].mxu0
      %3034 = vmatprep.mubr.bf16.mxu0 0
      %3035 = vmatmul.mubr.bf16.gmra.mrb[0].mxu0 %v2907
      %v3036 = vpop.f32.mrb[0].mxu0
      %v3037 = vadd.f32 0.0, %v3036
      %v3038 = vpop.f32.mrb[0].mxu0
      %v3039 = vpop.f32.mrb[0].mxu0
      %v3040 = vadd.f32 0.0, %v3039
      %v3041 = vpop.f32.mrb[0].mxu0
      %3042 = vmatprep.mubr.bf16.mxu0 0
      %3043 = vmatmul.mubr.bf16.gmra.mrb[0].mxu0 %v2910
      %v3044 = vpop.f32.mrb[0].mxu0
      %v3045 = vadd.f32 0.0, %v3044
      %v3046 = vpop.f32.mrb[0].mxu0
      %v3047 = vpop.f32.mrb[0].mxu0
      %v3048 = vadd.f32 0.0, %v3047
      %v3049 = vpop.f32.mrb[0].mxu0
      %3050 = vmatprep.mubr.bf16.mxu0 0
      %3051 = vmatmul.mubr.bf16.gmra.mrb[0].mxu0 %v2913
      %v3052 = vpop.f32.mrb[0].mxu0
      %v3053 = vadd.f32 0.0, %v3052
      %v3054 = vpop.f32.mrb[0].mxu0
      %v3055 = vpop.f32.mrb[0].mxu0
      %v3056 = vadd.f32 0.0, %v3055
      %v3057 = vpop.f32.mrb[0].mxu0
      %3058 = vmatprep.mubr.bf16.mxu0 0
      %3059 = vmatmul.mubr.bf16.gmra.mrb[0].mxu0 %v2916
      %v3060 = vpop.f32.mrb[0].mxu0
      %v3061 = vadd.f32 0.0, %v3060
      %v3062 = vpop.f32.mrb[0].mxu0
      %v3063 = vpop.f32.mrb[0].mxu0
      %v3064 = vadd.f32 0.0, %v3063
      %v3065 = vpop.f32.mrb[0].mxu0
      %3066 = vmatprep.mubr.bf16.mxu0 0
      %3067 = vmatmul.mubr.bf16.gmra.mrb[0].mxu0 %v2919
      %v3068 = vpop.f32.mrb[0].mxu0
      %v3069 = vadd.f32 0.0, %v3068
      %v3070 = vpop.f32.mrb[0].mxu0
      %v3071 = vpop.f32.mrb[0].mxu0
      %v3072 = vadd.f32 0.0, %v3071
      %v3073 = vpop.f32.mrb[0].mxu0
      %3074 = vmatprep.mubr.bf16.mxu0 0
      %3075 = vmatmul.mubr.bf16.gmra.mrb[0].mxu0 %v2922
      %v3076 = vpop.f32.mrb[0].mxu0
      %v3077 = vadd.f32 0.0, %v3076
      %v3078 = vpop.f32.mrb[0].mxu0
      %v3079 = vpop.f32.mrb[0].mxu0
      %v3080 = vadd.f32 0.0, %v3079
      %v3081 = vpop.f32.mrb[0].mxu0
      %3082 = vmatprep.mubr.bf16.mxu0 0
      %3083 = vmatmul.mubr.bf16.gmra.mrb[0].mxu0 %v2925
      %v3084 = vpop.f32.mrb[0].mxu0
      %v3085 = vadd.f32 0.0, %v3084
      %v3086 = vpop.f32.mrb[0].mxu0
      %v3087 = vpop.f32.mrb[0].mxu0
      %v3088 = vadd.f32 0.0, %v3087
      %v3089 = vpop.f32.mrb[0].mxu0
      %3090 = vdwg.mxu0
      %v3091 = vadd.f32 %v2797, %v2965
      %v3092 = vadd.f32 %v2798, %v2968
      %v3093 = vadd.f32 %v2799, %v2973
      %v3094 = vadd.f32 %v2800, %v2976
      %v3095 = vadd.f32 %v2801, %v2981
      %v3096 = vadd.f32 %v2802, %v2984
      %v3097 = vadd.f32 %v2803, %v2989
      %v3098 = vadd.f32 %v2804, %v2992
      %v3099 = vadd.f32 %v2805, %v2997
      %v3100 = vadd.f32 %v2806, %v3000
      %v3101 = vadd.f32 %v2807, %v3005
      %v3102 = vadd.f32 %v2808, %v3008
      %v3103 = vadd.f32 %v2809, %v3013
      %v3104 = vadd.f32 %v2810, %v3016
      %v3105 = vadd.f32 %v2811, %v3021
      %v3106 = vadd.f32 %v2812, %v3024
      %v3107 = vadd.f32 %v2813, %v3029
      %v3108 = vadd.f32 %v2814, %v3032
      %v3109 = vadd.f32 %v2815, %v3037
      %v3110 = vadd.f32 %v2816, %v3040
      %v3111 = vadd.f32 %v2817, %v3045
      %v3112 = vadd.f32 %v2818, %v3048
      %v3113 = vadd.f32 %v2819, %v3053
      %v3114 = vadd.f32 %v2820, %v3056
      %v3115 = vadd.f32 %v2821, %v3061
      %v3116 = vadd.f32 %v2822, %v3064
      %v3117 = vadd.f32 %v2823, %v3069
      %v3118 = vadd.f32 %v2824, %v3072
      %v3119 = vadd.f32 %v2825, %v3077
      %v3120 = vadd.f32 %v2826, %v3080
      %v3121 = vadd.f32 %v2827, %v3085
      %v3122 = vadd.f32 %v2828, %v3088
      %v3123 = vld [vmem:[%s2534 + $0x9] sm:$0xff]
      %v3124 = vld [vmem:[%s2534 + $0x11] sm:$0xff]
      %v3125 = vld [vmem:[%s2534 + $0x29] sm:$0xff]
      %v3126 = vld [vmem:[%s2534 + $0x31] sm:$0xff]
      %v3127 = vld [vmem:[%s2534 + $0x49] sm:$0xff]
      %v3128 = vld [vmem:[%s2534 + $0x51] sm:$0xff]
      %v3129 = vld [vmem:[%s2534 + $0x69] sm:$0xff]
      %v3130 = vld [vmem:[%s2534 + $0x71] sm:$0xff]
      %v3131 = vld [vmem:[%s2534 + $0x89] sm:$0xff]
      %v3132 = vld [vmem:[%s2534 + $0x91] sm:$0xff]
      %v3133 = vld [vmem:[%s2534 + $0xa9] sm:$0xff]
      %v3134 = vld [vmem:[%s2534 + $0xb1] sm:$0xff]
      %v3135 = vld [vmem:[%s2534 + $0xc9] sm:$0xff]
      %v3136 = vld [vmem:[%s2534 + $0xd1] sm:$0xff]
      %v3137 = vld [vmem:[%s2534 + $0xe9] sm:$0xff]
      %v3138 = vld [vmem:[%s2534 + $0xf1] sm:$0xff]
      %v3139 = vld [vmem:[%s2534 + $0x109] sm:$0xff]
      %v3140 = vld [vmem:[%s2534 + $0x111] sm:$0xff]
      %v3141 = vld [vmem:[%s2534 + $0x129] sm:$0xff]
      %v3142 = vld [vmem:[%s2534 + $0x131] sm:$0xff]
      %v3143 = vld [vmem:[%s2534 + $0x149] sm:$0xff]
      %v3144 = vld [vmem:[%s2534 + $0x151] sm:$0xff]
      %v3145 = vld [vmem:[%s2534 + $0x169] sm:$0xff]
      %v3146 = vld [vmem:[%s2534 + $0x171] sm:$0xff]
      %v3147 = vld [vmem:[%s2534 + $0x189] sm:$0xff]
      %v3148 = vld [vmem:[%s2534 + $0x191] sm:$0xff]
      %v3149 = vld [vmem:[%s2534 + $0x1a9] sm:$0xff]
      %v3150 = vld [vmem:[%s2534 + $0x1b1] sm:$0xff]
      %v3151 = vld [vmem:[%s2534 + $0x1c9] sm:$0xff]
      %v3152 = vld [vmem:[%s2534 + $0x1d1] sm:$0xff]
      %v3153 = vld [vmem:[%s2534 + $0x1e9] sm:$0xff]
      %v3154 = vld [vmem:[%s2534 + $0x1f1] sm:$0xff]
      %v3155 = vpack.c.bf16 %v3124, %v3123
      %v3156 = vpack.c.bf16 %v3126, %v3125
      %v3157 = vpack.c.bf16 %v3128, %v3127
      %v3158 = vpack.c.bf16 %v3130, %v3129
      %v3159 = vpack.c.bf16 %v3132, %v3131
      %v3160 = vpack.c.bf16 %v3134, %v3133
      %v3161 = vpack.c.bf16 %v3136, %v3135
      %v3162 = vpack.c.bf16 %v3138, %v3137
      %v3163 = vpack.c.bf16 %v3140, %v3139
      %v3164 = vpack.c.bf16 %v3142, %v3141
      %v3165 = vpack.c.bf16 %v3144, %v3143
      %v3166 = vpack.c.bf16 %v3146, %v3145
      %v3167 = vpack.c.bf16 %v3148, %v3147
      %v3168 = vpack.c.bf16 %v3150, %v3149
      %v3169 = vpack.c.bf16 %v3152, %v3151
      %v3170 = vpack.c.bf16 %v3154, %v3153
      %s3171 = scalar_lea.vmem %s5, 32
      %v3172 = vld [vmem:[%s3171] sm:$0xf]
      %v3174 = vsel %vm727, %v3155, 0
      %v3177 = vsel %vm727, %v3156, 0
      %v3180 = vsel %vm727, %v3157, 0
      %v3183 = vsel %vm727, %v3158, 0
      %v3186 = vsel %vm727, %v3159, 0
      %v3189 = vsel %vm727, %v3160, 0
      %v3192 = vsel %vm727, %v3161, 0
      %v3195 = vsel %vm727, %v3162, 0
      %v3198 = vsel %vm727, %v3163, 0
      %v3201 = vsel %vm727, %v3164, 0
      %v3204 = vsel %vm727, %v3165, 0
      %v3207 = vsel %vm727, %v3166, 0
      %v3210 = vsel %vm727, %v3167, 0
      %v3213 = vsel %vm727, %v3168, 0
      %v3216 = vsel %vm727, %v3169, 0
      %v3219 = vsel %vm727, %v3170, 0
      %v3222 = vsel %vm981, %v3172, 0
      %3224 = vmatprep.subr.bf16.mxu0 0
      %3225 = vmatpush1.bf16.msra.mxu0 %v3222
      %3226 = vmatprep.subr.bf16.mxu0 0
      %3227 = vmatpush1.bf16.msra.mxu0 0
      %3228 = vmatprep.subr.bf16.mxu0 0
      %3229 = vmatpush1.bf16.msra.mxu0 0
      %3230 = vmatprep.subr.bf16.mxu0 0
      %3231 = vmatpush1.bf16.msra.mxu0 0
      %3232 = vmatprep.subr.bf16.mxu0 0
      %3233 = vmatpush1.bf16.msra.mxu0 0
      %3234 = vmatprep.subr.bf16.mxu0 0
      %3235 = vmatpush1.bf16.msra.mxu0 0
      %3236 = vmatprep.subr.bf16.mxu0 0
      %3237 = vmatpush1.bf16.msra.mxu0 0
      %3238 = vmatprep.subr.bf16.mxu0 0
      %3239 = vmatpush1.bf16.msra.mxu0 0
      %3240 = vmatprep.subr.bf16.mxu0 0
      %3241 = vmatpush1.bf16.msra.mxu0 0
      %3242 = vmatprep.subr.bf16.mxu0 0
      %3243 = vmatpush1.bf16.msra.mxu0 0
      %3244 = vmatprep.subr.bf16.mxu0 0
      %3245 = vmatpush1.bf16.msra.mxu0 0
      %3246 = vmatprep.subr.bf16.mxu0 0
      %3247 = vmatpush1.bf16.msra.mxu0 0
      %3248 = vmatprep.subr.bf16.mxu0 0
      %3249 = vmatpush1.bf16.msra.mxu0 0
      %3250 = vmatprep.subr.bf16.mxu0 0
      %3251 = vmatpush1.bf16.msra.mxu0 0
      %3252 = vmatprep.subr.bf16.mxu0 0
      %3253 = vmatpush1.bf16.msra.mxu0 0
      %3254 = vmatprep.subr.bf16.mxu0 0
      %3255 = vmatpush1.bf16.msra.mxu0 0
      %3256 = vmatprep.mubr.bf16.mxu0 0
      %3257 = vmatmul.mubr.bf16.gmra.mrb[0].mxu0 %v3174
      %v3258 = vpop.f32.mrb[0].mxu0
      %v3259 = vadd.f32 0.0, %v3258
      %v3260 = vpop.f32.mrb[0].mxu0
      %v3261 = vpop.f32.mrb[0].mxu0
      %v3262 = vadd.f32 0.0, %v3261
      %v3263 = vpop.f32.mrb[0].mxu0
      %3264 = vmatprep.mubr.bf16.mxu0 0
      %3265 = vmatmul.mubr.bf16.gmra.mrb[0].mxu0 %v3177
      %v3266 = vpop.f32.mrb[0].mxu0
      %v3267 = vadd.f32 0.0, %v3266
      %v3268 = vpop.f32.mrb[0].mxu0
      %v3269 = vpop.f32.mrb[0].mxu0
      %v3270 = vadd.f32 0.0, %v3269
      %v3271 = vpop.f32.mrb[0].mxu0
      %3272 = vmatprep.mubr.bf16.mxu0 0
      %3273 = vmatmul.mubr.bf16.gmra.mrb[0].mxu0 %v3180
      %v3274 = vpop.f32.mrb[0].mxu0
      %v3275 = vadd.f32 0.0, %v3274
      %v3276 = vpop.f32.mrb[0].mxu0
      %v3277 = vpop.f32.mrb[0].mxu0
      %v3278 = vadd.f32 0.0, %v3277
      %v3279 = vpop.f32.mrb[0].mxu0
      %3280 = vmatprep.mubr.bf16.mxu0 0
      %3281 = vmatmul.mubr.bf16.gmra.mrb[0].mxu0 %v3183
      %v3282 = vpop.f32.mrb[0].mxu0
      %v3283 = vadd.f32 0.0, %v3282
      %v3284 = vpop.f32.mrb[0].mxu0
      %v3285 = vpop.f32.mrb[0].mxu0
      %v3286 = vadd.f32 0.0, %v3285
      %v3287 = vpop.f32.mrb[0].mxu0
      %3288 = vmatprep.mubr.bf16.mxu0 0
      %3289 = vmatmul.mubr.bf16.gmra.mrb[0].mxu0 %v3186
      %v3290 = vpop.f32.mrb[0].mxu0
      %v3291 = vadd.f32 0.0, %v3290
      %v3292 = vpop.f32.mrb[0].mxu0
      %v3293 = vpop.f32.mrb[0].mxu0
      %v3294 = vadd.f32 0.0, %v3293
      %v3295 = vpop.f32.mrb[0].mxu0
      %3296 = vmatprep.mubr.bf16.mxu0 0
      %3297 = vmatmul.mubr.bf16.gmra.mrb[0].mxu0 %v3189
      %v3298 = vpop.f32.mrb[0].mxu0
      %v3299 = vadd.f32 0.0, %v3298
      %v3300 = vpop.f32.mrb[0].mxu0
      %v3301 = vpop.f32.mrb[0].mxu0
      %v3302 = vadd.f32 0.0, %v3301
      %v3303 = vpop.f32.mrb[0].mxu0
      %3304 = vmatprep.mubr.bf16.mxu0 0
      %3305 = vmatmul.mubr.bf16.gmra.mrb[0].mxu0 %v3192
      %v3306 = vpop.f32.mrb[0].mxu0
      %v3307 = vadd.f32 0.0, %v3306
      %v3308 = vpop.f32.mrb[0].mxu0
      %v3309 = vpop.f32.mrb[0].mxu0
      %v3310 = vadd.f32 0.0, %v3309
      %v3311 = vpop.f32.mrb[0].mxu0
      %3312 = vmatprep.mubr.bf16.mxu0 0
      %3313 = vmatmul.mubr.bf16.gmra.mrb[0].mxu0 %v3195
      %v3314 = vpop.f32.mrb[0].mxu0
      %v3315 = vadd.f32 0.0, %v3314
      %v3316 = vpop.f32.mrb[0].mxu0
      %v3317 = vpop.f32.mrb[0].mxu0
      %v3318 = vadd.f32 0.0, %v3317
      %v3319 = vpop.f32.mrb[0].mxu0
      %3320 = vmatprep.mubr.bf16.mxu0 0
      %3321 = vmatmul.mubr.bf16.gmra.mrb[0].mxu0 %v3198
      %v3322 = vpop.f32.mrb[0].mxu0
      %v3323 = vadd.f32 0.0, %v3322
      %v3324 = vpop.f32.mrb[0].mxu0
      %v3325 = vpop.f32.mrb[0].mxu0
      %v3326 = vadd.f32 0.0, %v3325
      %v3327 = vpop.f32.mrb[0].mxu0
      %3328 = vmatprep.mubr.bf16.mxu0 0
      %3329 = vmatmul.mubr.bf16.gmra.mrb[0].mxu0 %v3201
      %v3330 = vpop.f32.mrb[0].mxu0
      %v3331 = vadd.f32 0.0, %v3330
      %v3332 = vpop.f32.mrb[0].mxu0
      %v3333 = vpop.f32.mrb[0].mxu0
      %v3334 = vadd.f32 0.0, %v3333
      %v3335 = vpop.f32.mrb[0].mxu0
      %3336 = vmatprep.mubr.bf16.mxu0 0
      %3337 = vmatmul.mubr.bf16.gmra.mrb[0].mxu0 %v3204
      %v3338 = vpop.f32.mrb[0].mxu0
      %v3339 = vadd.f32 0.0, %v3338
      %v3340 = vpop.f32.mrb[0].mxu0
      %v3341 = vpop.f32.mrb[0].mxu0
      %v3342 = vadd.f32 0.0, %v3341
      %v3343 = vpop.f32.mrb[0].mxu0
      %3344 = vmatprep.mubr.bf16.mxu0 0
      %3345 = vmatmul.mubr.bf16.gmra.mrb[0].mxu0 %v3207
      %v3346 = vpop.f32.mrb[0].mxu0
      %v3347 = vadd.f32 0.0, %v3346
      %v3348 = vpop.f32.mrb[0].mxu0
      %v3349 = vpop.f32.mrb[0].mxu0
      %v3350 = vadd.f32 0.0, %v3349
      %v3351 = vpop.f32.mrb[0].mxu0
      %3352 = vmatprep.mubr.bf16.mxu0 0
      %3353 = vmatmul.mubr.bf16.gmra.mrb[0].mxu0 %v3210
      %v3354 = vpop.f32.mrb[0].mxu0
      %v3355 = vadd.f32 0.0, %v3354
      %v3356 = vpop.f32.mrb[0].mxu0
      %v3357 = vpop.f32.mrb[0].mxu0
      %v3358 = vadd.f32 0.0, %v3357
      %v3359 = vpop.f32.mrb[0].mxu0
      %3360 = vmatprep.mubr.bf16.mxu0 0
      %3361 = vmatmul.mubr.bf16.gmra.mrb[0].mxu0 %v3213
      %v3362 = vpop.f32.mrb[0].mxu0
      %v3363 = vadd.f32 0.0, %v3362
      %v3364 = vpop.f32.mrb[0].mxu0
      %v3365 = vpop.f32.mrb[0].mxu0
      %v3366 = vadd.f32 0.0, %v3365
      %v3367 = vpop.f32.mrb[0].mxu0
      %3368 = vmatprep.mubr.bf16.mxu0 0
      %3369 = vmatmul.mubr.bf16.gmra.mrb[0].mxu0 %v3216
      %v3370 = vpop.f32.mrb[0].mxu0
      %v3371 = vadd.f32 0.0, %v3370
      %v3372 = vpop.f32.mrb[0].mxu0
      %v3373 = vpop.f32.mrb[0].mxu0
      %v3374 = vadd.f32 0.0, %v3373
      %v3375 = vpop.f32.mrb[0].mxu0
      %3376 = vmatprep.mubr.bf16.mxu0 0
      %3377 = vmatmul.mubr.bf16.gmra.mrb[0].mxu0 %v3219
      %v3378 = vpop.f32.mrb[0].mxu0
      %v3379 = vadd.f32 0.0, %v3378
      %v3380 = vpop.f32.mrb[0].mxu0
      %v3381 = vpop.f32.mrb[0].mxu0
      %v3382 = vadd.f32 0.0, %v3381
      %v3383 = vpop.f32.mrb[0].mxu0
      %3384 = vdwg.mxu0
      %v3385 = vadd.f32 %v3091, %v3259
      %v3386 = vadd.f32 %v3092, %v3262
      %v3387 = vadd.f32 %v3093, %v3267
      %v3388 = vadd.f32 %v3094, %v3270
      %v3389 = vadd.f32 %v3095, %v3275
      %v3390 = vadd.f32 %v3096, %v3278
      %v3391 = vadd.f32 %v3097, %v3283
      %v3392 = vadd.f32 %v3098, %v3286
      %v3393 = vadd.f32 %v3099, %v3291
      %v3394 = vadd.f32 %v3100, %v3294
      %v3395 = vadd.f32 %v3101, %v3299
      %v3396 = vadd.f32 %v3102, %v3302
      %v3397 = vadd.f32 %v3103, %v3307
      %v3398 = vadd.f32 %v3104, %v3310
      %v3399 = vadd.f32 %v3105, %v3315
      %v3400 = vadd.f32 %v3106, %v3318
      %v3401 = vadd.f32 %v3107, %v3323
      %v3402 = vadd.f32 %v3108, %v3326
      %v3403 = vadd.f32 %v3109, %v3331
      %v3404 = vadd.f32 %v3110, %v3334
      %v3405 = vadd.f32 %v3111, %v3339
      %v3406 = vadd.f32 %v3112, %v3342
      %v3407 = vadd.f32 %v3113, %v3347
      %v3408 = vadd.f32 %v3114, %v3350
      %v3409 = vadd.f32 %v3115, %v3355
      %v3410 = vadd.f32 %v3116, %v3358
      %v3411 = vadd.f32 %v3117, %v3363
      %v3412 = vadd.f32 %v3118, %v3366
      %v3413 = vadd.f32 %v3119, %v3371
      %v3414 = vadd.f32 %v3120, %v3374
      %v3415 = vadd.f32 %v3121, %v3379
      %v3416 = vadd.f32 %v3122, %v3382
      %v3417 = vld [vmem:[%s6] sm:$0x1]
      %v3419 = vlaneseq
      %v3420 = vshrl.u32 %v3419, 7
      %v3421 = vsub.s32 0, %v3420
      %v3422 = vrot.slane %v3417, %v3421
      %v3424 = vadd.f32 %v3385, %v3422
      %v3425 = vadd.f32 %v3386, %v3422
      %v3426 = vadd.f32 %v3387, %v3422
      %v3427 = vadd.f32 %v3388, %v3422
      %v3428 = vadd.f32 %v3389, %v3422
      %v3429 = vadd.f32 %v3390, %v3422
      %v3430 = vadd.f32 %v3391, %v3422
      %v3431 = vadd.f32 %v3392, %v3422
      %v3432 = vadd.f32 %v3393, %v3422
      %v3433 = vadd.f32 %v3394, %v3422
      %v3434 = vadd.f32 %v3395, %v3422
      %v3435 = vadd.f32 %v3396, %v3422
      %v3436 = vadd.f32 %v3397, %v3422
      %v3437 = vadd.f32 %v3398, %v3422
      %v3438 = vadd.f32 %v3399, %v3422
      %v3439 = vadd.f32 %v3400, %v3422
      %v3440 = vadd.f32 %v3401, %v3422
      %v3441 = vadd.f32 %v3402, %v3422
      %v3442 = vadd.f32 %v3403, %v3422
      %v3443 = vadd.f32 %v3404, %v3422
      %v3444 = vadd.f32 %v3405, %v3422
      %v3445 = vadd.f32 %v3406, %v3422
      %v3446 = vadd.f32 %v3407, %v3422
      %v3447 = vadd.f32 %v3408, %v3422
      %v3448 = vadd.f32 %v3409, %v3422
      %v3449 = vadd.f32 %v3410, %v3422
      %v3450 = vadd.f32 %v3411, %v3422
      %v3451 = vadd.f32 %v3412, %v3422
      %v3452 = vadd.f32 %v3413, %v3422
      %v3453 = vadd.f32 %v3414, %v3422
      %v3454 = vadd.f32 %v3415, %v3422
      %v3455 = vadd.f32 %v3416, %v3422
      %v3456 = vmax.f32 %v3424, 0.0
      %v3457 = vmax.f32 %v3425, 0.0
      %v3458 = vmax.f32 %v3426, 0.0
      %v3459 = vmax.f32 %v3427, 0.0
      %v3460 = vmax.f32 %v3428, 0.0
      %v3461 = vmax.f32 %v3429, 0.0
      %v3462 = vmax.f32 %v3430, 0.0
      %v3463 = vmax.f32 %v3431, 0.0
      %v3464 = vmax.f32 %v3432, 0.0
      %v3465 = vmax.f32 %v3433, 0.0
      %v3466 = vmax.f32 %v3434, 0.0
      %v3467 = vmax.f32 %v3435, 0.0
      %v3468 = vmax.f32 %v3436, 0.0
      %v3469 = vmax.f32 %v3437, 0.0
      %v3470 = vmax.f32 %v3438, 0.0
      %v3471 = vmax.f32 %v3439, 0.0
      %v3472 = vmax.f32 %v3440, 0.0
      %v3473 = vmax.f32 %v3441, 0.0
      %v3474 = vmax.f32 %v3442, 0.0
      %v3475 = vmax.f32 %v3443, 0.0
      %v3476 = vmax.f32 %v3444, 0.0
      %v3477 = vmax.f32 %v3445, 0.0
      %v3478 = vmax.f32 %v3446, 0.0
      %v3479 = vmax.f32 %v3447, 0.0
      %v3480 = vmax.f32 %v3448, 0.0
      %v3481 = vmax.f32 %v3449, 0.0
      %v3482 = vmax.f32 %v3450, 0.0
      %v3483 = vmax.f32 %v3451, 0.0
      %v3484 = vmax.f32 %v3452, 0.0
      %v3485 = vmax.f32 %v3453, 0.0
      %v3486 = vmax.f32 %v3454, 0.0
      %v3487 = vmax.f32 %v3455, 0.0
      %3488 = vst.msk [vmem:[#allocation3] sm:$0xff] %vm727, 0.0
      %3489 = vst.msk [vmem:[#allocation3 + $0x8] sm:$0xff] %vm727, 0.0
      %vm3490 = vcmask 58368
      %3491 = vst.msk [vmem:[#allocation3 + $0x10] sm:$0x3] %vm3490, 0.0
      %3492 = vst.msk [vmem:[#allocation3 + $0x18] sm:$0xff] %vm727, 0.0
      %3493 = vst.msk [vmem:[#allocation3 + $0x20] sm:$0xff] %vm727, 0.0
      %3494 = vst.msk [vmem:[#allocation3 + $0x28] sm:$0x3] %vm3490, 0.0
      %3495 = vst.msk [vmem:[#allocation3 + $0x30] sm:$0xff] %vm727, 0.0
      %3496 = vst.msk [vmem:[#allocation3 + $0x38] sm:$0xff] %vm727, 0.0
      %3497 = vst.msk [vmem:[#allocation3 + $0x40] sm:$0x3] %vm3490, 0.0
      %3498 = vst.msk [vmem:[#allocation3 + $0x48] sm:$0xff] %vm727, 0.0
      %3499 = vst.msk [vmem:[#allocation3 + $0x50] sm:$0xff] %vm727, 0.0
      %3500 = vst.msk [vmem:[#allocation3 + $0x58] sm:$0x3] %vm3490, 0.0
      %3501 = vst.msk [vmem:[#allocation3 + $0x60] sm:$0xff] %vm727, 0.0
      %3502 = vst.msk [vmem:[#allocation3 + $0x68] sm:$0xff] %vm727, 0.0
      %3503 = vst.msk [vmem:[#allocation3 + $0x70] sm:$0x3] %vm3490, 0.0
      %3504 = vst.msk [vmem:[#allocation3 + $0x78] sm:$0xff] %vm727, 0.0
      %3505 = vst.msk [vmem:[#allocation3 + $0x80] sm:$0xff] %vm727, 0.0
      %3506 = vst.msk [vmem:[#allocation3 + $0x88] sm:$0x3] %vm3490, 0.0
      %3507 = vst.msk [vmem:[#allocation3 + $0x90] sm:$0xff] %vm727, 0.0
      %3508 = vst.msk [vmem:[#allocation3 + $0x98] sm:$0xff] %vm727, 0.0
      %3509 = vst.msk [vmem:[#allocation3 + $0xa0] sm:$0x3] %vm3490, 0.0
      %3510 = vst.msk [vmem:[#allocation3 + $0xa8] sm:$0xff] %vm727, 0.0
      %3511 = vst.msk [vmem:[#allocation3 + $0xb0] sm:$0xff] %vm727, 0.0
      %3512 = vst.msk [vmem:[#allocation3 + $0xb8] sm:$0x3] %vm3490, 0.0
      %3513 = vst.msk [vmem:[#allocation3 + $0xc0] sm:$0xff] %vm727, 0.0
      %3514 = vst.msk [vmem:[#allocation3 + $0xc8] sm:$0xff] %vm727, 0.0
      %3515 = vst.msk [vmem:[#allocation3 + $0xd0] sm:$0x3] %vm3490, 0.0
      %3516 = vst.msk [vmem:[#allocation3 + $0xd8] sm:$0xff] %vm727, 0.0
      %3517 = vst.msk [vmem:[#allocation3 + $0xe0] sm:$0xff] %vm727, 0.0
      %3518 = vst.msk [vmem:[#allocation3 + $0xe8] sm:$0x3] %vm3490, 0.0
      %3519 = vst.msk [vmem:[#allocation3 + $0xf0] sm:$0xff] %vm727, 0.0
      %3520 = vst.msk [vmem:[#allocation3 + $0xf8] sm:$0xff] %vm727, 0.0
      %3521 = vst.msk [vmem:[#allocation3 + $0x100] sm:$0x3] %vm3490, 0.0
      %3522 = vst.msk [vmem:[#allocation3 + $0x108] sm:$0xff] %vm727, 0.0
      %3523 = vst.msk [vmem:[#allocation3 + $0x110] sm:$0xff] %vm727, 0.0
      %3524 = vst.msk [vmem:[#allocation3 + $0x118] sm:$0x3] %vm3490, 0.0
      %3525 = vst.msk [vmem:[#allocation3 + $0x120] sm:$0xff] %vm727, 0.0
      %3526 = vst.msk [vmem:[#allocation3 + $0x128] sm:$0xff] %vm727, 0.0
      %3527 = vst.msk [vmem:[#allocation3 + $0x130] sm:$0x3] %vm3490, 0.0
      %3528 = vst.msk [vmem:[#allocation3 + $0x138] sm:$0xff] %vm727, 0.0
      %3529 = vst.msk [vmem:[#allocation3 + $0x140] sm:$0xff] %vm727, 0.0
      %3530 = vst.msk [vmem:[#allocation3 + $0x148] sm:$0x3] %vm3490, 0.0
      %3531 = vst.msk [vmem:[#allocation3 + $0x150] sm:$0xff] %vm727, 0.0
      %3532 = vst.msk [vmem:[#allocation3 + $0x158] sm:$0xff] %vm727, 0.0
      %3533 = vst.msk [vmem:[#allocation3 + $0x160] sm:$0x3] %vm3490, 0.0
      %3534 = vst.msk [vmem:[#allocation3 + $0x168] sm:$0xff] %vm727, 0.0
      %3535 = vst.msk [vmem:[#allocation3 + $0x170] sm:$0xff] %vm727, 0.0
      %3536 = vst.msk [vmem:[#allocation3 + $0x178] sm:$0x3] %vm3490, 0.0
      %3537 = vst.msk [vmem:[#allocation3 + $0x180] sm:$0xff] %vm727, 0.0
      %3538 = vst.msk [vmem:[#allocation3 + $0x188] sm:$0xff] %vm727, 0.0
      %3539 = vst.msk [vmem:[#allocation3 + $0x190] sm:$0x3] %vm3490, 0.0
      %3540 = vst.msk [vmem:[#allocation3 + $0x198] sm:$0xff] %vm727, 0.0
      %3541 = vst.msk [vmem:[#allocation3 + $0x1a0] sm:$0xff] %vm727, 0.0
      %3542 = vst.msk [vmem:[#allocation3 + $0x1a8] sm:$0x3] %vm3490, 0.0
      %3543 = vst.msk [vmem:[#allocation3] sm:$0xff] %vm727, %v3456
      %3544 = vst.msk [vmem:[#allocation3 + $0x8] sm:$0xff] %vm727, %v3457
      %3545 = vst.msk [vmem:[#allocation3 + $0x18] sm:$0xff] %vm727, %v3458
      %3546 = vst.msk [vmem:[#allocation3 + $0x20] sm:$0xff] %vm727, %v3459
      %3547 = vst.msk [vmem:[#allocation3 + $0x30] sm:$0xff] %vm727, %v3460
      %3548 = vst.msk [vmem:[#allocation3 + $0x38] sm:$0xff] %vm727, %v3461
      %3549 = vst.msk [vmem:[#allocation3 + $0x48] sm:$0xff] %vm727, %v3462
      %3550 = vst.msk [vmem:[#allocation3 + $0x50] sm:$0xff] %vm727, %v3463
      %3551 = vst.msk [vmem:[#allocation3 + $0x60] sm:$0xff] %vm727, %v3464
      %3552 = vst.msk [vmem:[#allocation3 + $0x68] sm:$0xff] %vm727, %v3465
      %3553 = vst.msk [vmem:[#allocation3 + $0x78] sm:$0xff] %vm727, %v3466
      %3554 = vst.msk [vmem:[#allocation3 + $0x80] sm:$0xff] %vm727, %v3467
      %3555 = vst.msk [vmem:[#allocation3 + $0x90] sm:$0xff] %vm727, %v3468
      %3556 = vst.msk [vmem:[#allocation3 + $0x98] sm:$0xff] %vm727, %v3469
      %3557 = vst.msk [vmem:[#allocation3 + $0xa8] sm:$0xff] %vm727, %v3470
      %3558 = vst.msk [vmem:[#allocation3 + $0xb0] sm:$0xff] %vm727, %v3471
      %3559 = vst.msk [vmem:[#allocation3 + $0xc0] sm:$0xff] %vm727, %v3472
      %3560 = vst.msk [vmem:[#allocation3 + $0xc8] sm:$0xff] %vm727, %v3473
      %3561 = vst.msk [vmem:[#allocation3 + $0xd8] sm:$0xff] %vm727, %v3474
      %3562 = vst.msk [vmem:[#allocation3 + $0xe0] sm:$0xff] %vm727, %v3475
      %3563 = vst.msk [vmem:[#allocation3 + $0xf0] sm:$0xff] %vm727, %v3476
      %3564 = vst.msk [vmem:[#allocation3 + $0xf8] sm:$0xff] %vm727, %v3477
      %3565 = vst.msk [vmem:[#allocation3 + $0x108] sm:$0xff] %vm727, %v3478
      %3566 = vst.msk [vmem:[#allocation3 + $0x110] sm:$0xff] %vm727, %v3479
      %3567 = vst.msk [vmem:[#allocation3 + $0x120] sm:$0xff] %vm727, %v3480
      %3568 = vst.msk [vmem:[#allocation3 + $0x128] sm:$0xff] %vm727, %v3481
      %3569 = vst.msk [vmem:[#allocation3 + $0x138] sm:$0xff] %vm727, %v3482
      %3570 = vst.msk [vmem:[#allocation3 + $0x140] sm:$0xff] %vm727, %v3483
      %3571 = vst.msk [vmem:[#allocation3 + $0x150] sm:$0xff] %vm727, %v3484
      %3572 = vst.msk [vmem:[#allocation3 + $0x158] sm:$0xff] %vm727, %v3485
      %3573 = vst.msk [vmem:[#allocation3 + $0x168] sm:$0xff] %vm727, %v3486
      %3574 = vst.msk [vmem:[#allocation3 + $0x170] sm:$0xff] %vm727, %v3487
      %v3575 = vld [vmem:[%s354] sm:$0xf]
      %v3576 = vld [vmem:[%s354 + $0x4] sm:$0xf]
      %v3577 = vld [vmem:[%s354 + $0xc] sm:$0xf]
      %v3578 = vld [vmem:[%s354 + $0x10] sm:$0xf]
      %v3579 = vld [vmem:[%s354 + $0x18] sm:$0xf]
      %v3580 = vld [vmem:[%s354 + $0x1c] sm:$0xf]
      %v3581 = vld [vmem:[%s354 + $0x24] sm:$0xf]
      %v3582 = vld [vmem:[%s354 + $0x28] sm:$0xf]
      %v3583 = vld [vmem:[%s354 + $0x30] sm:$0xf]
      %v3584 = vld [vmem:[%s354 + $0x34] sm:$0xf]
      %v3585 = vld [vmem:[%s354 + $0x3c] sm:$0xf]
      %v3586 = vld [vmem:[%s354 + $0x40] sm:$0xf]
      %v3587 = vld [vmem:[%s354 + $0x48] sm:$0xf]
      %v3588 = vld [vmem:[%s354 + $0x4c] sm:$0xf]
      %v3589 = vld [vmem:[%s354 + $0x54] sm:$0xf]
      %v3590 = vld [vmem:[%s354 + $0x58] sm:$0xf]
      %v3591 = vld [vmem:[%s354 + $0x60] sm:$0xf]
      %v3592 = vld [vmem:[%s354 + $0x64] sm:$0xf]
      %v3593 = vld [vmem:[%s354 + $0x6c] sm:$0xf]
      %v3594 = vld [vmem:[%s354 + $0x70] sm:$0xf]
      %v3595 = vld [vmem:[%s354 + $0x78] sm:$0xf]
      %v3596 = vld [vmem:[%s354 + $0x7c] sm:$0xf]
      %v3597 = vld [vmem:[%s354 + $0x84] sm:$0xf]
      %v3598 = vld [vmem:[%s354 + $0x88] sm:$0xf]
      %v3599 = vld [vmem:[%s354 + $0x90] sm:$0xf]
      %v3600 = vld [vmem:[%s354 + $0x94] sm:$0xf]
      %v3601 = vld [vmem:[%s354 + $0x9c] sm:$0xf]
      %v3602 = vld [vmem:[%s354 + $0xa0] sm:$0xf]
      %v3603 = vld [vmem:[%s354 + $0xa8] sm:$0xf]
      %v3604 = vld [vmem:[%s354 + $0xac] sm:$0xf]
      %v3605 = vld [vmem:[%s354 + $0xb4] sm:$0xf]
      %v3606 = vld [vmem:[%s354 + $0xb8] sm:$0xf]
      %v3607 = vld [vmem:[#allocation3] sm:$0xff]
      %v3608 = vld [vmem:[#allocation3 + $0x8] sm:$0xff]
      %v3609 = vld [vmem:[#allocation3 + $0x18] sm:$0xff]
      %v3610 = vld [vmem:[#allocation3 + $0x20] sm:$0xff]
      %v3611 = vld [vmem:[#allocation3 + $0x30] sm:$0xff]
      %v3612 = vld [vmem:[#allocation3 + $0x38] sm:$0xff]
      %v3613 = vld [vmem:[#allocation3 + $0x48] sm:$0xff]
      %v3614 = vld [vmem:[#allocation3 + $0x50] sm:$0xff]
      %v3615 = vld [vmem:[#allocation3 + $0x60] sm:$0xff]
      %v3616 = vld [vmem:[#allocation3 + $0x68] sm:$0xff]
      %v3617 = vld [vmem:[#allocation3 + $0x78] sm:$0xff]
      %v3618 = vld [vmem:[#allocation3 + $0x80] sm:$0xff]
      %v3619 = vld [vmem:[#allocation3 + $0x90] sm:$0xff]
      %v3620 = vld [vmem:[#allocation3 + $0x98] sm:$0xff]
      %v3621 = vld [vmem:[#allocation3 + $0xa8] sm:$0xff]
      %v3622 = vld [vmem:[#allocation3 + $0xb0] sm:$0xff]
      %v3623 = vld [vmem:[#allocation3 + $0xc0] sm:$0xff]
      %v3624 = vld [vmem:[#allocation3 + $0xc8] sm:$0xff]
      %v3625 = vld [vmem:[#allocation3 + $0xd8] sm:$0xff]
      %v3626 = vld [vmem:[#allocation3 + $0xe0] sm:$0xff]
      %v3627 = vld [vmem:[#allocation3 + $0xf0] sm:$0xff]
      %v3628 = vld [vmem:[#allocation3 + $0xf8] sm:$0xff]
      %v3629 = vld [vmem:[#allocation3 + $0x108] sm:$0xff]
      %v3630 = vld [vmem:[#allocation3 + $0x110] sm:$0xff]
      %v3631 = vld [vmem:[#allocation3 + $0x120] sm:$0xff]
      %v3632 = vld [vmem:[#allocation3 + $0x128] sm:$0xff]
      %v3633 = vld [vmem:[#allocation3 + $0x138] sm:$0xff]
      %v3634 = vld [vmem:[#allocation3 + $0x140] sm:$0xff]
      %v3635 = vld [vmem:[#allocation3 + $0x150] sm:$0xff]
      %v3636 = vld [vmem:[#allocation3 + $0x158] sm:$0xff]
      %v3637 = vld [vmem:[#allocation3 + $0x168] sm:$0xff]
      %v3638 = vld [vmem:[#allocation3 + $0x170] sm:$0xff]
      %v3639 = vld [vmem:[%s1] sm:$0x3]
      %v3640 = vpack.c.bf16 %v3608, %v3607
      %v3641 = vpack.c.bf16 %v3610, %v3609
      %v3642 = vpack.c.bf16 %v3612, %v3611
      %v3643 = vpack.c.bf16 %v3614, %v3613
      %v3644 = vpack.c.bf16 %v3616, %v3615
      %v3645 = vpack.c.bf16 %v3618, %v3617
      %v3646 = vpack.c.bf16 %v3620, %v3619
      %v3647 = vpack.c.bf16 %v3622, %v3621
      %v3648 = vpack.c.bf16 %v3624, %v3623
      %v3649 = vpack.c.bf16 %v3626, %v3625
      %v3650 = vpack.c.bf16 %v3628, %v3627
      %v3651 = vpack.c.bf16 %v3630, %v3629
      %v3652 = vpack.c.bf16 %v3632, %v3631
      %v3653 = vpack.c.bf16 %v3634, %v3633
      %v3654 = vpack.c.bf16 %v3636, %v3635
      %v3655 = vpack.c.bf16 %v3638, %v3637
      %v3656 = vld [vmem:[%s7] sm:$0xf]
      %v3658 = vsel %vm727, %v3640, 0
      %v3661 = vsel %vm727, %v3641, 0
      %v3664 = vsel %vm727, %v3642, 0
      %v3667 = vsel %vm727, %v3643, 0
      %v3670 = vsel %vm727, %v3644, 0
      %v3673 = vsel %vm727, %v3645, 0
      %v3676 = vsel %vm727, %v3646, 0
      %v3679 = vsel %vm727, %v3647, 0
      %v3682 = vsel %vm727, %v3648, 0
      %v3685 = vsel %vm727, %v3649, 0
      %v3688 = vsel %vm727, %v3650, 0
      %v3691 = vsel %vm727, %v3651, 0
      %v3694 = vsel %vm727, %v3652, 0
      %v3697 = vsel %vm727, %v3653, 0
      %v3700 = vsel %vm727, %v3654, 0
      %v3703 = vsel %vm727, %v3655, 0
      %v3706 = vsel %vm981, %v3656, 0
      %3708 = vmatprep.subr.bf16.mxu0 0
      %3709 = vmatpush1.bf16.msra.mxu0 %v3706
      %3710 = vmatprep.subr.bf16.mxu0 0
      %3711 = vmatpush1.bf16.msra.mxu0 0
      %3712 = vmatprep.subr.bf16.mxu0 0
      %3713 = vmatpush1.bf16.msra.mxu0 0
      %3714 = vmatprep.subr.bf16.mxu0 0
      %3715 = vmatpush1.bf16.msra.mxu0 0
      %3716 = vmatprep.subr.bf16.mxu0 0
      %3717 = vmatpush1.bf16.msra.mxu0 0
      %3718 = vmatprep.subr.bf16.mxu0 0
      %3719 = vmatpush1.bf16.msra.mxu0 0
      %3720 = vmatprep.subr.bf16.mxu0 0
      %3721 = vmatpush1.bf16.msra.mxu0 0
      %3722 = vmatprep.subr.bf16.mxu0 0
      %3723 = vmatpush1.bf16.msra.mxu0 0
      %3724 = vmatprep.subr.bf16.mxu0 0
      %3725 = vmatpush1.bf16.msra.mxu0 0
      %3726 = vmatprep.subr.bf16.mxu0 0
      %3727 = vmatpush1.bf16.msra.mxu0 0
      %3728 = vmatprep.subr.bf16.mxu0 0
      %3729 = vmatpush1.bf16.msra.mxu0 0
      %3730 = vmatprep.subr.bf16.mxu0 0
      %3731 = vmatpush1.bf16.msra.mxu0 0
      %3732 = vmatprep.subr.bf16.mxu0 0
      %3733 = vmatpush1.bf16.msra.mxu0 0
      %3734 = vmatprep.subr.bf16.mxu0 0
      %3735 = vmatpush1.bf16.msra.mxu0 0
      %3736 = vmatprep.subr.bf16.mxu0 0
      %3737 = vmatpush1.bf16.msra.mxu0 0
      %3738 = vmatprep.subr.bf16.mxu0 0
      %3739 = vmatpush1.bf16.msra.mxu0 0
      %3740 = vmatprep.mubr.bf16.mxu0 0
      %3741 = vmatmul.mubr.bf16.gmra.mrb[0].mxu0 %v3658
      %v3742 = vpop.f32.mrb[0].mxu0
      %v3743 = vadd.f32 0.0, %v3742
      %v3744 = vpop.f32.mrb[0].mxu0
      %v3745 = vpop.f32.mrb[0].mxu0
      %v3746 = vadd.f32 0.0, %v3745
      %v3747 = vpop.f32.mrb[0].mxu0
      %3748 = vmatprep.mubr.bf16.mxu0 0
      %3749 = vmatmul.mubr.bf16.gmra.mrb[0].mxu0 %v3661
      %v3750 = vpop.f32.mrb[0].mxu0
      %v3751 = vadd.f32 0.0, %v3750
      %v3752 = vpop.f32.mrb[0].mxu0
      %v3753 = vpop.f32.mrb[0].mxu0
      %v3754 = vadd.f32 0.0, %v3753
      %v3755 = vpop.f32.mrb[0].mxu0
      %3756 = vmatprep.mubr.bf16.mxu0 0
      %3757 = vmatmul.mubr.bf16.gmra.mrb[0].mxu0 %v3664
      %v3758 = vpop.f32.mrb[0].mxu0
      %v3759 = vadd.f32 0.0, %v3758
      %v3760 = vpop.f32.mrb[0].mxu0
      %v3761 = vpop.f32.mrb[0].mxu0
      %v3762 = vadd.f32 0.0, %v3761
      %v3763 = vpop.f32.mrb[0].mxu0
      %3764 = vmatprep.mubr.bf16.mxu0 0
      %3765 = vmatmul.mubr.bf16.gmra.mrb[0].mxu0 %v3667
      %v3766 = vpop.f32.mrb[0].mxu0
      %v3767 = vadd.f32 0.0, %v3766
      %v3768 = vpop.f32.mrb[0].mxu0
      %v3769 = vpop.f32.mrb[0].mxu0
      %v3770 = vadd.f32 0.0, %v3769
      %v3771 = vpop.f32.mrb[0].mxu0
      %3772 = vmatprep.mubr.bf16.mxu0 0
      %3773 = vmatmul.mubr.bf16.gmra.mrb[0].mxu0 %v3670
      %v3774 = vpop.f32.mrb[0].mxu0
      %v3775 = vadd.f32 0.0, %v3774
      %v3776 = vpop.f32.mrb[0].mxu0
      %v3777 = vpop.f32.mrb[0].mxu0
      %v3778 = vadd.f32 0.0, %v3777
      %v3779 = vpop.f32.mrb[0].mxu0
      %3780 = vmatprep.mubr.bf16.mxu0 0
      %3781 = vmatmul.mubr.bf16.gmra.mrb[0].mxu0 %v3673
      %v3782 = vpop.f32.mrb[0].mxu0
      %v3783 = vadd.f32 0.0, %v3782
      %v3784 = vpop.f32.mrb[0].mxu0
      %v3785 = vpop.f32.mrb[0].mxu0
      %v3786 = vadd.f32 0.0, %v3785
      %v3787 = vpop.f32.mrb[0].mxu0
      %3788 = vmatprep.mubr.bf16.mxu0 0
      %3789 = vmatmul.mubr.bf16.gmra.mrb[0].mxu0 %v3676
      %v3790 = vpop.f32.mrb[0].mxu0
      %v3791 = vadd.f32 0.0, %v3790
      %v3792 = vpop.f32.mrb[0].mxu0
      %v3793 = vpop.f32.mrb[0].mxu0
      %v3794 = vadd.f32 0.0, %v3793
      %v3795 = vpop.f32.mrb[0].mxu0
      %3796 = vmatprep.mubr.bf16.mxu0 0
      %3797 = vmatmul.mubr.bf16.gmra.mrb[0].mxu0 %v3679
      %v3798 = vpop.f32.mrb[0].mxu0
      %v3799 = vadd.f32 0.0, %v3798
      %v3800 = vpop.f32.mrb[0].mxu0
      %v3801 = vpop.f32.mrb[0].mxu0
      %v3802 = vadd.f32 0.0, %v3801
      %v3803 = vpop.f32.mrb[0].mxu0
      %3804 = vmatprep.mubr.bf16.mxu0 0
      %3805 = vmatmul.mubr.bf16.gmra.mrb[0].mxu0 %v3682
      %v3806 = vpop.f32.mrb[0].mxu0
      %v3807 = vadd.f32 0.0, %v3806
      %v3808 = vpop.f32.mrb[0].mxu0
      %v3809 = vpop.f32.mrb[0].mxu0
      %v3810 = vadd.f32 0.0, %v3809
      %v3811 = vpop.f32.mrb[0].mxu0
      %3812 = vmatprep.mubr.bf16.mxu0 0
      %3813 = vmatmul.mubr.bf16.gmra.mrb[0].mxu0 %v3685
      %v3814 = vpop.f32.mrb[0].mxu0
      %v3815 = vadd.f32 0.0, %v3814
      %v3816 = vpop.f32.mrb[0].mxu0
      %v3817 = vpop.f32.mrb[0].mxu0
      %v3818 = vadd.f32 0.0, %v3817
      %v3819 = vpop.f32.mrb[0].mxu0
      %3820 = vmatprep.mubr.bf16.mxu0 0
      %3821 = vmatmul.mubr.bf16.gmra.mrb[0].mxu0 %v3688
      %v3822 = vpop.f32.mrb[0].mxu0
      %v3823 = vadd.f32 0.0, %v3822
      %v3824 = vpop.f32.mrb[0].mxu0
      %v3825 = vpop.f32.mrb[0].mxu0
      %v3826 = vadd.f32 0.0, %v3825
      %v3827 = vpop.f32.mrb[0].mxu0
      %3828 = vmatprep.mubr.bf16.mxu0 0
      %3829 = vmatmul.mubr.bf16.gmra.mrb[0].mxu0 %v3691
      %v3830 = vpop.f32.mrb[0].mxu0
      %v3831 = vadd.f32 0.0, %v3830
      %v3832 = vpop.f32.mrb[0].mxu0
      %v3833 = vpop.f32.mrb[0].mxu0
      %v3834 = vadd.f32 0.0, %v3833
      %v3835 = vpop.f32.mrb[0].mxu0
      %3836 = vmatprep.mubr.bf16.mxu0 0
      %3837 = vmatmul.mubr.bf16.gmra.mrb[0].mxu0 %v3694
      %v3838 = vpop.f32.mrb[0].mxu0
      %v3839 = vadd.f32 0.0, %v3838
      %v3840 = vpop.f32.mrb[0].mxu0
      %v3841 = vpop.f32.mrb[0].mxu0
      %v3842 = vadd.f32 0.0, %v3841
      %v3843 = vpop.f32.mrb[0].mxu0
      %3844 = vmatprep.mubr.bf16.mxu0 0
      %3845 = vmatmul.mubr.bf16.gmra.mrb[0].mxu0 %v3697
      %v3846 = vpop.f32.mrb[0].mxu0
      %v3847 = vadd.f32 0.0, %v3846
      %v3848 = vpop.f32.mrb[0].mxu0
      %v3849 = vpop.f32.mrb[0].mxu0
      %v3850 = vadd.f32 0.0, %v3849
      %v3851 = vpop.f32.mrb[0].mxu0
      %3852 = vmatprep.mubr.bf16.mxu0 0
      %3853 = vmatmul.mubr.bf16.gmra.mrb[0].mxu0 %v3700
      %v3854 = vpop.f32.mrb[0].mxu0
      %v3855 = vadd.f32 0.0, %v3854
      %v3856 = vpop.f32.mrb[0].mxu0
      %v3857 = vpop.f32.mrb[0].mxu0
      %v3858 = vadd.f32 0.0, %v3857
      %v3859 = vpop.f32.mrb[0].mxu0
      %3860 = vmatprep.mubr.bf16.mxu0 0
      %3861 = vmatmul.mubr.bf16.gmra.mrb[0].mxu0 %v3703
      %v3862 = vpop.f32.mrb[0].mxu0
      %v3863 = vadd.f32 0.0, %v3862
      %v3864 = vpop.f32.mrb[0].mxu0
      %v3865 = vpop.f32.mrb[0].mxu0
      %v3866 = vadd.f32 0.0, %v3865
      %v3867 = vpop.f32.mrb[0].mxu0
      %3868 = vdwg.mxu0
      %v3901 = vunpack.c.l.b16 %v3575
      %v3902 = vunpack.c.l.b16 %v3576
      %v3903 = vunpack.c.l.b16 %v3577
      %v3904 = vunpack.c.l.b16 %v3578
      %v3905 = vunpack.c.l.b16 %v3579
      %v3906 = vunpack.c.l.b16 %v3580
      %v3907 = vunpack.c.l.b16 %v3581
      %v3908 = vunpack.c.l.b16 %v3582
      %v3909 = vunpack.c.l.b16 %v3583
      %v3910 = vunpack.c.l.b16 %v3584
      %v3911 = vunpack.c.l.b16 %v3585
      %v3912 = vunpack.c.l.b16 %v3586
      %v3913 = vunpack.c.l.b16 %v3587
      %v3914 = vunpack.c.l.b16 %v3588
      %v3915 = vunpack.c.l.b16 %v3589
      %v3916 = vunpack.c.l.b16 %v3590
      %v3917 = vunpack.c.l.b16 %v3591
      %v3918 = vunpack.c.l.b16 %v3592
      %v3919 = vunpack.c.l.b16 %v3593
      %v3920 = vunpack.c.l.b16 %v3594
      %v3921 = vunpack.c.l.b16 %v3595
      %v3922 = vunpack.c.l.b16 %v3596
      %v3923 = vunpack.c.l.b16 %v3597
      %v3924 = vunpack.c.l.b16 %v3598
      %v3925 = vunpack.c.l.b16 %v3599
      %v3926 = vunpack.c.l.b16 %v3600
      %v3927 = vunpack.c.l.b16 %v3601
      %v3928 = vunpack.c.l.b16 %v3602
      %v3929 = vunpack.c.l.b16 %v3603
      %v3930 = vunpack.c.l.b16 %v3604
      %v3931 = vunpack.c.l.b16 %v3605
      %v3932 = vunpack.c.l.b16 %v3606
      %v3933 = vpack.c.b16 %v3902, %v3901
      %v3934 = vpack.c.b16 %v3904, %v3903
      %v3935 = vpack.c.b16 %v3906, %v3905
      %v3936 = vpack.c.b16 %v3908, %v3907
      %v3937 = vpack.c.b16 %v3910, %v3909
      %v3938 = vpack.c.b16 %v3912, %v3911
      %v3939 = vpack.c.b16 %v3914, %v3913
      %v3940 = vpack.c.b16 %v3916, %v3915
      %v3941 = vpack.c.b16 %v3918, %v3917
      %v3942 = vpack.c.b16 %v3920, %v3919
      %v3943 = vpack.c.b16 %v3922, %v3921
      %v3944 = vpack.c.b16 %v3924, %v3923
      %v3945 = vpack.c.b16 %v3926, %v3925
      %v3946 = vpack.c.b16 %v3928, %v3927
      %v3947 = vpack.c.b16 %v3930, %v3929
      %v3948 = vpack.c.b16 %v3932, %v3931
      %v3950 = vsel %vm481, %v3933, 0
      %v3953 = vsel %vm481, %v3934, 0
      %v3956 = vsel %vm481, %v3935, 0
      %v3959 = vsel %vm481, %v3936, 0
      %v3962 = vsel %vm481, %v3937, 0
      %v3965 = vsel %vm481, %v3938, 0
      %v3968 = vsel %vm481, %v3939, 0
      %v3971 = vsel %vm481, %v3940, 0
      %v3974 = vsel %vm481, %v3941, 0
      %v3977 = vsel %vm481, %v3942, 0
      %v3980 = vsel %vm481, %v3943, 0
      %v3983 = vsel %vm481, %v3944, 0
      %v3986 = vsel %vm481, %v3945, 0
      %v3989 = vsel %vm481, %v3946, 0
      %v3992 = vsel %vm481, %v3947, 0
      %v3995 = vsel %vm481, %v3948, 0
      %v3998 = vsel %vm530, %v3639, 0
      %4000 = vmatprep.subr.bf16.mxu0 0
      %4001 = vmatpush1.bf16.msra.mxu0 %v3998
      %4002 = vmatprep.subr.bf16.mxu0 0
      %4003 = vmatpush1.bf16.msra.mxu0 0
      %4004 = vmatprep.subr.bf16.mxu0 0
      %4005 = vmatpush1.bf16.msra.mxu0 0
      %4006 = vmatprep.subr.bf16.mxu0 0
      %4007 = vmatpush1.bf16.msra.mxu0 0
      %4008 = vmatprep.subr.bf16.mxu0 0
      %4009 = vmatpush1.bf16.msra.mxu0 0
      %4010 = vmatprep.subr.bf16.mxu0 0
      %4011 = vmatpush1.bf16.msra.mxu0 0
      %4012 = vmatprep.subr.bf16.mxu0 0
      %4013 = vmatpush1.bf16.msra.mxu0 0
      %4014 = vmatprep.subr.bf16.mxu0 0
      %4015 = vmatpush1.bf16.msra.mxu0 0
      %4016 = vmatprep.subr.bf16.mxu0 0
      %4017 = vmatpush1.bf16.msra.mxu0 0
      %4018 = vmatprep.subr.bf16.mxu0 0
      %4019 = vmatpush1.bf16.msra.mxu0 0
      %4020 = vmatprep.subr.bf16.mxu0 0
      %4021 = vmatpush1.bf16.msra.mxu0 0
      %4022 = vmatprep.subr.bf16.mxu0 0
      %4023 = vmatpush1.bf16.msra.mxu0 0
      %4024 = vmatprep.subr.bf16.mxu0 0
      %4025 = vmatpush1.bf16.msra.mxu0 0
      %4026 = vmatprep.subr.bf16.mxu0 0
      %4027 = vmatpush1.bf16.msra.mxu0 0
      %4028 = vmatprep.subr.bf16.mxu0 0
      %4029 = vmatpush1.bf16.msra.mxu0 0
      %4030 = vmatprep.subr.bf16.mxu0 0
      %4031 = vmatpush1.bf16.msra.mxu0 0
      %4032 = vmatprep.mubr.bf16.mxu0 0
      %4033 = vmatmul.mubr.bf16.gmra.mrb[0].mxu0 %v3950
      %v4034 = vpop.f32.mrb[0].mxu0
      %v4035 = vadd.f32 %v3743, %v4034
      %v4036 = vpop.f32.mrb[0].mxu0
      %v4037 = vpop.f32.mrb[0].mxu0
      %v4038 = vadd.f32 %v3746, %v4037
      %v4039 = vpop.f32.mrb[0].mxu0
      %4040 = vmatprep.mubr.bf16.mxu0 0
      %4041 = vmatmul.mubr.bf16.gmra.mrb[0].mxu0 %v3953
      %v4042 = vpop.f32.mrb[0].mxu0
      %v4043 = vadd.f32 %v3751, %v4042
      %v4044 = vpop.f32.mrb[0].mxu0
      %v4045 = vpop.f32.mrb[0].mxu0
      %v4046 = vadd.f32 %v3754, %v4045
      %v4047 = vpop.f32.mrb[0].mxu0
      %4048 = vmatprep.mubr.bf16.mxu0 0
      %4049 = vmatmul.mubr.bf16.gmra.mrb[0].mxu0 %v3956
      %v4050 = vpop.f32.mrb[0].mxu0
      %v4051 = vadd.f32 %v3759, %v4050
      %v4052 = vpop.f32.mrb[0].mxu0
      %v4053 = vpop.f32.mrb[0].mxu0
      %v4054 = vadd.f32 %v3762, %v4053
      %v4055 = vpop.f32.mrb[0].mxu0
      %4056 = vmatprep.mubr.bf16.mxu0 0
      %4057 = vmatmul.mubr.bf16.gmra.mrb[0].mxu0 %v3959
      %v4058 = vpop.f32.mrb[0].mxu0
      %v4059 = vadd.f32 %v3767, %v4058
      %v4060 = vpop.f32.mrb[0].mxu0
      %v4061 = vpop.f32.mrb[0].mxu0
      %v4062 = vadd.f32 %v3770, %v4061
      %v4063 = vpop.f32.mrb[0].mxu0
      %4064 = vmatprep.mubr.bf16.mxu0 0
      %4065 = vmatmul.mubr.bf16.gmra.mrb[0].mxu0 %v3962
      %v4066 = vpop.f32.mrb[0].mxu0
      %v4067 = vadd.f32 %v3775, %v4066
      %v4068 = vpop.f32.mrb[0].mxu0
      %v4069 = vpop.f32.mrb[0].mxu0
      %v4070 = vadd.f32 %v3778, %v4069
      %v4071 = vpop.f32.mrb[0].mxu0
      %4072 = vmatprep.mubr.bf16.mxu0 0
      %4073 = vmatmul.mubr.bf16.gmra.mrb[0].mxu0 %v3965
      %v4074 = vpop.f32.mrb[0].mxu0
      %v4075 = vadd.f32 %v3783, %v4074
      %v4076 = vpop.f32.mrb[0].mxu0
      %v4077 = vpop.f32.mrb[0].mxu0
      %v4078 = vadd.f32 %v3786, %v4077
      %v4079 = vpop.f32.mrb[0].mxu0
      %4080 = vmatprep.mubr.bf16.mxu0 0
      %4081 = vmatmul.mubr.bf16.gmra.mrb[0].mxu0 %v3968
      %v4082 = vpop.f32.mrb[0].mxu0
      %v4083 = vadd.f32 %v3791, %v4082
      %v4084 = vpop.f32.mrb[0].mxu0
      %v4085 = vpop.f32.mrb[0].mxu0
      %v4086 = vadd.f32 %v3794, %v4085
      %v4087 = vpop.f32.mrb[0].mxu0
      %4088 = vmatprep.mubr.bf16.mxu0 0
      %4089 = vmatmul.mubr.bf16.gmra.mrb[0].mxu0 %v3971
      %v4090 = vpop.f32.mrb[0].mxu0
      %v4091 = vadd.f32 %v3799, %v4090
      %v4092 = vpop.f32.mrb[0].mxu0
      %v4093 = vpop.f32.mrb[0].mxu0
      %v4094 = vadd.f32 %v3802, %v4093
      %v4095 = vpop.f32.mrb[0].mxu0
      %4096 = vmatprep.mubr.bf16.mxu0 0
      %4097 = vmatmul.mubr.bf16.gmra.mrb[0].mxu0 %v3974
      %v4098 = vpop.f32.mrb[0].mxu0
      %v4099 = vadd.f32 %v3807, %v4098
      %v4100 = vpop.f32.mrb[0].mxu0
      %v4101 = vpop.f32.mrb[0].mxu0
      %v4102 = vadd.f32 %v3810, %v4101
      %v4103 = vpop.f32.mrb[0].mxu0
      %4104 = vmatprep.mubr.bf16.mxu0 0
      %4105 = vmatmul.mubr.bf16.gmra.mrb[0].mxu0 %v3977
      %v4106 = vpop.f32.mrb[0].mxu0
      %v4107 = vadd.f32 %v3815, %v4106
      %v4108 = vpop.f32.mrb[0].mxu0
      %v4109 = vpop.f32.mrb[0].mxu0
      %v4110 = vadd.f32 %v3818, %v4109
      %v4111 = vpop.f32.mrb[0].mxu0
      %4112 = vmatprep.mubr.bf16.mxu0 0
      %4113 = vmatmul.mubr.bf16.gmra.mrb[0].mxu0 %v3980
      %v4114 = vpop.f32.mrb[0].mxu0
      %v4115 = vadd.f32 %v3823, %v4114
      %v4116 = vpop.f32.mrb[0].mxu0
      %v4117 = vpop.f32.mrb[0].mxu0
      %v4118 = vadd.f32 %v3826, %v4117
      %v4119 = vpop.f32.mrb[0].mxu0
      %4120 = vmatprep.mubr.bf16.mxu0 0
      %4121 = vmatmul.mubr.bf16.gmra.mrb[0].mxu0 %v3983
      %v4122 = vpop.f32.mrb[0].mxu0
      %v4123 = vadd.f32 %v3831, %v4122
      %v4124 = vpop.f32.mrb[0].mxu0
      %v4125 = vpop.f32.mrb[0].mxu0
      %v4126 = vadd.f32 %v3834, %v4125
      %v4127 = vpop.f32.mrb[0].mxu0
      %4128 = vmatprep.mubr.bf16.mxu0 0
      %4129 = vmatmul.mubr.bf16.gmra.mrb[0].mxu0 %v3986
      %v4130 = vpop.f32.mrb[0].mxu0
      %v4131 = vadd.f32 %v3839, %v4130
      %v4132 = vpop.f32.mrb[0].mxu0
      %v4133 = vpop.f32.mrb[0].mxu0
      %v4134 = vadd.f32 %v3842, %v4133
      %v4135 = vpop.f32.mrb[0].mxu0
      %4136 = vmatprep.mubr.bf16.mxu0 0
      %4137 = vmatmul.mubr.bf16.gmra.mrb[0].mxu0 %v3989
      %v4138 = vpop.f32.mrb[0].mxu0
      %v4139 = vadd.f32 %v3847, %v4138
      %v4140 = vpop.f32.mrb[0].mxu0
      %v4141 = vpop.f32.mrb[0].mxu0
      %v4142 = vadd.f32 %v3850, %v4141
      %v4143 = vpop.f32.mrb[0].mxu0
      %4144 = vmatprep.mubr.bf16.mxu0 0
      %4145 = vmatmul.mubr.bf16.gmra.mrb[0].mxu0 %v3992
      %v4146 = vpop.f32.mrb[0].mxu0
      %v4147 = vadd.f32 %v3855, %v4146
      %v4148 = vpop.f32.mrb[0].mxu0
      %v4149 = vpop.f32.mrb[0].mxu0
      %v4150 = vadd.f32 %v3858, %v4149
      %v4151 = vpop.f32.mrb[0].mxu0
      %4152 = vmatprep.mubr.bf16.mxu0 0
      %4153 = vmatmul.mubr.bf16.gmra.mrb[0].mxu0 %v3995
      %v4154 = vpop.f32.mrb[0].mxu0
      %v4155 = vadd.f32 %v3863, %v4154
      %v4156 = vpop.f32.mrb[0].mxu0
      %v4157 = vpop.f32.mrb[0].mxu0
      %v4158 = vadd.f32 %v3866, %v4157
      %v4159 = vpop.f32.mrb[0].mxu0
      %4160 = vdwg.mxu0
      %v4161 = vld [vmem:[%s354] sm:$0xf]
      %v4162 = vld [vmem:[%s354 + $0x4] sm:$0xf]
      %v4163 = vld [vmem:[%s354 + $0x8] sm:$0x1]
      %v4164 = vld [vmem:[%s354 + $0xc] sm:$0xf]
      %v4165 = vld [vmem:[%s354 + $0x10] sm:$0xf]
      %v4166 = vld [vmem:[%s354 + $0x14] sm:$0x1]
      %v4167 = vld [vmem:[%s354 + $0x18] sm:$0xf]
      %v4168 = vld [vmem:[%s354 + $0x1c] sm:$0xf]
      %v4169 = vld [vmem:[%s354 + $0x20] sm:$0x1]
      %v4170 = vld [vmem:[%s354 + $0x24] sm:$0xf]
      %v4171 = vld [vmem:[%s354 + $0x28] sm:$0xf]
      %v4172 = vld [vmem:[%s354 + $0x2c] sm:$0x1]
      %v4173 = vld [vmem:[%s354 + $0x30] sm:$0xf]
      %v4174 = vld [vmem:[%s354 + $0x34] sm:$0xf]
      %v4175 = vld [vmem:[%s354 + $0x38] sm:$0x1]
      %v4176 = vld [vmem:[%s354 + $0x3c] sm:$0xf]
      %v4177 = vld [vmem:[%s354 + $0x40] sm:$0xf]
      %v4178 = vld [vmem:[%s354 + $0x44] sm:$0x1]
      %v4179 = vld [vmem:[%s354 + $0x48] sm:$0xf]
      %v4180 = vld [vmem:[%s354 + $0x4c] sm:$0xf]
      %v4181 = vld [vmem:[%s354 + $0x50] sm:$0x1]
      %v4182 = vld [vmem:[%s354 + $0x54] sm:$0xf]
      %v4183 = vld [vmem:[%s354 + $0x58] sm:$0xf]
      %v4184 = vld [vmem:[%s354 + $0x5c] sm:$0x1]
      %v4185 = vld [vmem:[%s354 + $0x60] sm:$0xf]
      %v4186 = vld [vmem:[%s354 + $0x64] sm:$0xf]
      %v4187 = vld [vmem:[%s354 + $0x68] sm:$0x1]
      %v4188 = vld [vmem:[%s354 + $0x6c] sm:$0xf]
      %v4189 = vld [vmem:[%s354 + $0x70] sm:$0xf]
      %v4190 = vld [vmem:[%s354 + $0x74] sm:$0x1]
      %v4191 = vld [vmem:[%s354 + $0x78] sm:$0xf]
      %v4192 = vld [vmem:[%s354 + $0x7c] sm:$0xf]
      %v4193 = vld [vmem:[%s354 + $0x80] sm:$0x1]
      %v4194 = vld [vmem:[%s354 + $0x84] sm:$0xf]
      %v4195 = vld [vmem:[%s354 + $0x88] sm:$0xf]
      %v4196 = vld [vmem:[%s354 + $0x8c] sm:$0x1]
      %v4197 = vld [vmem:[%s354 + $0x90] sm:$0xf]
      %v4198 = vld [vmem:[%s354 + $0x94] sm:$0xf]
      %v4199 = vld [vmem:[%s354 + $0x98] sm:$0x1]
      %v4200 = vld [vmem:[%s354 + $0x9c] sm:$0xf]
      %v4201 = vld [vmem:[%s354 + $0xa0] sm:$0xf]
      %v4202 = vld [vmem:[%s354 + $0xa4] sm:$0x1]
      %v4203 = vld [vmem:[%s354 + $0xa8] sm:$0xf]
      %v4204 = vld [vmem:[%s354 + $0xac] sm:$0xf]
      %v4205 = vld [vmem:[%s354 + $0xb0] sm:$0x1]
      %v4206 = vld [vmem:[%s354 + $0xb4] sm:$0xf]
      %v4207 = vld [vmem:[%s354 + $0xb8] sm:$0xf]
      %v4208 = vld [vmem:[%s354 + $0xbc] sm:$0x1]
      %v4209 = vld [vmem:[#allocation3 + $0x1] sm:$0xff]
      %v4210 = vld [vmem:[#allocation3 + $0x9] sm:$0xff]
      %v4211 = vld [vmem:[#allocation3 + $0x19] sm:$0xff]
      %v4212 = vld [vmem:[#allocation3 + $0x21] sm:$0xff]
      %v4213 = vld [vmem:[#allocation3 + $0x31] sm:$0xff]
      %v4214 = vld [vmem:[#allocation3 + $0x39] sm:$0xff]
      %v4215 = vld [vmem:[#allocation3 + $0x49] sm:$0xff]
      %v4216 = vld [vmem:[#allocation3 + $0x51] sm:$0xff]
      %v4217 = vld [vmem:[#allocation3 + $0x61] sm:$0xff]
      %v4218 = vld [vmem:[#allocation3 + $0x69] sm:$0xff]
      %v4219 = vld [vmem:[#allocation3 + $0x79] sm:$0xff]
      %v4220 = vld [vmem:[#allocation3 + $0x81] sm:$0xff]
      %v4221 = vld [vmem:[#allocation3 + $0x91] sm:$0xff]
      %v4222 = vld [vmem:[#allocation3 + $0x99] sm:$0xff]
      %v4223 = vld [vmem:[#allocation3 + $0xa9] sm:$0xff]
      %v4224 = vld [vmem:[#allocation3 + $0xb1] sm:$0xff]
      %v4225 = vld [vmem:[#allocation3 + $0xc1] sm:$0xff]
      %v4226 = vld [vmem:[#allocation3 + $0xc9] sm:$0xff]
      %v4227 = vld [vmem:[#allocation3 + $0xd9] sm:$0xff]
      %v4228 = vld [vmem:[#allocation3 + $0xe1] sm:$0xff]
      %v4229 = vld [vmem:[#allocation3 + $0xf1] sm:$0xff]
      %v4230 = vld [vmem:[#allocation3 + $0xf9] sm:$0xff]
      %v4231 = vld [vmem:[#allocation3 + $0x109] sm:$0xff]
      %v4232 = vld [vmem:[#allocation3 + $0x111] sm:$0xff]
      %v4233 = vld [vmem:[#allocation3 + $0x121] sm:$0xff]
      %v4234 = vld [vmem:[#allocation3 + $0x129] sm:$0xff]
      %v4235 = vld [vmem:[#allocation3 + $0x139] sm:$0xff]
      %v4236 = vld [vmem:[#allocation3 + $0x141] sm:$0xff]
      %v4237 = vld [vmem:[#allocation3 + $0x151] sm:$0xff]
      %v4238 = vld [vmem:[#allocation3 + $0x159] sm:$0xff]
      %v4239 = vld [vmem:[#allocation3 + $0x169] sm:$0xff]
      %v4240 = vld [vmem:[#allocation3 + $0x171] sm:$0xff]
      %vm4241 = vsmask.f32 3328
      %vm4242 = vsmask.f32 7440
      %vm4243 = vmor %vm4241, %vm4242
      %v4245 = vshrl.u32 %v4161, 16
      %v4247 = vrot.slane %v4245, 4
      %v4248 = vshll.u32 %v4161, 16
      %v4250 = vrot.slane %v4248, 5
      %v4251 = vor.u32 %v4247, %v4250
      %v4252 = vrot.slane %v4251, 4
      %v4254 = vshll.u32 %v4162, 16
      %v4256 = vrot.slane %v4254, 5
      %v4257 = vsel %vm4243, %v4252, %v4256
      %v4258 = vshrl.u32 %v4162, 16
      %v4260 = vrot.slane %v4258, 4
      %v4261 = vor.u32 %v4260, %v4256
      %v4262 = vrot.slane %v4261, 4
      %v4264 = vshll.u32 %v4163, 16
      %v4266 = vrot.slane %v4264, 5
      %v4267 = vsel %vm4243, %v4262, %v4266
      %v4269 = vshrl.u32 %v4164, 16
      %v4271 = vrot.slane %v4269, 4
      %v4272 = vshll.u32 %v4164, 16
      %v4274 = vrot.slane %v4272, 5
      %v4275 = vor.u32 %v4271, %v4274
      %v4276 = vrot.slane %v4275, 4
      %v4278 = vshll.u32 %v4165, 16
      %v4280 = vrot.slane %v4278, 5
      %v4281 = vsel %vm4243, %v4276, %v4280
      %v4282 = vshrl.u32 %v4165, 16
      %v4284 = vrot.slane %v4282, 4
      %v4285 = vor.u32 %v4284, %v4280
      %v4286 = vrot.slane %v4285, 4
      %v4288 = vshll.u32 %v4166, 16
      %v4290 = vrot.slane %v4288, 5
      %v4291 = vsel %vm4243, %v4286, %v4290
      %v4293 = vshrl.u32 %v4167, 16
      %v4295 = vrot.slane %v4293, 4
      %v4296 = vshll.u32 %v4167, 16
      %v4298 = vrot.slane %v4296, 5
      %v4299 = vor.u32 %v4295, %v4298
      %v4300 = vrot.slane %v4299, 4
      %v4302 = vshll.u32 %v4168, 16
      %v4304 = vrot.slane %v4302, 5
      %v4305 = vsel %vm4243, %v4300, %v4304
      %v4306 = vshrl.u32 %v4168, 16
      %v4308 = vrot.slane %v4306, 4
      %v4309 = vor.u32 %v4308, %v4304
      %v4310 = vrot.slane %v4309, 4
      %v4312 = vshll.u32 %v4169, 16
      %v4314 = vrot.slane %v4312, 5
      %v4315 = vsel %vm4243, %v4310, %v4314
      %v4317 = vshrl.u32 %v4170, 16
      %v4319 = vrot.slane %v4317, 4
      %v4320 = vshll.u32 %v4170, 16
      %v4322 = vrot.slane %v4320, 5
      %v4323 = vor.u32 %v4319, %v4322
      %v4324 = vrot.slane %v4323, 4
      %v4326 = vshll.u32 %v4171, 16
      %v4328 = vrot.slane %v4326, 5
      %v4329 = vsel %vm4243, %v4324, %v4328
      %v4330 = vshrl.u32 %v4171, 16
      %v4332 = vrot.slane %v4330, 4
      %v4333 = vor.u32 %v4332, %v4328
      %v4334 = vrot.slane %v4333, 4
      %v4336 = vshll.u32 %v4172, 16
      %v4338 = vrot.slane %v4336, 5
      %v4339 = vsel %vm4243, %v4334, %v4338
      %v4341 = vshrl.u32 %v4173, 16
      %v4343 = vrot.slane %v4341, 4
      %v4344 = vshll.u32 %v4173, 16
      %v4346 = vrot.slane %v4344, 5
      %v4347 = vor.u32 %v4343, %v4346
      %v4348 = vrot.slane %v4347, 4
      %v4350 = vshll.u32 %v4174, 16
      %v4352 = vrot.slane %v4350, 5
      %v4353 = vsel %vm4243, %v4348, %v4352
      %v4354 = vshrl.u32 %v4174, 16
      %v4356 = vrot.slane %v4354, 4
      %v4357 = vor.u32 %v4356, %v4352
      %v4358 = vrot.slane %v4357, 4
      %v4360 = vshll.u32 %v4175, 16
      %v4362 = vrot.slane %v4360, 5
      %v4363 = vsel %vm4243, %v4358, %v4362
      %v4365 = vshrl.u32 %v4176, 16
      %v4367 = vrot.slane %v4365, 4
      %v4368 = vshll.u32 %v4176, 16
      %v4370 = vrot.slane %v4368, 5
      %v4371 = vor.u32 %v4367, %v4370
      %v4372 = vrot.slane %v4371, 4
      %v4374 = vshll.u32 %v4177, 16
      %v4376 = vrot.slane %v4374, 5
      %v4377 = vsel %vm4243, %v4372, %v4376
      %v4378 = vshrl.u32 %v4177, 16
      %v4380 = vrot.slane %v4378, 4
      %v4381 = vor.u32 %v4380, %v4376
      %v4382 = vrot.slane %v4381, 4
      %v4384 = vshll.u32 %v4178, 16
      %v4386 = vrot.slane %v4384, 5
      %v4387 = vsel %vm4243, %v4382, %v4386
      %v4389 = vshrl.u32 %v4179, 16
      %v4391 = vrot.slane %v4389, 4
      %v4392 = vshll.u32 %v4179, 16
      %v4394 = vrot.slane %v4392, 5
      %v4395 = vor.u32 %v4391, %v4394
      %v4396 = vrot.slane %v4395, 4
      %v4398 = vshll.u32 %v4180, 16
      %v4400 = vrot.slane %v4398, 5
      %v4401 = vsel %vm4243, %v4396, %v4400
      %v4402 = vshrl.u32 %v4180, 16
      %v4404 = vrot.slane %v4402, 4
      %v4405 = vor.u32 %v4404, %v4400
      %v4406 = vrot.slane %v4405, 4
      %v4408 = vshll.u32 %v4181, 16
      %v4410 = vrot.slane %v4408, 5
      %v4411 = vsel %vm4243, %v4406, %v4410
      %v4413 = vshrl.u32 %v4182, 16
      %v4415 = vrot.slane %v4413, 4
      %v4416 = vshll.u32 %v4182, 16
      %v4418 = vrot.slane %v4416, 5
      %v4419 = vor.u32 %v4415, %v4418
      %v4420 = vrot.slane %v4419, 4
      %v4422 = vshll.u32 %v4183, 16
      %v4424 = vrot.slane %v4422, 5
      %v4425 = vsel %vm4243, %v4420, %v4424
      %v4426 = vshrl.u32 %v4183, 16
      %v4428 = vrot.slane %v4426, 4
      %v4429 = vor.u32 %v4428, %v4424
      %v4430 = vrot.slane %v4429, 4
      %v4432 = vshll.u32 %v4184, 16
      %v4434 = vrot.slane %v4432, 5
      %v4435 = vsel %vm4243, %v4430, %v4434
      %v4437 = vshrl.u32 %v4185, 16
      %v4439 = vrot.slane %v4437, 4
      %v4440 = vshll.u32 %v4185, 16
      %v4442 = vrot.slane %v4440, 5
      %v4443 = vor.u32 %v4439, %v4442
      %v4444 = vrot.slane %v4443, 4
      %v4446 = vshll.u32 %v4186, 16
      %v4448 = vrot.slane %v4446, 5
      %v4449 = vsel %vm4243, %v4444, %v4448
      %v4450 = vshrl.u32 %v4186, 16
      %v4452 = vrot.slane %v4450, 4
      %v4453 = vor.u32 %v4452, %v4448
      %v4454 = vrot.slane %v4453, 4
      %v4456 = vshll.u32 %v4187, 16
      %v4458 = vrot.slane %v4456, 5
      %v4459 = vsel %vm4243, %v4454, %v4458
      %v4461 = vshrl.u32 %v4188, 16
      %v4463 = vrot.slane %v4461, 4
      %v4464 = vshll.u32 %v4188, 16
      %v4466 = vrot.slane %v4464, 5
      %v4467 = vor.u32 %v4463, %v4466
      %v4468 = vrot.slane %v4467, 4
      %v4470 = vshll.u32 %v4189, 16
      %v4472 = vrot.slane %v4470, 5
      %v4473 = vsel %vm4243, %v4468, %v4472
      %v4474 = vshrl.u32 %v4189, 16
      %v4476 = vrot.slane %v4474, 4
      %v4477 = vor.u32 %v4476, %v4472
      %v4478 = vrot.slane %v4477, 4
      %v4480 = vshll.u32 %v4190, 16
      %v4482 = vrot.slane %v4480, 5
      %v4483 = vsel %vm4243, %v4478, %v4482
      %v4485 = vshrl.u32 %v4191, 16
      %v4487 = vrot.slane %v4485, 4
      %v4488 = vshll.u32 %v4191, 16
      %v4490 = vrot.slane %v4488, 5
      %v4491 = vor.u32 %v4487, %v4490
      %v4492 = vrot.slane %v4491, 4
      %v4494 = vshll.u32 %v4192, 16
      %v4496 = vrot.slane %v4494, 5
      %v4497 = vsel %vm4243, %v4492, %v4496
      %v4498 = vshrl.u32 %v4192, 16
      %v4500 = vrot.slane %v4498, 4
      %v4501 = vor.u32 %v4500, %v4496
      %v4502 = vrot.slane %v4501, 4
      %v4504 = vshll.u32 %v4193, 16
      %v4506 = vrot.slane %v4504, 5
      %v4507 = vsel %vm4243, %v4502, %v4506
      %v4509 = vshrl.u32 %v4194, 16
      %v4511 = vrot.slane %v4509, 4
      %v4512 = vshll.u32 %v4194, 16
      %v4514 = vrot.slane %v4512, 5
      %v4515 = vor.u32 %v4511, %v4514
      %v4516 = vrot.slane %v4515, 4
      %v4518 = vshll.u32 %v4195, 16
      %v4520 = vrot.slane %v4518, 5
      %v4521 = vsel %vm4243, %v4516, %v4520
      %v4522 = vshrl.u32 %v4195, 16
      %v4524 = vrot.slane %v4522, 4
      %v4525 = vor.u32 %v4524, %v4520
      %v4526 = vrot.slane %v4525, 4
      %v4528 = vshll.u32 %v4196, 16
      %v4530 = vrot.slane %v4528, 5
      %v4531 = vsel %vm4243, %v4526, %v4530
      %v4533 = vshrl.u32 %v4197, 16
      %v4535 = vrot.slane %v4533, 4
      %v4536 = vshll.u32 %v4197, 16
      %v4538 = vrot.slane %v4536, 5
      %v4539 = vor.u32 %v4535, %v4538
      %v4540 = vrot.slane %v4539, 4
      %v4542 = vshll.u32 %v4198, 16
      %v4544 = vrot.slane %v4542, 5
      %v4545 = vsel %vm4243, %v4540, %v4544
      %v4546 = vshrl.u32 %v4198, 16
      %v4548 = vrot.slane %v4546, 4
      %v4549 = vor.u32 %v4548, %v4544
      %v4550 = vrot.slane %v4549, 4
      %v4552 = vshll.u32 %v4199, 16
      %v4554 = vrot.slane %v4552, 5
      %v4555 = vsel %vm4243, %v4550, %v4554
      %v4557 = vshrl.u32 %v4200, 16
      %v4559 = vrot.slane %v4557, 4
      %v4560 = vshll.u32 %v4200, 16
      %v4562 = vrot.slane %v4560, 5
      %v4563 = vor.u32 %v4559, %v4562
      %v4564 = vrot.slane %v4563, 4
      %v4566 = vshll.u32 %v4201, 16
      %v4568 = vrot.slane %v4566, 5
      %v4569 = vsel %vm4243, %v4564, %v4568
      %v4570 = vshrl.u32 %v4201, 16
      %v4572 = vrot.slane %v4570, 4
      %v4573 = vor.u32 %v4572, %v4568
      %v4574 = vrot.slane %v4573, 4
      %v4576 = vshll.u32 %v4202, 16
      %v4578 = vrot.slane %v4576, 5
      %v4579 = vsel %vm4243, %v4574, %v4578
      %v4581 = vshrl.u32 %v4203, 16
      %v4583 = vrot.slane %v4581, 4
      %v4584 = vshll.u32 %v4203, 16
      %v4586 = vrot.slane %v4584, 5
      %v4587 = vor.u32 %v4583, %v4586
      %v4588 = vrot.slane %v4587, 4
      %v4590 = vshll.u32 %v4204, 16
      %v4592 = vrot.slane %v4590, 5
      %v4593 = vsel %vm4243, %v4588, %v4592
      %v4594 = vshrl.u32 %v4204, 16
      %v4596 = vrot.slane %v4594, 4
      %v4597 = vor.u32 %v4596, %v4592
      %v4598 = vrot.slane %v4597, 4
      %v4600 = vshll.u32 %v4205, 16
      %v4602 = vrot.slane %v4600, 5
      %v4603 = vsel %vm4243, %v4598, %v4602
      %v4605 = vshrl.u32 %v4206, 16
      %v4607 = vrot.slane %v4605, 4
      %v4608 = vshll.u32 %v4206, 16
      %v4610 = vrot.slane %v4608, 5
      %v4611 = vor.u32 %v4607, %v4610
      %v4612 = vrot.slane %v4611, 4
      %v4614 = vshll.u32 %v4207, 16
      %v4616 = vrot.slane %v4614, 5
      %v4617 = vsel %vm4243, %v4612, %v4616
      %v4618 = vshrl.u32 %v4207, 16
      %v4620 = vrot.slane %v4618, 4
      %v4621 = vor.u32 %v4620, %v4616
      %v4622 = vrot.slane %v4621, 4
      %v4624 = vshll.u32 %v4208, 16
      %v4626 = vrot.slane %v4624, 5
      %v4627 = vsel %vm4243, %v4622, %v4626
      %s4660 = scalar_lea.vmem %s1, 2
      %v4661 = vld [vmem:[%s4660] sm:$0x3]
      %v4662 = vunpack.c.l.b16 %v4257
      %v4663 = vunpack.c.l.b16 %v4267
      %v4664 = vunpack.c.l.b16 %v4281
      %v4665 = vunpack.c.l.b16 %v4291
      %v4666 = vunpack.c.l.b16 %v4305
      %v4667 = vunpack.c.l.b16 %v4315
      %v4668 = vunpack.c.l.b16 %v4329
      %v4669 = vunpack.c.l.b16 %v4339
      %v4670 = vunpack.c.l.b16 %v4353
      %v4671 = vunpack.c.l.b16 %v4363
      %v4672 = vunpack.c.l.b16 %v4377
      %v4673 = vunpack.c.l.b16 %v4387
      %v4674 = vunpack.c.l.b16 %v4401
      %v4675 = vunpack.c.l.b16 %v4411
      %v4676 = vunpack.c.l.b16 %v4425
      %v4677 = vunpack.c.l.b16 %v4435
      %v4678 = vunpack.c.l.b16 %v4449
      %v4679 = vunpack.c.l.b16 %v4459
      %v4680 = vunpack.c.l.b16 %v4473
      %v4681 = vunpack.c.l.b16 %v4483
      %v4682 = vunpack.c.l.b16 %v4497
      %v4683 = vunpack.c.l.b16 %v4507
      %v4684 = vunpack.c.l.b16 %v4521
      %v4685 = vunpack.c.l.b16 %v4531
      %v4686 = vunpack.c.l.b16 %v4545
      %v4687 = vunpack.c.l.b16 %v4555
      %v4688 = vunpack.c.l.b16 %v4569
      %v4689 = vunpack.c.l.b16 %v4579
      %v4690 = vunpack.c.l.b16 %v4593
      %v4691 = vunpack.c.l.b16 %v4603
      %v4692 = vunpack.c.l.b16 %v4617
      %v4693 = vunpack.c.l.b16 %v4627
      %v4694 = vpack.c.b16 %v4663, %v4662
      %v4695 = vpack.c.b16 %v4665, %v4664
      %v4696 = vpack.c.b16 %v4667, %v4666
      %v4697 = vpack.c.b16 %v4669, %v4668
      %v4698 = vpack.c.b16 %v4671, %v4670
      %v4699 = vpack.c.b16 %v4673, %v4672
      %v4700 = vpack.c.b16 %v4675, %v4674
      %v4701 = vpack.c.b16 %v4677, %v4676
      %v4702 = vpack.c.b16 %v4679, %v4678
      %v4703 = vpack.c.b16 %v4681, %v4680
      %v4704 = vpack.c.b16 %v4683, %v4682
      %v4705 = vpack.c.b16 %v4685, %v4684
      %v4706 = vpack.c.b16 %v4687, %v4686
      %v4707 = vpack.c.b16 %v4689, %v4688
      %v4708 = vpack.c.b16 %v4691, %v4690
      %v4709 = vpack.c.b16 %v4693, %v4692
      %v4711 = vsel %vm481, %v4694, 0
      %v4714 = vsel %vm481, %v4695, 0
      %v4717 = vsel %vm481, %v4696, 0
      %v4720 = vsel %vm481, %v4697, 0
      %v4723 = vsel %vm481, %v4698, 0
      %v4726 = vsel %vm481, %v4699, 0
      %v4729 = vsel %vm481, %v4700, 0
      %v4732 = vsel %vm481, %v4701, 0
      %v4735 = vsel %vm481, %v4702, 0
      %v4738 = vsel %vm481, %v4703, 0
      %v4741 = vsel %vm481, %v4704, 0
      %v4744 = vsel %vm481, %v4705, 0
      %v4747 = vsel %vm481, %v4706, 0
      %v4750 = vsel %vm481, %v4707, 0
      %v4753 = vsel %vm481, %v4708, 0
      %v4756 = vsel %vm481, %v4709, 0
      %v4759 = vsel %vm530, %v4661, 0
      %4761 = vmatprep.subr.bf16.mxu0 0
      %4762 = vmatpush1.bf16.msra.mxu0 %v4759
      %4763 = vmatprep.subr.bf16.mxu0 0
      %4764 = vmatpush1.bf16.msra.mxu0 0
      %4765 = vmatprep.subr.bf16.mxu0 0
      %4766 = vmatpush1.bf16.msra.mxu0 0
      %4767 = vmatprep.subr.bf16.mxu0 0
      %4768 = vmatpush1.bf16.msra.mxu0 0
      %4769 = vmatprep.subr.bf16.mxu0 0
      %4770 = vmatpush1.bf16.msra.mxu0 0
      %4771 = vmatprep.subr.bf16.mxu0 0
      %4772 = vmatpush1.bf16.msra.mxu0 0
      %4773 = vmatprep.subr.bf16.mxu0 0
      %4774 = vmatpush1.bf16.msra.mxu0 0
      %4775 = vmatprep.subr.bf16.mxu0 0
      %4776 = vmatpush1.bf16.msra.mxu0 0
      %4777 = vmatprep.subr.bf16.mxu0 0
      %4778 = vmatpush1.bf16.msra.mxu0 0
      %4779 = vmatprep.subr.bf16.mxu0 0
      %4780 = vmatpush1.bf16.msra.mxu0 0
      %4781 = vmatprep.subr.bf16.mxu0 0
      %4782 = vmatpush1.bf16.msra.mxu0 0
      %4783 = vmatprep.subr.bf16.mxu0 0
      %4784 = vmatpush1.bf16.msra.mxu0 0
      %4785 = vmatprep.subr.bf16.mxu0 0
      %4786 = vmatpush1.bf16.msra.mxu0 0
      %4787 = vmatprep.subr.bf16.mxu0 0
      %4788 = vmatpush1.bf16.msra.mxu0 0
      %4789 = vmatprep.subr.bf16.mxu0 0
      %4790 = vmatpush1.bf16.msra.mxu0 0
      %4791 = vmatprep.subr.bf16.mxu0 0
      %4792 = vmatpush1.bf16.msra.mxu0 0
      %4793 = vmatprep.mubr.bf16.mxu0 0
      %4794 = vmatmul.mubr.bf16.gmra.mrb[0].mxu0 %v4711
      %v4795 = vpop.f32.mrb[0].mxu0
      %v4796 = vadd.f32 0.0, %v4795
      %v4797 = vpop.f32.mrb[0].mxu0
      %v4798 = vpop.f32.mrb[0].mxu0
      %v4799 = vadd.f32 0.0, %v4798
      %v4800 = vpop.f32.mrb[0].mxu0
      %4801 = vmatprep.mubr.bf16.mxu0 0
      %4802 = vmatmul.mubr.bf16.gmra.mrb[0].mxu0 %v4714
      %v4803 = vpop.f32.mrb[0].mxu0
      %v4804 = vadd.f32 0.0, %v4803
      %v4805 = vpop.f32.mrb[0].mxu0
      %v4806 = vpop.f32.mrb[0].mxu0
      %v4807 = vadd.f32 0.0, %v4806
      %v4808 = vpop.f32.mrb[0].mxu0
      %4809 = vmatprep.mubr.bf16.mxu0 0
      %4810 = vmatmul.mubr.bf16.gmra.mrb[0].mxu0 %v4717
      %v4811 = vpop.f32.mrb[0].mxu0
      %v4812 = vadd.f32 0.0, %v4811
      %v4813 = vpop.f32.mrb[0].mxu0
      %v4814 = vpop.f32.mrb[0].mxu0
      %v4815 = vadd.f32 0.0, %v4814
      %v4816 = vpop.f32.mrb[0].mxu0
      %4817 = vmatprep.mubr.bf16.mxu0 0
      %4818 = vmatmul.mubr.bf16.gmra.mrb[0].mxu0 %v4720
      %v4819 = vpop.f32.mrb[0].mxu0
      %v4820 = vadd.f32 0.0, %v4819
      %v4821 = vpop.f32.mrb[0].mxu0
      %v4822 = vpop.f32.mrb[0].mxu0
      %v4823 = vadd.f32 0.0, %v4822
      %v4824 = vpop.f32.mrb[0].mxu0
      %4825 = vmatprep.mubr.bf16.mxu0 0
      %4826 = vmatmul.mubr.bf16.gmra.mrb[0].mxu0 %v4723
      %v4827 = vpop.f32.mrb[0].mxu0
      %v4828 = vadd.f32 0.0, %v4827
      %v4829 = vpop.f32.mrb[0].mxu0
      %v4830 = vpop.f32.mrb[0].mxu0
      %v4831 = vadd.f32 0.0, %v4830
      %v4832 = vpop.f32.mrb[0].mxu0
      %4833 = vmatprep.mubr.bf16.mxu0 0
      %4834 = vmatmul.mubr.bf16.gmra.mrb[0].mxu0 %v4726
      %v4835 = vpop.f32.mrb[0].mxu0
      %v4836 = vadd.f32 0.0, %v4835
      %v4837 = vpop.f32.mrb[0].mxu0
      %v4838 = vpop.f32.mrb[0].mxu0
      %v4839 = vadd.f32 0.0, %v4838
      %v4840 = vpop.f32.mrb[0].mxu0
      %4841 = vmatprep.mubr.bf16.mxu0 0
      %4842 = vmatmul.mubr.bf16.gmra.mrb[0].mxu0 %v4729
      %v4843 = vpop.f32.mrb[0].mxu0
      %v4844 = vadd.f32 0.0, %v4843
      %v4845 = vpop.f32.mrb[0].mxu0
      %v4846 = vpop.f32.mrb[0].mxu0
      %v4847 = vadd.f32 0.0, %v4846
      %v4848 = vpop.f32.mrb[0].mxu0
      %4849 = vmatprep.mubr.bf16.mxu0 0
      %4850 = vmatmul.mubr.bf16.gmra.mrb[0].mxu0 %v4732
      %v4851 = vpop.f32.mrb[0].mxu0
      %v4852 = vadd.f32 0.0, %v4851
      %v4853 = vpop.f32.mrb[0].mxu0
      %v4854 = vpop.f32.mrb[0].mxu0
      %v4855 = vadd.f32 0.0, %v4854
      %v4856 = vpop.f32.mrb[0].mxu0
      %4857 = vmatprep.mubr.bf16.mxu0 0
      %4858 = vmatmul.mubr.bf16.gmra.mrb[0].mxu0 %v4735
      %v4859 = vpop.f32.mrb[0].mxu0
      %v4860 = vadd.f32 0.0, %v4859
      %v4861 = vpop.f32.mrb[0].mxu0
      %v4862 = vpop.f32.mrb[0].mxu0
      %v4863 = vadd.f32 0.0, %v4862
      %v4864 = vpop.f32.mrb[0].mxu0
      %4865 = vmatprep.mubr.bf16.mxu0 0
      %4866 = vmatmul.mubr.bf16.gmra.mrb[0].mxu0 %v4738
      %v4867 = vpop.f32.mrb[0].mxu0
      %v4868 = vadd.f32 0.0, %v4867
      %v4869 = vpop.f32.mrb[0].mxu0
      %v4870 = vpop.f32.mrb[0].mxu0
      %v4871 = vadd.f32 0.0, %v4870
      %v4872 = vpop.f32.mrb[0].mxu0
      %4873 = vmatprep.mubr.bf16.mxu0 0
      %4874 = vmatmul.mubr.bf16.gmra.mrb[0].mxu0 %v4741
      %v4875 = vpop.f32.mrb[0].mxu0
      %v4876 = vadd.f32 0.0, %v4875
      %v4877 = vpop.f32.mrb[0].mxu0
      %v4878 = vpop.f32.mrb[0].mxu0
      %v4879 = vadd.f32 0.0, %v4878
      %v4880 = vpop.f32.mrb[0].mxu0
      %4881 = vmatprep.mubr.bf16.mxu0 0
      %4882 = vmatmul.mubr.bf16.gmra.mrb[0].mxu0 %v4744
      %v4883 = vpop.f32.mrb[0].mxu0
      %v4884 = vadd.f32 0.0, %v4883
      %v4885 = vpop.f32.mrb[0].mxu0
      %v4886 = vpop.f32.mrb[0].mxu0
      %v4887 = vadd.f32 0.0, %v4886
      %v4888 = vpop.f32.mrb[0].mxu0
      %4889 = vmatprep.mubr.bf16.mxu0 0
      %4890 = vmatmul.mubr.bf16.gmra.mrb[0].mxu0 %v4747
      %v4891 = vpop.f32.mrb[0].mxu0
      %v4892 = vadd.f32 0.0, %v4891
      %v4893 = vpop.f32.mrb[0].mxu0
      %v4894 = vpop.f32.mrb[0].mxu0
      %v4895 = vadd.f32 0.0, %v4894
      %v4896 = vpop.f32.mrb[0].mxu0
      %4897 = vmatprep.mubr.bf16.mxu0 0
      %4898 = vmatmul.mubr.bf16.gmra.mrb[0].mxu0 %v4750
      %v4899 = vpop.f32.mrb[0].mxu0
      %v4900 = vadd.f32 0.0, %v4899
      %v4901 = vpop.f32.mrb[0].mxu0
      %v4902 = vpop.f32.mrb[0].mxu0
      %v4903 = vadd.f32 0.0, %v4902
      %v4904 = vpop.f32.mrb[0].mxu0
      %4905 = vmatprep.mubr.bf16.mxu0 0
      %4906 = vmatmul.mubr.bf16.gmra.mrb[0].mxu0 %v4753
      %v4907 = vpop.f32.mrb[0].mxu0
      %v4908 = vadd.f32 0.0, %v4907
      %v4909 = vpop.f32.mrb[0].mxu0
      %v4910 = vpop.f32.mrb[0].mxu0
      %v4911 = vadd.f32 0.0, %v4910
      %v4912 = vpop.f32.mrb[0].mxu0
      %4913 = vmatprep.mubr.bf16.mxu0 0
      %4914 = vmatmul.mubr.bf16.gmra.mrb[0].mxu0 %v4756
      %v4915 = vpop.f32.mrb[0].mxu0
      %v4916 = vadd.f32 0.0, %v4915
      %v4917 = vpop.f32.mrb[0].mxu0
      %v4918 = vpop.f32.mrb[0].mxu0
      %v4919 = vadd.f32 0.0, %v4918
      %v4920 = vpop.f32.mrb[0].mxu0
      %4921 = vdwg.mxu0
      %v4922 = vadd.f32 %v4035, %v4796
      %v4923 = vadd.f32 %v4038, %v4799
      %v4924 = vadd.f32 %v4043, %v4804
      %v4925 = vadd.f32 %v4046, %v4807
      %v4926 = vadd.f32 %v4051, %v4812
      %v4927 = vadd.f32 %v4054, %v4815
      %v4928 = vadd.f32 %v4059, %v4820
      %v4929 = vadd.f32 %v4062, %v4823
      %v4930 = vadd.f32 %v4067, %v4828
      %v4931 = vadd.f32 %v4070, %v4831
      %v4932 = vadd.f32 %v4075, %v4836
      %v4933 = vadd.f32 %v4078, %v4839
      %v4934 = vadd.f32 %v4083, %v4844
      %v4935 = vadd.f32 %v4086, %v4847
      %v4936 = vadd.f32 %v4091, %v4852
      %v4937 = vadd.f32 %v4094, %v4855
      %v4938 = vadd.f32 %v4099, %v4860
      %v4939 = vadd.f32 %v4102, %v4863
      %v4940 = vadd.f32 %v4107, %v4868
      %v4941 = vadd.f32 %v4110, %v4871
      %v4942 = vadd.f32 %v4115, %v4876
      %v4943 = vadd.f32 %v4118, %v4879
      %v4944 = vadd.f32 %v4123, %v4884
      %v4945 = vadd.f32 %v4126, %v4887
      %v4946 = vadd.f32 %v4131, %v4892
      %v4947 = vadd.f32 %v4134, %v4895
      %v4948 = vadd.f32 %v4139, %v4900
      %v4949 = vadd.f32 %v4142, %v4903
      %v4950 = vadd.f32 %v4147, %v4908
      %v4951 = vadd.f32 %v4150, %v4911
      %v4952 = vadd.f32 %v4155, %v4916
      %v4953 = vadd.f32 %v4158, %v4919
      %v4954 = vpack.c.bf16 %v4210, %v4209
      %v4955 = vpack.c.bf16 %v4212, %v4211
      %v4956 = vpack.c.bf16 %v4214, %v4213
      %v4957 = vpack.c.bf16 %v4216, %v4215
      %v4958 = vpack.c.bf16 %v4218, %v4217
      %v4959 = vpack.c.bf16 %v4220, %v4219
      %v4960 = vpack.c.bf16 %v4222, %v4221
      %v4961 = vpack.c.bf16 %v4224, %v4223
      %v4962 = vpack.c.bf16 %v4226, %v4225
      %v4963 = vpack.c.bf16 %v4228, %v4227
      %v4964 = vpack.c.bf16 %v4230, %v4229
      %v4965 = vpack.c.bf16 %v4232, %v4231
      %v4966 = vpack.c.bf16 %v4234, %v4233
      %v4967 = vpack.c.bf16 %v4236, %v4235
      %v4968 = vpack.c.bf16 %v4238, %v4237
      %v4969 = vpack.c.bf16 %v4240, %v4239
      %s4970 = scalar_lea.vmem %s7, 4
      %v4971 = vld [vmem:[%s4970] sm:$0xf]
      %v4973 = vsel %vm727, %v4954, 0
      %v4976 = vsel %vm727, %v4955, 0
      %v4979 = vsel %vm727, %v4956, 0
      %v4982 = vsel %vm727, %v4957, 0
      %v4985 = vsel %vm727, %v4958, 0
      %v4988 = vsel %vm727, %v4959, 0
      %v4991 = vsel %vm727, %v4960, 0
      %v4994 = vsel %vm727, %v4961, 0
      %v4997 = vsel %vm727, %v4962, 0
      %v5000 = vsel %vm727, %v4963, 0
      %v5003 = vsel %vm727, %v4964, 0
      %v5006 = vsel %vm727, %v4965, 0
      %v5009 = vsel %vm727, %v4966, 0
      %v5012 = vsel %vm727, %v4967, 0
      %v5015 = vsel %vm727, %v4968, 0
      %v5018 = vsel %vm727, %v4969, 0
      %v5021 = vsel %vm981, %v4971, 0
      %5023 = vmatprep.subr.bf16.mxu0 0
      %5024 = vmatpush1.bf16.msra.mxu0 %v5021
      %5025 = vmatprep.subr.bf16.mxu0 0
      %5026 = vmatpush1.bf16.msra.mxu0 0
      %5027 = vmatprep.subr.bf16.mxu0 0
      %5028 = vmatpush1.bf16.msra.mxu0 0
      %5029 = vmatprep.subr.bf16.mxu0 0
      %5030 = vmatpush1.bf16.msra.mxu0 0
      %5031 = vmatprep.subr.bf16.mxu0 0
      %5032 = vmatpush1.bf16.msra.mxu0 0
      %5033 = vmatprep.subr.bf16.mxu0 0
      %5034 = vmatpush1.bf16.msra.mxu0 0
      %5035 = vmatprep.subr.bf16.mxu0 0
      %5036 = vmatpush1.bf16.msra.mxu0 0
      %5037 = vmatprep.subr.bf16.mxu0 0
      %5038 = vmatpush1.bf16.msra.mxu0 0
      %5039 = vmatprep.subr.bf16.mxu0 0
      %5040 = vmatpush1.bf16.msra.mxu0 0
      %5041 = vmatprep.subr.bf16.mxu0 0
      %5042 = vmatpush1.bf16.msra.mxu0 0
      %5043 = vmatprep.subr.bf16.mxu0 0
      %5044 = vmatpush1.bf16.msra.mxu0 0
      %5045 = vmatprep.subr.bf16.mxu0 0
      %5046 = vmatpush1.bf16.msra.mxu0 0
      %5047 = vmatprep.subr.bf16.mxu0 0
      %5048 = vmatpush1.bf16.msra.mxu0 0
      %5049 = vmatprep.subr.bf16.mxu0 0
      %5050 = vmatpush1.bf16.msra.mxu0 0
      %5051 = vmatprep.subr.bf16.mxu0 0
      %5052 = vmatpush1.bf16.msra.mxu0 0
      %5053 = vmatprep.subr.bf16.mxu0 0
      %5054 = vmatpush1.bf16.msra.mxu0 0
      %5055 = vmatprep.mubr.bf16.mxu0 0
      %5056 = vmatmul.mubr.bf16.gmra.mrb[0].mxu0 %v4973
      %v5057 = vpop.f32.mrb[0].mxu0
      %v5058 = vadd.f32 0.0, %v5057
      %v5059 = vpop.f32.mrb[0].mxu0
      %v5060 = vpop.f32.mrb[0].mxu0
      %v5061 = vadd.f32 0.0, %v5060
      %v5062 = vpop.f32.mrb[0].mxu0
      %5063 = vmatprep.mubr.bf16.mxu0 0
      %5064 = vmatmul.mubr.bf16.gmra.mrb[0].mxu0 %v4976
      %v5065 = vpop.f32.mrb[0].mxu0
      %v5066 = vadd.f32 0.0, %v5065
      %v5067 = vpop.f32.mrb[0].mxu0
      %v5068 = vpop.f32.mrb[0].mxu0
      %v5069 = vadd.f32 0.0, %v5068
      %v5070 = vpop.f32.mrb[0].mxu0
      %5071 = vmatprep.mubr.bf16.mxu0 0
      %5072 = vmatmul.mubr.bf16.gmra.mrb[0].mxu0 %v4979
      %v5073 = vpop.f32.mrb[0].mxu0
      %v5074 = vadd.f32 0.0, %v5073
      %v5075 = vpop.f32.mrb[0].mxu0
      %v5076 = vpop.f32.mrb[0].mxu0
      %v5077 = vadd.f32 0.0, %v5076
      %v5078 = vpop.f32.mrb[0].mxu0
      %5079 = vmatprep.mubr.bf16.mxu0 0
      %5080 = vmatmul.mubr.bf16.gmra.mrb[0].mxu0 %v4982
      %v5081 = vpop.f32.mrb[0].mxu0
      %v5082 = vadd.f32 0.0, %v5081
      %v5083 = vpop.f32.mrb[0].mxu0
      %v5084 = vpop.f32.mrb[0].mxu0
      %v5085 = vadd.f32 0.0, %v5084
      %v5086 = vpop.f32.mrb[0].mxu0
      %5087 = vmatprep.mubr.bf16.mxu0 0
      %5088 = vmatmul.mubr.bf16.gmra.mrb[0].mxu0 %v4985
      %v5089 = vpop.f32.mrb[0].mxu0
      %v5090 = vadd.f32 0.0, %v5089
      %v5091 = vpop.f32.mrb[0].mxu0
      %v5092 = vpop.f32.mrb[0].mxu0
      %v5093 = vadd.f32 0.0, %v5092
      %v5094 = vpop.f32.mrb[0].mxu0
      %5095 = vmatprep.mubr.bf16.mxu0 0
      %5096 = vmatmul.mubr.bf16.gmra.mrb[0].mxu0 %v4988
      %v5097 = vpop.f32.mrb[0].mxu0
      %v5098 = vadd.f32 0.0, %v5097
      %v5099 = vpop.f32.mrb[0].mxu0
      %v5100 = vpop.f32.mrb[0].mxu0
      %v5101 = vadd.f32 0.0, %v5100
      %v5102 = vpop.f32.mrb[0].mxu0
      %5103 = vmatprep.mubr.bf16.mxu0 0
      %5104 = vmatmul.mubr.bf16.gmra.mrb[0].mxu0 %v4991
      %v5105 = vpop.f32.mrb[0].mxu0
      %v5106 = vadd.f32 0.0, %v5105
      %v5107 = vpop.f32.mrb[0].mxu0
      %v5108 = vpop.f32.mrb[0].mxu0
      %v5109 = vadd.f32 0.0, %v5108
      %v5110 = vpop.f32.mrb[0].mxu0
      %5111 = vmatprep.mubr.bf16.mxu0 0
      %5112 = vmatmul.mubr.bf16.gmra.mrb[0].mxu0 %v4994
      %v5113 = vpop.f32.mrb[0].mxu0
      %v5114 = vadd.f32 0.0, %v5113
      %v5115 = vpop.f32.mrb[0].mxu0
      %v5116 = vpop.f32.mrb[0].mxu0
      %v5117 = vadd.f32 0.0, %v5116
      %v5118 = vpop.f32.mrb[0].mxu0
      %5119 = vmatprep.mubr.bf16.mxu0 0
      %5120 = vmatmul.mubr.bf16.gmra.mrb[0].mxu0 %v4997
      %v5121 = vpop.f32.mrb[0].mxu0
      %v5122 = vadd.f32 0.0, %v5121
      %v5123 = vpop.f32.mrb[0].mxu0
      %v5124 = vpop.f32.mrb[0].mxu0
      %v5125 = vadd.f32 0.0, %v5124
      %v5126 = vpop.f32.mrb[0].mxu0
      %5127 = vmatprep.mubr.bf16.mxu0 0
      %5128 = vmatmul.mubr.bf16.gmra.mrb[0].mxu0 %v5000
      %v5129 = vpop.f32.mrb[0].mxu0
      %v5130 = vadd.f32 0.0, %v5129
      %v5131 = vpop.f32.mrb[0].mxu0
      %v5132 = vpop.f32.mrb[0].mxu0
      %v5133 = vadd.f32 0.0, %v5132
      %v5134 = vpop.f32.mrb[0].mxu0
      %5135 = vmatprep.mubr.bf16.mxu0 0
      %5136 = vmatmul.mubr.bf16.gmra.mrb[0].mxu0 %v5003
      %v5137 = vpop.f32.mrb[0].mxu0
      %v5138 = vadd.f32 0.0, %v5137
      %v5139 = vpop.f32.mrb[0].mxu0
      %v5140 = vpop.f32.mrb[0].mxu0
      %v5141 = vadd.f32 0.0, %v5140
      %v5142 = vpop.f32.mrb[0].mxu0
      %5143 = vmatprep.mubr.bf16.mxu0 0
      %5144 = vmatmul.mubr.bf16.gmra.mrb[0].mxu0 %v5006
      %v5145 = vpop.f32.mrb[0].mxu0
      %v5146 = vadd.f32 0.0, %v5145
      %v5147 = vpop.f32.mrb[0].mxu0
      %v5148 = vpop.f32.mrb[0].mxu0
      %v5149 = vadd.f32 0.0, %v5148
      %v5150 = vpop.f32.mrb[0].mxu0
      %5151 = vmatprep.mubr.bf16.mxu0 0
      %5152 = vmatmul.mubr.bf16.gmra.mrb[0].mxu0 %v5009
      %v5153 = vpop.f32.mrb[0].mxu0
      %v5154 = vadd.f32 0.0, %v5153
      %v5155 = vpop.f32.mrb[0].mxu0
      %v5156 = vpop.f32.mrb[0].mxu0
      %v5157 = vadd.f32 0.0, %v5156
      %v5158 = vpop.f32.mrb[0].mxu0
      %5159 = vmatprep.mubr.bf16.mxu0 0
      %5160 = vmatmul.mubr.bf16.gmra.mrb[0].mxu0 %v5012
      %v5161 = vpop.f32.mrb[0].mxu0
      %v5162 = vadd.f32 0.0, %v5161
      %v5163 = vpop.f32.mrb[0].mxu0
      %v5164 = vpop.f32.mrb[0].mxu0
      %v5165 = vadd.f32 0.0, %v5164
      %v5166 = vpop.f32.mrb[0].mxu0
      %5167 = vmatprep.mubr.bf16.mxu0 0
      %5168 = vmatmul.mubr.bf16.gmra.mrb[0].mxu0 %v5015
      %v5169 = vpop.f32.mrb[0].mxu0
      %v5170 = vadd.f32 0.0, %v5169
      %v5171 = vpop.f32.mrb[0].mxu0
      %v5172 = vpop.f32.mrb[0].mxu0
      %v5173 = vadd.f32 0.0, %v5172
      %v5174 = vpop.f32.mrb[0].mxu0
      %5175 = vmatprep.mubr.bf16.mxu0 0
      %5176 = vmatmul.mubr.bf16.gmra.mrb[0].mxu0 %v5018
      %v5177 = vpop.f32.mrb[0].mxu0
      %v5178 = vadd.f32 0.0, %v5177
      %v5179 = vpop.f32.mrb[0].mxu0
      %v5180 = vpop.f32.mrb[0].mxu0
      %v5181 = vadd.f32 0.0, %v5180
      %v5182 = vpop.f32.mrb[0].mxu0
      %5183 = vdwg.mxu0
      %v5184 = vadd.f32 %v4922, %v5058
      %v5185 = vadd.f32 %v4923, %v5061
      %v5186 = vadd.f32 %v4924, %v5066
      %v5187 = vadd.f32 %v4925, %v5069
      %v5188 = vadd.f32 %v4926, %v5074
      %v5189 = vadd.f32 %v4927, %v5077
      %v5190 = vadd.f32 %v4928, %v5082
      %v5191 = vadd.f32 %v4929, %v5085
      %v5192 = vadd.f32 %v4930, %v5090
      %v5193 = vadd.f32 %v4931, %v5093
      %v5194 = vadd.f32 %v4932, %v5098
      %v5195 = vadd.f32 %v4933, %v5101
      %v5196 = vadd.f32 %v4934, %v5106
      %v5197 = vadd.f32 %v4935, %v5109
      %v5198 = vadd.f32 %v4936, %v5114
      %v5199 = vadd.f32 %v4937, %v5117
      %v5200 = vadd.f32 %v4938, %v5122
      %v5201 = vadd.f32 %v4939, %v5125
      %v5202 = vadd.f32 %v4940, %v5130
      %v5203 = vadd.f32 %v4941, %v5133
      %v5204 = vadd.f32 %v4942, %v5138
      %v5205 = vadd.f32 %v4943, %v5141
      %v5206 = vadd.f32 %v4944, %v5146
      %v5207 = vadd.f32 %v4945, %v5149
      %v5208 = vadd.f32 %v4946, %v5154
      %v5209 = vadd.f32 %v4947, %v5157
      %v5210 = vadd.f32 %v4948, %v5162
      %v5211 = vadd.f32 %v4949, %v5165
      %v5212 = vadd.f32 %v4950, %v5170
      %v5213 = vadd.f32 %v4951, %v5173
      %v5214 = vadd.f32 %v4952, %v5178
      %v5215 = vadd.f32 %v4953, %v5181
      %v5216 = vld [vmem:[%s354] sm:$0xe]
      %v5217 = vld [vmem:[%s354 + $0xc] sm:$0xe]
      %v5218 = vld [vmem:[%s354 + $0x18] sm:$0xe]
      %v5219 = vld [vmem:[%s354 + $0x24] sm:$0xe]
      %v5220 = vld [vmem:[%s354 + $0x30] sm:$0xe]
      %v5221 = vld [vmem:[%s354 + $0x3c] sm:$0xe]
      %v5222 = vld [vmem:[%s354 + $0x48] sm:$0xe]
      %v5223 = vld [vmem:[%s354 + $0x54] sm:$0xe]
      %v5224 = vld [vmem:[%s354 + $0x60] sm:$0xe]
      %v5225 = vld [vmem:[%s354 + $0x6c] sm:$0xe]
      %v5226 = vld [vmem:[%s354 + $0x78] sm:$0xe]
      %v5227 = vld [vmem:[%s354 + $0x84] sm:$0xe]
      %v5228 = vld [vmem:[%s354 + $0x90] sm:$0xe]
      %v5229 = vld [vmem:[%s354 + $0x9c] sm:$0xe]
      %v5230 = vld [vmem:[%s354 + $0xa8] sm:$0xe]
      %v5231 = vld [vmem:[%s354 + $0xb4] sm:$0xe]
      %v5232 = vld [vmem:[#allocation3 + $0x2] sm:$0xff]
      %v5233 = vld [vmem:[#allocation3 + $0xa] sm:$0xff]
      %v5234 = vld [vmem:[#allocation3 + $0x1a] sm:$0xff]
      %v5235 = vld [vmem:[#allocation3 + $0x22] sm:$0xff]
      %v5236 = vld [vmem:[#allocation3 + $0x32] sm:$0xff]
      %v5237 = vld [vmem:[#allocation3 + $0x3a] sm:$0xff]
      %v5238 = vld [vmem:[#allocation3 + $0x4a] sm:$0xff]
      %v5239 = vld [vmem:[#allocation3 + $0x52] sm:$0xff]
      %v5240 = vld [vmem:[#allocation3 + $0x62] sm:$0xff]
      %v5241 = vld [vmem:[#allocation3 + $0x6a] sm:$0xff]
      %v5242 = vld [vmem:[#allocation3 + $0x7a] sm:$0xff]
      %v5243 = vld [vmem:[#allocation3 + $0x82] sm:$0xff]
      %v5244 = vld [vmem:[#allocation3 + $0x92] sm:$0xff]
      %v5245 = vld [vmem:[#allocation3 + $0x9a] sm:$0xff]
      %v5246 = vld [vmem:[#allocation3 + $0xaa] sm:$0xff]
      %v5247 = vld [vmem:[#allocation3 + $0xb2] sm:$0xff]
      %v5248 = vld [vmem:[#allocation3 + $0xc2] sm:$0xff]
      %v5249 = vld [vmem:[#allocation3 + $0xca] sm:$0xff]
      %v5250 = vld [vmem:[#allocation3 + $0xda] sm:$0xff]
      %v5251 = vld [vmem:[#allocation3 + $0xe2] sm:$0xff]
      %v5252 = vld [vmem:[#allocation3 + $0xf2] sm:$0xff]
      %v5253 = vld [vmem:[#allocation3 + $0xfa] sm:$0xff]
      %v5254 = vld [vmem:[#allocation3 + $0x10a] sm:$0xff]
      %v5255 = vld [vmem:[#allocation3 + $0x112] sm:$0xff]
      %v5256 = vld [vmem:[#allocation3 + $0x122] sm:$0xff]
      %v5257 = vld [vmem:[#allocation3 + $0x12a] sm:$0xff]
      %v5258 = vld [vmem:[#allocation3 + $0x13a] sm:$0xff]
      %v5259 = vld [vmem:[#allocation3 + $0x142] sm:$0xff]
      %v5260 = vld [vmem:[#allocation3 + $0x152] sm:$0xff]
      %v5261 = vld [vmem:[#allocation3 + $0x15a] sm:$0xff]
      %v5262 = vld [vmem:[#allocation3 + $0x16a] sm:$0xff]
      %v5263 = vld [vmem:[#allocation3 + $0x172] sm:$0xff]
      %vm5312 = vcmask 1042432
      %vm5313 = vcmask 1046532
      %vm5314 = vmor %vm5312, %vm5313
      %v5315 = vrot.slane %v5216, 5
      %v5316 = vrot.slane %v5315, 4
      %v5317 = vrot.slane %v4162, 5
      %v5318 = vsel %vm5314, %v5316, %v5317
      %v5319 = vrot.slane %v5317, 4
      %v5320 = vrot.slane %v4163, 5
      %v5321 = vsel %vm5314, %v5319, %v5320
      %v5322 = vrot.slane %v5217, 5
      %v5323 = vrot.slane %v5322, 4
      %v5324 = vrot.slane %v4165, 5
      %v5325 = vsel %vm5314, %v5323, %v5324
      %v5326 = vrot.slane %v5324, 4
      %v5327 = vrot.slane %v4166, 5
      %v5328 = vsel %vm5314, %v5326, %v5327
      %v5329 = vrot.slane %v5218, 5
      %v5330 = vrot.slane %v5329, 4
      %v5331 = vrot.slane %v4168, 5
      %v5332 = vsel %vm5314, %v5330, %v5331
      %v5333 = vrot.slane %v5331, 4
      %v5334 = vrot.slane %v4169, 5
      %v5335 = vsel %vm5314, %v5333, %v5334
      %v5336 = vrot.slane %v5219, 5
      %v5337 = vrot.slane %v5336, 4
      %v5338 = vrot.slane %v4171, 5
      %v5339 = vsel %vm5314, %v5337, %v5338
      %v5340 = vrot.slane %v5338, 4
      %v5341 = vrot.slane %v4172, 5
      %v5342 = vsel %vm5314, %v5340, %v5341
      %v5343 = vrot.slane %v5220, 5
      %v5344 = vrot.slane %v5343, 4
      %v5345 = vrot.slane %v4174, 5
      %v5346 = vsel %vm5314, %v5344, %v5345
      %v5347 = vrot.slane %v5345, 4
      %v5348 = vrot.slane %v4175, 5
      %v5349 = vsel %vm5314, %v5347, %v5348
      %v5350 = vrot.slane %v5221, 5
      %v5351 = vrot.slane %v5350, 4
      %v5352 = vrot.slane %v4177, 5
      %v5353 = vsel %vm5314, %v5351, %v5352
      %v5354 = vrot.slane %v5352, 4
      %v5355 = vrot.slane %v4178, 5
      %v5356 = vsel %vm5314, %v5354, %v5355
      %v5357 = vrot.slane %v5222, 5
      %v5358 = vrot.slane %v5357, 4
      %v5359 = vrot.slane %v4180, 5
      %v5360 = vsel %vm5314, %v5358, %v5359
      %v5361 = vrot.slane %v5359, 4
      %v5362 = vrot.slane %v4181, 5
      %v5363 = vsel %vm5314, %v5361, %v5362
      %v5364 = vrot.slane %v5223, 5
      %v5365 = vrot.slane %v5364, 4
      %v5366 = vrot.slane %v4183, 5
      %v5367 = vsel %vm5314, %v5365, %v5366
      %v5368 = vrot.slane %v5366, 4
      %v5369 = vrot.slane %v4184, 5
      %v5370 = vsel %vm5314, %v5368, %v5369
      %v5371 = vrot.slane %v5224, 5
      %v5372 = vrot.slane %v5371, 4
      %v5373 = vrot.slane %v4186, 5
      %v5374 = vsel %vm5314, %v5372, %v5373
      %v5375 = vrot.slane %v5373, 4
      %v5376 = vrot.slane %v4187, 5
      %v5377 = vsel %vm5314, %v5375, %v5376
      %v5378 = vrot.slane %v5225, 5
      %v5379 = vrot.slane %v5378, 4
      %v5380 = vrot.slane %v4189, 5
      %v5381 = vsel %vm5314, %v5379, %v5380
      %v5382 = vrot.slane %v5380, 4
      %v5383 = vrot.slane %v4190, 5
      %v5384 = vsel %vm5314, %v5382, %v5383
      %v5385 = vrot.slane %v5226, 5
      %v5386 = vrot.slane %v5385, 4
      %v5387 = vrot.slane %v4192, 5
      %v5388 = vsel %vm5314, %v5386, %v5387
      %v5389 = vrot.slane %v5387, 4
      %v5390 = vrot.slane %v4193, 5
      %v5391 = vsel %vm5314, %v5389, %v5390
      %v5392 = vrot.slane %v5227, 5
      %v5393 = vrot.slane %v5392, 4
      %v5394 = vrot.slane %v4195, 5
      %v5395 = vsel %vm5314, %v5393, %v5394
      %v5396 = vrot.slane %v5394, 4
      %v5397 = vrot.slane %v4196, 5
      %v5398 = vsel %vm5314, %v5396, %v5397
      %v5399 = vrot.slane %v5228, 5
      %v5400 = vrot.slane %v5399, 4
      %v5401 = vrot.slane %v4198, 5
      %v5402 = vsel %vm5314, %v5400, %v5401
      %v5403 = vrot.slane %v5401, 4
      %v5404 = vrot.slane %v4199, 5
      %v5405 = vsel %vm5314, %v5403, %v5404
      %v5406 = vrot.slane %v5229, 5
      %v5407 = vrot.slane %v5406, 4
      %v5408 = vrot.slane %v4201, 5
      %v5409 = vsel %vm5314, %v5407, %v5408
      %v5410 = vrot.slane %v5408, 4
      %v5411 = vrot.slane %v4202, 5
      %v5412 = vsel %vm5314, %v5410, %v5411
      %v5413 = vrot.slane %v5230, 5
      %v5414 = vrot.slane %v5413, 4
      %v5415 = vrot.slane %v4204, 5
      %v5416 = vsel %vm5314, %v5414, %v5415
      %v5417 = vrot.slane %v5415, 4
      %v5418 = vrot.slane %v4205, 5
      %v5419 = vsel %vm5314, %v5417, %v5418
      %v5420 = vrot.slane %v5231, 5
      %v5421 = vrot.slane %v5420, 4
      %v5422 = vrot.slane %v4207, 5
      %v5423 = vsel %vm5314, %v5421, %v5422
      %v5424 = vrot.slane %v5422, 4
      %v5425 = vrot.slane %v4208, 5
      %v5426 = vsel %vm5314, %v5424, %v5425
      %s5459 = scalar_lea.vmem %s1, 4
      %v5460 = vld [vmem:[%s5459] sm:$0x3]
      %v5461 = vunpack.c.l.b16 %v5318
      %v5462 = vunpack.c.l.b16 %v5321
      %v5463 = vunpack.c.l.b16 %v5325
      %v5464 = vunpack.c.l.b16 %v5328
      %v5465 = vunpack.c.l.b16 %v5332
      %v5466 = vunpack.c.l.b16 %v5335
      %v5467 = vunpack.c.l.b16 %v5339
      %v5468 = vunpack.c.l.b16 %v5342
      %v5469 = vunpack.c.l.b16 %v5346
      %v5470 = vunpack.c.l.b16 %v5349
      %v5471 = vunpack.c.l.b16 %v5353
      %v5472 = vunpack.c.l.b16 %v5356
      %v5473 = vunpack.c.l.b16 %v5360
      %v5474 = vunpack.c.l.b16 %v5363
      %v5475 = vunpack.c.l.b16 %v5367
      %v5476 = vunpack.c.l.b16 %v5370
      %v5477 = vunpack.c.l.b16 %v5374
      %v5478 = vunpack.c.l.b16 %v5377
      %v5479 = vunpack.c.l.b16 %v5381
      %v5480 = vunpack.c.l.b16 %v5384
      %v5481 = vunpack.c.l.b16 %v5388
      %v5482 = vunpack.c.l.b16 %v5391
      %v5483 = vunpack.c.l.b16 %v5395
      %v5484 = vunpack.c.l.b16 %v5398
      %v5485 = vunpack.c.l.b16 %v5402
      %v5486 = vunpack.c.l.b16 %v5405
      %v5487 = vunpack.c.l.b16 %v5409
      %v5488 = vunpack.c.l.b16 %v5412
      %v5489 = vunpack.c.l.b16 %v5416
      %v5490 = vunpack.c.l.b16 %v5419
      %v5491 = vunpack.c.l.b16 %v5423
      %v5492 = vunpack.c.l.b16 %v5426
      %v5493 = vpack.c.b16 %v5462, %v5461
      %v5494 = vpack.c.b16 %v5464, %v5463
      %v5495 = vpack.c.b16 %v5466, %v5465
      %v5496 = vpack.c.b16 %v5468, %v5467
      %v5497 = vpack.c.b16 %v5470, %v5469
      %v5498 = vpack.c.b16 %v5472, %v5471
      %v5499 = vpack.c.b16 %v5474, %v5473
      %v5500 = vpack.c.b16 %v5476, %v5475
      %v5501 = vpack.c.b16 %v5478, %v5477
      %v5502 = vpack.c.b16 %v5480, %v5479
      %v5503 = vpack.c.b16 %v5482, %v5481
      %v5504 = vpack.c.b16 %v5484, %v5483
      %v5505 = vpack.c.b16 %v5486, %v5485
      %v5506 = vpack.c.b16 %v5488, %v5487
      %v5507 = vpack.c.b16 %v5490, %v5489
      %v5508 = vpack.c.b16 %v5492, %v5491
      %v5510 = vsel %vm481, %v5493, 0
      %v5513 = vsel %vm481, %v5494, 0
      %v5516 = vsel %vm481, %v5495, 0
      %v5519 = vsel %vm481, %v5496, 0
      %v5522 = vsel %vm481, %v5497, 0
      %v5525 = vsel %vm481, %v5498, 0
      %v5528 = vsel %vm481, %v5499, 0
      %v5531 = vsel %vm481, %v5500, 0
      %v5534 = vsel %vm481, %v5501, 0
      %v5537 = vsel %vm481, %v5502, 0
      %v5540 = vsel %vm481, %v5503, 0
      %v5543 = vsel %vm481, %v5504, 0
      %v5546 = vsel %vm481, %v5505, 0
      %v5549 = vsel %vm481, %v5506, 0
      %v5552 = vsel %vm481, %v5507, 0
      %v5555 = vsel %vm481, %v5508, 0
      %v5558 = vsel %vm530, %v5460, 0
      %5560 = vmatprep.subr.bf16.mxu0 0
      %5561 = vmatpush1.bf16.msra.mxu0 %v5558
      %5562 = vmatprep.subr.bf16.mxu0 0
      %5563 = vmatpush1.bf16.msra.mxu0 0
      %5564 = vmatprep.subr.bf16.mxu0 0
      %5565 = vmatpush1.bf16.msra.mxu0 0
      %5566 = vmatprep.subr.bf16.mxu0 0
      %5567 = vmatpush1.bf16.msra.mxu0 0
      %5568 = vmatprep.subr.bf16.mxu0 0
      %5569 = vmatpush1.bf16.msra.mxu0 0
      %5570 = vmatprep.subr.bf16.mxu0 0
      %5571 = vmatpush1.bf16.msra.mxu0 0
      %5572 = vmatprep.subr.bf16.mxu0 0
      %5573 = vmatpush1.bf16.msra.mxu0 0
      %5574 = vmatprep.subr.bf16.mxu0 0
      %5575 = vmatpush1.bf16.msra.mxu0 0
      %5576 = vmatprep.subr.bf16.mxu0 0
      %5577 = vmatpush1.bf16.msra.mxu0 0
      %5578 = vmatprep.subr.bf16.mxu0 0
      %5579 = vmatpush1.bf16.msra.mxu0 0
      %5580 = vmatprep.subr.bf16.mxu0 0
      %5581 = vmatpush1.bf16.msra.mxu0 0
      %5582 = vmatprep.subr.bf16.mxu0 0
      %5583 = vmatpush1.bf16.msra.mxu0 0
      %5584 = vmatprep.subr.bf16.mxu0 0
      %5585 = vmatpush1.bf16.msra.mxu0 0
      %5586 = vmatprep.subr.bf16.mxu0 0
      %5587 = vmatpush1.bf16.msra.mxu0 0
      %5588 = vmatprep.subr.bf16.mxu0 0
      %5589 = vmatpush1.bf16.msra.mxu0 0
      %5590 = vmatprep.subr.bf16.mxu0 0
      %5591 = vmatpush1.bf16.msra.mxu0 0
      %5592 = vmatprep.mubr.bf16.mxu0 0
      %5593 = vmatmul.mubr.bf16.gmra.mrb[0].mxu0 %v5510
      %v5594 = vpop.f32.mrb[0].mxu0
      %v5595 = vadd.f32 0.0, %v5594
      %v5596 = vpop.f32.mrb[0].mxu0
      %v5597 = vpop.f32.mrb[0].mxu0
      %v5598 = vadd.f32 0.0, %v5597
      %v5599 = vpop.f32.mrb[0].mxu0
      %5600 = vmatprep.mubr.bf16.mxu0 0
      %5601 = vmatmul.mubr.bf16.gmra.mrb[0].mxu0 %v5513
      %v5602 = vpop.f32.mrb[0].mxu0
      %v5603 = vadd.f32 0.0, %v5602
      %v5604 = vpop.f32.mrb[0].mxu0
      %v5605 = vpop.f32.mrb[0].mxu0
      %v5606 = vadd.f32 0.0, %v5605
      %v5607 = vpop.f32.mrb[0].mxu0
      %5608 = vmatprep.mubr.bf16.mxu0 0
      %5609 = vmatmul.mubr.bf16.gmra.mrb[0].mxu0 %v5516
      %v5610 = vpop.f32.mrb[0].mxu0
      %v5611 = vadd.f32 0.0, %v5610
      %v5612 = vpop.f32.mrb[0].mxu0
      %v5613 = vpop.f32.mrb[0].mxu0
      %v5614 = vadd.f32 0.0, %v5613
      %v5615 = vpop.f32.mrb[0].mxu0
      %5616 = vmatprep.mubr.bf16.mxu0 0
      %5617 = vmatmul.mubr.bf16.gmra.mrb[0].mxu0 %v5519
      %v5618 = vpop.f32.mrb[0].mxu0
      %v5619 = vadd.f32 0.0, %v5618
      %v5620 = vpop.f32.mrb[0].mxu0
      %v5621 = vpop.f32.mrb[0].mxu0
      %v5622 = vadd.f32 0.0, %v5621
      %v5623 = vpop.f32.mrb[0].mxu0
      %5624 = vmatprep.mubr.bf16.mxu0 0
      %5625 = vmatmul.mubr.bf16.gmra.mrb[0].mxu0 %v5522
      %v5626 = vpop.f32.mrb[0].mxu0
      %v5627 = vadd.f32 0.0, %v5626
      %v5628 = vpop.f32.mrb[0].mxu0
      %v5629 = vpop.f32.mrb[0].mxu0
      %v5630 = vadd.f32 0.0, %v5629
      %v5631 = vpop.f32.mrb[0].mxu0
      %5632 = vmatprep.mubr.bf16.mxu0 0
      %5633 = vmatmul.mubr.bf16.gmra.mrb[0].mxu0 %v5525
      %v5634 = vpop.f32.mrb[0].mxu0
      %v5635 = vadd.f32 0.0, %v5634
      %v5636 = vpop.f32.mrb[0].mxu0
      %v5637 = vpop.f32.mrb[0].mxu0
      %v5638 = vadd.f32 0.0, %v5637
      %v5639 = vpop.f32.mrb[0].mxu0
      %5640 = vmatprep.mubr.bf16.mxu0 0
      %5641 = vmatmul.mubr.bf16.gmra.mrb[0].mxu0 %v5528
      %v5642 = vpop.f32.mrb[0].mxu0
      %v5643 = vadd.f32 0.0, %v5642
      %v5644 = vpop.f32.mrb[0].mxu0
      %v5645 = vpop.f32.mrb[0].mxu0
      %v5646 = vadd.f32 0.0, %v5645
      %v5647 = vpop.f32.mrb[0].mxu0
      %5648 = vmatprep.mubr.bf16.mxu0 0
      %5649 = vmatmul.mubr.bf16.gmra.mrb[0].mxu0 %v5531
      %v5650 = vpop.f32.mrb[0].mxu0
      %v5651 = vadd.f32 0.0, %v5650
      %v5652 = vpop.f32.mrb[0].mxu0
      %v5653 = vpop.f32.mrb[0].mxu0
      %v5654 = vadd.f32 0.0, %v5653
      %v5655 = vpop.f32.mrb[0].mxu0
      %5656 = vmatprep.mubr.bf16.mxu0 0
      %5657 = vmatmul.mubr.bf16.gmra.mrb[0].mxu0 %v5534
      %v5658 = vpop.f32.mrb[0].mxu0
      %v5659 = vadd.f32 0.0, %v5658
      %v5660 = vpop.f32.mrb[0].mxu0
      %v5661 = vpop.f32.mrb[0].mxu0
      %v5662 = vadd.f32 0.0, %v5661
      %v5663 = vpop.f32.mrb[0].mxu0
      %5664 = vmatprep.mubr.bf16.mxu0 0
      %5665 = vmatmul.mubr.bf16.gmra.mrb[0].mxu0 %v5537
      %v5666 = vpop.f32.mrb[0].mxu0
      %v5667 = vadd.f32 0.0, %v5666
      %v5668 = vpop.f32.mrb[0].mxu0
      %v5669 = vpop.f32.mrb[0].mxu0
      %v5670 = vadd.f32 0.0, %v5669
      %v5671 = vpop.f32.mrb[0].mxu0
      %5672 = vmatprep.mubr.bf16.mxu0 0
      %5673 = vmatmul.mubr.bf16.gmra.mrb[0].mxu0 %v5540
      %v5674 = vpop.f32.mrb[0].mxu0
      %v5675 = vadd.f32 0.0, %v5674
      %v5676 = vpop.f32.mrb[0].mxu0
      %v5677 = vpop.f32.mrb[0].mxu0
      %v5678 = vadd.f32 0.0, %v5677
      %v5679 = vpop.f32.mrb[0].mxu0
      %5680 = vmatprep.mubr.bf16.mxu0 0
      %5681 = vmatmul.mubr.bf16.gmra.mrb[0].mxu0 %v5543
      %v5682 = vpop.f32.mrb[0].mxu0
      %v5683 = vadd.f32 0.0, %v5682
      %v5684 = vpop.f32.mrb[0].mxu0
      %v5685 = vpop.f32.mrb[0].mxu0
      %v5686 = vadd.f32 0.0, %v5685
      %v5687 = vpop.f32.mrb[0].mxu0
      %5688 = vmatprep.mubr.bf16.mxu0 0
      %5689 = vmatmul.mubr.bf16.gmra.mrb[0].mxu0 %v5546
      %v5690 = vpop.f32.mrb[0].mxu0
      %v5691 = vadd.f32 0.0, %v5690
      %v5692 = vpop.f32.mrb[0].mxu0
      %v5693 = vpop.f32.mrb[0].mxu0
      %v5694 = vadd.f32 0.0, %v5693
      %v5695 = vpop.f32.mrb[0].mxu0
      %5696 = vmatprep.mubr.bf16.mxu0 0
      %5697 = vmatmul.mubr.bf16.gmra.mrb[0].mxu0 %v5549
      %v5698 = vpop.f32.mrb[0].mxu0
      %v5699 = vadd.f32 0.0, %v5698
      %v5700 = vpop.f32.mrb[0].mxu0
      %v5701 = vpop.f32.mrb[0].mxu0
      %v5702 = vadd.f32 0.0, %v5701
      %v5703 = vpop.f32.mrb[0].mxu0
      %5704 = vmatprep.mubr.bf16.mxu0 0
      %5705 = vmatmul.mubr.bf16.gmra.mrb[0].mxu0 %v5552
      %v5706 = vpop.f32.mrb[0].mxu0
      %v5707 = vadd.f32 0.0, %v5706
      %v5708 = vpop.f32.mrb[0].mxu0
      %v5709 = vpop.f32.mrb[0].mxu0
      %v5710 = vadd.f32 0.0, %v5709
      %v5711 = vpop.f32.mrb[0].mxu0
      %5712 = vmatprep.mubr.bf16.mxu0 0
      %5713 = vmatmul.mubr.bf16.gmra.mrb[0].mxu0 %v5555
      %v5714 = vpop.f32.mrb[0].mxu0
      %v5715 = vadd.f32 0.0, %v5714
      %v5716 = vpop.f32.mrb[0].mxu0
      %v5717 = vpop.f32.mrb[0].mxu0
      %v5718 = vadd.f32 0.0, %v5717
      %v5719 = vpop.f32.mrb[0].mxu0
      %5720 = vdwg.mxu0
      %v5721 = vadd.f32 %v5184, %v5595
      %v5722 = vadd.f32 %v5185, %v5598
      %v5723 = vadd.f32 %v5186, %v5603
      %v5724 = vadd.f32 %v5187, %v5606
      %v5725 = vadd.f32 %v5188, %v5611
      %v5726 = vadd.f32 %v5189, %v5614
      %v5727 = vadd.f32 %v5190, %v5619
      %v5728 = vadd.f32 %v5191, %v5622
      %v5729 = vadd.f32 %v5192, %v5627
      %v5730 = vadd.f32 %v5193, %v5630
      %v5731 = vadd.f32 %v5194, %v5635
      %v5732 = vadd.f32 %v5195, %v5638
      %v5733 = vadd.f32 %v5196, %v5643
      %v5734 = vadd.f32 %v5197, %v5646
      %v5735 = vadd.f32 %v5198, %v5651
      %v5736 = vadd.f32 %v5199, %v5654
      %v5737 = vadd.f32 %v5200, %v5659
      %v5738 = vadd.f32 %v5201, %v5662
      %v5739 = vadd.f32 %v5202, %v5667
      %v5740 = vadd.f32 %v5203, %v5670
      %v5741 = vadd.f32 %v5204, %v5675
      %v5742 = vadd.f32 %v5205, %v5678
      %v5743 = vadd.f32 %v5206, %v5683
      %v5744 = vadd.f32 %v5207, %v5686
      %v5745 = vadd.f32 %v5208, %v5691
      %v5746 = vadd.f32 %v5209, %v5694
      %v5747 = vadd.f32 %v5210, %v5699
      %v5748 = vadd.f32 %v5211, %v5702
      %v5749 = vadd.f32 %v5212, %v5707
      %v5750 = vadd.f32 %v5213, %v5710
      %v5751 = vadd.f32 %v5214, %v5715
      %v5752 = vadd.f32 %v5215, %v5718
      %v5753 = vpack.c.bf16 %v5233, %v5232
      %v5754 = vpack.c.bf16 %v5235, %v5234
      %v5755 = vpack.c.bf16 %v5237, %v5236
      %v5756 = vpack.c.bf16 %v5239, %v5238
      %v5757 = vpack.c.bf16 %v5241, %v5240
      %v5758 = vpack.c.bf16 %v5243, %v5242
      %v5759 = vpack.c.bf16 %v5245, %v5244
      %v5760 = vpack.c.bf16 %v5247, %v5246
      %v5761 = vpack.c.bf16 %v5249, %v5248
      %v5762 = vpack.c.bf16 %v5251, %v5250
      %v5763 = vpack.c.bf16 %v5253, %v5252
      %v5764 = vpack.c.bf16 %v5255, %v5254
      %v5765 = vpack.c.bf16 %v5257, %v5256
      %v5766 = vpack.c.bf16 %v5259, %v5258
      %v5767 = vpack.c.bf16 %v5261, %v5260
      %v5768 = vpack.c.bf16 %v5263, %v5262
      %s5769 = scalar_lea.vmem %s7, 8
      %v5770 = vld [vmem:[%s5769] sm:$0xf]
      %v5772 = vsel %vm727, %v5753, 0
      %v5775 = vsel %vm727, %v5754, 0
      %v5778 = vsel %vm727, %v5755, 0
      %v5781 = vsel %vm727, %v5756, 0
      %v5784 = vsel %vm727, %v5757, 0
      %v5787 = vsel %vm727, %v5758, 0
      %v5790 = vsel %vm727, %v5759, 0
      %v5793 = vsel %vm727, %v5760, 0
      %v5796 = vsel %vm727, %v5761, 0
      %v5799 = vsel %vm727, %v5762, 0
      %v5802 = vsel %vm727, %v5763, 0
      %v5805 = vsel %vm727, %v5764, 0
      %v5808 = vsel %vm727, %v5765, 0
      %v5811 = vsel %vm727, %v5766, 0
      %v5814 = vsel %vm727, %v5767, 0
      %v5817 = vsel %vm727, %v5768, 0
      %v5820 = vsel %vm981, %v5770, 0
      %5822 = vmatprep.subr.bf16.mxu0 0
      %5823 = vmatpush1.bf16.msra.mxu0 %v5820
      %5824 = vmatprep.subr.bf16.mxu0 0
      %5825 = vmatpush1.bf16.msra.mxu0 0
      %5826 = vmatprep.subr.bf16.mxu0 0
      %5827 = vmatpush1.bf16.msra.mxu0 0
      %5828 = vmatprep.subr.bf16.mxu0 0
      %5829 = vmatpush1.bf16.msra.mxu0 0
      %5830 = vmatprep.subr.bf16.mxu0 0
      %5831 = vmatpush1.bf16.msra.mxu0 0
      %5832 = vmatprep.subr.bf16.mxu0 0
      %5833 = vmatpush1.bf16.msra.mxu0 0
      %5834 = vmatprep.subr.bf16.mxu0 0
      %5835 = vmatpush1.bf16.msra.mxu0 0
      %5836 = vmatprep.subr.bf16.mxu0 0
      %5837 = vmatpush1.bf16.msra.mxu0 0
      %5838 = vmatprep.subr.bf16.mxu0 0
      %5839 = vmatpush1.bf16.msra.mxu0 0
      %5840 = vmatprep.subr.bf16.mxu0 0
      %5841 = vmatpush1.bf16.msra.mxu0 0
      %5842 = vmatprep.subr.bf16.mxu0 0
      %5843 = vmatpush1.bf16.msra.mxu0 0
      %5844 = vmatprep.subr.bf16.mxu0 0
      %5845 = vmatpush1.bf16.msra.mxu0 0
      %5846 = vmatprep.subr.bf16.mxu0 0
      %5847 = vmatpush1.bf16.msra.mxu0 0
      %5848 = vmatprep.subr.bf16.mxu0 0
      %5849 = vmatpush1.bf16.msra.mxu0 0
      %5850 = vmatprep.subr.bf16.mxu0 0
      %5851 = vmatpush1.bf16.msra.mxu0 0
      %5852 = vmatprep.subr.bf16.mxu0 0
      %5853 = vmatpush1.bf16.msra.mxu0 0
      %5854 = vmatprep.mubr.bf16.mxu0 0
      %5855 = vmatmul.mubr.bf16.gmra.mrb[0].mxu0 %v5772
      %v5856 = vpop.f32.mrb[0].mxu0
      %v5857 = vadd.f32 0.0, %v5856
      %v5858 = vpop.f32.mrb[0].mxu0
      %v5859 = vpop.f32.mrb[0].mxu0
      %v5860 = vadd.f32 0.0, %v5859
      %v5861 = vpop.f32.mrb[0].mxu0
      %5862 = vmatprep.mubr.bf16.mxu0 0
      %5863 = vmatmul.mubr.bf16.gmra.mrb[0].mxu0 %v5775
      %v5864 = vpop.f32.mrb[0].mxu0
      %v5865 = vadd.f32 0.0, %v5864
      %v5866 = vpop.f32.mrb[0].mxu0
      %v5867 = vpop.f32.mrb[0].mxu0
      %v5868 = vadd.f32 0.0, %v5867
      %v5869 = vpop.f32.mrb[0].mxu0
      %5870 = vmatprep.mubr.bf16.mxu0 0
      %5871 = vmatmul.mubr.bf16.gmra.mrb[0].mxu0 %v5778
      %v5872 = vpop.f32.mrb[0].mxu0
      %v5873 = vadd.f32 0.0, %v5872
      %v5874 = vpop.f32.mrb[0].mxu0
      %v5875 = vpop.f32.mrb[0].mxu0
      %v5876 = vadd.f32 0.0, %v5875
      %v5877 = vpop.f32.mrb[0].mxu0
      %5878 = vmatprep.mubr.bf16.mxu0 0
      %5879 = vmatmul.mubr.bf16.gmra.mrb[0].mxu0 %v5781
      %v5880 = vpop.f32.mrb[0].mxu0
      %v5881 = vadd.f32 0.0, %v5880
      %v5882 = vpop.f32.mrb[0].mxu0
      %v5883 = vpop.f32.mrb[0].mxu0
      %v5884 = vadd.f32 0.0, %v5883
      %v5885 = vpop.f32.mrb[0].mxu0
      %5886 = vmatprep.mubr.bf16.mxu0 0
      %5887 = vmatmul.mubr.bf16.gmra.mrb[0].mxu0 %v5784
      %v5888 = vpop.f32.mrb[0].mxu0
      %v5889 = vadd.f32 0.0, %v5888
      %v5890 = vpop.f32.mrb[0].mxu0
      %v5891 = vpop.f32.mrb[0].mxu0
      %v5892 = vadd.f32 0.0, %v5891
      %v5893 = vpop.f32.mrb[0].mxu0
      %5894 = vmatprep.mubr.bf16.mxu0 0
      %5895 = vmatmul.mubr.bf16.gmra.mrb[0].mxu0 %v5787
      %v5896 = vpop.f32.mrb[0].mxu0
      %v5897 = vadd.f32 0.0, %v5896
      %v5898 = vpop.f32.mrb[0].mxu0
      %v5899 = vpop.f32.mrb[0].mxu0
      %v5900 = vadd.f32 0.0, %v5899
      %v5901 = vpop.f32.mrb[0].mxu0
      %5902 = vmatprep.mubr.bf16.mxu0 0
      %5903 = vmatmul.mubr.bf16.gmra.mrb[0].mxu0 %v5790
      %v5904 = vpop.f32.mrb[0].mxu0
      %v5905 = vadd.f32 0.0, %v5904
      %v5906 = vpop.f32.mrb[0].mxu0
      %v5907 = vpop.f32.mrb[0].mxu0
      %v5908 = vadd.f32 0.0, %v5907
      %v5909 = vpop.f32.mrb[0].mxu0
      %5910 = vmatprep.mubr.bf16.mxu0 0
      %5911 = vmatmul.mubr.bf16.gmra.mrb[0].mxu0 %v5793
      %v5912 = vpop.f32.mrb[0].mxu0
      %v5913 = vadd.f32 0.0, %v5912
      %v5914 = vpop.f32.mrb[0].mxu0
      %v5915 = vpop.f32.mrb[0].mxu0
      %v5916 = vadd.f32 0.0, %v5915
      %v5917 = vpop.f32.mrb[0].mxu0
      %5918 = vmatprep.mubr.bf16.mxu0 0
      %5919 = vmatmul.mubr.bf16.gmra.mrb[0].mxu0 %v5796
      %v5920 = vpop.f32.mrb[0].mxu0
      %v5921 = vadd.f32 0.0, %v5920
      %v5922 = vpop.f32.mrb[0].mxu0
      %v5923 = vpop.f32.mrb[0].mxu0
      %v5924 = vadd.f32 0.0, %v5923
      %v5925 = vpop.f32.mrb[0].mxu0
      %5926 = vmatprep.mubr.bf16.mxu0 0
      %5927 = vmatmul.mubr.bf16.gmra.mrb[0].mxu0 %v5799
      %v5928 = vpop.f32.mrb[0].mxu0
      %v5929 = vadd.f32 0.0, %v5928
      %v5930 = vpop.f32.mrb[0].mxu0
      %v5931 = vpop.f32.mrb[0].mxu0
      %v5932 = vadd.f32 0.0, %v5931
      %v5933 = vpop.f32.mrb[0].mxu0
      %5934 = vmatprep.mubr.bf16.mxu0 0
      %5935 = vmatmul.mubr.bf16.gmra.mrb[0].mxu0 %v5802
      %v5936 = vpop.f32.mrb[0].mxu0
      %v5937 = vadd.f32 0.0, %v5936
      %v5938 = vpop.f32.mrb[0].mxu0
      %v5939 = vpop.f32.mrb[0].mxu0
      %v5940 = vadd.f32 0.0, %v5939
      %v5941 = vpop.f32.mrb[0].mxu0
      %5942 = vmatprep.mubr.bf16.mxu0 0
      %5943 = vmatmul.mubr.bf16.gmra.mrb[0].mxu0 %v5805
      %v5944 = vpop.f32.mrb[0].mxu0
      %v5945 = vadd.f32 0.0, %v5944
      %v5946 = vpop.f32.mrb[0].mxu0
      %v5947 = vpop.f32.mrb[0].mxu0
      %v5948 = vadd.f32 0.0, %v5947
      %v5949 = vpop.f32.mrb[0].mxu0
      %5950 = vmatprep.mubr.bf16.mxu0 0
      %5951 = vmatmul.mubr.bf16.gmra.mrb[0].mxu0 %v5808
      %v5952 = vpop.f32.mrb[0].mxu0
      %v5953 = vadd.f32 0.0, %v5952
      %v5954 = vpop.f32.mrb[0].mxu0
      %v5955 = vpop.f32.mrb[0].mxu0
      %v5956 = vadd.f32 0.0, %v5955
      %v5957 = vpop.f32.mrb[0].mxu0
      %5958 = vmatprep.mubr.bf16.mxu0 0
      %5959 = vmatmul.mubr.bf16.gmra.mrb[0].mxu0 %v5811
      %v5960 = vpop.f32.mrb[0].mxu0
      %v5961 = vadd.f32 0.0, %v5960
      %v5962 = vpop.f32.mrb[0].mxu0
      %v5963 = vpop.f32.mrb[0].mxu0
      %v5964 = vadd.f32 0.0, %v5963
      %v5965 = vpop.f32.mrb[0].mxu0
      %5966 = vmatprep.mubr.bf16.mxu0 0
      %5967 = vmatmul.mubr.bf16.gmra.mrb[0].mxu0 %v5814
      %v5968 = vpop.f32.mrb[0].mxu0
      %v5969 = vadd.f32 0.0, %v5968
      %v5970 = vpop.f32.mrb[0].mxu0
      %v5971 = vpop.f32.mrb[0].mxu0
      %v5972 = vadd.f32 0.0, %v5971
      %v5973 = vpop.f32.mrb[0].mxu0
      %5974 = vmatprep.mubr.bf16.mxu0 0
      %5975 = vmatmul.mubr.bf16.gmra.mrb[0].mxu0 %v5817
      %v5976 = vpop.f32.mrb[0].mxu0
      %v5977 = vadd.f32 0.0, %v5976
      %v5978 = vpop.f32.mrb[0].mxu0
      %v5979 = vpop.f32.mrb[0].mxu0
      %v5980 = vadd.f32 0.0, %v5979
      %v5981 = vpop.f32.mrb[0].mxu0
      %5982 = vdwg.mxu0
      %v5983 = vadd.f32 %v5721, %v5857
      %v5984 = vadd.f32 %v5722, %v5860
      %v5985 = vadd.f32 %v5723, %v5865
      %v5986 = vadd.f32 %v5724, %v5868
      %v5987 = vadd.f32 %v5725, %v5873
      %v5988 = vadd.f32 %v5726, %v5876
      %v5989 = vadd.f32 %v5727, %v5881
      %v5990 = vadd.f32 %v5728, %v5884
      %v5991 = vadd.f32 %v5729, %v5889
      %v5992 = vadd.f32 %v5730, %v5892
      %v5993 = vadd.f32 %v5731, %v5897
      %v5994 = vadd.f32 %v5732, %v5900
      %v5995 = vadd.f32 %v5733, %v5905
      %v5996 = vadd.f32 %v5734, %v5908
      %v5997 = vadd.f32 %v5735, %v5913
      %v5998 = vadd.f32 %v5736, %v5916
      %v5999 = vadd.f32 %v5737, %v5921
      %v6000 = vadd.f32 %v5738, %v5924
      %v6001 = vadd.f32 %v5739, %v5929
      %v6002 = vadd.f32 %v5740, %v5932
      %v6003 = vadd.f32 %v5741, %v5937
      %v6004 = vadd.f32 %v5742, %v5940
      %v6005 = vadd.f32 %v5743, %v5945
      %v6006 = vadd.f32 %v5744, %v5948
      %v6007 = vadd.f32 %v5745, %v5953
      %v6008 = vadd.f32 %v5746, %v5956
      %v6009 = vadd.f32 %v5747, %v5961
      %v6010 = vadd.f32 %v5748, %v5964
      %v6011 = vadd.f32 %v5749, %v5969
      %v6012 = vadd.f32 %v5750, %v5972
      %v6013 = vadd.f32 %v5751, %v5977
      %v6014 = vadd.f32 %v5752, %v5980
      %s6015 = scalar_lea.vmem %s354, 12
      %v6016 = vld [vmem:[%s6015] sm:$0xf]
      %v6017 = vld [vmem:[%s6015 + $0x4] sm:$0xf]
      %v6018 = vld [vmem:[%s6015 + $0xc] sm:$0xf]
      %v6019 = vld [vmem:[%s6015 + $0x10] sm:$0xf]
      %v6020 = vld [vmem:[%s6015 + $0x18] sm:$0xf]
      %v6021 = vld [vmem:[%s6015 + $0x1c] sm:$0xf]
      %v6022 = vld [vmem:[%s6015 + $0x24] sm:$0xf]
      %v6023 = vld [vmem:[%s6015 + $0x28] sm:$0xf]
      %v6024 = vld [vmem:[%s6015 + $0x30] sm:$0xf]
      %v6025 = vld [vmem:[%s6015 + $0x34] sm:$0xf]
      %v6026 = vld [vmem:[%s6015 + $0x3c] sm:$0xf]
      %v6027 = vld [vmem:[%s6015 + $0x40] sm:$0xf]
      %v6028 = vld [vmem:[%s6015 + $0x48] sm:$0xf]
      %v6029 = vld [vmem:[%s6015 + $0x4c] sm:$0xf]
      %v6030 = vld [vmem:[%s6015 + $0x54] sm:$0xf]
      %v6031 = vld [vmem:[%s6015 + $0x58] sm:$0xf]
      %v6032 = vld [vmem:[%s6015 + $0x60] sm:$0xf]
      %v6033 = vld [vmem:[%s6015 + $0x64] sm:$0xf]
      %v6034 = vld [vmem:[%s6015 + $0x6c] sm:$0xf]
      %v6035 = vld [vmem:[%s6015 + $0x70] sm:$0xf]
      %v6036 = vld [vmem:[%s6015 + $0x78] sm:$0xf]
      %v6037 = vld [vmem:[%s6015 + $0x7c] sm:$0xf]
      %v6038 = vld [vmem:[%s6015 + $0x84] sm:$0xf]
      %v6039 = vld [vmem:[%s6015 + $0x88] sm:$0xf]
      %v6040 = vld [vmem:[%s6015 + $0x90] sm:$0xf]
      %v6041 = vld [vmem:[%s6015 + $0x94] sm:$0xf]
      %v6042 = vld [vmem:[%s6015 + $0x9c] sm:$0xf]
      %v6043 = vld [vmem:[%s6015 + $0xa0] sm:$0xf]
      %v6044 = vld [vmem:[%s6015 + $0xa8] sm:$0xf]
      %v6045 = vld [vmem:[%s6015 + $0xac] sm:$0xf]
      %v6046 = vld [vmem:[%s6015 + $0xb4] sm:$0xf]
      %v6047 = vld [vmem:[%s6015 + $0xb8] sm:$0xf]
      %s6048 = scalar_lea.vmem [#allocation3], 24
      %v6049 = vld [vmem:[%s6048] sm:$0xff]
      %v6050 = vld [vmem:[%s6048 + $0x8] sm:$0xff]
      %v6051 = vld [vmem:[%s6048 + $0x18] sm:$0xff]
      %v6052 = vld [vmem:[%s6048 + $0x20] sm:$0xff]
      %v6053 = vld [vmem:[%s6048 + $0x30] sm:$0xff]
      %v6054 = vld [vmem:[%s6048 + $0x38] sm:$0xff]
      %v6055 = vld [vmem:[%s6048 + $0x48] sm:$0xff]
      %v6056 = vld [vmem:[%s6048 + $0x50] sm:$0xff]
      %v6057 = vld [vmem:[%s6048 + $0x60] sm:$0xff]
      %v6058 = vld [vmem:[%s6048 + $0x68] sm:$0xff]
      %v6059 = vld [vmem:[%s6048 + $0x78] sm:$0xff]
      %v6060 = vld [vmem:[%s6048 + $0x80] sm:$0xff]
      %v6061 = vld [vmem:[%s6048 + $0x90] sm:$0xff]
      %v6062 = vld [vmem:[%s6048 + $0x98] sm:$0xff]
      %v6063 = vld [vmem:[%s6048 + $0xa8] sm:$0xff]
      %v6064 = vld [vmem:[%s6048 + $0xb0] sm:$0xff]
      %v6065 = vld [vmem:[%s6048 + $0xc0] sm:$0xff]
      %v6066 = vld [vmem:[%s6048 + $0xc8] sm:$0xff]
      %v6067 = vld [vmem:[%s6048 + $0xd8] sm:$0xff]
      %v6068 = vld [vmem:[%s6048 + $0xe0] sm:$0xff]
      %v6069 = vld [vmem:[%s6048 + $0xf0] sm:$0xff]
      %v6070 = vld [vmem:[%s6048 + $0xf8] sm:$0xff]
      %v6071 = vld [vmem:[%s6048 + $0x108] sm:$0xff]
      %v6072 = vld [vmem:[%s6048 + $0x110] sm:$0xff]
      %v6073 = vld [vmem:[%s6048 + $0x120] sm:$0xff]
      %v6074 = vld [vmem:[%s6048 + $0x128] sm:$0xff]
      %v6075 = vld [vmem:[%s6048 + $0x138] sm:$0xff]
      %v6076 = vld [vmem:[%s6048 + $0x140] sm:$0xff]
      %v6077 = vld [vmem:[%s6048 + $0x150] sm:$0xff]
      %v6078 = vld [vmem:[%s6048 + $0x158] sm:$0xff]
      %v6079 = vld [vmem:[%s6048 + $0x168] sm:$0xff]
      %v6080 = vld [vmem:[%s6048 + $0x170] sm:$0xff]
      %s6081 = scalar_lea.vmem %s1, 6
      %v6082 = vld [vmem:[%s6081] sm:$0x3]
      %v6115 = vunpack.c.l.b16 %v6016
      %v6116 = vunpack.c.l.b16 %v6017
      %v6117 = vunpack.c.l.b16 %v6018
      %v6118 = vunpack.c.l.b16 %v6019
      %v6119 = vunpack.c.l.b16 %v6020
      %v6120 = vunpack.c.l.b16 %v6021
      %v6121 = vunpack.c.l.b16 %v6022
      %v6122 = vunpack.c.l.b16 %v6023
      %v6123 = vunpack.c.l.b16 %v6024
      %v6124 = vunpack.c.l.b16 %v6025
      %v6125 = vunpack.c.l.b16 %v6026
      %v6126 = vunpack.c.l.b16 %v6027
      %v6127 = vunpack.c.l.b16 %v6028
      %v6128 = vunpack.c.l.b16 %v6029
      %v6129 = vunpack.c.l.b16 %v6030
      %v6130 = vunpack.c.l.b16 %v6031
      %v6131 = vunpack.c.l.b16 %v6032
      %v6132 = vunpack.c.l.b16 %v6033
      %v6133 = vunpack.c.l.b16 %v6034
      %v6134 = vunpack.c.l.b16 %v6035
      %v6135 = vunpack.c.l.b16 %v6036
      %v6136 = vunpack.c.l.b16 %v6037
      %v6137 = vunpack.c.l.b16 %v6038
      %v6138 = vunpack.c.l.b16 %v6039
      %v6139 = vunpack.c.l.b16 %v6040
      %v6140 = vunpack.c.l.b16 %v6041
      %v6141 = vunpack.c.l.b16 %v6042
      %v6142 = vunpack.c.l.b16 %v6043
      %v6143 = vunpack.c.l.b16 %v6044
      %v6144 = vunpack.c.l.b16 %v6045
      %v6145 = vunpack.c.l.b16 %v6046
      %v6146 = vunpack.c.l.b16 %v6047
      %v6147 = vpack.c.b16 %v6116, %v6115
      %v6148 = vpack.c.b16 %v6118, %v6117
      %v6149 = vpack.c.b16 %v6120, %v6119
      %v6150 = vpack.c.b16 %v6122, %v6121
      %v6151 = vpack.c.b16 %v6124, %v6123
      %v6152 = vpack.c.b16 %v6126, %v6125
      %v6153 = vpack.c.b16 %v6128, %v6127
      %v6154 = vpack.c.b16 %v6130, %v6129
      %v6155 = vpack.c.b16 %v6132, %v6131
      %v6156 = vpack.c.b16 %v6134, %v6133
      %v6157 = vpack.c.b16 %v6136, %v6135
      %v6158 = vpack.c.b16 %v6138, %v6137
      %v6159 = vpack.c.b16 %v6140, %v6139
      %v6160 = vpack.c.b16 %v6142, %v6141
      %v6161 = vpack.c.b16 %v6144, %v6143
      %v6162 = vpack.c.b16 %v6146, %v6145
      %v6164 = vsel %vm481, %v6147, 0
      %v6167 = vsel %vm481, %v6148, 0
      %v6170 = vsel %vm481, %v6149, 0
      %v6173 = vsel %vm481, %v6150, 0
      %v6176 = vsel %vm481, %v6151, 0
      %v6179 = vsel %vm481, %v6152, 0
      %v6182 = vsel %vm481, %v6153, 0
      %v6185 = vsel %vm481, %v6154, 0
      %v6188 = vsel %vm481, %v6155, 0
      %v6191 = vsel %vm481, %v6156, 0
      %v6194 = vsel %vm481, %v6157, 0
      %v6197 = vsel %vm481, %v6158, 0
      %v6200 = vsel %vm481, %v6159, 0
      %v6203 = vsel %vm481, %v6160, 0
      %v6206 = vsel %vm481, %v6161, 0
      %v6209 = vsel %vm481, %v6162, 0
      %v6212 = vsel %vm530, %v6082, 0
      %6214 = vmatprep.subr.bf16.mxu0 0
      %6215 = vmatpush1.bf16.msra.mxu0 %v6212
      %6216 = vmatprep.subr.bf16.mxu0 0
      %6217 = vmatpush1.bf16.msra.mxu0 0
      %6218 = vmatprep.subr.bf16.mxu0 0
      %6219 = vmatpush1.bf16.msra.mxu0 0
      %6220 = vmatprep.subr.bf16.mxu0 0
      %6221 = vmatpush1.bf16.msra.mxu0 0
      %6222 = vmatprep.subr.bf16.mxu0 0
      %6223 = vmatpush1.bf16.msra.mxu0 0
      %6224 = vmatprep.subr.bf16.mxu0 0
      %6225 = vmatpush1.bf16.msra.mxu0 0
      %6226 = vmatprep.subr.bf16.mxu0 0
      %6227 = vmatpush1.bf16.msra.mxu0 0
      %6228 = vmatprep.subr.bf16.mxu0 0
      %6229 = vmatpush1.bf16.msra.mxu0 0
      %6230 = vmatprep.subr.bf16.mxu0 0
      %6231 = vmatpush1.bf16.msra.mxu0 0
      %6232 = vmatprep.subr.bf16.mxu0 0
      %6233 = vmatpush1.bf16.msra.mxu0 0
      %6234 = vmatprep.subr.bf16.mxu0 0
      %6235 = vmatpush1.bf16.msra.mxu0 0
      %6236 = vmatprep.subr.bf16.mxu0 0
      %6237 = vmatpush1.bf16.msra.mxu0 0
      %6238 = vmatprep.subr.bf16.mxu0 0
      %6239 = vmatpush1.bf16.msra.mxu0 0
      %6240 = vmatprep.subr.bf16.mxu0 0
      %6241 = vmatpush1.bf16.msra.mxu0 0
      %6242 = vmatprep.subr.bf16.mxu0 0
      %6243 = vmatpush1.bf16.msra.mxu0 0
      %6244 = vmatprep.subr.bf16.mxu0 0
      %6245 = vmatpush1.bf16.msra.mxu0 0
      %6246 = vmatprep.mubr.bf16.mxu0 0
      %6247 = vmatmul.mubr.bf16.gmra.mrb[0].mxu0 %v6164
      %v6248 = vpop.f32.mrb[0].mxu0
      %v6249 = vadd.f32 0.0, %v6248
      %v6250 = vpop.f32.mrb[0].mxu0
      %v6251 = vpop.f32.mrb[0].mxu0
      %v6252 = vadd.f32 0.0, %v6251
      %v6253 = vpop.f32.mrb[0].mxu0
      %6254 = vmatprep.mubr.bf16.mxu0 0
      %6255 = vmatmul.mubr.bf16.gmra.mrb[0].mxu0 %v6167
      %v6256 = vpop.f32.mrb[0].mxu0
      %v6257 = vadd.f32 0.0, %v6256
      %v6258 = vpop.f32.mrb[0].mxu0
      %v6259 = vpop.f32.mrb[0].mxu0
      %v6260 = vadd.f32 0.0, %v6259
      %v6261 = vpop.f32.mrb[0].mxu0
      %6262 = vmatprep.mubr.bf16.mxu0 0
      %6263 = vmatmul.mubr.bf16.gmra.mrb[0].mxu0 %v6170
      %v6264 = vpop.f32.mrb[0].mxu0
      %v6265 = vadd.f32 0.0, %v6264
      %v6266 = vpop.f32.mrb[0].mxu0
      %v6267 = vpop.f32.mrb[0].mxu0
      %v6268 = vadd.f32 0.0, %v6267
      %v6269 = vpop.f32.mrb[0].mxu0
      %6270 = vmatprep.mubr.bf16.mxu0 0
      %6271 = vmatmul.mubr.bf16.gmra.mrb[0].mxu0 %v6173
      %v6272 = vpop.f32.mrb[0].mxu0
      %v6273 = vadd.f32 0.0, %v6272
      %v6274 = vpop.f32.mrb[0].mxu0
      %v6275 = vpop.f32.mrb[0].mxu0
      %v6276 = vadd.f32 0.0, %v6275
      %v6277 = vpop.f32.mrb[0].mxu0
      %6278 = vmatprep.mubr.bf16.mxu0 0
      %6279 = vmatmul.mubr.bf16.gmra.mrb[0].mxu0 %v6176
      %v6280 = vpop.f32.mrb[0].mxu0
      %v6281 = vadd.f32 0.0, %v6280
      %v6282 = vpop.f32.mrb[0].mxu0
      %v6283 = vpop.f32.mrb[0].mxu0
      %v6284 = vadd.f32 0.0, %v6283
      %v6285 = vpop.f32.mrb[0].mxu0
      %6286 = vmatprep.mubr.bf16.mxu0 0
      %6287 = vmatmul.mubr.bf16.gmra.mrb[0].mxu0 %v6179
      %v6288 = vpop.f32.mrb[0].mxu0
      %v6289 = vadd.f32 0.0, %v6288
      %v6290 = vpop.f32.mrb[0].mxu0
      %v6291 = vpop.f32.mrb[0].mxu0
      %v6292 = vadd.f32 0.0, %v6291
      %v6293 = vpop.f32.mrb[0].mxu0
      %6294 = vmatprep.mubr.bf16.mxu0 0
      %6295 = vmatmul.mubr.bf16.gmra.mrb[0].mxu0 %v6182
      %v6296 = vpop.f32.mrb[0].mxu0
      %v6297 = vadd.f32 0.0, %v6296
      %v6298 = vpop.f32.mrb[0].mxu0
      %v6299 = vpop.f32.mrb[0].mxu0
      %v6300 = vadd.f32 0.0, %v6299
      %v6301 = vpop.f32.mrb[0].mxu0
      %6302 = vmatprep.mubr.bf16.mxu0 0
      %6303 = vmatmul.mubr.bf16.gmra.mrb[0].mxu0 %v6185
      %v6304 = vpop.f32.mrb[0].mxu0
      %v6305 = vadd.f32 0.0, %v6304
      %v6306 = vpop.f32.mrb[0].mxu0
      %v6307 = vpop.f32.mrb[0].mxu0
      %v6308 = vadd.f32 0.0, %v6307
      %v6309 = vpop.f32.mrb[0].mxu0
      %6310 = vmatprep.mubr.bf16.mxu0 0
      %6311 = vmatmul.mubr.bf16.gmra.mrb[0].mxu0 %v6188
      %v6312 = vpop.f32.mrb[0].mxu0
      %v6313 = vadd.f32 0.0, %v6312
      %v6314 = vpop.f32.mrb[0].mxu0
      %v6315 = vpop.f32.mrb[0].mxu0
      %v6316 = vadd.f32 0.0, %v6315
      %v6317 = vpop.f32.mrb[0].mxu0
      %6318 = vmatprep.mubr.bf16.mxu0 0
      %6319 = vmatmul.mubr.bf16.gmra.mrb[0].mxu0 %v6191
      %v6320 = vpop.f32.mrb[0].mxu0
      %v6321 = vadd.f32 0.0, %v6320
      %v6322 = vpop.f32.mrb[0].mxu0
      %v6323 = vpop.f32.mrb[0].mxu0
      %v6324 = vadd.f32 0.0, %v6323
      %v6325 = vpop.f32.mrb[0].mxu0
      %6326 = vmatprep.mubr.bf16.mxu0 0
      %6327 = vmatmul.mubr.bf16.gmra.mrb[0].mxu0 %v6194
      %v6328 = vpop.f32.mrb[0].mxu0
      %v6329 = vadd.f32 0.0, %v6328
      %v6330 = vpop.f32.mrb[0].mxu0
      %v6331 = vpop.f32.mrb[0].mxu0
      %v6332 = vadd.f32 0.0, %v6331
      %v6333 = vpop.f32.mrb[0].mxu0
      %6334 = vmatprep.mubr.bf16.mxu0 0
      %6335 = vmatmul.mubr.bf16.gmra.mrb[0].mxu0 %v6197
      %v6336 = vpop.f32.mrb[0].mxu0
      %v6337 = vadd.f32 0.0, %v6336
      %v6338 = vpop.f32.mrb[0].mxu0
      %v6339 = vpop.f32.mrb[0].mxu0
      %v6340 = vadd.f32 0.0, %v6339
      %v6341 = vpop.f32.mrb[0].mxu0
      %6342 = vmatprep.mubr.bf16.mxu0 0
      %6343 = vmatmul.mubr.bf16.gmra.mrb[0].mxu0 %v6200
      %v6344 = vpop.f32.mrb[0].mxu0
      %v6345 = vadd.f32 0.0, %v6344
      %v6346 = vpop.f32.mrb[0].mxu0
      %v6347 = vpop.f32.mrb[0].mxu0
      %v6348 = vadd.f32 0.0, %v6347
      %v6349 = vpop.f32.mrb[0].mxu0
      %6350 = vmatprep.mubr.bf16.mxu0 0
      %6351 = vmatmul.mubr.bf16.gmra.mrb[0].mxu0 %v6203
      %v6352 = vpop.f32.mrb[0].mxu0
      %v6353 = vadd.f32 0.0, %v6352
      %v6354 = vpop.f32.mrb[0].mxu0
      %v6355 = vpop.f32.mrb[0].mxu0
      %v6356 = vadd.f32 0.0, %v6355
      %v6357 = vpop.f32.mrb[0].mxu0
      %6358 = vmatprep.mubr.bf16.mxu0 0
      %6359 = vmatmul.mubr.bf16.gmra.mrb[0].mxu0 %v6206
      %v6360 = vpop.f32.mrb[0].mxu0
      %v6361 = vadd.f32 0.0, %v6360
      %v6362 = vpop.f32.mrb[0].mxu0
      %v6363 = vpop.f32.mrb[0].mxu0
      %v6364 = vadd.f32 0.0, %v6363
      %v6365 = vpop.f32.mrb[0].mxu0
      %6366 = vmatprep.mubr.bf16.mxu0 0
      %6367 = vmatmul.mubr.bf16.gmra.mrb[0].mxu0 %v6209
      %v6368 = vpop.f32.mrb[0].mxu0
      %v6369 = vadd.f32 0.0, %v6368
      %v6370 = vpop.f32.mrb[0].mxu0
      %v6371 = vpop.f32.mrb[0].mxu0
      %v6372 = vadd.f32 0.0, %v6371
      %v6373 = vpop.f32.mrb[0].mxu0
      %6374 = vdwg.mxu0
      %v6375 = vadd.f32 %v5983, %v6249
      %v6376 = vadd.f32 %v5984, %v6252
      %v6377 = vadd.f32 %v5985, %v6257
      %v6378 = vadd.f32 %v5986, %v6260
      %v6379 = vadd.f32 %v5987, %v6265
      %v6380 = vadd.f32 %v5988, %v6268
      %v6381 = vadd.f32 %v5989, %v6273
      %v6382 = vadd.f32 %v5990, %v6276
      %v6383 = vadd.f32 %v5991, %v6281
      %v6384 = vadd.f32 %v5992, %v6284
      %v6385 = vadd.f32 %v5993, %v6289
      %v6386 = vadd.f32 %v5994, %v6292
      %v6387 = vadd.f32 %v5995, %v6297
      %v6388 = vadd.f32 %v5996, %v6300
      %v6389 = vadd.f32 %v5997, %v6305
      %v6390 = vadd.f32 %v5998, %v6308
      %v6391 = vadd.f32 %v5999, %v6313
      %v6392 = vadd.f32 %v6000, %v6316
      %v6393 = vadd.f32 %v6001, %v6321
      %v6394 = vadd.f32 %v6002, %v6324
      %v6395 = vadd.f32 %v6003, %v6329
      %v6396 = vadd.f32 %v6004, %v6332
      %v6397 = vadd.f32 %v6005, %v6337
      %v6398 = vadd.f32 %v6006, %v6340
      %v6399 = vadd.f32 %v6007, %v6345
      %v6400 = vadd.f32 %v6008, %v6348
      %v6401 = vadd.f32 %v6009, %v6353
      %v6402 = vadd.f32 %v6010, %v6356
      %v6403 = vadd.f32 %v6011, %v6361
      %v6404 = vadd.f32 %v6012, %v6364
      %v6405 = vadd.f32 %v6013, %v6369
      %v6406 = vadd.f32 %v6014, %v6372
      %v6407 = vpack.c.bf16 %v6050, %v6049
      %v6408 = vpack.c.bf16 %v6052, %v6051
      %v6409 = vpack.c.bf16 %v6054, %v6053
      %v6410 = vpack.c.bf16 %v6056, %v6055
      %v6411 = vpack.c.bf16 %v6058, %v6057
      %v6412 = vpack.c.bf16 %v6060, %v6059
      %v6413 = vpack.c.bf16 %v6062, %v6061
      %v6414 = vpack.c.bf16 %v6064, %v6063
      %v6415 = vpack.c.bf16 %v6066, %v6065
      %v6416 = vpack.c.bf16 %v6068, %v6067
      %v6417 = vpack.c.bf16 %v6070, %v6069
      %v6418 = vpack.c.bf16 %v6072, %v6071
      %v6419 = vpack.c.bf16 %v6074, %v6073
      %v6420 = vpack.c.bf16 %v6076, %v6075
      %v6421 = vpack.c.bf16 %v6078, %v6077
      %v6422 = vpack.c.bf16 %v6080, %v6079
      %s6423 = scalar_lea.vmem %s7, 12
      %v6424 = vld [vmem:[%s6423] sm:$0xf]
      %v6426 = vsel %vm727, %v6407, 0
      %v6429 = vsel %vm727, %v6408, 0
      %v6432 = vsel %vm727, %v6409, 0
      %v6435 = vsel %vm727, %v6410, 0
      %v6438 = vsel %vm727, %v6411, 0
      %v6441 = vsel %vm727, %v6412, 0
      %v6444 = vsel %vm727, %v6413, 0
      %v6447 = vsel %vm727, %v6414, 0
      %v6450 = vsel %vm727, %v6415, 0
      %v6453 = vsel %vm727, %v6416, 0
      %v6456 = vsel %vm727, %v6417, 0
      %v6459 = vsel %vm727, %v6418, 0
      %v6462 = vsel %vm727, %v6419, 0
      %v6465 = vsel %vm727, %v6420, 0
      %v6468 = vsel %vm727, %v6421, 0
      %v6471 = vsel %vm727, %v6422, 0
      %v6474 = vsel %vm981, %v6424, 0
      %6476 = vmatprep.subr.bf16.mxu0 0
      %6477 = vmatpush1.bf16.msra.mxu0 %v6474
      %6478 = vmatprep.subr.bf16.mxu0 0
      %6479 = vmatpush1.bf16.msra.mxu0 0
      %6480 = vmatprep.subr.bf16.mxu0 0
      %6481 = vmatpush1.bf16.msra.mxu0 0
      %6482 = vmatprep.subr.bf16.mxu0 0
      %6483 = vmatpush1.bf16.msra.mxu0 0
      %6484 = vmatprep.subr.bf16.mxu0 0
      %6485 = vmatpush1.bf16.msra.mxu0 0
      %6486 = vmatprep.subr.bf16.mxu0 0
      %6487 = vmatpush1.bf16.msra.mxu0 0
      %6488 = vmatprep.subr.bf16.mxu0 0
      %6489 = vmatpush1.bf16.msra.mxu0 0
      %6490 = vmatprep.subr.bf16.mxu0 0
      %6491 = vmatpush1.bf16.msra.mxu0 0
      %6492 = vmatprep.subr.bf16.mxu0 0
      %6493 = vmatpush1.bf16.msra.mxu0 0
      %6494 = vmatprep.subr.bf16.mxu0 0
      %6495 = vmatpush1.bf16.msra.mxu0 0
      %6496 = vmatprep.subr.bf16.mxu0 0
      %6497 = vmatpush1.bf16.msra.mxu0 0
      %6498 = vmatprep.subr.bf16.mxu0 0
      %6499 = vmatpush1.bf16.msra.mxu0 0
      %6500 = vmatprep.subr.bf16.mxu0 0
      %6501 = vmatpush1.bf16.msra.mxu0 0
      %6502 = vmatprep.subr.bf16.mxu0 0
      %6503 = vmatpush1.bf16.msra.mxu0 0
      %6504 = vmatprep.subr.bf16.mxu0 0
      %6505 = vmatpush1.bf16.msra.mxu0 0
      %6506 = vmatprep.subr.bf16.mxu0 0
      %6507 = vmatpush1.bf16.msra.mxu0 0
      %6508 = vmatprep.mubr.bf16.mxu0 0
      %6509 = vmatmul.mubr.bf16.gmra.mrb[0].mxu0 %v6426
      %v6510 = vpop.f32.mrb[0].mxu0
      %v6511 = vadd.f32 0.0, %v6510
      %v6512 = vpop.f32.mrb[0].mxu0
      %v6513 = vpop.f32.mrb[0].mxu0
      %v6514 = vadd.f32 0.0, %v6513
      %v6515 = vpop.f32.mrb[0].mxu0
      %6516 = vmatprep.mubr.bf16.mxu0 0
      %6517 = vmatmul.mubr.bf16.gmra.mrb[0].mxu0 %v6429
      %v6518 = vpop.f32.mrb[0].mxu0
      %v6519 = vadd.f32 0.0, %v6518
      %v6520 = vpop.f32.mrb[0].mxu0
      %v6521 = vpop.f32.mrb[0].mxu0
      %v6522 = vadd.f32 0.0, %v6521
      %v6523 = vpop.f32.mrb[0].mxu0
      %6524 = vmatprep.mubr.bf16.mxu0 0
      %6525 = vmatmul.mubr.bf16.gmra.mrb[0].mxu0 %v6432
      %v6526 = vpop.f32.mrb[0].mxu0
      %v6527 = vadd.f32 0.0, %v6526
      %v6528 = vpop.f32.mrb[0].mxu0
      %v6529 = vpop.f32.mrb[0].mxu0
      %v6530 = vadd.f32 0.0, %v6529
      %v6531 = vpop.f32.mrb[0].mxu0
      %6532 = vmatprep.mubr.bf16.mxu0 0
      %6533 = vmatmul.mubr.bf16.gmra.mrb[0].mxu0 %v6435
      %v6534 = vpop.f32.mrb[0].mxu0
      %v6535 = vadd.f32 0.0, %v6534
      %v6536 = vpop.f32.mrb[0].mxu0
      %v6537 = vpop.f32.mrb[0].mxu0
      %v6538 = vadd.f32 0.0, %v6537
      %v6539 = vpop.f32.mrb[0].mxu0
      %6540 = vmatprep.mubr.bf16.mxu0 0
      %6541 = vmatmul.mubr.bf16.gmra.mrb[0].mxu0 %v6438
      %v6542 = vpop.f32.mrb[0].mxu0
      %v6543 = vadd.f32 0.0, %v6542
      %v6544 = vpop.f32.mrb[0].mxu0
      %v6545 = vpop.f32.mrb[0].mxu0
      %v6546 = vadd.f32 0.0, %v6545
      %v6547 = vpop.f32.mrb[0].mxu0
      %6548 = vmatprep.mubr.bf16.mxu0 0
      %6549 = vmatmul.mubr.bf16.gmra.mrb[0].mxu0 %v6441
      %v6550 = vpop.f32.mrb[0].mxu0
      %v6551 = vadd.f32 0.0, %v6550
      %v6552 = vpop.f32.mrb[0].mxu0
      %v6553 = vpop.f32.mrb[0].mxu0
      %v6554 = vadd.f32 0.0, %v6553
      %v6555 = vpop.f32.mrb[0].mxu0
      %6556 = vmatprep.mubr.bf16.mxu0 0
      %6557 = vmatmul.mubr.bf16.gmra.mrb[0].mxu0 %v6444
      %v6558 = vpop.f32.mrb[0].mxu0
      %v6559 = vadd.f32 0.0, %v6558
      %v6560 = vpop.f32.mrb[0].mxu0
      %v6561 = vpop.f32.mrb[0].mxu0
      %v6562 = vadd.f32 0.0, %v6561
      %v6563 = vpop.f32.mrb[0].mxu0
      %6564 = vmatprep.mubr.bf16.mxu0 0
      %6565 = vmatmul.mubr.bf16.gmra.mrb[0].mxu0 %v6447
      %v6566 = vpop.f32.mrb[0].mxu0
      %v6567 = vadd.f32 0.0, %v6566
      %v6568 = vpop.f32.mrb[0].mxu0
      %v6569 = vpop.f32.mrb[0].mxu0
      %v6570 = vadd.f32 0.0, %v6569
      %v6571 = vpop.f32.mrb[0].mxu0
      %6572 = vmatprep.mubr.bf16.mxu0 0
      %6573 = vmatmul.mubr.bf16.gmra.mrb[0].mxu0 %v6450
      %v6574 = vpop.f32.mrb[0].mxu0
      %v6575 = vadd.f32 0.0, %v6574
      %v6576 = vpop.f32.mrb[0].mxu0
      %v6577 = vpop.f32.mrb[0].mxu0
      %v6578 = vadd.f32 0.0, %v6577
      %v6579 = vpop.f32.mrb[0].mxu0
      %6580 = vmatprep.mubr.bf16.mxu0 0
      %6581 = vmatmul.mubr.bf16.gmra.mrb[0].mxu0 %v6453
      %v6582 = vpop.f32.mrb[0].mxu0
      %v6583 = vadd.f32 0.0, %v6582
      %v6584 = vpop.f32.mrb[0].mxu0
      %v6585 = vpop.f32.mrb[0].mxu0
      %v6586 = vadd.f32 0.0, %v6585
      %v6587 = vpop.f32.mrb[0].mxu0
      %6588 = vmatprep.mubr.bf16.mxu0 0
      %6589 = vmatmul.mubr.bf16.gmra.mrb[0].mxu0 %v6456
      %v6590 = vpop.f32.mrb[0].mxu0
      %v6591 = vadd.f32 0.0, %v6590
      %v6592 = vpop.f32.mrb[0].mxu0
      %v6593 = vpop.f32.mrb[0].mxu0
      %v6594 = vadd.f32 0.0, %v6593
      %v6595 = vpop.f32.mrb[0].mxu0
      %6596 = vmatprep.mubr.bf16.mxu0 0
      %6597 = vmatmul.mubr.bf16.gmra.mrb[0].mxu0 %v6459
      %v6598 = vpop.f32.mrb[0].mxu0
      %v6599 = vadd.f32 0.0, %v6598
      %v6600 = vpop.f32.mrb[0].mxu0
      %v6601 = vpop.f32.mrb[0].mxu0
      %v6602 = vadd.f32 0.0, %v6601
      %v6603 = vpop.f32.mrb[0].mxu0
      %6604 = vmatprep.mubr.bf16.mxu0 0
      %6605 = vmatmul.mubr.bf16.gmra.mrb[0].mxu0 %v6462
      %v6606 = vpop.f32.mrb[0].mxu0
      %v6607 = vadd.f32 0.0, %v6606
      %v6608 = vpop.f32.mrb[0].mxu0
      %v6609 = vpop.f32.mrb[0].mxu0
      %v6610 = vadd.f32 0.0, %v6609
      %v6611 = vpop.f32.mrb[0].mxu0
      %6612 = vmatprep.mubr.bf16.mxu0 0
      %6613 = vmatmul.mubr.bf16.gmra.mrb[0].mxu0 %v6465
      %v6614 = vpop.f32.mrb[0].mxu0
      %v6615 = vadd.f32 0.0, %v6614
      %v6616 = vpop.f32.mrb[0].mxu0
      %v6617 = vpop.f32.mrb[0].mxu0
      %v6618 = vadd.f32 0.0, %v6617
      %v6619 = vpop.f32.mrb[0].mxu0
      %6620 = vmatprep.mubr.bf16.mxu0 0
      %6621 = vmatmul.mubr.bf16.gmra.mrb[0].mxu0 %v6468
      %v6622 = vpop.f32.mrb[0].mxu0
      %v6623 = vadd.f32 0.0, %v6622
      %v6624 = vpop.f32.mrb[0].mxu0
      %v6625 = vpop.f32.mrb[0].mxu0
      %v6626 = vadd.f32 0.0, %v6625
      %v6627 = vpop.f32.mrb[0].mxu0
      %6628 = vmatprep.mubr.bf16.mxu0 0
      %6629 = vmatmul.mubr.bf16.gmra.mrb[0].mxu0 %v6471
      %v6630 = vpop.f32.mrb[0].mxu0
      %v6631 = vadd.f32 0.0, %v6630
      %v6632 = vpop.f32.mrb[0].mxu0
      %v6633 = vpop.f32.mrb[0].mxu0
      %v6634 = vadd.f32 0.0, %v6633
      %v6635 = vpop.f32.mrb[0].mxu0
      %6636 = vdwg.mxu0
      %v6637 = vadd.f32 %v6375, %v6511
      %v6638 = vadd.f32 %v6376, %v6514
      %v6639 = vadd.f32 %v6377, %v6519
      %v6640 = vadd.f32 %v6378, %v6522
      %v6641 = vadd.f32 %v6379, %v6527
      %v6642 = vadd.f32 %v6380, %v6530
      %v6643 = vadd.f32 %v6381, %v6535
      %v6644 = vadd.f32 %v6382, %v6538
      %v6645 = vadd.f32 %v6383, %v6543
      %v6646 = vadd.f32 %v6384, %v6546
      %v6647 = vadd.f32 %v6385, %v6551
      %v6648 = vadd.f32 %v6386, %v6554
      %v6649 = vadd.f32 %v6387, %v6559
      %v6650 = vadd.f32 %v6388, %v6562
      %v6651 = vadd.f32 %v6389, %v6567
      %v6652 = vadd.f32 %v6390, %v6570
      %v6653 = vadd.f32 %v6391, %v6575
      %v6654 = vadd.f32 %v6392, %v6578
      %v6655 = vadd.f32 %v6393, %v6583
      %v6656 = vadd.f32 %v6394, %v6586
      %v6657 = vadd.f32 %v6395, %v6591
      %v6658 = vadd.f32 %v6396, %v6594
      %v6659 = vadd.f32 %v6397, %v6599
      %v6660 = vadd.f32 %v6398, %v6602
      %v6661 = vadd.f32 %v6399, %v6607
      %v6662 = vadd.f32 %v6400, %v6610
      %v6663 = vadd.f32 %v6401, %v6615
      %v6664 = vadd.f32 %v6402, %v6618
      %v6665 = vadd.f32 %v6403, %v6623
      %v6666 = vadd.f32 %v6404, %v6626
      %v6667 = vadd.f32 %v6405, %v6631
      %v6668 = vadd.f32 %v6406, %v6634
      %v6669 = vld [vmem:[%s6015] sm:$0xf]
      %v6670 = vld [vmem:[%s6015 + $0x4] sm:$0xf]
      %v6671 = vld [vmem:[%s6015 + $0x8] sm:$0x1]
      %v6672 = vld [vmem:[%s6015 + $0xc] sm:$0xf]
      %v6673 = vld [vmem:[%s6015 + $0x10] sm:$0xf]
      %v6674 = vld [vmem:[%s6015 + $0x14] sm:$0x1]
      %v6675 = vld [vmem:[%s6015 + $0x18] sm:$0xf]
      %v6676 = vld [vmem:[%s6015 + $0x1c] sm:$0xf]
      %v6677 = vld [vmem:[%s6015 + $0x20] sm:$0x1]
      %v6678 = vld [vmem:[%s6015 + $0x24] sm:$0xf]
      %v6679 = vld [vmem:[%s6015 + $0x28] sm:$0xf]
      %v6680 = vld [vmem:[%s6015 + $0x2c] sm:$0x1]
      %v6681 = vld [vmem:[%s6015 + $0x30] sm:$0xf]
      %v6682 = vld [vmem:[%s6015 + $0x34] sm:$0xf]
      %v6683 = vld [vmem:[%s6015 + $0x38] sm:$0x1]
      %v6684 = vld [vmem:[%s6015 + $0x3c] sm:$0xf]
      %v6685 = vld [vmem:[%s6015 + $0x40] sm:$0xf]
      %v6686 = vld [vmem:[%s6015 + $0x44] sm:$0x1]
      %v6687 = vld [vmem:[%s6015 + $0x48] sm:$0xf]
      %v6688 = vld [vmem:[%s6015 + $0x4c] sm:$0xf]
      %v6689 = vld [vmem:[%s6015 + $0x50] sm:$0x1]
      %v6690 = vld [vmem:[%s6015 + $0x54] sm:$0xf]
      %v6691 = vld [vmem:[%s6015 + $0x58] sm:$0xf]
      %v6692 = vld [vmem:[%s6015 + $0x5c] sm:$0x1]
      %v6693 = vld [vmem:[%s6015 + $0x60] sm:$0xf]
      %v6694 = vld [vmem:[%s6015 + $0x64] sm:$0xf]
      %v6695 = vld [vmem:[%s6015 + $0x68] sm:$0x1]
      %v6696 = vld [vmem:[%s6015 + $0x6c] sm:$0xf]
      %v6697 = vld [vmem:[%s6015 + $0x70] sm:$0xf]
      %v6698 = vld [vmem:[%s6015 + $0x74] sm:$0x1]
      %v6699 = vld [vmem:[%s6015 + $0x78] sm:$0xf]
      %v6700 = vld [vmem:[%s6015 + $0x7c] sm:$0xf]
      %v6701 = vld [vmem:[%s6015 + $0x80] sm:$0x1]
      %v6702 = vld [vmem:[%s6015 + $0x84] sm:$0xf]
      %v6703 = vld [vmem:[%s6015 + $0x88] sm:$0xf]
      %v6704 = vld [vmem:[%s6015 + $0x8c] sm:$0x1]
      %v6705 = vld [vmem:[%s6015 + $0x90] sm:$0xf]
      %v6706 = vld [vmem:[%s6015 + $0x94] sm:$0xf]
      %v6707 = vld [vmem:[%s6015 + $0x98] sm:$0x1]
      %v6708 = vld [vmem:[%s6015 + $0x9c] sm:$0xf]
      %v6709 = vld [vmem:[%s6015 + $0xa0] sm:$0xf]
      %v6710 = vld [vmem:[%s6015 + $0xa4] sm:$0x1]
      %v6711 = vld [vmem:[%s6015 + $0xa8] sm:$0xf]
      %v6712 = vld [vmem:[%s6015 + $0xac] sm:$0xf]
      %v6713 = vld [vmem:[%s6015 + $0xb0] sm:$0x1]
      %v6714 = vld [vmem:[%s6015 + $0xb4] sm:$0xf]
      %v6715 = vld [vmem:[%s6015 + $0xb8] sm:$0xf]
      %v6716 = vld [vmem:[%s6015 + $0xbc] sm:$0x1]
      %v6717 = vld [vmem:[%s6048 + $0x1] sm:$0xff]
      %v6718 = vld [vmem:[%s6048 + $0x9] sm:$0xff]
      %v6719 = vld [vmem:[%s6048 + $0x19] sm:$0xff]
      %v6720 = vld [vmem:[%s6048 + $0x21] sm:$0xff]
      %v6721 = vld [vmem:[%s6048 + $0x31] sm:$0xff]
      %v6722 = vld [vmem:[%s6048 + $0x39] sm:$0xff]
      %v6723 = vld [vmem:[%s6048 + $0x49] sm:$0xff]
      %v6724 = vld [vmem:[%s6048 + $0x51] sm:$0xff]
      %v6725 = vld [vmem:[%s6048 + $0x61] sm:$0xff]
      %v6726 = vld [vmem:[%s6048 + $0x69] sm:$0xff]
      %v6727 = vld [vmem:[%s6048 + $0x79] sm:$0xff]
      %v6728 = vld [vmem:[%s6048 + $0x81] sm:$0xff]
      %v6729 = vld [vmem:[%s6048 + $0x91] sm:$0xff]
      %v6730 = vld [vmem:[%s6048 + $0x99] sm:$0xff]
      %v6731 = vld [vmem:[%s6048 + $0xa9] sm:$0xff]
      %v6732 = vld [vmem:[%s6048 + $0xb1] sm:$0xff]
      %v6733 = vld [vmem:[%s6048 + $0xc1] sm:$0xff]
      %v6734 = vld [vmem:[%s6048 + $0xc9] sm:$0xff]
      %v6735 = vld [vmem:[%s6048 + $0xd9] sm:$0xff]
      %v6736 = vld [vmem:[%s6048 + $0xe1] sm:$0xff]
      %v6737 = vld [vmem:[%s6048 + $0xf1] sm:$0xff]
      %v6738 = vld [vmem:[%s6048 + $0xf9] sm:$0xff]
      %v6739 = vld [vmem:[%s6048 + $0x109] sm:$0xff]
      %v6740 = vld [vmem:[%s6048 + $0x111] sm:$0xff]
      %v6741 = vld [vmem:[%s6048 + $0x121] sm:$0xff]
      %v6742 = vld [vmem:[%s6048 + $0x129] sm:$0xff]
      %v6743 = vld [vmem:[%s6048 + $0x139] sm:$0xff]
      %v6744 = vld [vmem:[%s6048 + $0x141] sm:$0xff]
      %v6745 = vld [vmem:[%s6048 + $0x151] sm:$0xff]
      %v6746 = vld [vmem:[%s6048 + $0x159] sm:$0xff]
      %v6747 = vld [vmem:[%s6048 + $0x169] sm:$0xff]
      %v6748 = vld [vmem:[%s6048 + $0x171] sm:$0xff]
      %v6750 = vshrl.u32 %v6669, 16
      %v6752 = vrot.slane %v6750, 4
      %v6753 = vshll.u32 %v6669, 16
      %v6755 = vrot.slane %v6753, 5
      %v6756 = vor.u32 %v6752, %v6755
      %v6757 = vrot.slane %v6756, 4
      %v6759 = vshll.u32 %v6670, 16
      %v6761 = vrot.slane %v6759, 5
      %v6762 = vsel %vm4243, %v6757, %v6761
      %v6763 = vshrl.u32 %v6670, 16
      %v6765 = vrot.slane %v6763, 4
      %v6766 = vor.u32 %v6765, %v6761
      %v6767 = vrot.slane %v6766, 4
      %v6769 = vshll.u32 %v6671, 16
      %v6771 = vrot.slane %v6769, 5
      %v6772 = vsel %vm4243, %v6767, %v6771
      %v6774 = vshrl.u32 %v6672, 16
      %v6776 = vrot.slane %v6774, 4
      %v6777 = vshll.u32 %v6672, 16
      %v6779 = vrot.slane %v6777, 5
      %v6780 = vor.u32 %v6776, %v6779
      %v6781 = vrot.slane %v6780, 4
      %v6783 = vshll.u32 %v6673, 16
      %v6785 = vrot.slane %v6783, 5
      %v6786 = vsel %vm4243, %v6781, %v6785
      %v6787 = vshrl.u32 %v6673, 16
      %v6789 = vrot.slane %v6787, 4
      %v6790 = vor.u32 %v6789, %v6785
      %v6791 = vrot.slane %v6790, 4
      %v6793 = vshll.u32 %v6674, 16
      %v6795 = vrot.slane %v6793, 5
      %v6796 = vsel %vm4243, %v6791, %v6795
      %v6798 = vshrl.u32 %v6675, 16
      %v6800 = vrot.slane %v6798, 4
      %v6801 = vshll.u32 %v6675, 16
      %v6803 = vrot.slane %v6801, 5
      %v6804 = vor.u32 %v6800, %v6803
      %v6805 = vrot.slane %v6804, 4
      %v6807 = vshll.u32 %v6676, 16
      %v6809 = vrot.slane %v6807, 5
      %v6810 = vsel %vm4243, %v6805, %v6809
      %v6811 = vshrl.u32 %v6676, 16
      %v6813 = vrot.slane %v6811, 4
      %v6814 = vor.u32 %v6813, %v6809
      %v6815 = vrot.slane %v6814, 4
      %v6817 = vshll.u32 %v6677, 16
      %v6819 = vrot.slane %v6817, 5
      %v6820 = vsel %vm4243, %v6815, %v6819
      %v6822 = vshrl.u32 %v6678, 16
      %v6824 = vrot.slane %v6822, 4
      %v6825 = vshll.u32 %v6678, 16
      %v6827 = vrot.slane %v6825, 5
      %v6828 = vor.u32 %v6824, %v6827
      %v6829 = vrot.slane %v6828, 4
      %v6831 = vshll.u32 %v6679, 16
      %v6833 = vrot.slane %v6831, 5
      %v6834 = vsel %vm4243, %v6829, %v6833
      %v6835 = vshrl.u32 %v6679, 16
      %v6837 = vrot.slane %v6835, 4
      %v6838 = vor.u32 %v6837, %v6833
      %v6839 = vrot.slane %v6838, 4
      %v6841 = vshll.u32 %v6680, 16
      %v6843 = vrot.slane %v6841, 5
      %v6844 = vsel %vm4243, %v6839, %v6843
      %v6846 = vshrl.u32 %v6681, 16
      %v6848 = vrot.slane %v6846, 4
      %v6849 = vshll.u32 %v6681, 16
      %v6851 = vrot.slane %v6849, 5
      %v6852 = vor.u32 %v6848, %v6851
      %v6853 = vrot.slane %v6852, 4
      %v6855 = vshll.u32 %v6682, 16
      %v6857 = vrot.slane %v6855, 5
      %v6858 = vsel %vm4243, %v6853, %v6857
      %v6859 = vshrl.u32 %v6682, 16
      %v6861 = vrot.slane %v6859, 4
      %v6862 = vor.u32 %v6861, %v6857
      %v6863 = vrot.slane %v6862, 4
      %v6865 = vshll.u32 %v6683, 16
      %v6867 = vrot.slane %v6865, 5
      %v6868 = vsel %vm4243, %v6863, %v6867
      %v6870 = vshrl.u32 %v6684, 16
      %v6872 = vrot.slane %v6870, 4
      %v6873 = vshll.u32 %v6684, 16
      %v6875 = vrot.slane %v6873, 5
      %v6876 = vor.u32 %v6872, %v6875
      %v6877 = vrot.slane %v6876, 4
      %v6879 = vshll.u32 %v6685, 16
      %v6881 = vrot.slane %v6879, 5
      %v6882 = vsel %vm4243, %v6877, %v6881
      %v6883 = vshrl.u32 %v6685, 16
      %v6885 = vrot.slane %v6883, 4
      %v6886 = vor.u32 %v6885, %v6881
      %v6887 = vrot.slane %v6886, 4
      %v6889 = vshll.u32 %v6686, 16
      %v6891 = vrot.slane %v6889, 5
      %v6892 = vsel %vm4243, %v6887, %v6891
      %v6894 = vshrl.u32 %v6687, 16
      %v6896 = vrot.slane %v6894, 4
      %v6897 = vshll.u32 %v6687, 16
      %v6899 = vrot.slane %v6897, 5
      %v6900 = vor.u32 %v6896, %v6899
      %v6901 = vrot.slane %v6900, 4
      %v6903 = vshll.u32 %v6688, 16
      %v6905 = vrot.slane %v6903, 5
      %v6906 = vsel %vm4243, %v6901, %v6905
      %v6907 = vshrl.u32 %v6688, 16
      %v6909 = vrot.slane %v6907, 4
      %v6910 = vor.u32 %v6909, %v6905
      %v6911 = vrot.slane %v6910, 4
      %v6913 = vshll.u32 %v6689, 16
      %v6915 = vrot.slane %v6913, 5
      %v6916 = vsel %vm4243, %v6911, %v6915
      %v6918 = vshrl.u32 %v6690, 16
      %v6920 = vrot.slane %v6918, 4
      %v6921 = vshll.u32 %v6690, 16
      %v6923 = vrot.slane %v6921, 5
      %v6924 = vor.u32 %v6920, %v6923
      %v6925 = vrot.slane %v6924, 4
      %v6927 = vshll.u32 %v6691, 16
      %v6929 = vrot.slane %v6927, 5
      %v6930 = vsel %vm4243, %v6925, %v6929
      %v6931 = vshrl.u32 %v6691, 16
      %v6933 = vrot.slane %v6931, 4
      %v6934 = vor.u32 %v6933, %v6929
      %v6935 = vrot.slane %v6934, 4
      %v6937 = vshll.u32 %v6692, 16
      %v6939 = vrot.slane %v6937, 5
      %v6940 = vsel %vm4243, %v6935, %v6939
      %v6942 = vshrl.u32 %v6693, 16
      %v6944 = vrot.slane %v6942, 4
      %v6945 = vshll.u32 %v6693, 16
      %v6947 = vrot.slane %v6945, 5
      %v6948 = vor.u32 %v6944, %v6947
      %v6949 = vrot.slane %v6948, 4
      %v6951 = vshll.u32 %v6694, 16
      %v6953 = vrot.slane %v6951, 5
      %v6954 = vsel %vm4243, %v6949, %v6953
      %v6955 = vshrl.u32 %v6694, 16
      %v6957 = vrot.slane %v6955, 4
      %v6958 = vor.u32 %v6957, %v6953
      %v6959 = vrot.slane %v6958, 4
      %v6961 = vshll.u32 %v6695, 16
      %v6963 = vrot.slane %v6961, 5
      %v6964 = vsel %vm4243, %v6959, %v6963
      %v6966 = vshrl.u32 %v6696, 16
      %v6968 = vrot.slane %v6966, 4
      %v6969 = vshll.u32 %v6696, 16
      %v6971 = vrot.slane %v6969, 5
      %v6972 = vor.u32 %v6968, %v6971
      %v6973 = vrot.slane %v6972, 4
      %v6975 = vshll.u32 %v6697, 16
      %v6977 = vrot.slane %v6975, 5
      %v6978 = vsel %vm4243, %v6973, %v6977
      %v6979 = vshrl.u32 %v6697, 16
      %v6981 = vrot.slane %v6979, 4
      %v6982 = vor.u32 %v6981, %v6977
      %v6983 = vrot.slane %v6982, 4
      %v6985 = vshll.u32 %v6698, 16
      %v6987 = vrot.slane %v6985, 5
      %v6988 = vsel %vm4243, %v6983, %v6987
      %v6990 = vshrl.u32 %v6699, 16
      %v6992 = vrot.slane %v6990, 4
      %v6993 = vshll.u32 %v6699, 16
      %v6995 = vrot.slane %v6993, 5
      %v6996 = vor.u32 %v6992, %v6995
      %v6997 = vrot.slane %v6996, 4
      %v6999 = vshll.u32 %v6700, 16
      %v7001 = vrot.slane %v6999, 5
      %v7002 = vsel %vm4243, %v6997, %v7001
      %v7003 = vshrl.u32 %v6700, 16
      %v7005 = vrot.slane %v7003, 4
      %v7006 = vor.u32 %v7005, %v7001
      %v7007 = vrot.slane %v7006, 4
      %v7009 = vshll.u32 %v6701, 16
      %v7011 = vrot.slane %v7009, 5
      %v7012 = vsel %vm4243, %v7007, %v7011
      %v7014 = vshrl.u32 %v6702, 16
      %v7016 = vrot.slane %v7014, 4
      %v7017 = vshll.u32 %v6702, 16
      %v7019 = vrot.slane %v7017, 5
      %v7020 = vor.u32 %v7016, %v7019
      %v7021 = vrot.slane %v7020, 4
      %v7023 = vshll.u32 %v6703, 16
      %v7025 = vrot.slane %v7023, 5
      %v7026 = vsel %vm4243, %v7021, %v7025
      %v7027 = vshrl.u32 %v6703, 16
      %v7029 = vrot.slane %v7027, 4
      %v7030 = vor.u32 %v7029, %v7025
      %v7031 = vrot.slane %v7030, 4
      %v7033 = vshll.u32 %v6704, 16
      %v7035 = vrot.slane %v7033, 5
      %v7036 = vsel %vm4243, %v7031, %v7035
      %v7038 = vshrl.u32 %v6705, 16
      %v7040 = vrot.slane %v7038, 4
      %v7041 = vshll.u32 %v6705, 16
      %v7043 = vrot.slane %v7041, 5
      %v7044 = vor.u32 %v7040, %v7043
      %v7045 = vrot.slane %v7044, 4
      %v7047 = vshll.u32 %v6706, 16
      %v7049 = vrot.slane %v7047, 5
      %v7050 = vsel %vm4243, %v7045, %v7049
      %v7051 = vshrl.u32 %v6706, 16
      %v7053 = vrot.slane %v7051, 4
      %v7054 = vor.u32 %v7053, %v7049
      %v7055 = vrot.slane %v7054, 4
      %v7057 = vshll.u32 %v6707, 16
      %v7059 = vrot.slane %v7057, 5
      %v7060 = vsel %vm4243, %v7055, %v7059
      %v7062 = vshrl.u32 %v6708, 16
      %v7064 = vrot.slane %v7062, 4
      %v7065 = vshll.u32 %v6708, 16
      %v7067 = vrot.slane %v7065, 5
      %v7068 = vor.u32 %v7064, %v7067
      %v7069 = vrot.slane %v7068, 4
      %v7071 = vshll.u32 %v6709, 16
      %v7073 = vrot.slane %v7071, 5
      %v7074 = vsel %vm4243, %v7069, %v7073
      %v7075 = vshrl.u32 %v6709, 16
      %v7077 = vrot.slane %v7075, 4
      %v7078 = vor.u32 %v7077, %v7073
      %v7079 = vrot.slane %v7078, 4
      %v7081 = vshll.u32 %v6710, 16
      %v7083 = vrot.slane %v7081, 5
      %v7084 = vsel %vm4243, %v7079, %v7083
      %v7086 = vshrl.u32 %v6711, 16
      %v7088 = vrot.slane %v7086, 4
      %v7089 = vshll.u32 %v6711, 16
      %v7091 = vrot.slane %v7089, 5
      %v7092 = vor.u32 %v7088, %v7091
      %v7093 = vrot.slane %v7092, 4
      %v7095 = vshll.u32 %v6712, 16
      %v7097 = vrot.slane %v7095, 5
      %v7098 = vsel %vm4243, %v7093, %v7097
      %v7099 = vshrl.u32 %v6712, 16
      %v7101 = vrot.slane %v7099, 4
      %v7102 = vor.u32 %v7101, %v7097
      %v7103 = vrot.slane %v7102, 4
      %v7105 = vshll.u32 %v6713, 16
      %v7107 = vrot.slane %v7105, 5
      %v7108 = vsel %vm4243, %v7103, %v7107
      %v7110 = vshrl.u32 %v6714, 16
      %v7112 = vrot.slane %v7110, 4
      %v7113 = vshll.u32 %v6714, 16
      %v7115 = vrot.slane %v7113, 5
      %v7116 = vor.u32 %v7112, %v7115
      %v7117 = vrot.slane %v7116, 4
      %v7119 = vshll.u32 %v6715, 16
      %v7121 = vrot.slane %v7119, 5
      %v7122 = vsel %vm4243, %v7117, %v7121
      %v7123 = vshrl.u32 %v6715, 16
      %v7125 = vrot.slane %v7123, 4
      %v7126 = vor.u32 %v7125, %v7121
      %v7127 = vrot.slane %v7126, 4
      %v7129 = vshll.u32 %v6716, 16
      %v7131 = vrot.slane %v7129, 5
      %v7132 = vsel %vm4243, %v7127, %v7131
      %s7165 = scalar_lea.vmem %s1, 8
      %v7166 = vld [vmem:[%s7165] sm:$0x3]
      %v7167 = vunpack.c.l.b16 %v6762
      %v7168 = vunpack.c.l.b16 %v6772
      %v7169 = vunpack.c.l.b16 %v6786
      %v7170 = vunpack.c.l.b16 %v6796
      %v7171 = vunpack.c.l.b16 %v6810
      %v7172 = vunpack.c.l.b16 %v6820
      %v7173 = vunpack.c.l.b16 %v6834
      %v7174 = vunpack.c.l.b16 %v6844
      %v7175 = vunpack.c.l.b16 %v6858
      %v7176 = vunpack.c.l.b16 %v6868
      %v7177 = vunpack.c.l.b16 %v6882
      %v7178 = vunpack.c.l.b16 %v6892
      %v7179 = vunpack.c.l.b16 %v6906
      %v7180 = vunpack.c.l.b16 %v6916
      %v7181 = vunpack.c.l.b16 %v6930
      %v7182 = vunpack.c.l.b16 %v6940
      %v7183 = vunpack.c.l.b16 %v6954
      %v7184 = vunpack.c.l.b16 %v6964
      %v7185 = vunpack.c.l.b16 %v6978
      %v7186 = vunpack.c.l.b16 %v6988
      %v7187 = vunpack.c.l.b16 %v7002
      %v7188 = vunpack.c.l.b16 %v7012
      %v7189 = vunpack.c.l.b16 %v7026
      %v7190 = vunpack.c.l.b16 %v7036
      %v7191 = vunpack.c.l.b16 %v7050
      %v7192 = vunpack.c.l.b16 %v7060
      %v7193 = vunpack.c.l.b16 %v7074
      %v7194 = vunpack.c.l.b16 %v7084
      %v7195 = vunpack.c.l.b16 %v7098
      %v7196 = vunpack.c.l.b16 %v7108
      %v7197 = vunpack.c.l.b16 %v7122
      %v7198 = vunpack.c.l.b16 %v7132
      %v7199 = vpack.c.b16 %v7168, %v7167
      %v7200 = vpack.c.b16 %v7170, %v7169
      %v7201 = vpack.c.b16 %v7172, %v7171
      %v7202 = vpack.c.b16 %v7174, %v7173
      %v7203 = vpack.c.b16 %v7176, %v7175
      %v7204 = vpack.c.b16 %v7178, %v7177
      %v7205 = vpack.c.b16 %v7180, %v7179
      %v7206 = vpack.c.b16 %v7182, %v7181
      %v7207 = vpack.c.b16 %v7184, %v7183
      %v7208 = vpack.c.b16 %v7186, %v7185
      %v7209 = vpack.c.b16 %v7188, %v7187
      %v7210 = vpack.c.b16 %v7190, %v7189
      %v7211 = vpack.c.b16 %v7192, %v7191
      %v7212 = vpack.c.b16 %v7194, %v7193
      %v7213 = vpack.c.b16 %v7196, %v7195
      %v7214 = vpack.c.b16 %v7198, %v7197
      %v7216 = vsel %vm481, %v7199, 0
      %v7219 = vsel %vm481, %v7200, 0
      %v7222 = vsel %vm481, %v7201, 0
      %v7225 = vsel %vm481, %v7202, 0
      %v7228 = vsel %vm481, %v7203, 0
      %v7231 = vsel %vm481, %v7204, 0
      %v7234 = vsel %vm481, %v7205, 0
      %v7237 = vsel %vm481, %v7206, 0
      %v7240 = vsel %vm481, %v7207, 0
      %v7243 = vsel %vm481, %v7208, 0
      %v7246 = vsel %vm481, %v7209, 0
      %v7249 = vsel %vm481, %v7210, 0
      %v7252 = vsel %vm481, %v7211, 0
      %v7255 = vsel %vm481, %v7212, 0
      %v7258 = vsel %vm481, %v7213, 0
      %v7261 = vsel %vm481, %v7214, 0
      %v7264 = vsel %vm530, %v7166, 0
      %7266 = vmatprep.subr.bf16.mxu0 0
      %7267 = vmatpush1.bf16.msra.mxu0 %v7264
      %7268 = vmatprep.subr.bf16.mxu0 0
      %7269 = vmatpush1.bf16.msra.mxu0 0
      %7270 = vmatprep.subr.bf16.mxu0 0
      %7271 = vmatpush1.bf16.msra.mxu0 0
      %7272 = vmatprep.subr.bf16.mxu0 0
      %7273 = vmatpush1.bf16.msra.mxu0 0
      %7274 = vmatprep.subr.bf16.mxu0 0
      %7275 = vmatpush1.bf16.msra.mxu0 0
      %7276 = vmatprep.subr.bf16.mxu0 0
      %7277 = vmatpush1.bf16.msra.mxu0 0
      %7278 = vmatprep.subr.bf16.mxu0 0
      %7279 = vmatpush1.bf16.msra.mxu0 0
      %7280 = vmatprep.subr.bf16.mxu0 0
      %7281 = vmatpush1.bf16.msra.mxu0 0
      %7282 = vmatprep.subr.bf16.mxu0 0
      %7283 = vmatpush1.bf16.msra.mxu0 0
      %7284 = vmatprep.subr.bf16.mxu0 0
      %7285 = vmatpush1.bf16.msra.mxu0 0
      %7286 = vmatprep.subr.bf16.mxu0 0
      %7287 = vmatpush1.bf16.msra.mxu0 0
      %7288 = vmatprep.subr.bf16.mxu0 0
      %7289 = vmatpush1.bf16.msra.mxu0 0
      %7290 = vmatprep.subr.bf16.mxu0 0
      %7291 = vmatpush1.bf16.msra.mxu0 0
      %7292 = vmatprep.subr.bf16.mxu0 0
      %7293 = vmatpush1.bf16.msra.mxu0 0
      %7294 = vmatprep.subr.bf16.mxu0 0
      %7295 = vmatpush1.bf16.msra.mxu0 0
      %7296 = vmatprep.subr.bf16.mxu0 0
      %7297 = vmatpush1.bf16.msra.mxu0 0
      %7298 = vmatprep.mubr.bf16.mxu0 0
      %7299 = vmatmul.mubr.bf16.gmra.mrb[0].mxu0 %v7216
      %v7300 = vpop.f32.mrb[0].mxu0
      %v7301 = vadd.f32 0.0, %v7300
      %v7302 = vpop.f32.mrb[0].mxu0
      %v7303 = vpop.f32.mrb[0].mxu0
      %v7304 = vadd.f32 0.0, %v7303
      %v7305 = vpop.f32.mrb[0].mxu0
      %7306 = vmatprep.mubr.bf16.mxu0 0
      %7307 = vmatmul.mubr.bf16.gmra.mrb[0].mxu0 %v7219
      %v7308 = vpop.f32.mrb[0].mxu0
      %v7309 = vadd.f32 0.0, %v7308
      %v7310 = vpop.f32.mrb[0].mxu0
      %v7311 = vpop.f32.mrb[0].mxu0
      %v7312 = vadd.f32 0.0, %v7311
      %v7313 = vpop.f32.mrb[0].mxu0
      %7314 = vmatprep.mubr.bf16.mxu0 0
      %7315 = vmatmul.mubr.bf16.gmra.mrb[0].mxu0 %v7222
      %v7316 = vpop.f32.mrb[0].mxu0
      %v7317 = vadd.f32 0.0, %v7316
      %v7318 = vpop.f32.mrb[0].mxu0
      %v7319 = vpop.f32.mrb[0].mxu0
      %v7320 = vadd.f32 0.0, %v7319
      %v7321 = vpop.f32.mrb[0].mxu0
      %7322 = vmatprep.mubr.bf16.mxu0 0
      %7323 = vmatmul.mubr.bf16.gmra.mrb[0].mxu0 %v7225
      %v7324 = vpop.f32.mrb[0].mxu0
      %v7325 = vadd.f32 0.0, %v7324
      %v7326 = vpop.f32.mrb[0].mxu0
      %v7327 = vpop.f32.mrb[0].mxu0
      %v7328 = vadd.f32 0.0, %v7327
      %v7329 = vpop.f32.mrb[0].mxu0
      %7330 = vmatprep.mubr.bf16.mxu0 0
      %7331 = vmatmul.mubr.bf16.gmra.mrb[0].mxu0 %v7228
      %v7332 = vpop.f32.mrb[0].mxu0
      %v7333 = vadd.f32 0.0, %v7332
      %v7334 = vpop.f32.mrb[0].mxu0
      %v7335 = vpop.f32.mrb[0].mxu0
      %v7336 = vadd.f32 0.0, %v7335
      %v7337 = vpop.f32.mrb[0].mxu0
      %7338 = vmatprep.mubr.bf16.mxu0 0
      %7339 = vmatmul.mubr.bf16.gmra.mrb[0].mxu0 %v7231
      %v7340 = vpop.f32.mrb[0].mxu0
      %v7341 = vadd.f32 0.0, %v7340
      %v7342 = vpop.f32.mrb[0].mxu0
      %v7343 = vpop.f32.mrb[0].mxu0
      %v7344 = vadd.f32 0.0, %v7343
      %v7345 = vpop.f32.mrb[0].mxu0
      %7346 = vmatprep.mubr.bf16.mxu0 0
      %7347 = vmatmul.mubr.bf16.gmra.mrb[0].mxu0 %v7234
      %v7348 = vpop.f32.mrb[0].mxu0
      %v7349 = vadd.f32 0.0, %v7348
      %v7350 = vpop.f32.mrb[0].mxu0
      %v7351 = vpop.f32.mrb[0].mxu0
      %v7352 = vadd.f32 0.0, %v7351
      %v7353 = vpop.f32.mrb[0].mxu0
      %7354 = vmatprep.mubr.bf16.mxu0 0
      %7355 = vmatmul.mubr.bf16.gmra.mrb[0].mxu0 %v7237
      %v7356 = vpop.f32.mrb[0].mxu0
      %v7357 = vadd.f32 0.0, %v7356
      %v7358 = vpop.f32.mrb[0].mxu0
      %v7359 = vpop.f32.mrb[0].mxu0
      %v7360 = vadd.f32 0.0, %v7359
      %v7361 = vpop.f32.mrb[0].mxu0
      %7362 = vmatprep.mubr.bf16.mxu0 0
      %7363 = vmatmul.mubr.bf16.gmra.mrb[0].mxu0 %v7240
      %v7364 = vpop.f32.mrb[0].mxu0
      %v7365 = vadd.f32 0.0, %v7364
      %v7366 = vpop.f32.mrb[0].mxu0
      %v7367 = vpop.f32.mrb[0].mxu0
      %v7368 = vadd.f32 0.0, %v7367
      %v7369 = vpop.f32.mrb[0].mxu0
      %7370 = vmatprep.mubr.bf16.mxu0 0
      %7371 = vmatmul.mubr.bf16.gmra.mrb[0].mxu0 %v7243
      %v7372 = vpop.f32.mrb[0].mxu0
      %v7373 = vadd.f32 0.0, %v7372
      %v7374 = vpop.f32.mrb[0].mxu0
      %v7375 = vpop.f32.mrb[0].mxu0
      %v7376 = vadd.f32 0.0, %v7375
      %v7377 = vpop.f32.mrb[0].mxu0
      %7378 = vmatprep.mubr.bf16.mxu0 0
      %7379 = vmatmul.mubr.bf16.gmra.mrb[0].mxu0 %v7246
      %v7380 = vpop.f32.mrb[0].mxu0
      %v7381 = vadd.f32 0.0, %v7380
      %v7382 = vpop.f32.mrb[0].mxu0
      %v7383 = vpop.f32.mrb[0].mxu0
      %v7384 = vadd.f32 0.0, %v7383
      %v7385 = vpop.f32.mrb[0].mxu0
      %7386 = vmatprep.mubr.bf16.mxu0 0
      %7387 = vmatmul.mubr.bf16.gmra.mrb[0].mxu0 %v7249
      %v7388 = vpop.f32.mrb[0].mxu0
      %v7389 = vadd.f32 0.0, %v7388
      %v7390 = vpop.f32.mrb[0].mxu0
      %v7391 = vpop.f32.mrb[0].mxu0
      %v7392 = vadd.f32 0.0, %v7391
      %v7393 = vpop.f32.mrb[0].mxu0
      %7394 = vmatprep.mubr.bf16.mxu0 0
      %7395 = vmatmul.mubr.bf16.gmra.mrb[0].mxu0 %v7252
      %v7396 = vpop.f32.mrb[0].mxu0
      %v7397 = vadd.f32 0.0, %v7396
      %v7398 = vpop.f32.mrb[0].mxu0
      %v7399 = vpop.f32.mrb[0].mxu0
      %v7400 = vadd.f32 0.0, %v7399
      %v7401 = vpop.f32.mrb[0].mxu0
      %7402 = vmatprep.mubr.bf16.mxu0 0
      %7403 = vmatmul.mubr.bf16.gmra.mrb[0].mxu0 %v7255
      %v7404 = vpop.f32.mrb[0].mxu0
      %v7405 = vadd.f32 0.0, %v7404
      %v7406 = vpop.f32.mrb[0].mxu0
      %v7407 = vpop.f32.mrb[0].mxu0
      %v7408 = vadd.f32 0.0, %v7407
      %v7409 = vpop.f32.mrb[0].mxu0
      %7410 = vmatprep.mubr.bf16.mxu0 0
      %7411 = vmatmul.mubr.bf16.gmra.mrb[0].mxu0 %v7258
      %v7412 = vpop.f32.mrb[0].mxu0
      %v7413 = vadd.f32 0.0, %v7412
      %v7414 = vpop.f32.mrb[0].mxu0
      %v7415 = vpop.f32.mrb[0].mxu0
      %v7416 = vadd.f32 0.0, %v7415
      %v7417 = vpop.f32.mrb[0].mxu0
      %7418 = vmatprep.mubr.bf16.mxu0 0
      %7419 = vmatmul.mubr.bf16.gmra.mrb[0].mxu0 %v7261
      %v7420 = vpop.f32.mrb[0].mxu0
      %v7421 = vadd.f32 0.0, %v7420
      %v7422 = vpop.f32.mrb[0].mxu0
      %v7423 = vpop.f32.mrb[0].mxu0
      %v7424 = vadd.f32 0.0, %v7423
      %v7425 = vpop.f32.mrb[0].mxu0
      %7426 = vdwg.mxu0
      %v7427 = vadd.f32 %v6637, %v7301
      %v7428 = vadd.f32 %v6638, %v7304
      %v7429 = vadd.f32 %v6639, %v7309
      %v7430 = vadd.f32 %v6640, %v7312
      %v7431 = vadd.f32 %v6641, %v7317
      %v7432 = vadd.f32 %v6642, %v7320
      %v7433 = vadd.f32 %v6643, %v7325
      %v7434 = vadd.f32 %v6644, %v7328
      %v7435 = vadd.f32 %v6645, %v7333
      %v7436 = vadd.f32 %v6646, %v7336
      %v7437 = vadd.f32 %v6647, %v7341
      %v7438 = vadd.f32 %v6648, %v7344
      %v7439 = vadd.f32 %v6649, %v7349
      %v7440 = vadd.f32 %v6650, %v7352
      %v7441 = vadd.f32 %v6651, %v7357
      %v7442 = vadd.f32 %v6652, %v7360
      %v7443 = vadd.f32 %v6653, %v7365
      %v7444 = vadd.f32 %v6654, %v7368
      %v7445 = vadd.f32 %v6655, %v7373
      %v7446 = vadd.f32 %v6656, %v7376
      %v7447 = vadd.f32 %v6657, %v7381
      %v7448 = vadd.f32 %v6658, %v7384
      %v7449 = vadd.f32 %v6659, %v7389
      %v7450 = vadd.f32 %v6660, %v7392
      %v7451 = vadd.f32 %v6661, %v7397
      %v7452 = vadd.f32 %v6662, %v7400
      %v7453 = vadd.f32 %v6663, %v7405
      %v7454 = vadd.f32 %v6664, %v7408
      %v7455 = vadd.f32 %v6665, %v7413
      %v7456 = vadd.f32 %v6666, %v7416
      %v7457 = vadd.f32 %v6667, %v7421
      %v7458 = vadd.f32 %v6668, %v7424
      %v7459 = vpack.c.bf16 %v6718, %v6717
      %v7460 = vpack.c.bf16 %v6720, %v6719
      %v7461 = vpack.c.bf16 %v6722, %v6721
      %v7462 = vpack.c.bf16 %v6724, %v6723
      %v7463 = vpack.c.bf16 %v6726, %v6725
      %v7464 = vpack.c.bf16 %v6728, %v6727
      %v7465 = vpack.c.bf16 %v6730, %v6729
      %v7466 = vpack.c.bf16 %v6732, %v6731
      %v7467 = vpack.c.bf16 %v6734, %v6733
      %v7468 = vpack.c.bf16 %v6736, %v6735
      %v7469 = vpack.c.bf16 %v6738, %v6737
      %v7470 = vpack.c.bf16 %v6740, %v6739
      %v7471 = vpack.c.bf16 %v6742, %v6741
      %v7472 = vpack.c.bf16 %v6744, %v6743
      %v7473 = vpack.c.bf16 %v6746, %v6745
      %v7474 = vpack.c.bf16 %v6748, %v6747
      %s7475 = scalar_lea.vmem %s7, 16
      %v7476 = vld [vmem:[%s7475] sm:$0xf]
      %v7478 = vsel %vm727, %v7459, 0
      %v7481 = vsel %vm727, %v7460, 0
      %v7484 = vsel %vm727, %v7461, 0
      %v7487 = vsel %vm727, %v7462, 0
      %v7490 = vsel %vm727, %v7463, 0
      %v7493 = vsel %vm727, %v7464, 0
      %v7496 = vsel %vm727, %v7465, 0
      %v7499 = vsel %vm727, %v7466, 0
      %v7502 = vsel %vm727, %v7467, 0
      %v7505 = vsel %vm727, %v7468, 0
      %v7508 = vsel %vm727, %v7469, 0
      %v7511 = vsel %vm727, %v7470, 0
      %v7514 = vsel %vm727, %v7471, 0
      %v7517 = vsel %vm727, %v7472, 0
      %v7520 = vsel %vm727, %v7473, 0
      %v7523 = vsel %vm727, %v7474, 0
      %v7526 = vsel %vm981, %v7476, 0
      %7528 = vmatprep.subr.bf16.mxu0 0
      %7529 = vmatpush1.bf16.msra.mxu0 %v7526
      %7530 = vmatprep.subr.bf16.mxu0 0
      %7531 = vmatpush1.bf16.msra.mxu0 0
      %7532 = vmatprep.subr.bf16.mxu0 0
      %7533 = vmatpush1.bf16.msra.mxu0 0
      %7534 = vmatprep.subr.bf16.mxu0 0
      %7535 = vmatpush1.bf16.msra.mxu0 0
      %7536 = vmatprep.subr.bf16.mxu0 0
      %7537 = vmatpush1.bf16.msra.mxu0 0
      %7538 = vmatprep.subr.bf16.mxu0 0
      %7539 = vmatpush1.bf16.msra.mxu0 0
      %7540 = vmatprep.subr.bf16.mxu0 0
      %7541 = vmatpush1.bf16.msra.mxu0 0
      %7542 = vmatprep.subr.bf16.mxu0 0
      %7543 = vmatpush1.bf16.msra.mxu0 0
      %7544 = vmatprep.subr.bf16.mxu0 0
      %7545 = vmatpush1.bf16.msra.mxu0 0
      %7546 = vmatprep.subr.bf16.mxu0 0
      %7547 = vmatpush1.bf16.msra.mxu0 0
      %7548 = vmatprep.subr.bf16.mxu0 0
      %7549 = vmatpush1.bf16.msra.mxu0 0
      %7550 = vmatprep.subr.bf16.mxu0 0
      %7551 = vmatpush1.bf16.msra.mxu0 0
      %7552 = vmatprep.subr.bf16.mxu0 0
      %7553 = vmatpush1.bf16.msra.mxu0 0
      %7554 = vmatprep.subr.bf16.mxu0 0
      %7555 = vmatpush1.bf16.msra.mxu0 0
      %7556 = vmatprep.subr.bf16.mxu0 0
      %7557 = vmatpush1.bf16.msra.mxu0 0
      %7558 = vmatprep.subr.bf16.mxu0 0
      %7559 = vmatpush1.bf16.msra.mxu0 0
      %7560 = vmatprep.mubr.bf16.mxu0 0
      %7561 = vmatmul.mubr.bf16.gmra.mrb[0].mxu0 %v7478
      %v7562 = vpop.f32.mrb[0].mxu0
      %v7563 = vadd.f32 0.0, %v7562
      %v7564 = vpop.f32.mrb[0].mxu0
      %v7565 = vpop.f32.mrb[0].mxu0
      %v7566 = vadd.f32 0.0, %v7565
      %v7567 = vpop.f32.mrb[0].mxu0
      %7568 = vmatprep.mubr.bf16.mxu0 0
      %7569 = vmatmul.mubr.bf16.gmra.mrb[0].mxu0 %v7481
      %v7570 = vpop.f32.mrb[0].mxu0
      %v7571 = vadd.f32 0.0, %v7570
      %v7572 = vpop.f32.mrb[0].mxu0
      %v7573 = vpop.f32.mrb[0].mxu0
      %v7574 = vadd.f32 0.0, %v7573
      %v7575 = vpop.f32.mrb[0].mxu0
      %7576 = vmatprep.mubr.bf16.mxu0 0
      %7577 = vmatmul.mubr.bf16.gmra.mrb[0].mxu0 %v7484
      %v7578 = vpop.f32.mrb[0].mxu0
      %v7579 = vadd.f32 0.0, %v7578
      %v7580 = vpop.f32.mrb[0].mxu0
      %v7581 = vpop.f32.mrb[0].mxu0
      %v7582 = vadd.f32 0.0, %v7581
      %v7583 = vpop.f32.mrb[0].mxu0
      %7584 = vmatprep.mubr.bf16.mxu0 0
      %7585 = vmatmul.mubr.bf16.gmra.mrb[0].mxu0 %v7487
      %v7586 = vpop.f32.mrb[0].mxu0
      %v7587 = vadd.f32 0.0, %v7586
      %v7588 = vpop.f32.mrb[0].mxu0
      %v7589 = vpop.f32.mrb[0].mxu0
      %v7590 = vadd.f32 0.0, %v7589
      %v7591 = vpop.f32.mrb[0].mxu0
      %7592 = vmatprep.mubr.bf16.mxu0 0
      %7593 = vmatmul.mubr.bf16.gmra.mrb[0].mxu0 %v7490
      %v7594 = vpop.f32.mrb[0].mxu0
      %v7595 = vadd.f32 0.0, %v7594
      %v7596 = vpop.f32.mrb[0].mxu0
      %v7597 = vpop.f32.mrb[0].mxu0
      %v7598 = vadd.f32 0.0, %v7597
      %v7599 = vpop.f32.mrb[0].mxu0
      %7600 = vmatprep.mubr.bf16.mxu0 0
      %7601 = vmatmul.mubr.bf16.gmra.mrb[0].mxu0 %v7493
      %v7602 = vpop.f32.mrb[0].mxu0
      %v7603 = vadd.f32 0.0, %v7602
      %v7604 = vpop.f32.mrb[0].mxu0
      %v7605 = vpop.f32.mrb[0].mxu0
      %v7606 = vadd.f32 0.0, %v7605
      %v7607 = vpop.f32.mrb[0].mxu0
      %7608 = vmatprep.mubr.bf16.mxu0 0
      %7609 = vmatmul.mubr.bf16.gmra.mrb[0].mxu0 %v7496
      %v7610 = vpop.f32.mrb[0].mxu0
      %v7611 = vadd.f32 0.0, %v7610
      %v7612 = vpop.f32.mrb[0].mxu0
      %v7613 = vpop.f32.mrb[0].mxu0
      %v7614 = vadd.f32 0.0, %v7613
      %v7615 = vpop.f32.mrb[0].mxu0
      %7616 = vmatprep.mubr.bf16.mxu0 0
      %7617 = vmatmul.mubr.bf16.gmra.mrb[0].mxu0 %v7499
      %v7618 = vpop.f32.mrb[0].mxu0
      %v7619 = vadd.f32 0.0, %v7618
      %v7620 = vpop.f32.mrb[0].mxu0
      %v7621 = vpop.f32.mrb[0].mxu0
      %v7622 = vadd.f32 0.0, %v7621
      %v7623 = vpop.f32.mrb[0].mxu0
      %7624 = vmatprep.mubr.bf16.mxu0 0
      %7625 = vmatmul.mubr.bf16.gmra.mrb[0].mxu0 %v7502
      %v7626 = vpop.f32.mrb[0].mxu0
      %v7627 = vadd.f32 0.0, %v7626
      %v7628 = vpop.f32.mrb[0].mxu0
      %v7629 = vpop.f32.mrb[0].mxu0
      %v7630 = vadd.f32 0.0, %v7629
      %v7631 = vpop.f32.mrb[0].mxu0
      %7632 = vmatprep.mubr.bf16.mxu0 0
      %7633 = vmatmul.mubr.bf16.gmra.mrb[0].mxu0 %v7505
      %v7634 = vpop.f32.mrb[0].mxu0
      %v7635 = vadd.f32 0.0, %v7634
      %v7636 = vpop.f32.mrb[0].mxu0
      %v7637 = vpop.f32.mrb[0].mxu0
      %v7638 = vadd.f32 0.0, %v7637
      %v7639 = vpop.f32.mrb[0].mxu0
      %7640 = vmatprep.mubr.bf16.mxu0 0
      %7641 = vmatmul.mubr.bf16.gmra.mrb[0].mxu0 %v7508
      %v7642 = vpop.f32.mrb[0].mxu0
      %v7643 = vadd.f32 0.0, %v7642
      %v7644 = vpop.f32.mrb[0].mxu0
      %v7645 = vpop.f32.mrb[0].mxu0
      %v7646 = vadd.f32 0.0, %v7645
      %v7647 = vpop.f32.mrb[0].mxu0
      %7648 = vmatprep.mubr.bf16.mxu0 0
      %7649 = vmatmul.mubr.bf16.gmra.mrb[0].mxu0 %v7511
      %v7650 = vpop.f32.mrb[0].mxu0
      %v7651 = vadd.f32 0.0, %v7650
      %v7652 = vpop.f32.mrb[0].mxu0
      %v7653 = vpop.f32.mrb[0].mxu0
      %v7654 = vadd.f32 0.0, %v7653
      %v7655 = vpop.f32.mrb[0].mxu0
      %7656 = vmatprep.mubr.bf16.mxu0 0
      %7657 = vmatmul.mubr.bf16.gmra.mrb[0].mxu0 %v7514
      %v7658 = vpop.f32.mrb[0].mxu0
      %v7659 = vadd.f32 0.0, %v7658
      %v7660 = vpop.f32.mrb[0].mxu0
      %v7661 = vpop.f32.mrb[0].mxu0
      %v7662 = vadd.f32 0.0, %v7661
      %v7663 = vpop.f32.mrb[0].mxu0
      %7664 = vmatprep.mubr.bf16.mxu0 0
      %7665 = vmatmul.mubr.bf16.gmra.mrb[0].mxu0 %v7517
      %v7666 = vpop.f32.mrb[0].mxu0
      %v7667 = vadd.f32 0.0, %v7666
      %v7668 = vpop.f32.mrb[0].mxu0
      %v7669 = vpop.f32.mrb[0].mxu0
      %v7670 = vadd.f32 0.0, %v7669
      %v7671 = vpop.f32.mrb[0].mxu0
      %7672 = vmatprep.mubr.bf16.mxu0 0
      %7673 = vmatmul.mubr.bf16.gmra.mrb[0].mxu0 %v7520
      %v7674 = vpop.f32.mrb[0].mxu0
      %v7675 = vadd.f32 0.0, %v7674
      %v7676 = vpop.f32.mrb[0].mxu0
      %v7677 = vpop.f32.mrb[0].mxu0
      %v7678 = vadd.f32 0.0, %v7677
      %v7679 = vpop.f32.mrb[0].mxu0
      %7680 = vmatprep.mubr.bf16.mxu0 0
      %7681 = vmatmul.mubr.bf16.gmra.mrb[0].mxu0 %v7523
      %v7682 = vpop.f32.mrb[0].mxu0
      %v7683 = vadd.f32 0.0, %v7682
      %v7684 = vpop.f32.mrb[0].mxu0
      %v7685 = vpop.f32.mrb[0].mxu0
      %v7686 = vadd.f32 0.0, %v7685
      %v7687 = vpop.f32.mrb[0].mxu0
      %7688 = vdwg.mxu0
      %v7689 = vadd.f32 %v7427, %v7563
      %v7690 = vadd.f32 %v7428, %v7566
      %v7691 = vadd.f32 %v7429, %v7571
      %v7692 = vadd.f32 %v7430, %v7574
      %v7693 = vadd.f32 %v7431, %v7579
      %v7694 = vadd.f32 %v7432, %v7582
      %v7695 = vadd.f32 %v7433, %v7587
      %v7696 = vadd.f32 %v7434, %v7590
      %v7697 = vadd.f32 %v7435, %v7595
      %v7698 = vadd.f32 %v7436, %v7598
      %v7699 = vadd.f32 %v7437, %v7603
      %v7700 = vadd.f32 %v7438, %v7606
      %v7701 = vadd.f32 %v7439, %v7611
      %v7702 = vadd.f32 %v7440, %v7614
      %v7703 = vadd.f32 %v7441, %v7619
      %v7704 = vadd.f32 %v7442, %v7622
      %v7705 = vadd.f32 %v7443, %v7627
      %v7706 = vadd.f32 %v7444, %v7630
      %v7707 = vadd.f32 %v7445, %v7635
      %v7708 = vadd.f32 %v7446, %v7638
      %v7709 = vadd.f32 %v7447, %v7643
      %v7710 = vadd.f32 %v7448, %v7646
      %v7711 = vadd.f32 %v7449, %v7651
      %v7712 = vadd.f32 %v7450, %v7654
      %v7713 = vadd.f32 %v7451, %v7659
      %v7714 = vadd.f32 %v7452, %v7662
      %v7715 = vadd.f32 %v7453, %v7667
      %v7716 = vadd.f32 %v7454, %v7670
      %v7717 = vadd.f32 %v7455, %v7675
      %v7718 = vadd.f32 %v7456, %v7678
      %v7719 = vadd.f32 %v7457, %v7683
      %v7720 = vadd.f32 %v7458, %v7686
      %v7721 = vld [vmem:[%s6015] sm:$0xe]
      %v7722 = vld [vmem:[%s6015 + $0xc] sm:$0xe]
      %v7723 = vld [vmem:[%s6015 + $0x18] sm:$0xe]
      %v7724 = vld [vmem:[%s6015 + $0x24] sm:$0xe]
      %v7725 = vld [vmem:[%s6015 + $0x30] sm:$0xe]
      %v7726 = vld [vmem:[%s6015 + $0x3c] sm:$0xe]
      %v7727 = vld [vmem:[%s6015 + $0x48] sm:$0xe]
      %v7728 = vld [vmem:[%s6015 + $0x54] sm:$0xe]
      %v7729 = vld [vmem:[%s6015 + $0x60] sm:$0xe]
      %v7730 = vld [vmem:[%s6015 + $0x6c] sm:$0xe]
      %v7731 = vld [vmem:[%s6015 + $0x78] sm:$0xe]
      %v7732 = vld [vmem:[%s6015 + $0x84] sm:$0xe]
      %v7733 = vld [vmem:[%s6015 + $0x90] sm:$0xe]
      %v7734 = vld [vmem:[%s6015 + $0x9c] sm:$0xe]
      %v7735 = vld [vmem:[%s6015 + $0xa8] sm:$0xe]
      %v7736 = vld [vmem:[%s6015 + $0xb4] sm:$0xe]
      %v7737 = vld [vmem:[%s6048 + $0x2] sm:$0xff]
      %v7738 = vld [vmem:[%s6048 + $0xa] sm:$0xff]
      %v7739 = vld [vmem:[%s6048 + $0x1a] sm:$0xff]
      %v7740 = vld [vmem:[%s6048 + $0x22] sm:$0xff]
      %v7741 = vld [vmem:[%s6048 + $0x32] sm:$0xff]
      %v7742 = vld [vmem:[%s6048 + $0x3a] sm:$0xff]
      %v7743 = vld [vmem:[%s6048 + $0x4a] sm:$0xff]
      %v7744 = vld [vmem:[%s6048 + $0x52] sm:$0xff]
      %v7745 = vld [vmem:[%s6048 + $0x62] sm:$0xff]
      %v7746 = vld [vmem:[%s6048 + $0x6a] sm:$0xff]
      %v7747 = vld [vmem:[%s6048 + $0x7a] sm:$0xff]
      %v7748 = vld [vmem:[%s6048 + $0x82] sm:$0xff]
      %v7749 = vld [vmem:[%s6048 + $0x92] sm:$0xff]
      %v7750 = vld [vmem:[%s6048 + $0x9a] sm:$0xff]
      %v7751 = vld [vmem:[%s6048 + $0xaa] sm:$0xff]
      %v7752 = vld [vmem:[%s6048 + $0xb2] sm:$0xff]
      %v7753 = vld [vmem:[%s6048 + $0xc2] sm:$0xff]
      %v7754 = vld [vmem:[%s6048 + $0xca] sm:$0xff]
      %v7755 = vld [vmem:[%s6048 + $0xda] sm:$0xff]
      %v7756 = vld [vmem:[%s6048 + $0xe2] sm:$0xff]
      %v7757 = vld [vmem:[%s6048 + $0xf2] sm:$0xff]
      %v7758 = vld [vmem:[%s6048 + $0xfa] sm:$0xff]
      %v7759 = vld [vmem:[%s6048 + $0x10a] sm:$0xff]
      %v7760 = vld [vmem:[%s6048 + $0x112] sm:$0xff]
      %v7761 = vld [vmem:[%s6048 + $0x122] sm:$0xff]
      %v7762 = vld [vmem:[%s6048 + $0x12a] sm:$0xff]
      %v7763 = vld [vmem:[%s6048 + $0x13a] sm:$0xff]
      %v7764 = vld [vmem:[%s6048 + $0x142] sm:$0xff]
      %v7765 = vld [vmem:[%s6048 + $0x152] sm:$0xff]
      %v7766 = vld [vmem:[%s6048 + $0x15a] sm:$0xff]
      %v7767 = vld [vmem:[%s6048 + $0x16a] sm:$0xff]
      %v7768 = vld [vmem:[%s6048 + $0x172] sm:$0xff]
      %v7817 = vrot.slane %v7721, 5
      %v7818 = vrot.slane %v7817, 4
      %v7819 = vrot.slane %v6670, 5
      %v7820 = vsel %vm5314, %v7818, %v7819
      %v7821 = vrot.slane %v7819, 4
      %v7822 = vrot.slane %v6671, 5
      %v7823 = vsel %vm5314, %v7821, %v7822
      %v7824 = vrot.slane %v7722, 5
      %v7825 = vrot.slane %v7824, 4
      %v7826 = vrot.slane %v6673, 5
      %v7827 = vsel %vm5314, %v7825, %v7826
      %v7828 = vrot.slane %v7826, 4
      %v7829 = vrot.slane %v6674, 5
      %v7830 = vsel %vm5314, %v7828, %v7829
      %v7831 = vrot.slane %v7723, 5
      %v7832 = vrot.slane %v7831, 4
      %v7833 = vrot.slane %v6676, 5
      %v7834 = vsel %vm5314, %v7832, %v7833
      %v7835 = vrot.slane %v7833, 4
      %v7836 = vrot.slane %v6677, 5
      %v7837 = vsel %vm5314, %v7835, %v7836
      %v7838 = vrot.slane %v7724, 5
      %v7839 = vrot.slane %v7838, 4
      %v7840 = vrot.slane %v6679, 5
      %v7841 = vsel %vm5314, %v7839, %v7840
      %v7842 = vrot.slane %v7840, 4
      %v7843 = vrot.slane %v6680, 5
      %v7844 = vsel %vm5314, %v7842, %v7843
      %v7845 = vrot.slane %v7725, 5
      %v7846 = vrot.slane %v7845, 4
      %v7847 = vrot.slane %v6682, 5
      %v7848 = vsel %vm5314, %v7846, %v7847
      %v7849 = vrot.slane %v7847, 4
      %v7850 = vrot.slane %v6683, 5
      %v7851 = vsel %vm5314, %v7849, %v7850
      %v7852 = vrot.slane %v7726, 5
      %v7853 = vrot.slane %v7852, 4
      %v7854 = vrot.slane %v6685, 5
      %v7855 = vsel %vm5314, %v7853, %v7854
      %v7856 = vrot.slane %v7854, 4
      %v7857 = vrot.slane %v6686, 5
      %v7858 = vsel %vm5314, %v7856, %v7857
      %v7859 = vrot.slane %v7727, 5
      %v7860 = vrot.slane %v7859, 4
      %v7861 = vrot.slane %v6688, 5
      %v7862 = vsel %vm5314, %v7860, %v7861
      %v7863 = vrot.slane %v7861, 4
      %v7864 = vrot.slane %v6689, 5
      %v7865 = vsel %vm5314, %v7863, %v7864
      %v7866 = vrot.slane %v7728, 5
      %v7867 = vrot.slane %v7866, 4
      %v7868 = vrot.slane %v6691, 5
      %v7869 = vsel %vm5314, %v7867, %v7868
      %v7870 = vrot.slane %v7868, 4
      %v7871 = vrot.slane %v6692, 5
      %v7872 = vsel %vm5314, %v7870, %v7871
      %v7873 = vrot.slane %v7729, 5
      %v7874 = vrot.slane %v7873, 4
      %v7875 = vrot.slane %v6694, 5
      %v7876 = vsel %vm5314, %v7874, %v7875
      %v7877 = vrot.slane %v7875, 4
      %v7878 = vrot.slane %v6695, 5
      %v7879 = vsel %vm5314, %v7877, %v7878
      %v7880 = vrot.slane %v7730, 5
      %v7881 = vrot.slane %v7880, 4
      %v7882 = vrot.slane %v6697, 5
      %v7883 = vsel %vm5314, %v7881, %v7882
      %v7884 = vrot.slane %v7882, 4
      %v7885 = vrot.slane %v6698, 5
      %v7886 = vsel %vm5314, %v7884, %v7885
      %v7887 = vrot.slane %v7731, 5
      %v7888 = vrot.slane %v7887, 4
      %v7889 = vrot.slane %v6700, 5
      %v7890 = vsel %vm5314, %v7888, %v7889
      %v7891 = vrot.slane %v7889, 4
      %v7892 = vrot.slane %v6701, 5
      %v7893 = vsel %vm5314, %v7891, %v7892
      %v7894 = vrot.slane %v7732, 5
      %v7895 = vrot.slane %v7894, 4
      %v7896 = vrot.slane %v6703, 5
      %v7897 = vsel %vm5314, %v7895, %v7896
      %v7898 = vrot.slane %v7896, 4
      %v7899 = vrot.slane %v6704, 5
      %v7900 = vsel %vm5314, %v7898, %v7899
      %v7901 = vrot.slane %v7733, 5
      %v7902 = vrot.slane %v7901, 4
      %v7903 = vrot.slane %v6706, 5
      %v7904 = vsel %vm5314, %v7902, %v7903
      %v7905 = vrot.slane %v7903, 4
      %v7906 = vrot.slane %v6707, 5
      %v7907 = vsel %vm5314, %v7905, %v7906
      %v7908 = vrot.slane %v7734, 5
      %v7909 = vrot.slane %v7908, 4
      %v7910 = vrot.slane %v6709, 5
      %v7911 = vsel %vm5314, %v7909, %v7910
      %v7912 = vrot.slane %v7910, 4
      %v7913 = vrot.slane %v6710, 5
      %v7914 = vsel %vm5314, %v7912, %v7913
      %v7915 = vrot.slane %v7735, 5
      %v7916 = vrot.slane %v7915, 4
      %v7917 = vrot.slane %v6712, 5
      %v7918 = vsel %vm5314, %v7916, %v7917
      %v7919 = vrot.slane %v7917, 4
      %v7920 = vrot.slane %v6713, 5
      %v7921 = vsel %vm5314, %v7919, %v7920
      %v7922 = vrot.slane %v7736, 5
      %v7923 = vrot.slane %v7922, 4
      %v7924 = vrot.slane %v6715, 5
      %v7925 = vsel %vm5314, %v7923, %v7924
      %v7926 = vrot.slane %v7924, 4
      %v7927 = vrot.slane %v6716, 5
      %v7928 = vsel %vm5314, %v7926, %v7927
      %s7961 = scalar_lea.vmem %s1, 10
      %v7962 = vld [vmem:[%s7961] sm:$0x3]
      %v7963 = vunpack.c.l.b16 %v7820
      %v7964 = vunpack.c.l.b16 %v7823
      %v7965 = vunpack.c.l.b16 %v7827
      %v7966 = vunpack.c.l.b16 %v7830
      %v7967 = vunpack.c.l.b16 %v7834
      %v7968 = vunpack.c.l.b16 %v7837
      %v7969 = vunpack.c.l.b16 %v7841
      %v7970 = vunpack.c.l.b16 %v7844
      %v7971 = vunpack.c.l.b16 %v7848
      %v7972 = vunpack.c.l.b16 %v7851
      %v7973 = vunpack.c.l.b16 %v7855
      %v7974 = vunpack.c.l.b16 %v7858
      %v7975 = vunpack.c.l.b16 %v7862
      %v7976 = vunpack.c.l.b16 %v7865
      %v7977 = vunpack.c.l.b16 %v7869
      %v7978 = vunpack.c.l.b16 %v7872
      %v7979 = vunpack.c.l.b16 %v7876
      %v7980 = vunpack.c.l.b16 %v7879
      %v7981 = vunpack.c.l.b16 %v7883
      %v7982 = vunpack.c.l.b16 %v7886
      %v7983 = vunpack.c.l.b16 %v7890
      %v7984 = vunpack.c.l.b16 %v7893
      %v7985 = vunpack.c.l.b16 %v7897
      %v7986 = vunpack.c.l.b16 %v7900
      %v7987 = vunpack.c.l.b16 %v7904
      %v7988 = vunpack.c.l.b16 %v7907
      %v7989 = vunpack.c.l.b16 %v7911
      %v7990 = vunpack.c.l.b16 %v7914
      %v7991 = vunpack.c.l.b16 %v7918
      %v7992 = vunpack.c.l.b16 %v7921
      %v7993 = vunpack.c.l.b16 %v7925
      %v7994 = vunpack.c.l.b16 %v7928
      %v7995 = vpack.c.b16 %v7964, %v7963
      %v7996 = vpack.c.b16 %v7966, %v7965
      %v7997 = vpack.c.b16 %v7968, %v7967
      %v7998 = vpack.c.b16 %v7970, %v7969
      %v7999 = vpack.c.b16 %v7972, %v7971
      %v8000 = vpack.c.b16 %v7974, %v7973
      %v8001 = vpack.c.b16 %v7976, %v7975
      %v8002 = vpack.c.b16 %v7978, %v7977
      %v8003 = vpack.c.b16 %v7980, %v7979
      %v8004 = vpack.c.b16 %v7982, %v7981
      %v8005 = vpack.c.b16 %v7984, %v7983
      %v8006 = vpack.c.b16 %v7986, %v7985
      %v8007 = vpack.c.b16 %v7988, %v7987
      %v8008 = vpack.c.b16 %v7990, %v7989
      %v8009 = vpack.c.b16 %v7992, %v7991
      %v8010 = vpack.c.b16 %v7994, %v7993
      %v8012 = vsel %vm481, %v7995, 0
      %v8015 = vsel %vm481, %v7996, 0
      %v8018 = vsel %vm481, %v7997, 0
      %v8021 = vsel %vm481, %v7998, 0
      %v8024 = vsel %vm481, %v7999, 0
      %v8027 = vsel %vm481, %v8000, 0
      %v8030 = vsel %vm481, %v8001, 0
      %v8033 = vsel %vm481, %v8002, 0
      %v8036 = vsel %vm481, %v8003, 0
      %v8039 = vsel %vm481, %v8004, 0
      %v8042 = vsel %vm481, %v8005, 0
      %v8045 = vsel %vm481, %v8006, 0
      %v8048 = vsel %vm481, %v8007, 0
      %v8051 = vsel %vm481, %v8008, 0
      %v8054 = vsel %vm481, %v8009, 0
      %v8057 = vsel %vm481, %v8010, 0
      %v8060 = vsel %vm530, %v7962, 0
      %8062 = vmatprep.subr.bf16.mxu0 0
      %8063 = vmatpush1.bf16.msra.mxu0 %v8060
      %8064 = vmatprep.subr.bf16.mxu0 0
      %8065 = vmatpush1.bf16.msra.mxu0 0
      %8066 = vmatprep.subr.bf16.mxu0 0
      %8067 = vmatpush1.bf16.msra.mxu0 0
      %8068 = vmatprep.subr.bf16.mxu0 0
      %8069 = vmatpush1.bf16.msra.mxu0 0
      %8070 = vmatprep.subr.bf16.mxu0 0
      %8071 = vmatpush1.bf16.msra.mxu0 0
      %8072 = vmatprep.subr.bf16.mxu0 0
      %8073 = vmatpush1.bf16.msra.mxu0 0
      %8074 = vmatprep.subr.bf16.mxu0 0
      %8075 = vmatpush1.bf16.msra.mxu0 0
      %8076 = vmatprep.subr.bf16.mxu0 0
      %8077 = vmatpush1.bf16.msra.mxu0 0
      %8078 = vmatprep.subr.bf16.mxu0 0
      %8079 = vmatpush1.bf16.msra.mxu0 0
      %8080 = vmatprep.subr.bf16.mxu0 0
      %8081 = vmatpush1.bf16.msra.mxu0 0
      %8082 = vmatprep.subr.bf16.mxu0 0
      %8083 = vmatpush1.bf16.msra.mxu0 0
      %8084 = vmatprep.subr.bf16.mxu0 0
      %8085 = vmatpush1.bf16.msra.mxu0 0
      %8086 = vmatprep.subr.bf16.mxu0 0
      %8087 = vmatpush1.bf16.msra.mxu0 0
      %8088 = vmatprep.subr.bf16.mxu0 0
      %8089 = vmatpush1.bf16.msra.mxu0 0
      %8090 = vmatprep.subr.bf16.mxu0 0
      %8091 = vmatpush1.bf16.msra.mxu0 0
      %8092 = vmatprep.subr.bf16.mxu0 0
      %8093 = vmatpush1.bf16.msra.mxu0 0
      %8094 = vmatprep.mubr.bf16.mxu0 0
      %8095 = vmatmul.mubr.bf16.gmra.mrb[0].mxu0 %v8012
      %v8096 = vpop.f32.mrb[0].mxu0
      %v8097 = vadd.f32 0.0, %v8096
      %v8098 = vpop.f32.mrb[0].mxu0
      %v8099 = vpop.f32.mrb[0].mxu0
      %v8100 = vadd.f32 0.0, %v8099
      %v8101 = vpop.f32.mrb[0].mxu0
      %8102 = vmatprep.mubr.bf16.mxu0 0
      %8103 = vmatmul.mubr.bf16.gmra.mrb[0].mxu0 %v8015
      %v8104 = vpop.f32.mrb[0].mxu0
      %v8105 = vadd.f32 0.0, %v8104
      %v8106 = vpop.f32.mrb[0].mxu0
      %v8107 = vpop.f32.mrb[0].mxu0
      %v8108 = vadd.f32 0.0, %v8107
      %v8109 = vpop.f32.mrb[0].mxu0
      %8110 = vmatprep.mubr.bf16.mxu0 0
      %8111 = vmatmul.mubr.bf16.gmra.mrb[0].mxu0 %v8018
      %v8112 = vpop.f32.mrb[0].mxu0
      %v8113 = vadd.f32 0.0, %v8112
      %v8114 = vpop.f32.mrb[0].mxu0
      %v8115 = vpop.f32.mrb[0].mxu0
      %v8116 = vadd.f32 0.0, %v8115
      %v8117 = vpop.f32.mrb[0].mxu0
      %8118 = vmatprep.mubr.bf16.mxu0 0
      %8119 = vmatmul.mubr.bf16.gmra.mrb[0].mxu0 %v8021
      %v8120 = vpop.f32.mrb[0].mxu0
      %v8121 = vadd.f32 0.0, %v8120
      %v8122 = vpop.f32.mrb[0].mxu0
      %v8123 = vpop.f32.mrb[0].mxu0
      %v8124 = vadd.f32 0.0, %v8123
      %v8125 = vpop.f32.mrb[0].mxu0
      %8126 = vmatprep.mubr.bf16.mxu0 0
      %8127 = vmatmul.mubr.bf16.gmra.mrb[0].mxu0 %v8024
      %v8128 = vpop.f32.mrb[0].mxu0
      %v8129 = vadd.f32 0.0, %v8128
      %v8130 = vpop.f32.mrb[0].mxu0
      %v8131 = vpop.f32.mrb[0].mxu0
      %v8132 = vadd.f32 0.0, %v8131
      %v8133 = vpop.f32.mrb[0].mxu0
      %8134 = vmatprep.mubr.bf16.mxu0 0
      %8135 = vmatmul.mubr.bf16.gmra.mrb[0].mxu0 %v8027
      %v8136 = vpop.f32.mrb[0].mxu0
      %v8137 = vadd.f32 0.0, %v8136
      %v8138 = vpop.f32.mrb[0].mxu0
      %v8139 = vpop.f32.mrb[0].mxu0
      %v8140 = vadd.f32 0.0, %v8139
      %v8141 = vpop.f32.mrb[0].mxu0
      %8142 = vmatprep.mubr.bf16.mxu0 0
      %8143 = vmatmul.mubr.bf16.gmra.mrb[0].mxu0 %v8030
      %v8144 = vpop.f32.mrb[0].mxu0
      %v8145 = vadd.f32 0.0, %v8144
      %v8146 = vpop.f32.mrb[0].mxu0
      %v8147 = vpop.f32.mrb[0].mxu0
      %v8148 = vadd.f32 0.0, %v8147
      %v8149 = vpop.f32.mrb[0].mxu0
      %8150 = vmatprep.mubr.bf16.mxu0 0
      %8151 = vmatmul.mubr.bf16.gmra.mrb[0].mxu0 %v8033
      %v8152 = vpop.f32.mrb[0].mxu0
      %v8153 = vadd.f32 0.0, %v8152
      %v8154 = vpop.f32.mrb[0].mxu0
      %v8155 = vpop.f32.mrb[0].mxu0
      %v8156 = vadd.f32 0.0, %v8155
      %v8157 = vpop.f32.mrb[0].mxu0
      %8158 = vmatprep.mubr.bf16.mxu0 0
      %8159 = vmatmul.mubr.bf16.gmra.mrb[0].mxu0 %v8036
      %v8160 = vpop.f32.mrb[0].mxu0
      %v8161 = vadd.f32 0.0, %v8160
      %v8162 = vpop.f32.mrb[0].mxu0
      %v8163 = vpop.f32.mrb[0].mxu0
      %v8164 = vadd.f32 0.0, %v8163
      %v8165 = vpop.f32.mrb[0].mxu0
      %8166 = vmatprep.mubr.bf16.mxu0 0
      %8167 = vmatmul.mubr.bf16.gmra.mrb[0].mxu0 %v8039
      %v8168 = vpop.f32.mrb[0].mxu0
      %v8169 = vadd.f32 0.0, %v8168
      %v8170 = vpop.f32.mrb[0].mxu0
      %v8171 = vpop.f32.mrb[0].mxu0
      %v8172 = vadd.f32 0.0, %v8171
      %v8173 = vpop.f32.mrb[0].mxu0
      %8174 = vmatprep.mubr.bf16.mxu0 0
      %8175 = vmatmul.mubr.bf16.gmra.mrb[0].mxu0 %v8042
      %v8176 = vpop.f32.mrb[0].mxu0
      %v8177 = vadd.f32 0.0, %v8176
      %v8178 = vpop.f32.mrb[0].mxu0
      %v8179 = vpop.f32.mrb[0].mxu0
      %v8180 = vadd.f32 0.0, %v8179
      %v8181 = vpop.f32.mrb[0].mxu0
      %8182 = vmatprep.mubr.bf16.mxu0 0
      %8183 = vmatmul.mubr.bf16.gmra.mrb[0].mxu0 %v8045
      %v8184 = vpop.f32.mrb[0].mxu0
      %v8185 = vadd.f32 0.0, %v8184
      %v8186 = vpop.f32.mrb[0].mxu0
      %v8187 = vpop.f32.mrb[0].mxu0
      %v8188 = vadd.f32 0.0, %v8187
      %v8189 = vpop.f32.mrb[0].mxu0
      %8190 = vmatprep.mubr.bf16.mxu0 0
      %8191 = vmatmul.mubr.bf16.gmra.mrb[0].mxu0 %v8048
      %v8192 = vpop.f32.mrb[0].mxu0
      %v8193 = vadd.f32 0.0, %v8192
      %v8194 = vpop.f32.mrb[0].mxu0
      %v8195 = vpop.f32.mrb[0].mxu0
      %v8196 = vadd.f32 0.0, %v8195
      %v8197 = vpop.f32.mrb[0].mxu0
      %8198 = vmatprep.mubr.bf16.mxu0 0
      %8199 = vmatmul.mubr.bf16.gmra.mrb[0].mxu0 %v8051
      %v8200 = vpop.f32.mrb[0].mxu0
      %v8201 = vadd.f32 0.0, %v8200
      %v8202 = vpop.f32.mrb[0].mxu0
      %v8203 = vpop.f32.mrb[0].mxu0
      %v8204 = vadd.f32 0.0, %v8203
      %v8205 = vpop.f32.mrb[0].mxu0
      %8206 = vmatprep.mubr.bf16.mxu0 0
      %8207 = vmatmul.mubr.bf16.gmra.mrb[0].mxu0 %v8054
      %v8208 = vpop.f32.mrb[0].mxu0
      %v8209 = vadd.f32 0.0, %v8208
      %v8210 = vpop.f32.mrb[0].mxu0
      %v8211 = vpop.f32.mrb[0].mxu0
      %v8212 = vadd.f32 0.0, %v8211
      %v8213 = vpop.f32.mrb[0].mxu0
      %8214 = vmatprep.mubr.bf16.mxu0 0
      %8215 = vmatmul.mubr.bf16.gmra.mrb[0].mxu0 %v8057
      %v8216 = vpop.f32.mrb[0].mxu0
      %v8217 = vadd.f32 0.0, %v8216
      %v8218 = vpop.f32.mrb[0].mxu0
      %v8219 = vpop.f32.mrb[0].mxu0
      %v8220 = vadd.f32 0.0, %v8219
      %v8221 = vpop.f32.mrb[0].mxu0
      %8222 = vdwg.mxu0
      %v8223 = vadd.f32 %v7689, %v8097
      %v8224 = vadd.f32 %v7690, %v8100
      %v8225 = vadd.f32 %v7691, %v8105
      %v8226 = vadd.f32 %v7692, %v8108
      %v8227 = vadd.f32 %v7693, %v8113
      %v8228 = vadd.f32 %v7694, %v8116
      %v8229 = vadd.f32 %v7695, %v8121
      %v8230 = vadd.f32 %v7696, %v8124
      %v8231 = vadd.f32 %v7697, %v8129
      %v8232 = vadd.f32 %v7698, %v8132
      %v8233 = vadd.f32 %v7699, %v8137
      %v8234 = vadd.f32 %v7700, %v8140
      %v8235 = vadd.f32 %v7701, %v8145
      %v8236 = vadd.f32 %v7702, %v8148
      %v8237 = vadd.f32 %v7703, %v8153
      %v8238 = vadd.f32 %v7704, %v8156
      %v8239 = vadd.f32 %v7705, %v8161
      %v8240 = vadd.f32 %v7706, %v8164
      %v8241 = vadd.f32 %v7707, %v8169
      %v8242 = vadd.f32 %v7708, %v8172
      %v8243 = vadd.f32 %v7709, %v8177
      %v8244 = vadd.f32 %v7710, %v8180
      %v8245 = vadd.f32 %v7711, %v8185
      %v8246 = vadd.f32 %v7712, %v8188
      %v8247 = vadd.f32 %v7713, %v8193
      %v8248 = vadd.f32 %v7714, %v8196
      %v8249 = vadd.f32 %v7715, %v8201
      %v8250 = vadd.f32 %v7716, %v8204
      %v8251 = vadd.f32 %v7717, %v8209
      %v8252 = vadd.f32 %v7718, %v8212
      %v8253 = vadd.f32 %v7719, %v8217
      %v8254 = vadd.f32 %v7720, %v8220
      %v8255 = vpack.c.bf16 %v7738, %v7737
      %v8256 = vpack.c.bf16 %v7740, %v7739
      %v8257 = vpack.c.bf16 %v7742, %v7741
      %v8258 = vpack.c.bf16 %v7744, %v7743
      %v8259 = vpack.c.bf16 %v7746, %v7745
      %v8260 = vpack.c.bf16 %v7748, %v7747
      %v8261 = vpack.c.bf16 %v7750, %v7749
      %v8262 = vpack.c.bf16 %v7752, %v7751
      %v8263 = vpack.c.bf16 %v7754, %v7753
      %v8264 = vpack.c.bf16 %v7756, %v7755
      %v8265 = vpack.c.bf16 %v7758, %v7757
      %v8266 = vpack.c.bf16 %v7760, %v7759
      %v8267 = vpack.c.bf16 %v7762, %v7761
      %v8268 = vpack.c.bf16 %v7764, %v7763
      %v8269 = vpack.c.bf16 %v7766, %v7765
      %v8270 = vpack.c.bf16 %v7768, %v7767
      %s8271 = scalar_lea.vmem %s7, 20
      %v8272 = vld [vmem:[%s8271] sm:$0xf]
      %v8274 = vsel %vm727, %v8255, 0
      %v8277 = vsel %vm727, %v8256, 0
      %v8280 = vsel %vm727, %v8257, 0
      %v8283 = vsel %vm727, %v8258, 0
      %v8286 = vsel %vm727, %v8259, 0
      %v8289 = vsel %vm727, %v8260, 0
      %v8292 = vsel %vm727, %v8261, 0
      %v8295 = vsel %vm727, %v8262, 0
      %v8298 = vsel %vm727, %v8263, 0
      %v8301 = vsel %vm727, %v8264, 0
      %v8304 = vsel %vm727, %v8265, 0
      %v8307 = vsel %vm727, %v8266, 0
      %v8310 = vsel %vm727, %v8267, 0
      %v8313 = vsel %vm727, %v8268, 0
      %v8316 = vsel %vm727, %v8269, 0
      %v8319 = vsel %vm727, %v8270, 0
      %v8322 = vsel %vm981, %v8272, 0
      %8324 = vmatprep.subr.bf16.mxu0 0
      %8325 = vmatpush1.bf16.msra.mxu0 %v8322
      %8326 = vmatprep.subr.bf16.mxu0 0
      %8327 = vmatpush1.bf16.msra.mxu0 0
      %8328 = vmatprep.subr.bf16.mxu0 0
      %8329 = vmatpush1.bf16.msra.mxu0 0
      %8330 = vmatprep.subr.bf16.mxu0 0
      %8331 = vmatpush1.bf16.msra.mxu0 0
      %8332 = vmatprep.subr.bf16.mxu0 0
      %8333 = vmatpush1.bf16.msra.mxu0 0
      %8334 = vmatprep.subr.bf16.mxu0 0
      %8335 = vmatpush1.bf16.msra.mxu0 0
      %8336 = vmatprep.subr.bf16.mxu0 0
      %8337 = vmatpush1.bf16.msra.mxu0 0
      %8338 = vmatprep.subr.bf16.mxu0 0
      %8339 = vmatpush1.bf16.msra.mxu0 0
      %8340 = vmatprep.subr.bf16.mxu0 0
      %8341 = vmatpush1.bf16.msra.mxu0 0
      %8342 = vmatprep.subr.bf16.mxu0 0
      %8343 = vmatpush1.bf16.msra.mxu0 0
      %8344 = vmatprep.subr.bf16.mxu0 0
      %8345 = vmatpush1.bf16.msra.mxu0 0
      %8346 = vmatprep.subr.bf16.mxu0 0
      %8347 = vmatpush1.bf16.msra.mxu0 0
      %8348 = vmatprep.subr.bf16.mxu0 0
      %8349 = vmatpush1.bf16.msra.mxu0 0
      %8350 = vmatprep.subr.bf16.mxu0 0
      %8351 = vmatpush1.bf16.msra.mxu0 0
      %8352 = vmatprep.subr.bf16.mxu0 0
      %8353 = vmatpush1.bf16.msra.mxu0 0
      %8354 = vmatprep.subr.bf16.mxu0 0
      %8355 = vmatpush1.bf16.msra.mxu0 0
      %8356 = vmatprep.mubr.bf16.mxu0 0
      %8357 = vmatmul.mubr.bf16.gmra.mrb[0].mxu0 %v8274
      %v8358 = vpop.f32.mrb[0].mxu0
      %v8359 = vadd.f32 0.0, %v8358
      %v8360 = vpop.f32.mrb[0].mxu0
      %v8361 = vpop.f32.mrb[0].mxu0
      %v8362 = vadd.f32 0.0, %v8361
      %v8363 = vpop.f32.mrb[0].mxu0
      %8364 = vmatprep.mubr.bf16.mxu0 0
      %8365 = vmatmul.mubr.bf16.gmra.mrb[0].mxu0 %v8277
      %v8366 = vpop.f32.mrb[0].mxu0
      %v8367 = vadd.f32 0.0, %v8366
      %v8368 = vpop.f32.mrb[0].mxu0
      %v8369 = vpop.f32.mrb[0].mxu0
      %v8370 = vadd.f32 0.0, %v8369
      %v8371 = vpop.f32.mrb[0].mxu0
      %8372 = vmatprep.mubr.bf16.mxu0 0
      %8373 = vmatmul.mubr.bf16.gmra.mrb[0].mxu0 %v8280
      %v8374 = vpop.f32.mrb[0].mxu0
      %v8375 = vadd.f32 0.0, %v8374
      %v8376 = vpop.f32.mrb[0].mxu0
      %v8377 = vpop.f32.mrb[0].mxu0
      %v8378 = vadd.f32 0.0, %v8377
      %v8379 = vpop.f32.mrb[0].mxu0
      %8380 = vmatprep.mubr.bf16.mxu0 0
      %8381 = vmatmul.mubr.bf16.gmra.mrb[0].mxu0 %v8283
      %v8382 = vpop.f32.mrb[0].mxu0
      %v8383 = vadd.f32 0.0, %v8382
      %v8384 = vpop.f32.mrb[0].mxu0
      %v8385 = vpop.f32.mrb[0].mxu0
      %v8386 = vadd.f32 0.0, %v8385
      %v8387 = vpop.f32.mrb[0].mxu0
      %8388 = vmatprep.mubr.bf16.mxu0 0
      %8389 = vmatmul.mubr.bf16.gmra.mrb[0].mxu0 %v8286
      %v8390 = vpop.f32.mrb[0].mxu0
      %v8391 = vadd.f32 0.0, %v8390
      %v8392 = vpop.f32.mrb[0].mxu0
      %v8393 = vpop.f32.mrb[0].mxu0
      %v8394 = vadd.f32 0.0, %v8393
      %v8395 = vpop.f32.mrb[0].mxu0
      %8396 = vmatprep.mubr.bf16.mxu0 0
      %8397 = vmatmul.mubr.bf16.gmra.mrb[0].mxu0 %v8289
      %v8398 = vpop.f32.mrb[0].mxu0
      %v8399 = vadd.f32 0.0, %v8398
      %v8400 = vpop.f32.mrb[0].mxu0
      %v8401 = vpop.f32.mrb[0].mxu0
      %v8402 = vadd.f32 0.0, %v8401
      %v8403 = vpop.f32.mrb[0].mxu0
      %8404 = vmatprep.mubr.bf16.mxu0 0
      %8405 = vmatmul.mubr.bf16.gmra.mrb[0].mxu0 %v8292
      %v8406 = vpop.f32.mrb[0].mxu0
      %v8407 = vadd.f32 0.0, %v8406
      %v8408 = vpop.f32.mrb[0].mxu0
      %v8409 = vpop.f32.mrb[0].mxu0
      %v8410 = vadd.f32 0.0, %v8409
      %v8411 = vpop.f32.mrb[0].mxu0
      %8412 = vmatprep.mubr.bf16.mxu0 0
      %8413 = vmatmul.mubr.bf16.gmra.mrb[0].mxu0 %v8295
      %v8414 = vpop.f32.mrb[0].mxu0
      %v8415 = vadd.f32 0.0, %v8414
      %v8416 = vpop.f32.mrb[0].mxu0
      %v8417 = vpop.f32.mrb[0].mxu0
      %v8418 = vadd.f32 0.0, %v8417
      %v8419 = vpop.f32.mrb[0].mxu0
      %8420 = vmatprep.mubr.bf16.mxu0 0
      %8421 = vmatmul.mubr.bf16.gmra.mrb[0].mxu0 %v8298
      %v8422 = vpop.f32.mrb[0].mxu0
      %v8423 = vadd.f32 0.0, %v8422
      %v8424 = vpop.f32.mrb[0].mxu0
      %v8425 = vpop.f32.mrb[0].mxu0
      %v8426 = vadd.f32 0.0, %v8425
      %v8427 = vpop.f32.mrb[0].mxu0
      %8428 = vmatprep.mubr.bf16.mxu0 0
      %8429 = vmatmul.mubr.bf16.gmra.mrb[0].mxu0 %v8301
      %v8430 = vpop.f32.mrb[0].mxu0
      %v8431 = vadd.f32 0.0, %v8430
      %v8432 = vpop.f32.mrb[0].mxu0
      %v8433 = vpop.f32.mrb[0].mxu0
      %v8434 = vadd.f32 0.0, %v8433
      %v8435 = vpop.f32.mrb[0].mxu0
      %8436 = vmatprep.mubr.bf16.mxu0 0
      %8437 = vmatmul.mubr.bf16.gmra.mrb[0].mxu0 %v8304
      %v8438 = vpop.f32.mrb[0].mxu0
      %v8439 = vadd.f32 0.0, %v8438
      %v8440 = vpop.f32.mrb[0].mxu0
      %v8441 = vpop.f32.mrb[0].mxu0
      %v8442 = vadd.f32 0.0, %v8441
      %v8443 = vpop.f32.mrb[0].mxu0
      %8444 = vmatprep.mubr.bf16.mxu0 0
      %8445 = vmatmul.mubr.bf16.gmra.mrb[0].mxu0 %v8307
      %v8446 = vpop.f32.mrb[0].mxu0
      %v8447 = vadd.f32 0.0, %v8446
      %v8448 = vpop.f32.mrb[0].mxu0
      %v8449 = vpop.f32.mrb[0].mxu0
      %v8450 = vadd.f32 0.0, %v8449
      %v8451 = vpop.f32.mrb[0].mxu0
      %8452 = vmatprep.mubr.bf16.mxu0 0
      %8453 = vmatmul.mubr.bf16.gmra.mrb[0].mxu0 %v8310
      %v8454 = vpop.f32.mrb[0].mxu0
      %v8455 = vadd.f32 0.0, %v8454
      %v8456 = vpop.f32.mrb[0].mxu0
      %v8457 = vpop.f32.mrb[0].mxu0
      %v8458 = vadd.f32 0.0, %v8457
      %v8459 = vpop.f32.mrb[0].mxu0
      %8460 = vmatprep.mubr.bf16.mxu0 0
      %8461 = vmatmul.mubr.bf16.gmra.mrb[0].mxu0 %v8313
      %v8462 = vpop.f32.mrb[0].mxu0
      %v8463 = vadd.f32 0.0, %v8462
      %v8464 = vpop.f32.mrb[0].mxu0
      %v8465 = vpop.f32.mrb[0].mxu0
      %v8466 = vadd.f32 0.0, %v8465
      %v8467 = vpop.f32.mrb[0].mxu0
      %8468 = vmatprep.mubr.bf16.mxu0 0
      %8469 = vmatmul.mubr.bf16.gmra.mrb[0].mxu0 %v8316
      %v8470 = vpop.f32.mrb[0].mxu0
      %v8471 = vadd.f32 0.0, %v8470
      %v8472 = vpop.f32.mrb[0].mxu0
      %v8473 = vpop.f32.mrb[0].mxu0
      %v8474 = vadd.f32 0.0, %v8473
      %v8475 = vpop.f32.mrb[0].mxu0
      %8476 = vmatprep.mubr.bf16.mxu0 0
      %8477 = vmatmul.mubr.bf16.gmra.mrb[0].mxu0 %v8319
      %v8478 = vpop.f32.mrb[0].mxu0
      %v8479 = vadd.f32 0.0, %v8478
      %v8480 = vpop.f32.mrb[0].mxu0
      %v8481 = vpop.f32.mrb[0].mxu0
      %v8482 = vadd.f32 0.0, %v8481
      %v8483 = vpop.f32.mrb[0].mxu0
      %8484 = vdwg.mxu0
      %v8485 = vadd.f32 %v8223, %v8359
      %v8486 = vadd.f32 %v8224, %v8362
      %v8487 = vadd.f32 %v8225, %v8367
      %v8488 = vadd.f32 %v8226, %v8370
      %v8489 = vadd.f32 %v8227, %v8375
      %v8490 = vadd.f32 %v8228, %v8378
      %v8491 = vadd.f32 %v8229, %v8383
      %v8492 = vadd.f32 %v8230, %v8386
      %v8493 = vadd.f32 %v8231, %v8391
      %v8494 = vadd.f32 %v8232, %v8394
      %v8495 = vadd.f32 %v8233, %v8399
      %v8496 = vadd.f32 %v8234, %v8402
      %v8497 = vadd.f32 %v8235, %v8407
      %v8498 = vadd.f32 %v8236, %v8410
      %v8499 = vadd.f32 %v8237, %v8415
      %v8500 = vadd.f32 %v8238, %v8418
      %v8501 = vadd.f32 %v8239, %v8423
      %v8502 = vadd.f32 %v8240, %v8426
      %v8503 = vadd.f32 %v8241, %v8431
      %v8504 = vadd.f32 %v8242, %v8434
      %v8505 = vadd.f32 %v8243, %v8439
      %v8506 = vadd.f32 %v8244, %v8442
      %v8507 = vadd.f32 %v8245, %v8447
      %v8508 = vadd.f32 %v8246, %v8450
      %v8509 = vadd.f32 %v8247, %v8455
      %v8510 = vadd.f32 %v8248, %v8458
      %v8511 = vadd.f32 %v8249, %v8463
      %v8512 = vadd.f32 %v8250, %v8466
      %v8513 = vadd.f32 %v8251, %v8471
      %v8514 = vadd.f32 %v8252, %v8474
      %v8515 = vadd.f32 %v8253, %v8479
      %v8516 = vadd.f32 %v8254, %v8482
      %s8517 = scalar_lea.vmem %s354, 24
      %v8518 = vld [vmem:[%s8517] sm:$0xf]
      %v8519 = vld [vmem:[%s8517 + $0x4] sm:$0xf]
      %v8520 = vld [vmem:[%s8517 + $0xc] sm:$0xf]
      %v8521 = vld [vmem:[%s8517 + $0x10] sm:$0xf]
      %v8522 = vld [vmem:[%s8517 + $0x18] sm:$0xf]
      %v8523 = vld [vmem:[%s8517 + $0x1c] sm:$0xf]
      %v8524 = vld [vmem:[%s8517 + $0x24] sm:$0xf]
      %v8525 = vld [vmem:[%s8517 + $0x28] sm:$0xf]
      %v8526 = vld [vmem:[%s8517 + $0x30] sm:$0xf]
      %v8527 = vld [vmem:[%s8517 + $0x34] sm:$0xf]
      %v8528 = vld [vmem:[%s8517 + $0x3c] sm:$0xf]
      %v8529 = vld [vmem:[%s8517 + $0x40] sm:$0xf]
      %v8530 = vld [vmem:[%s8517 + $0x48] sm:$0xf]
      %v8531 = vld [vmem:[%s8517 + $0x4c] sm:$0xf]
      %v8532 = vld [vmem:[%s8517 + $0x54] sm:$0xf]
      %v8533 = vld [vmem:[%s8517 + $0x58] sm:$0xf]
      %v8534 = vld [vmem:[%s8517 + $0x60] sm:$0xf]
      %v8535 = vld [vmem:[%s8517 + $0x64] sm:$0xf]
      %v8536 = vld [vmem:[%s8517 + $0x6c] sm:$0xf]
      %v8537 = vld [vmem:[%s8517 + $0x70] sm:$0xf]
      %v8538 = vld [vmem:[%s8517 + $0x78] sm:$0xf]
      %v8539 = vld [vmem:[%s8517 + $0x7c] sm:$0xf]
      %v8540 = vld [vmem:[%s8517 + $0x84] sm:$0xf]
      %v8541 = vld [vmem:[%s8517 + $0x88] sm:$0xf]
      %v8542 = vld [vmem:[%s8517 + $0x90] sm:$0xf]
      %v8543 = vld [vmem:[%s8517 + $0x94] sm:$0xf]
      %v8544 = vld [vmem:[%s8517 + $0x9c] sm:$0xf]
      %v8545 = vld [vmem:[%s8517 + $0xa0] sm:$0xf]
      %v8546 = vld [vmem:[%s8517 + $0xa8] sm:$0xf]
      %v8547 = vld [vmem:[%s8517 + $0xac] sm:$0xf]
      %v8548 = vld [vmem:[%s8517 + $0xb4] sm:$0xf]
      %v8549 = vld [vmem:[%s8517 + $0xb8] sm:$0xf]
      %s8550 = scalar_lea.vmem [#allocation3], 48
      %v8551 = vld [vmem:[%s8550] sm:$0xff]
      %v8552 = vld [vmem:[%s8550 + $0x8] sm:$0xff]
      %v8553 = vld [vmem:[%s8550 + $0x18] sm:$0xff]
      %v8554 = vld [vmem:[%s8550 + $0x20] sm:$0xff]
      %v8555 = vld [vmem:[%s8550 + $0x30] sm:$0xff]
      %v8556 = vld [vmem:[%s8550 + $0x38] sm:$0xff]
      %v8557 = vld [vmem:[%s8550 + $0x48] sm:$0xff]
      %v8558 = vld [vmem:[%s8550 + $0x50] sm:$0xff]
      %v8559 = vld [vmem:[%s8550 + $0x60] sm:$0xff]
      %v8560 = vld [vmem:[%s8550 + $0x68] sm:$0xff]
      %v8561 = vld [vmem:[%s8550 + $0x78] sm:$0xff]
      %v8562 = vld [vmem:[%s8550 + $0x80] sm:$0xff]
      %v8563 = vld [vmem:[%s8550 + $0x90] sm:$0xff]
      %v8564 = vld [vmem:[%s8550 + $0x98] sm:$0xff]
      %v8565 = vld [vmem:[%s8550 + $0xa8] sm:$0xff]
      %v8566 = vld [vmem:[%s8550 + $0xb0] sm:$0xff]
      %v8567 = vld [vmem:[%s8550 + $0xc0] sm:$0xff]
      %v8568 = vld [vmem:[%s8550 + $0xc8] sm:$0xff]
      %v8569 = vld [vmem:[%s8550 + $0xd8] sm:$0xff]
      %v8570 = vld [vmem:[%s8550 + $0xe0] sm:$0xff]
      %v8571 = vld [vmem:[%s8550 + $0xf0] sm:$0xff]
      %v8572 = vld [vmem:[%s8550 + $0xf8] sm:$0xff]
      %v8573 = vld [vmem:[%s8550 + $0x108] sm:$0xff]
      %v8574 = vld [vmem:[%s8550 + $0x110] sm:$0xff]
      %v8575 = vld [vmem:[%s8550 + $0x120] sm:$0xff]
      %v8576 = vld [vmem:[%s8550 + $0x128] sm:$0xff]
      %v8577 = vld [vmem:[%s8550 + $0x138] sm:$0xff]
      %v8578 = vld [vmem:[%s8550 + $0x140] sm:$0xff]
      %v8579 = vld [vmem:[%s8550 + $0x150] sm:$0xff]
      %v8580 = vld [vmem:[%s8550 + $0x158] sm:$0xff]
      %v8581 = vld [vmem:[%s8550 + $0x168] sm:$0xff]
      %v8582 = vld [vmem:[%s8550 + $0x170] sm:$0xff]
      %s8583 = scalar_lea.vmem %s1, 12
      %v8584 = vld [vmem:[%s8583] sm:$0x3]
      %v8617 = vunpack.c.l.b16 %v8518
      %v8618 = vunpack.c.l.b16 %v8519
      %v8619 = vunpack.c.l.b16 %v8520
      %v8620 = vunpack.c.l.b16 %v8521
      %v8621 = vunpack.c.l.b16 %v8522
      %v8622 = vunpack.c.l.b16 %v8523
      %v8623 = vunpack.c.l.b16 %v8524
      %v8624 = vunpack.c.l.b16 %v8525
      %v8625 = vunpack.c.l.b16 %v8526
      %v8626 = vunpack.c.l.b16 %v8527
      %v8627 = vunpack.c.l.b16 %v8528
      %v8628 = vunpack.c.l.b16 %v8529
      %v8629 = vunpack.c.l.b16 %v8530
      %v8630 = vunpack.c.l.b16 %v8531
      %v8631 = vunpack.c.l.b16 %v8532
      %v8632 = vunpack.c.l.b16 %v8533
      %v8633 = vunpack.c.l.b16 %v8534
      %v8634 = vunpack.c.l.b16 %v8535
      %v8635 = vunpack.c.l.b16 %v8536
      %v8636 = vunpack.c.l.b16 %v8537
      %v8637 = vunpack.c.l.b16 %v8538
      %v8638 = vunpack.c.l.b16 %v8539
      %v8639 = vunpack.c.l.b16 %v8540
      %v8640 = vunpack.c.l.b16 %v8541
      %v8641 = vunpack.c.l.b16 %v8542
      %v8642 = vunpack.c.l.b16 %v8543
      %v8643 = vunpack.c.l.b16 %v8544
      %v8644 = vunpack.c.l.b16 %v8545
      %v8645 = vunpack.c.l.b16 %v8546
      %v8646 = vunpack.c.l.b16 %v8547
      %v8647 = vunpack.c.l.b16 %v8548
      %v8648 = vunpack.c.l.b16 %v8549
      %v8649 = vpack.c.b16 %v8618, %v8617
      %v8650 = vpack.c.b16 %v8620, %v8619
      %v8651 = vpack.c.b16 %v8622, %v8621
      %v8652 = vpack.c.b16 %v8624, %v8623
      %v8653 = vpack.c.b16 %v8626, %v8625
      %v8654 = vpack.c.b16 %v8628, %v8627
      %v8655 = vpack.c.b16 %v8630, %v8629
      %v8656 = vpack.c.b16 %v8632, %v8631
      %v8657 = vpack.c.b16 %v8634, %v8633
      %v8658 = vpack.c.b16 %v8636, %v8635
      %v8659 = vpack.c.b16 %v8638, %v8637
      %v8660 = vpack.c.b16 %v8640, %v8639
      %v8661 = vpack.c.b16 %v8642, %v8641
      %v8662 = vpack.c.b16 %v8644, %v8643
      %v8663 = vpack.c.b16 %v8646, %v8645
      %v8664 = vpack.c.b16 %v8648, %v8647
      %v8666 = vsel %vm481, %v8649, 0
      %v8669 = vsel %vm481, %v8650, 0
      %v8672 = vsel %vm481, %v8651, 0
      %v8675 = vsel %vm481, %v8652, 0
      %v8678 = vsel %vm481, %v8653, 0
      %v8681 = vsel %vm481, %v8654, 0
      %v8684 = vsel %vm481, %v8655, 0
      %v8687 = vsel %vm481, %v8656, 0
      %v8690 = vsel %vm481, %v8657, 0
      %v8693 = vsel %vm481, %v8658, 0
      %v8696 = vsel %vm481, %v8659, 0
      %v8699 = vsel %vm481, %v8660, 0
      %v8702 = vsel %vm481, %v8661, 0
      %v8705 = vsel %vm481, %v8662, 0
      %v8708 = vsel %vm481, %v8663, 0
      %v8711 = vsel %vm481, %v8664, 0
      %v8714 = vsel %vm530, %v8584, 0
      %8716 = vmatprep.subr.bf16.mxu0 0
      %8717 = vmatpush1.bf16.msra.mxu0 %v8714
      %8718 = vmatprep.subr.bf16.mxu0 0
      %8719 = vmatpush1.bf16.msra.mxu0 0
      %8720 = vmatprep.subr.bf16.mxu0 0
      %8721 = vmatpush1.bf16.msra.mxu0 0
      %8722 = vmatprep.subr.bf16.mxu0 0
      %8723 = vmatpush1.bf16.msra.mxu0 0
      %8724 = vmatprep.subr.bf16.mxu0 0
      %8725 = vmatpush1.bf16.msra.mxu0 0
      %8726 = vmatprep.subr.bf16.mxu0 0
      %8727 = vmatpush1.bf16.msra.mxu0 0
      %8728 = vmatprep.subr.bf16.mxu0 0
      %8729 = vmatpush1.bf16.msra.mxu0 0
      %8730 = vmatprep.subr.bf16.mxu0 0
      %8731 = vmatpush1.bf16.msra.mxu0 0
      %8732 = vmatprep.subr.bf16.mxu0 0
      %8733 = vmatpush1.bf16.msra.mxu0 0
      %8734 = vmatprep.subr.bf16.mxu0 0
      %8735 = vmatpush1.bf16.msra.mxu0 0
      %8736 = vmatprep.subr.bf16.mxu0 0
      %8737 = vmatpush1.bf16.msra.mxu0 0
      %8738 = vmatprep.subr.bf16.mxu0 0
      %8739 = vmatpush1.bf16.msra.mxu0 0
      %8740 = vmatprep.subr.bf16.mxu0 0
      %8741 = vmatpush1.bf16.msra.mxu0 0
      %8742 = vmatprep.subr.bf16.mxu0 0
      %8743 = vmatpush1.bf16.msra.mxu0 0
      %8744 = vmatprep.subr.bf16.mxu0 0
      %8745 = vmatpush1.bf16.msra.mxu0 0
      %8746 = vmatprep.subr.bf16.mxu0 0
      %8747 = vmatpush1.bf16.msra.mxu0 0
      %8748 = vmatprep.mubr.bf16.mxu0 0
      %8749 = vmatmul.mubr.bf16.gmra.mrb[0].mxu0 %v8666
      %v8750 = vpop.f32.mrb[0].mxu0
      %v8751 = vadd.f32 0.0, %v8750
      %v8752 = vpop.f32.mrb[0].mxu0
      %v8753 = vpop.f32.mrb[0].mxu0
      %v8754 = vadd.f32 0.0, %v8753
      %v8755 = vpop.f32.mrb[0].mxu0
      %8756 = vmatprep.mubr.bf16.mxu0 0
      %8757 = vmatmul.mubr.bf16.gmra.mrb[0].mxu0 %v8669
      %v8758 = vpop.f32.mrb[0].mxu0
      %v8759 = vadd.f32 0.0, %v8758
      %v8760 = vpop.f32.mrb[0].mxu0
      %v8761 = vpop.f32.mrb[0].mxu0
      %v8762 = vadd.f32 0.0, %v8761
      %v8763 = vpop.f32.mrb[0].mxu0
      %8764 = vmatprep.mubr.bf16.mxu0 0
      %8765 = vmatmul.mubr.bf16.gmra.mrb[0].mxu0 %v8672
      %v8766 = vpop.f32.mrb[0].mxu0
      %v8767 = vadd.f32 0.0, %v8766
      %v8768 = vpop.f32.mrb[0].mxu0
      %v8769 = vpop.f32.mrb[0].mxu0
      %v8770 = vadd.f32 0.0, %v8769
      %v8771 = vpop.f32.mrb[0].mxu0
      %8772 = vmatprep.mubr.bf16.mxu0 0
      %8773 = vmatmul.mubr.bf16.gmra.mrb[0].mxu0 %v8675
      %v8774 = vpop.f32.mrb[0].mxu0
      %v8775 = vadd.f32 0.0, %v8774
      %v8776 = vpop.f32.mrb[0].mxu0
      %v8777 = vpop.f32.mrb[0].mxu0
      %v8778 = vadd.f32 0.0, %v8777
      %v8779 = vpop.f32.mrb[0].mxu0
      %8780 = vmatprep.mubr.bf16.mxu0 0
      %8781 = vmatmul.mubr.bf16.gmra.mrb[0].mxu0 %v8678
      %v8782 = vpop.f32.mrb[0].mxu0
      %v8783 = vadd.f32 0.0, %v8782
      %v8784 = vpop.f32.mrb[0].mxu0
      %v8785 = vpop.f32.mrb[0].mxu0
      %v8786 = vadd.f32 0.0, %v8785
      %v8787 = vpop.f32.mrb[0].mxu0
      %8788 = vmatprep.mubr.bf16.mxu0 0
      %8789 = vmatmul.mubr.bf16.gmra.mrb[0].mxu0 %v8681
      %v8790 = vpop.f32.mrb[0].mxu0
      %v8791 = vadd.f32 0.0, %v8790
      %v8792 = vpop.f32.mrb[0].mxu0
      %v8793 = vpop.f32.mrb[0].mxu0
      %v8794 = vadd.f32 0.0, %v8793
      %v8795 = vpop.f32.mrb[0].mxu0
      %8796 = vmatprep.mubr.bf16.mxu0 0
      %8797 = vmatmul.mubr.bf16.gmra.mrb[0].mxu0 %v8684
      %v8798 = vpop.f32.mrb[0].mxu0
      %v8799 = vadd.f32 0.0, %v8798
      %v8800 = vpop.f32.mrb[0].mxu0
      %v8801 = vpop.f32.mrb[0].mxu0
      %v8802 = vadd.f32 0.0, %v8801
      %v8803 = vpop.f32.mrb[0].mxu0
      %8804 = vmatprep.mubr.bf16.mxu0 0
      %8805 = vmatmul.mubr.bf16.gmra.mrb[0].mxu0 %v8687
      %v8806 = vpop.f32.mrb[0].mxu0
      %v8807 = vadd.f32 0.0, %v8806
      %v8808 = vpop.f32.mrb[0].mxu0
      %v8809 = vpop.f32.mrb[0].mxu0
      %v8810 = vadd.f32 0.0, %v8809
      %v8811 = vpop.f32.mrb[0].mxu0
      %8812 = vmatprep.mubr.bf16.mxu0 0
      %8813 = vmatmul.mubr.bf16.gmra.mrb[0].mxu0 %v8690
      %v8814 = vpop.f32.mrb[0].mxu0
      %v8815 = vadd.f32 0.0, %v8814
      %v8816 = vpop.f32.mrb[0].mxu0
      %v8817 = vpop.f32.mrb[0].mxu0
      %v8818 = vadd.f32 0.0, %v8817
      %v8819 = vpop.f32.mrb[0].mxu0
      %8820 = vmatprep.mubr.bf16.mxu0 0
      %8821 = vmatmul.mubr.bf16.gmra.mrb[0].mxu0 %v8693
      %v8822 = vpop.f32.mrb[0].mxu0
      %v8823 = vadd.f32 0.0, %v8822
      %v8824 = vpop.f32.mrb[0].mxu0
      %v8825 = vpop.f32.mrb[0].mxu0
      %v8826 = vadd.f32 0.0, %v8825
      %v8827 = vpop.f32.mrb[0].mxu0
      %8828 = vmatprep.mubr.bf16.mxu0 0
      %8829 = vmatmul.mubr.bf16.gmra.mrb[0].mxu0 %v8696
      %v8830 = vpop.f32.mrb[0].mxu0
      %v8831 = vadd.f32 0.0, %v8830
      %v8832 = vpop.f32.mrb[0].mxu0
      %v8833 = vpop.f32.mrb[0].mxu0
      %v8834 = vadd.f32 0.0, %v8833
      %v8835 = vpop.f32.mrb[0].mxu0
      %8836 = vmatprep.mubr.bf16.mxu0 0
      %8837 = vmatmul.mubr.bf16.gmra.mrb[0].mxu0 %v8699
      %v8838 = vpop.f32.mrb[0].mxu0
      %v8839 = vadd.f32 0.0, %v8838
      %v8840 = vpop.f32.mrb[0].mxu0
      %v8841 = vpop.f32.mrb[0].mxu0
      %v8842 = vadd.f32 0.0, %v8841
      %v8843 = vpop.f32.mrb[0].mxu0
      %8844 = vmatprep.mubr.bf16.mxu0 0
      %8845 = vmatmul.mubr.bf16.gmra.mrb[0].mxu0 %v8702
      %v8846 = vpop.f32.mrb[0].mxu0
      %v8847 = vadd.f32 0.0, %v8846
      %v8848 = vpop.f32.mrb[0].mxu0
      %v8849 = vpop.f32.mrb[0].mxu0
      %v8850 = vadd.f32 0.0, %v8849
      %v8851 = vpop.f32.mrb[0].mxu0
      %8852 = vmatprep.mubr.bf16.mxu0 0
      %8853 = vmatmul.mubr.bf16.gmra.mrb[0].mxu0 %v8705
      %v8854 = vpop.f32.mrb[0].mxu0
      %v8855 = vadd.f32 0.0, %v8854
      %v8856 = vpop.f32.mrb[0].mxu0
      %v8857 = vpop.f32.mrb[0].mxu0
      %v8858 = vadd.f32 0.0, %v8857
      %v8859 = vpop.f32.mrb[0].mxu0
      %8860 = vmatprep.mubr.bf16.mxu0 0
      %8861 = vmatmul.mubr.bf16.gmra.mrb[0].mxu0 %v8708
      %v8862 = vpop.f32.mrb[0].mxu0
      %v8863 = vadd.f32 0.0, %v8862
      %v8864 = vpop.f32.mrb[0].mxu0
      %v8865 = vpop.f32.mrb[0].mxu0
      %v8866 = vadd.f32 0.0, %v8865
      %v8867 = vpop.f32.mrb[0].mxu0
      %8868 = vmatprep.mubr.bf16.mxu0 0
      %8869 = vmatmul.mubr.bf16.gmra.mrb[0].mxu0 %v8711
      %v8870 = vpop.f32.mrb[0].mxu0
      %v8871 = vadd.f32 0.0, %v8870
      %v8872 = vpop.f32.mrb[0].mxu0
      %v8873 = vpop.f32.mrb[0].mxu0
      %v8874 = vadd.f32 0.0, %v8873
      %v8875 = vpop.f32.mrb[0].mxu0
      %8876 = vdwg.mxu0
      %v8877 = vadd.f32 %v8485, %v8751
      %v8878 = vadd.f32 %v8486, %v8754
      %v8879 = vadd.f32 %v8487, %v8759
      %v8880 = vadd.f32 %v8488, %v8762
      %v8881 = vadd.f32 %v8489, %v8767
      %v8882 = vadd.f32 %v8490, %v8770
      %v8883 = vadd.f32 %v8491, %v8775
      %v8884 = vadd.f32 %v8492, %v8778
      %v8885 = vadd.f32 %v8493, %v8783
      %v8886 = vadd.f32 %v8494, %v8786
      %v8887 = vadd.f32 %v8495, %v8791
      %v8888 = vadd.f32 %v8496, %v8794
      %v8889 = vadd.f32 %v8497, %v8799
      %v8890 = vadd.f32 %v8498, %v8802
      %v8891 = vadd.f32 %v8499, %v8807
      %v8892 = vadd.f32 %v8500, %v8810
      %v8893 = vadd.f32 %v8501, %v8815
      %v8894 = vadd.f32 %v8502, %v8818
      %v8895 = vadd.f32 %v8503, %v8823
      %v8896 = vadd.f32 %v8504, %v8826
      %v8897 = vadd.f32 %v8505, %v8831
      %v8898 = vadd.f32 %v8506, %v8834
      %v8899 = vadd.f32 %v8507, %v8839
      %v8900 = vadd.f32 %v8508, %v8842
      %v8901 = vadd.f32 %v8509, %v8847
      %v8902 = vadd.f32 %v8510, %v8850
      %v8903 = vadd.f32 %v8511, %v8855
      %v8904 = vadd.f32 %v8512, %v8858
      %v8905 = vadd.f32 %v8513, %v8863
      %v8906 = vadd.f32 %v8514, %v8866
      %v8907 = vadd.f32 %v8515, %v8871
      %v8908 = vadd.f32 %v8516, %v8874
      %v8909 = vpack.c.bf16 %v8552, %v8551
      %v8910 = vpack.c.bf16 %v8554, %v8553
      %v8911 = vpack.c.bf16 %v8556, %v8555
      %v8912 = vpack.c.bf16 %v8558, %v8557
      %v8913 = vpack.c.bf16 %v8560, %v8559
      %v8914 = vpack.c.bf16 %v8562, %v8561
      %v8915 = vpack.c.bf16 %v8564, %v8563
      %v8916 = vpack.c.bf16 %v8566, %v8565
      %v8917 = vpack.c.bf16 %v8568, %v8567
      %v8918 = vpack.c.bf16 %v8570, %v8569
      %v8919 = vpack.c.bf16 %v8572, %v8571
      %v8920 = vpack.c.bf16 %v8574, %v8573
      %v8921 = vpack.c.bf16 %v8576, %v8575
      %v8922 = vpack.c.bf16 %v8578, %v8577
      %v8923 = vpack.c.bf16 %v8580, %v8579
      %v8924 = vpack.c.bf16 %v8582, %v8581
      %s8925 = scalar_lea.vmem %s7, 24
      %v8926 = vld [vmem:[%s8925] sm:$0xf]
      %v8928 = vsel %vm727, %v8909, 0
      %v8931 = vsel %vm727, %v8910, 0
      %v8934 = vsel %vm727, %v8911, 0
      %v8937 = vsel %vm727, %v8912, 0
      %v8940 = vsel %vm727, %v8913, 0
      %v8943 = vsel %vm727, %v8914, 0
      %v8946 = vsel %vm727, %v8915, 0
      %v8949 = vsel %vm727, %v8916, 0
      %v8952 = vsel %vm727, %v8917, 0
      %v8955 = vsel %vm727, %v8918, 0
      %v8958 = vsel %vm727, %v8919, 0
      %v8961 = vsel %vm727, %v8920, 0
      %v8964 = vsel %vm727, %v8921, 0
      %v8967 = vsel %vm727, %v8922, 0
      %v8970 = vsel %vm727, %v8923, 0
      %v8973 = vsel %vm727, %v8924, 0
      %v8976 = vsel %vm981, %v8926, 0
      %8978 = vmatprep.subr.bf16.mxu0 0
      %8979 = vmatpush1.bf16.msra.mxu0 %v8976
      %8980 = vmatprep.subr.bf16.mxu0 0
      %8981 = vmatpush1.bf16.msra.mxu0 0
      %8982 = vmatprep.subr.bf16.mxu0 0
      %8983 = vmatpush1.bf16.msra.mxu0 0
      %8984 = vmatprep.subr.bf16.mxu0 0
      %8985 = vmatpush1.bf16.msra.mxu0 0
      %8986 = vmatprep.subr.bf16.mxu0 0
      %8987 = vmatpush1.bf16.msra.mxu0 0
      %8988 = vmatprep.subr.bf16.mxu0 0
      %8989 = vmatpush1.bf16.msra.mxu0 0
      %8990 = vmatprep.subr.bf16.mxu0 0
      %8991 = vmatpush1.bf16.msra.mxu0 0
      %8992 = vmatprep.subr.bf16.mxu0 0
      %8993 = vmatpush1.bf16.msra.mxu0 0
      %8994 = vmatprep.subr.bf16.mxu0 0
      %8995 = vmatpush1.bf16.msra.mxu0 0
      %8996 = vmatprep.subr.bf16.mxu0 0
      %8997 = vmatpush1.bf16.msra.mxu0 0
      %8998 = vmatprep.subr.bf16.mxu0 0
      %8999 = vmatpush1.bf16.msra.mxu0 0
      %9000 = vmatprep.subr.bf16.mxu0 0
      %9001 = vmatpush1.bf16.msra.mxu0 0
      %9002 = vmatprep.subr.bf16.mxu0 0
      %9003 = vmatpush1.bf16.msra.mxu0 0
      %9004 = vmatprep.subr.bf16.mxu0 0
      %9005 = vmatpush1.bf16.msra.mxu0 0
      %9006 = vmatprep.subr.bf16.mxu0 0
      %9007 = vmatpush1.bf16.msra.mxu0 0
      %9008 = vmatprep.subr.bf16.mxu0 0
      %9009 = vmatpush1.bf16.msra.mxu0 0
      %9010 = vmatprep.mubr.bf16.mxu0 0
      %9011 = vmatmul.mubr.bf16.gmra.mrb[0].mxu0 %v8928
      %v9012 = vpop.f32.mrb[0].mxu0
      %v9013 = vadd.f32 0.0, %v9012
      %v9014 = vpop.f32.mrb[0].mxu0
      %v9015 = vpop.f32.mrb[0].mxu0
      %v9016 = vadd.f32 0.0, %v9015
      %v9017 = vpop.f32.mrb[0].mxu0
      %9018 = vmatprep.mubr.bf16.mxu0 0
      %9019 = vmatmul.mubr.bf16.gmra.mrb[0].mxu0 %v8931
      %v9020 = vpop.f32.mrb[0].mxu0
      %v9021 = vadd.f32 0.0, %v9020
      %v9022 = vpop.f32.mrb[0].mxu0
      %v9023 = vpop.f32.mrb[0].mxu0
      %v9024 = vadd.f32 0.0, %v9023
      %v9025 = vpop.f32.mrb[0].mxu0
      %9026 = vmatprep.mubr.bf16.mxu0 0
      %9027 = vmatmul.mubr.bf16.gmra.mrb[0].mxu0 %v8934
      %v9028 = vpop.f32.mrb[0].mxu0
      %v9029 = vadd.f32 0.0, %v9028
      %v9030 = vpop.f32.mrb[0].mxu0
      %v9031 = vpop.f32.mrb[0].mxu0
      %v9032 = vadd.f32 0.0, %v9031
      %v9033 = vpop.f32.mrb[0].mxu0
      %9034 = vmatprep.mubr.bf16.mxu0 0
      %9035 = vmatmul.mubr.bf16.gmra.mrb[0].mxu0 %v8937
      %v9036 = vpop.f32.mrb[0].mxu0
      %v9037 = vadd.f32 0.0, %v9036
      %v9038 = vpop.f32.mrb[0].mxu0
      %v9039 = vpop.f32.mrb[0].mxu0
      %v9040 = vadd.f32 0.0, %v9039
      %v9041 = vpop.f32.mrb[0].mxu0
      %9042 = vmatprep.mubr.bf16.mxu0 0
      %9043 = vmatmul.mubr.bf16.gmra.mrb[0].mxu0 %v8940
      %v9044 = vpop.f32.mrb[0].mxu0
      %v9045 = vadd.f32 0.0, %v9044
      %v9046 = vpop.f32.mrb[0].mxu0
      %v9047 = vpop.f32.mrb[0].mxu0
      %v9048 = vadd.f32 0.0, %v9047
      %v9049 = vpop.f32.mrb[0].mxu0
      %9050 = vmatprep.mubr.bf16.mxu0 0
      %9051 = vmatmul.mubr.bf16.gmra.mrb[0].mxu0 %v8943
      %v9052 = vpop.f32.mrb[0].mxu0
      %v9053 = vadd.f32 0.0, %v9052
      %v9054 = vpop.f32.mrb[0].mxu0
      %v9055 = vpop.f32.mrb[0].mxu0
      %v9056 = vadd.f32 0.0, %v9055
      %v9057 = vpop.f32.mrb[0].mxu0
      %9058 = vmatprep.mubr.bf16.mxu0 0
      %9059 = vmatmul.mubr.bf16.gmra.mrb[0].mxu0 %v8946
      %v9060 = vpop.f32.mrb[0].mxu0
      %v9061 = vadd.f32 0.0, %v9060
      %v9062 = vpop.f32.mrb[0].mxu0
      %v9063 = vpop.f32.mrb[0].mxu0
      %v9064 = vadd.f32 0.0, %v9063
      %v9065 = vpop.f32.mrb[0].mxu0
      %9066 = vmatprep.mubr.bf16.mxu0 0
      %9067 = vmatmul.mubr.bf16.gmra.mrb[0].mxu0 %v8949
      %v9068 = vpop.f32.mrb[0].mxu0
      %v9069 = vadd.f32 0.0, %v9068
      %v9070 = vpop.f32.mrb[0].mxu0
      %v9071 = vpop.f32.mrb[0].mxu0
      %v9072 = vadd.f32 0.0, %v9071
      %v9073 = vpop.f32.mrb[0].mxu0
      %9074 = vmatprep.mubr.bf16.mxu0 0
      %9075 = vmatmul.mubr.bf16.gmra.mrb[0].mxu0 %v8952
      %v9076 = vpop.f32.mrb[0].mxu0
      %v9077 = vadd.f32 0.0, %v9076
      %v9078 = vpop.f32.mrb[0].mxu0
      %v9079 = vpop.f32.mrb[0].mxu0
      %v9080 = vadd.f32 0.0, %v9079
      %v9081 = vpop.f32.mrb[0].mxu0
      %9082 = vmatprep.mubr.bf16.mxu0 0
      %9083 = vmatmul.mubr.bf16.gmra.mrb[0].mxu0 %v8955
      %v9084 = vpop.f32.mrb[0].mxu0
      %v9085 = vadd.f32 0.0, %v9084
      %v9086 = vpop.f32.mrb[0].mxu0
      %v9087 = vpop.f32.mrb[0].mxu0
      %v9088 = vadd.f32 0.0, %v9087
      %v9089 = vpop.f32.mrb[0].mxu0
      %9090 = vmatprep.mubr.bf16.mxu0 0
      %9091 = vmatmul.mubr.bf16.gmra.mrb[0].mxu0 %v8958
      %v9092 = vpop.f32.mrb[0].mxu0
      %v9093 = vadd.f32 0.0, %v9092
      %v9094 = vpop.f32.mrb[0].mxu0
      %v9095 = vpop.f32.mrb[0].mxu0
      %v9096 = vadd.f32 0.0, %v9095
      %v9097 = vpop.f32.mrb[0].mxu0
      %9098 = vmatprep.mubr.bf16.mxu0 0
      %9099 = vmatmul.mubr.bf16.gmra.mrb[0].mxu0 %v8961
      %v9100 = vpop.f32.mrb[0].mxu0
      %v9101 = vadd.f32 0.0, %v9100
      %v9102 = vpop.f32.mrb[0].mxu0
      %v9103 = vpop.f32.mrb[0].mxu0
      %v9104 = vadd.f32 0.0, %v9103
      %v9105 = vpop.f32.mrb[0].mxu0
      %9106 = vmatprep.mubr.bf16.mxu0 0
      %9107 = vmatmul.mubr.bf16.gmra.mrb[0].mxu0 %v8964
      %v9108 = vpop.f32.mrb[0].mxu0
      %v9109 = vadd.f32 0.0, %v9108
      %v9110 = vpop.f32.mrb[0].mxu0
      %v9111 = vpop.f32.mrb[0].mxu0
      %v9112 = vadd.f32 0.0, %v9111
      %v9113 = vpop.f32.mrb[0].mxu0
      %9114 = vmatprep.mubr.bf16.mxu0 0
      %9115 = vmatmul.mubr.bf16.gmra.mrb[0].mxu0 %v8967
      %v9116 = vpop.f32.mrb[0].mxu0
      %v9117 = vadd.f32 0.0, %v9116
      %v9118 = vpop.f32.mrb[0].mxu0
      %v9119 = vpop.f32.mrb[0].mxu0
      %v9120 = vadd.f32 0.0, %v9119
      %v9121 = vpop.f32.mrb[0].mxu0
      %9122 = vmatprep.mubr.bf16.mxu0 0
      %9123 = vmatmul.mubr.bf16.gmra.mrb[0].mxu0 %v8970
      %v9124 = vpop.f32.mrb[0].mxu0
      %v9125 = vadd.f32 0.0, %v9124
      %v9126 = vpop.f32.mrb[0].mxu0
      %v9127 = vpop.f32.mrb[0].mxu0
      %v9128 = vadd.f32 0.0, %v9127
      %v9129 = vpop.f32.mrb[0].mxu0
      %9130 = vmatprep.mubr.bf16.mxu0 0
      %9131 = vmatmul.mubr.bf16.gmra.mrb[0].mxu0 %v8973
      %v9132 = vpop.f32.mrb[0].mxu0
      %v9133 = vadd.f32 0.0, %v9132
      %v9134 = vpop.f32.mrb[0].mxu0
      %v9135 = vpop.f32.mrb[0].mxu0
      %v9136 = vadd.f32 0.0, %v9135
      %v9137 = vpop.f32.mrb[0].mxu0
      %9138 = vdwg.mxu0
      %v9139 = vadd.f32 %v8877, %v9013
      %v9140 = vadd.f32 %v8878, %v9016
      %v9141 = vadd.f32 %v8879, %v9021
      %v9142 = vadd.f32 %v8880, %v9024
      %v9143 = vadd.f32 %v8881, %v9029
      %v9144 = vadd.f32 %v8882, %v9032
      %v9145 = vadd.f32 %v8883, %v9037
      %v9146 = vadd.f32 %v8884, %v9040
      %v9147 = vadd.f32 %v8885, %v9045
      %v9148 = vadd.f32 %v8886, %v9048
      %v9149 = vadd.f32 %v8887, %v9053
      %v9150 = vadd.f32 %v8888, %v9056
      %v9151 = vadd.f32 %v8889, %v9061
      %v9152 = vadd.f32 %v8890, %v9064
      %v9153 = vadd.f32 %v8891, %v9069
      %v9154 = vadd.f32 %v8892, %v9072
      %v9155 = vadd.f32 %v8893, %v9077
      %v9156 = vadd.f32 %v8894, %v9080
      %v9157 = vadd.f32 %v8895, %v9085
      %v9158 = vadd.f32 %v8896, %v9088
      %v9159 = vadd.f32 %v8897, %v9093
      %v9160 = vadd.f32 %v8898, %v9096
      %v9161 = vadd.f32 %v8899, %v9101
      %v9162 = vadd.f32 %v8900, %v9104
      %v9163 = vadd.f32 %v8901, %v9109
      %v9164 = vadd.f32 %v8902, %v9112
      %v9165 = vadd.f32 %v8903, %v9117
      %v9166 = vadd.f32 %v8904, %v9120
      %v9167 = vadd.f32 %v8905, %v9125
      %v9168 = vadd.f32 %v8906, %v9128
      %v9169 = vadd.f32 %v8907, %v9133
      %v9170 = vadd.f32 %v8908, %v9136
      %v9171 = vld [vmem:[%s8517] sm:$0xf]
      %v9172 = vld [vmem:[%s8517 + $0x4] sm:$0xf]
      %v9173 = vld [vmem:[%s8517 + $0x8] sm:$0x1]
      %v9174 = vld [vmem:[%s8517 + $0xc] sm:$0xf]
      %v9175 = vld [vmem:[%s8517 + $0x10] sm:$0xf]
      %v9176 = vld [vmem:[%s8517 + $0x14] sm:$0x1]
      %v9177 = vld [vmem:[%s8517 + $0x18] sm:$0xf]
      %v9178 = vld [vmem:[%s8517 + $0x1c] sm:$0xf]
      %v9179 = vld [vmem:[%s8517 + $0x20] sm:$0x1]
      %v9180 = vld [vmem:[%s8517 + $0x24] sm:$0xf]
      %v9181 = vld [vmem:[%s8517 + $0x28] sm:$0xf]
      %v9182 = vld [vmem:[%s8517 + $0x2c] sm:$0x1]
      %v9183 = vld [vmem:[%s8517 + $0x30] sm:$0xf]
      %v9184 = vld [vmem:[%s8517 + $0x34] sm:$0xf]
      %v9185 = vld [vmem:[%s8517 + $0x38] sm:$0x1]
      %v9186 = vld [vmem:[%s8517 + $0x3c] sm:$0xf]
      %v9187 = vld [vmem:[%s8517 + $0x40] sm:$0xf]
      %v9188 = vld [vmem:[%s8517 + $0x44] sm:$0x1]
      %v9189 = vld [vmem:[%s8517 + $0x48] sm:$0xf]
      %v9190 = vld [vmem:[%s8517 + $0x4c] sm:$0xf]
      %v9191 = vld [vmem:[%s8517 + $0x50] sm:$0x1]
      %v9192 = vld [vmem:[%s8517 + $0x54] sm:$0xf]
      %v9193 = vld [vmem:[%s8517 + $0x58] sm:$0xf]
      %v9194 = vld [vmem:[%s8517 + $0x5c] sm:$0x1]
      %v9195 = vld [vmem:[%s8517 + $0x60] sm:$0xf]
      %v9196 = vld [vmem:[%s8517 + $0x64] sm:$0xf]
      %v9197 = vld [vmem:[%s8517 + $0x68] sm:$0x1]
      %v9198 = vld [vmem:[%s8517 + $0x6c] sm:$0xf]
      %v9199 = vld [vmem:[%s8517 + $0x70] sm:$0xf]
      %v9200 = vld [vmem:[%s8517 + $0x74] sm:$0x1]
      %v9201 = vld [vmem:[%s8517 + $0x78] sm:$0xf]
      %v9202 = vld [vmem:[%s8517 + $0x7c] sm:$0xf]
      %v9203 = vld [vmem:[%s8517 + $0x80] sm:$0x1]
      %v9204 = vld [vmem:[%s8517 + $0x84] sm:$0xf]
      %v9205 = vld [vmem:[%s8517 + $0x88] sm:$0xf]
      %v9206 = vld [vmem:[%s8517 + $0x8c] sm:$0x1]
      %v9207 = vld [vmem:[%s8517 + $0x90] sm:$0xf]
      %v9208 = vld [vmem:[%s8517 + $0x94] sm:$0xf]
      %v9209 = vld [vmem:[%s8517 + $0x98] sm:$0x1]
      %v9210 = vld [vmem:[%s8517 + $0x9c] sm:$0xf]
      %v9211 = vld [vmem:[%s8517 + $0xa0] sm:$0xf]
      %v9212 = vld [vmem:[%s8517 + $0xa4] sm:$0x1]
      %v9213 = vld [vmem:[%s8517 + $0xa8] sm:$0xf]
      %v9214 = vld [vmem:[%s8517 + $0xac] sm:$0xf]
      %v9215 = vld [vmem:[%s8517 + $0xb0] sm:$0x1]
      %v9216 = vld [vmem:[%s8517 + $0xb4] sm:$0xf]
      %v9217 = vld [vmem:[%s8517 + $0xb8] sm:$0xf]
      %v9218 = vld [vmem:[%s8517 + $0xbc] sm:$0x1]
      %v9219 = vld [vmem:[%s8550 + $0x1] sm:$0xff]
      %v9220 = vld [vmem:[%s8550 + $0x9] sm:$0xff]
      %v9221 = vld [vmem:[%s8550 + $0x19] sm:$0xff]
      %v9222 = vld [vmem:[%s8550 + $0x21] sm:$0xff]
      %v9223 = vld [vmem:[%s8550 + $0x31] sm:$0xff]
      %v9224 = vld [vmem:[%s8550 + $0x39] sm:$0xff]
      %v9225 = vld [vmem:[%s8550 + $0x49] sm:$0xff]
      %v9226 = vld [vmem:[%s8550 + $0x51] sm:$0xff]
      %v9227 = vld [vmem:[%s8550 + $0x61] sm:$0xff]
      %v9228 = vld [vmem:[%s8550 + $0x69] sm:$0xff]
      %v9229 = vld [vmem:[%s8550 + $0x79] sm:$0xff]
      %v9230 = vld [vmem:[%s8550 + $0x81] sm:$0xff]
      %v9231 = vld [vmem:[%s8550 + $0x91] sm:$0xff]
      %v9232 = vld [vmem:[%s8550 + $0x99] sm:$0xff]
      %v9233 = vld [vmem:[%s8550 + $0xa9] sm:$0xff]
      %v9234 = vld [vmem:[%s8550 + $0xb1] sm:$0xff]
      %v9235 = vld [vmem:[%s8550 + $0xc1] sm:$0xff]
      %v9236 = vld [vmem:[%s8550 + $0xc9] sm:$0xff]
      %v9237 = vld [vmem:[%s8550 + $0xd9] sm:$0xff]
      %v9238 = vld [vmem:[%s8550 + $0xe1] sm:$0xff]
      %v9239 = vld [vmem:[%s8550 + $0xf1] sm:$0xff]
      %v9240 = vld [vmem:[%s8550 + $0xf9] sm:$0xff]
      %v9241 = vld [vmem:[%s8550 + $0x109] sm:$0xff]
      %v9242 = vld [vmem:[%s8550 + $0x111] sm:$0xff]
      %v9243 = vld [vmem:[%s8550 + $0x121] sm:$0xff]
      %v9244 = vld [vmem:[%s8550 + $0x129] sm:$0xff]
      %v9245 = vld [vmem:[%s8550 + $0x139] sm:$0xff]
      %v9246 = vld [vmem:[%s8550 + $0x141] sm:$0xff]
      %v9247 = vld [vmem:[%s8550 + $0x151] sm:$0xff]
      %v9248 = vld [vmem:[%s8550 + $0x159] sm:$0xff]
      %v9249 = vld [vmem:[%s8550 + $0x169] sm:$0xff]
      %v9250 = vld [vmem:[%s8550 + $0x171] sm:$0xff]
      %v9252 = vshrl.u32 %v9171, 16
      %v9254 = vrot.slane %v9252, 4
      %v9255 = vshll.u32 %v9171, 16
      %v9257 = vrot.slane %v9255, 5
      %v9258 = vor.u32 %v9254, %v9257
      %v9259 = vrot.slane %v9258, 4
      %v9261 = vshll.u32 %v9172, 16
      %v9263 = vrot.slane %v9261, 5
      %v9264 = vsel %vm4243, %v9259, %v9263
      %v9265 = vshrl.u32 %v9172, 16
      %v9267 = vrot.slane %v9265, 4
      %v9268 = vor.u32 %v9267, %v9263
      %v9269 = vrot.slane %v9268, 4
      %v9271 = vshll.u32 %v9173, 16
      %v9273 = vrot.slane %v9271, 5
      %v9274 = vsel %vm4243, %v9269, %v9273
      %v9276 = vshrl.u32 %v9174, 16
      %v9278 = vrot.slane %v9276, 4
      %v9279 = vshll.u32 %v9174, 16
      %v9281 = vrot.slane %v9279, 5
      %v9282 = vor.u32 %v9278, %v9281
      %v9283 = vrot.slane %v9282, 4
      %v9285 = vshll.u32 %v9175, 16
      %v9287 = vrot.slane %v9285, 5
      %v9288 = vsel %vm4243, %v9283, %v9287
      %v9289 = vshrl.u32 %v9175, 16
      %v9291 = vrot.slane %v9289, 4
      %v9292 = vor.u32 %v9291, %v9287
      %v9293 = vrot.slane %v9292, 4
      %v9295 = vshll.u32 %v9176, 16
      %v9297 = vrot.slane %v9295, 5
      %v9298 = vsel %vm4243, %v9293, %v9297
      %v9300 = vshrl.u32 %v9177, 16
      %v9302 = vrot.slane %v9300, 4
      %v9303 = vshll.u32 %v9177, 16
      %v9305 = vrot.slane %v9303, 5
      %v9306 = vor.u32 %v9302, %v9305
      %v9307 = vrot.slane %v9306, 4
      %v9309 = vshll.u32 %v9178, 16
      %v9311 = vrot.slane %v9309, 5
      %v9312 = vsel %vm4243, %v9307, %v9311
      %v9313 = vshrl.u32 %v9178, 16
      %v9315 = vrot.slane %v9313, 4
      %v9316 = vor.u32 %v9315, %v9311
      %v9317 = vrot.slane %v9316, 4
      %v9319 = vshll.u32 %v9179, 16
      %v9321 = vrot.slane %v9319, 5
      %v9322 = vsel %vm4243, %v9317, %v9321
      %v9324 = vshrl.u32 %v9180, 16
      %v9326 = vrot.slane %v9324, 4
      %v9327 = vshll.u32 %v9180, 16
      %v9329 = vrot.slane %v9327, 5
      %v9330 = vor.u32 %v9326, %v9329
      %v9331 = vrot.slane %v9330, 4
      %v9333 = vshll.u32 %v9181, 16
      %v9335 = vrot.slane %v9333, 5
      %v9336 = vsel %vm4243, %v9331, %v9335
      %v9337 = vshrl.u32 %v9181, 16
      %v9339 = vrot.slane %v9337, 4
      %v9340 = vor.u32 %v9339, %v9335
      %v9341 = vrot.slane %v9340, 4
      %v9343 = vshll.u32 %v9182, 16
      %v9345 = vrot.slane %v9343, 5
      %v9346 = vsel %vm4243, %v9341, %v9345
      %v9348 = vshrl.u32 %v9183, 16
      %v9350 = vrot.slane %v9348, 4
      %v9351 = vshll.u32 %v9183, 16
      %v9353 = vrot.slane %v9351, 5
      %v9354 = vor.u32 %v9350, %v9353
      %v9355 = vrot.slane %v9354, 4
      %v9357 = vshll.u32 %v9184, 16
      %v9359 = vrot.slane %v9357, 5
      %v9360 = vsel %vm4243, %v9355, %v9359
      %v9361 = vshrl.u32 %v9184, 16
      %v9363 = vrot.slane %v9361, 4
      %v9364 = vor.u32 %v9363, %v9359
      %v9365 = vrot.slane %v9364, 4
      %v9367 = vshll.u32 %v9185, 16
      %v9369 = vrot.slane %v9367, 5
      %v9370 = vsel %vm4243, %v9365, %v9369
      %v9372 = vshrl.u32 %v9186, 16
      %v9374 = vrot.slane %v9372, 4
      %v9375 = vshll.u32 %v9186, 16
      %v9377 = vrot.slane %v9375, 5
      %v9378 = vor.u32 %v9374, %v9377
      %v9379 = vrot.slane %v9378, 4
      %v9381 = vshll.u32 %v9187, 16
      %v9383 = vrot.slane %v9381, 5
      %v9384 = vsel %vm4243, %v9379, %v9383
      %v9385 = vshrl.u32 %v9187, 16
      %v9387 = vrot.slane %v9385, 4
      %v9388 = vor.u32 %v9387, %v9383
      %v9389 = vrot.slane %v9388, 4
      %v9391 = vshll.u32 %v9188, 16
      %v9393 = vrot.slane %v9391, 5
      %v9394 = vsel %vm4243, %v9389, %v9393
      %v9396 = vshrl.u32 %v9189, 16
      %v9398 = vrot.slane %v9396, 4
      %v9399 = vshll.u32 %v9189, 16
      %v9401 = vrot.slane %v9399, 5
      %v9402 = vor.u32 %v9398, %v9401
      %v9403 = vrot.slane %v9402, 4
      %v9405 = vshll.u32 %v9190, 16
      %v9407 = vrot.slane %v9405, 5
      %v9408 = vsel %vm4243, %v9403, %v9407
      %v9409 = vshrl.u32 %v9190, 16
      %v9411 = vrot.slane %v9409, 4
      %v9412 = vor.u32 %v9411, %v9407
      %v9413 = vrot.slane %v9412, 4
      %v9415 = vshll.u32 %v9191, 16
      %v9417 = vrot.slane %v9415, 5
      %v9418 = vsel %vm4243, %v9413, %v9417
      %v9420 = vshrl.u32 %v9192, 16
      %v9422 = vrot.slane %v9420, 4
      %v9423 = vshll.u32 %v9192, 16
      %v9425 = vrot.slane %v9423, 5
      %v9426 = vor.u32 %v9422, %v9425
      %v9427 = vrot.slane %v9426, 4
      %v9429 = vshll.u32 %v9193, 16
      %v9431 = vrot.slane %v9429, 5
      %v9432 = vsel %vm4243, %v9427, %v9431
      %v9433 = vshrl.u32 %v9193, 16
      %v9435 = vrot.slane %v9433, 4
      %v9436 = vor.u32 %v9435, %v9431
      %v9437 = vrot.slane %v9436, 4
      %v9439 = vshll.u32 %v9194, 16
      %v9441 = vrot.slane %v9439, 5
      %v9442 = vsel %vm4243, %v9437, %v9441
      %v9444 = vshrl.u32 %v9195, 16
      %v9446 = vrot.slane %v9444, 4
      %v9447 = vshll.u32 %v9195, 16
      %v9449 = vrot.slane %v9447, 5
      %v9450 = vor.u32 %v9446, %v9449
      %v9451 = vrot.slane %v9450, 4
      %v9453 = vshll.u32 %v9196, 16
      %v9455 = vrot.slane %v9453, 5
      %v9456 = vsel %vm4243, %v9451, %v9455
      %v9457 = vshrl.u32 %v9196, 16
      %v9459 = vrot.slane %v9457, 4
      %v9460 = vor.u32 %v9459, %v9455
      %v9461 = vrot.slane %v9460, 4
      %v9463 = vshll.u32 %v9197, 16
      %v9465 = vrot.slane %v9463, 5
      %v9466 = vsel %vm4243, %v9461, %v9465
      %v9468 = vshrl.u32 %v9198, 16
      %v9470 = vrot.slane %v9468, 4
      %v9471 = vshll.u32 %v9198, 16
      %v9473 = vrot.slane %v9471, 5
      %v9474 = vor.u32 %v9470, %v9473
      %v9475 = vrot.slane %v9474, 4
      %v9477 = vshll.u32 %v9199, 16
      %v9479 = vrot.slane %v9477, 5
      %v9480 = vsel %vm4243, %v9475, %v9479
      %v9481 = vshrl.u32 %v9199, 16
      %v9483 = vrot.slane %v9481, 4
      %v9484 = vor.u32 %v9483, %v9479
      %v9485 = vrot.slane %v9484, 4
      %v9487 = vshll.u32 %v9200, 16
      %v9489 = vrot.slane %v9487, 5
      %v9490 = vsel %vm4243, %v9485, %v9489
      %v9492 = vshrl.u32 %v9201, 16
      %v9494 = vrot.slane %v9492, 4
      %v9495 = vshll.u32 %v9201, 16
      %v9497 = vrot.slane %v9495, 5
      %v9498 = vor.u32 %v9494, %v9497
      %v9499 = vrot.slane %v9498, 4
      %v9501 = vshll.u32 %v9202, 16
      %v9503 = vrot.slane %v9501, 5
      %v9504 = vsel %vm4243, %v9499, %v9503
      %v9505 = vshrl.u32 %v9202, 16
      %v9507 = vrot.slane %v9505, 4
      %v9508 = vor.u32 %v9507, %v9503
      %v9509 = vrot.slane %v9508, 4
      %v9511 = vshll.u32 %v9203, 16
      %v9513 = vrot.slane %v9511, 5
      %v9514 = vsel %vm4243, %v9509, %v9513
      %v9516 = vshrl.u32 %v9204, 16
      %v9518 = vrot.slane %v9516, 4
      %v9519 = vshll.u32 %v9204, 16
      %v9521 = vrot.slane %v9519, 5
      %v9522 = vor.u32 %v9518, %v9521
      %v9523 = vrot.slane %v9522, 4
      %v9525 = vshll.u32 %v9205, 16
      %v9527 = vrot.slane %v9525, 5
      %v9528 = vsel %vm4243, %v9523, %v9527
      %v9529 = vshrl.u32 %v9205, 16
      %v9531 = vrot.slane %v9529, 4
      %v9532 = vor.u32 %v9531, %v9527
      %v9533 = vrot.slane %v9532, 4
      %v9535 = vshll.u32 %v9206, 16
      %v9537 = vrot.slane %v9535, 5
      %v9538 = vsel %vm4243, %v9533, %v9537
      %v9540 = vshrl.u32 %v9207, 16
      %v9542 = vrot.slane %v9540, 4
      %v9543 = vshll.u32 %v9207, 16
      %v9545 = vrot.slane %v9543, 5
      %v9546 = vor.u32 %v9542, %v9545
      %v9547 = vrot.slane %v9546, 4
      %v9549 = vshll.u32 %v9208, 16
      %v9551 = vrot.slane %v9549, 5
      %v9552 = vsel %vm4243, %v9547, %v9551
      %v9553 = vshrl.u32 %v9208, 16
      %v9555 = vrot.slane %v9553, 4
      %v9556 = vor.u32 %v9555, %v9551
      %v9557 = vrot.slane %v9556, 4
      %v9559 = vshll.u32 %v9209, 16
      %v9561 = vrot.slane %v9559, 5
      %v9562 = vsel %vm4243, %v9557, %v9561
      %v9564 = vshrl.u32 %v9210, 16
      %v9566 = vrot.slane %v9564, 4
      %v9567 = vshll.u32 %v9210, 16
      %v9569 = vrot.slane %v9567, 5
      %v9570 = vor.u32 %v9566, %v9569
      %v9571 = vrot.slane %v9570, 4
      %v9573 = vshll.u32 %v9211, 16
      %v9575 = vrot.slane %v9573, 5
      %v9576 = vsel %vm4243, %v9571, %v9575
      %v9577 = vshrl.u32 %v9211, 16
      %v9579 = vrot.slane %v9577, 4
      %v9580 = vor.u32 %v9579, %v9575
      %v9581 = vrot.slane %v9580, 4
      %v9583 = vshll.u32 %v9212, 16
      %v9585 = vrot.slane %v9583, 5
      %v9586 = vsel %vm4243, %v9581, %v9585
      %v9588 = vshrl.u32 %v9213, 16
      %v9590 = vrot.slane %v9588, 4
      %v9591 = vshll.u32 %v9213, 16
      %v9593 = vrot.slane %v9591, 5
      %v9594 = vor.u32 %v9590, %v9593
      %v9595 = vrot.slane %v9594, 4
      %v9597 = vshll.u32 %v9214, 16
      %v9599 = vrot.slane %v9597, 5
      %v9600 = vsel %vm4243, %v9595, %v9599
      %v9601 = vshrl.u32 %v9214, 16
      %v9603 = vrot.slane %v9601, 4
      %v9604 = vor.u32 %v9603, %v9599
      %v9605 = vrot.slane %v9604, 4
      %v9607 = vshll.u32 %v9215, 16
      %v9609 = vrot.slane %v9607, 5
      %v9610 = vsel %vm4243, %v9605, %v9609
      %v9612 = vshrl.u32 %v9216, 16
      %v9614 = vrot.slane %v9612, 4
      %v9615 = vshll.u32 %v9216, 16
      %v9617 = vrot.slane %v9615, 5
      %v9618 = vor.u32 %v9614, %v9617
      %v9619 = vrot.slane %v9618, 4
      %v9621 = vshll.u32 %v9217, 16
      %v9623 = vrot.slane %v9621, 5
      %v9624 = vsel %vm4243, %v9619, %v9623
      %v9625 = vshrl.u32 %v9217, 16
      %v9627 = vrot.slane %v9625, 4
      %v9628 = vor.u32 %v9627, %v9623
      %v9629 = vrot.slane %v9628, 4
      %v9631 = vshll.u32 %v9218, 16
      %v9633 = vrot.slane %v9631, 5
      %v9634 = vsel %vm4243, %v9629, %v9633
      %s9667 = scalar_lea.vmem %s1, 14
      %v9668 = vld [vmem:[%s9667] sm:$0x3]
      %v9669 = vunpack.c.l.b16 %v9264
      %v9670 = vunpack.c.l.b16 %v9274
      %v9671 = vunpack.c.l.b16 %v9288
      %v9672 = vunpack.c.l.b16 %v9298
      %v9673 = vunpack.c.l.b16 %v9312
      %v9674 = vunpack.c.l.b16 %v9322
      %v9675 = vunpack.c.l.b16 %v9336
      %v9676 = vunpack.c.l.b16 %v9346
      %v9677 = vunpack.c.l.b16 %v9360
      %v9678 = vunpack.c.l.b16 %v9370
      %v9679 = vunpack.c.l.b16 %v9384
      %v9680 = vunpack.c.l.b16 %v9394
      %v9681 = vunpack.c.l.b16 %v9408
      %v9682 = vunpack.c.l.b16 %v9418
      %v9683 = vunpack.c.l.b16 %v9432
      %v9684 = vunpack.c.l.b16 %v9442
      %v9685 = vunpack.c.l.b16 %v9456
      %v9686 = vunpack.c.l.b16 %v9466
      %v9687 = vunpack.c.l.b16 %v9480
      %v9688 = vunpack.c.l.b16 %v9490
      %v9689 = vunpack.c.l.b16 %v9504
      %v9690 = vunpack.c.l.b16 %v9514
      %v9691 = vunpack.c.l.b16 %v9528
      %v9692 = vunpack.c.l.b16 %v9538
      %v9693 = vunpack.c.l.b16 %v9552
      %v9694 = vunpack.c.l.b16 %v9562
      %v9695 = vunpack.c.l.b16 %v9576
      %v9696 = vunpack.c.l.b16 %v9586
      %v9697 = vunpack.c.l.b16 %v9600
      %v9698 = vunpack.c.l.b16 %v9610
      %v9699 = vunpack.c.l.b16 %v9624
      %v9700 = vunpack.c.l.b16 %v9634
      %v9701 = vpack.c.b16 %v9670, %v9669
      %v9702 = vpack.c.b16 %v9672, %v9671
      %v9703 = vpack.c.b16 %v9674, %v9673
      %v9704 = vpack.c.b16 %v9676, %v9675
      %v9705 = vpack.c.b16 %v9678, %v9677
      %v9706 = vpack.c.b16 %v9680, %v9679
      %v9707 = vpack.c.b16 %v9682, %v9681
      %v9708 = vpack.c.b16 %v9684, %v9683
      %v9709 = vpack.c.b16 %v9686, %v9685
      %v9710 = vpack.c.b16 %v9688, %v9687
      %v9711 = vpack.c.b16 %v9690, %v9689
      %v9712 = vpack.c.b16 %v9692, %v9691
      %v9713 = vpack.c.b16 %v9694, %v9693
      %v9714 = vpack.c.b16 %v9696, %v9695
      %v9715 = vpack.c.b16 %v9698, %v9697
      %v9716 = vpack.c.b16 %v9700, %v9699
      %v9718 = vsel %vm481, %v9701, 0
      %v9721 = vsel %vm481, %v9702, 0
      %v9724 = vsel %vm481, %v9703, 0
      %v9727 = vsel %vm481, %v9704, 0
      %v9730 = vsel %vm481, %v9705, 0
      %v9733 = vsel %vm481, %v9706, 0
      %v9736 = vsel %vm481, %v9707, 0
      %v9739 = vsel %vm481, %v9708, 0
      %v9742 = vsel %vm481, %v9709, 0
      %v9745 = vsel %vm481, %v9710, 0
      %v9748 = vsel %vm481, %v9711, 0
      %v9751 = vsel %vm481, %v9712, 0
      %v9754 = vsel %vm481, %v9713, 0
      %v9757 = vsel %vm481, %v9714, 0
      %v9760 = vsel %vm481, %v9715, 0
      %v9763 = vsel %vm481, %v9716, 0
      %v9766 = vsel %vm530, %v9668, 0
      %9768 = vmatprep.subr.bf16.mxu0 0
      %9769 = vmatpush1.bf16.msra.mxu0 %v9766
      %9770 = vmatprep.subr.bf16.mxu0 0
      %9771 = vmatpush1.bf16.msra.mxu0 0
      %9772 = vmatprep.subr.bf16.mxu0 0
      %9773 = vmatpush1.bf16.msra.mxu0 0
      %9774 = vmatprep.subr.bf16.mxu0 0
      %9775 = vmatpush1.bf16.msra.mxu0 0
      %9776 = vmatprep.subr.bf16.mxu0 0
      %9777 = vmatpush1.bf16.msra.mxu0 0
      %9778 = vmatprep.subr.bf16.mxu0 0
      %9779 = vmatpush1.bf16.msra.mxu0 0
      %9780 = vmatprep.subr.bf16.mxu0 0
      %9781 = vmatpush1.bf16.msra.mxu0 0
      %9782 = vmatprep.subr.bf16.mxu0 0
      %9783 = vmatpush1.bf16.msra.mxu0 0
      %9784 = vmatprep.subr.bf16.mxu0 0
      %9785 = vmatpush1.bf16.msra.mxu0 0
      %9786 = vmatprep.subr.bf16.mxu0 0
      %9787 = vmatpush1.bf16.msra.mxu0 0
      %9788 = vmatprep.subr.bf16.mxu0 0
      %9789 = vmatpush1.bf16.msra.mxu0 0
      %9790 = vmatprep.subr.bf16.mxu0 0
      %9791 = vmatpush1.bf16.msra.mxu0 0
      %9792 = vmatprep.subr.bf16.mxu0 0
      %9793 = vmatpush1.bf16.msra.mxu0 0
      %9794 = vmatprep.subr.bf16.mxu0 0
      %9795 = vmatpush1.bf16.msra.mxu0 0
      %9796 = vmatprep.subr.bf16.mxu0 0
      %9797 = vmatpush1.bf16.msra.mxu0 0
      %9798 = vmatprep.subr.bf16.mxu0 0
      %9799 = vmatpush1.bf16.msra.mxu0 0
      %9800 = vmatprep.mubr.bf16.mxu0 0
      %9801 = vmatmul.mubr.bf16.gmra.mrb[0].mxu0 %v9718
      %v9802 = vpop.f32.mrb[0].mxu0
      %v9803 = vadd.f32 0.0, %v9802
      %v9804 = vpop.f32.mrb[0].mxu0
      %v9805 = vpop.f32.mrb[0].mxu0
      %v9806 = vadd.f32 0.0, %v9805
      %v9807 = vpop.f32.mrb[0].mxu0
      %9808 = vmatprep.mubr.bf16.mxu0 0
      %9809 = vmatmul.mubr.bf16.gmra.mrb[0].mxu0 %v9721
      %v9810 = vpop.f32.mrb[0].mxu0
      %v9811 = vadd.f32 0.0, %v9810
      %v9812 = vpop.f32.mrb[0].mxu0
      %v9813 = vpop.f32.mrb[0].mxu0
      %v9814 = vadd.f32 0.0, %v9813
      %v9815 = vpop.f32.mrb[0].mxu0
      %9816 = vmatprep.mubr.bf16.mxu0 0
      %9817 = vmatmul.mubr.bf16.gmra.mrb[0].mxu0 %v9724
      %v9818 = vpop.f32.mrb[0].mxu0
      %v9819 = vadd.f32 0.0, %v9818
      %v9820 = vpop.f32.mrb[0].mxu0
      %v9821 = vpop.f32.mrb[0].mxu0
      %v9822 = vadd.f32 0.0, %v9821
      %v9823 = vpop.f32.mrb[0].mxu0
      %9824 = vmatprep.mubr.bf16.mxu0 0
      %9825 = vmatmul.mubr.bf16.gmra.mrb[0].mxu0 %v9727
      %v9826 = vpop.f32.mrb[0].mxu0
      %v9827 = vadd.f32 0.0, %v9826
      %v9828 = vpop.f32.mrb[0].mxu0
      %v9829 = vpop.f32.mrb[0].mxu0
      %v9830 = vadd.f32 0.0, %v9829
      %v9831 = vpop.f32.mrb[0].mxu0
      %9832 = vmatprep.mubr.bf16.mxu0 0
      %9833 = vmatmul.mubr.bf16.gmra.mrb[0].mxu0 %v9730
      %v9834 = vpop.f32.mrb[0].mxu0
      %v9835 = vadd.f32 0.0, %v9834
      %v9836 = vpop.f32.mrb[0].mxu0
      %v9837 = vpop.f32.mrb[0].mxu0
      %v9838 = vadd.f32 0.0, %v9837
      %v9839 = vpop.f32.mrb[0].mxu0
      %9840 = vmatprep.mubr.bf16.mxu0 0
      %9841 = vmatmul.mubr.bf16.gmra.mrb[0].mxu0 %v9733
      %v9842 = vpop.f32.mrb[0].mxu0
      %v9843 = vadd.f32 0.0, %v9842
      %v9844 = vpop.f32.mrb[0].mxu0
      %v9845 = vpop.f32.mrb[0].mxu0
      %v9846 = vadd.f32 0.0, %v9845
      %v9847 = vpop.f32.mrb[0].mxu0
      %9848 = vmatprep.mubr.bf16.mxu0 0
      %9849 = vmatmul.mubr.bf16.gmra.mrb[0].mxu0 %v9736
      %v9850 = vpop.f32.mrb[0].mxu0
      %v9851 = vadd.f32 0.0, %v9850
      %v9852 = vpop.f32.mrb[0].mxu0
      %v9853 = vpop.f32.mrb[0].mxu0
      %v9854 = vadd.f32 0.0, %v9853
      %v9855 = vpop.f32.mrb[0].mxu0
      %9856 = vmatprep.mubr.bf16.mxu0 0
      %9857 = vmatmul.mubr.bf16.gmra.mrb[0].mxu0 %v9739
      %v9858 = vpop.f32.mrb[0].mxu0
      %v9859 = vadd.f32 0.0, %v9858
      %v9860 = vpop.f32.mrb[0].mxu0
      %v9861 = vpop.f32.mrb[0].mxu0
      %v9862 = vadd.f32 0.0, %v9861
      %v9863 = vpop.f32.mrb[0].mxu0
      %9864 = vmatprep.mubr.bf16.mxu0 0
      %9865 = vmatmul.mubr.bf16.gmra.mrb[0].mxu0 %v9742
      %v9866 = vpop.f32.mrb[0].mxu0
      %v9867 = vadd.f32 0.0, %v9866
      %v9868 = vpop.f32.mrb[0].mxu0
      %v9869 = vpop.f32.mrb[0].mxu0
      %v9870 = vadd.f32 0.0, %v9869
      %v9871 = vpop.f32.mrb[0].mxu0
      %9872 = vmatprep.mubr.bf16.mxu0 0
      %9873 = vmatmul.mubr.bf16.gmra.mrb[0].mxu0 %v9745
      %v9874 = vpop.f32.mrb[0].mxu0
      %v9875 = vadd.f32 0.0, %v9874
      %v9876 = vpop.f32.mrb[0].mxu0
      %v9877 = vpop.f32.mrb[0].mxu0
      %v9878 = vadd.f32 0.0, %v9877
      %v9879 = vpop.f32.mrb[0].mxu0
      %9880 = vmatprep.mubr.bf16.mxu0 0
      %9881 = vmatmul.mubr.bf16.gmra.mrb[0].mxu0 %v9748
      %v9882 = vpop.f32.mrb[0].mxu0
      %v9883 = vadd.f32 0.0, %v9882
      %v9884 = vpop.f32.mrb[0].mxu0
      %v9885 = vpop.f32.mrb[0].mxu0
      %v9886 = vadd.f32 0.0, %v9885
      %v9887 = vpop.f32.mrb[0].mxu0
      %9888 = vmatprep.mubr.bf16.mxu0 0
      %9889 = vmatmul.mubr.bf16.gmra.mrb[0].mxu0 %v9751
      %v9890 = vpop.f32.mrb[0].mxu0
      %v9891 = vadd.f32 0.0, %v9890
      %v9892 = vpop.f32.mrb[0].mxu0
      %v9893 = vpop.f32.mrb[0].mxu0
      %v9894 = vadd.f32 0.0, %v9893
      %v9895 = vpop.f32.mrb[0].mxu0
      %9896 = vmatprep.mubr.bf16.mxu0 0
      %9897 = vmatmul.mubr.bf16.gmra.mrb[0].mxu0 %v9754
      %v9898 = vpop.f32.mrb[0].mxu0
      %v9899 = vadd.f32 0.0, %v9898
      %v9900 = vpop.f32.mrb[0].mxu0
      %v9901 = vpop.f32.mrb[0].mxu0
      %v9902 = vadd.f32 0.0, %v9901
      %v9903 = vpop.f32.mrb[0].mxu0
      %9904 = vmatprep.mubr.bf16.mxu0 0
      %9905 = vmatmul.mubr.bf16.gmra.mrb[0].mxu0 %v9757
      %v9906 = vpop.f32.mrb[0].mxu0
      %v9907 = vadd.f32 0.0, %v9906
      %v9908 = vpop.f32.mrb[0].mxu0
      %v9909 = vpop.f32.mrb[0].mxu0
      %v9910 = vadd.f32 0.0, %v9909
      %v9911 = vpop.f32.mrb[0].mxu0
      %9912 = vmatprep.mubr.bf16.mxu0 0
      %9913 = vmatmul.mubr.bf16.gmra.mrb[0].mxu0 %v9760
      %v9914 = vpop.f32.mrb[0].mxu0
      %v9915 = vadd.f32 0.0, %v9914
      %v9916 = vpop.f32.mrb[0].mxu0
      %v9917 = vpop.f32.mrb[0].mxu0
      %v9918 = vadd.f32 0.0, %v9917
      %v9919 = vpop.f32.mrb[0].mxu0
      %9920 = vmatprep.mubr.bf16.mxu0 0
      %9921 = vmatmul.mubr.bf16.gmra.mrb[0].mxu0 %v9763
      %v9922 = vpop.f32.mrb[0].mxu0
      %v9923 = vadd.f32 0.0, %v9922
      %v9924 = vpop.f32.mrb[0].mxu0
      %v9925 = vpop.f32.mrb[0].mxu0
      %v9926 = vadd.f32 0.0, %v9925
      %v9927 = vpop.f32.mrb[0].mxu0
      %9928 = vdwg.mxu0
      %v9929 = vadd.f32 %v9139, %v9803
      %v9930 = vadd.f32 %v9140, %v9806
      %v9931 = vadd.f32 %v9141, %v9811
      %v9932 = vadd.f32 %v9142, %v9814
      %v9933 = vadd.f32 %v9143, %v9819
      %v9934 = vadd.f32 %v9144, %v9822
      %v9935 = vadd.f32 %v9145, %v9827
      %v9936 = vadd.f32 %v9146, %v9830
      %v9937 = vadd.f32 %v9147, %v9835
      %v9938 = vadd.f32 %v9148, %v9838
      %v9939 = vadd.f32 %v9149, %v9843
      %v9940 = vadd.f32 %v9150, %v9846
      %v9941 = vadd.f32 %v9151, %v9851
      %v9942 = vadd.f32 %v9152, %v9854
      %v9943 = vadd.f32 %v9153, %v9859
      %v9944 = vadd.f32 %v9154, %v9862
      %v9945 = vadd.f32 %v9155, %v9867
      %v9946 = vadd.f32 %v9156, %v9870
      %v9947 = vadd.f32 %v9157, %v9875
      %v9948 = vadd.f32 %v9158, %v9878
      %v9949 = vadd.f32 %v9159, %v9883
      %v9950 = vadd.f32 %v9160, %v9886
      %v9951 = vadd.f32 %v9161, %v9891
      %v9952 = vadd.f32 %v9162, %v9894
      %v9953 = vadd.f32 %v9163, %v9899
      %v9954 = vadd.f32 %v9164, %v9902
      %v9955 = vadd.f32 %v9165, %v9907
      %v9956 = vadd.f32 %v9166, %v9910
      %v9957 = vadd.f32 %v9167, %v9915
      %v9958 = vadd.f32 %v9168, %v9918
      %v9959 = vadd.f32 %v9169, %v9923
      %v9960 = vadd.f32 %v9170, %v9926
      %v9961 = vpack.c.bf16 %v9220, %v9219
      %v9962 = vpack.c.bf16 %v9222, %v9221
      %v9963 = vpack.c.bf16 %v9224, %v9223
      %v9964 = vpack.c.bf16 %v9226, %v9225
      %v9965 = vpack.c.bf16 %v9228, %v9227
      %v9966 = vpack.c.bf16 %v9230, %v9229
      %v9967 = vpack.c.bf16 %v9232, %v9231
      %v9968 = vpack.c.bf16 %v9234, %v9233
      %v9969 = vpack.c.bf16 %v9236, %v9235
      %v9970 = vpack.c.bf16 %v9238, %v9237
      %v9971 = vpack.c.bf16 %v9240, %v9239
      %v9972 = vpack.c.bf16 %v9242, %v9241
      %v9973 = vpack.c.bf16 %v9244, %v9243
      %v9974 = vpack.c.bf16 %v9246, %v9245
      %v9975 = vpack.c.bf16 %v9248, %v9247
      %v9976 = vpack.c.bf16 %v9250, %v9249
      %s9977 = scalar_lea.vmem %s7, 28
      %v9978 = vld [vmem:[%s9977] sm:$0xf]
      %v9980 = vsel %vm727, %v9961, 0
      %v9983 = vsel %vm727, %v9962, 0
      %v9986 = vsel %vm727, %v9963, 0
      %v9989 = vsel %vm727, %v9964, 0
      %v9992 = vsel %vm727, %v9965, 0
      %v9995 = vsel %vm727, %v9966, 0
      %v9998 = vsel %vm727, %v9967, 0
      %v10001 = vsel %vm727, %v9968, 0
      %v10004 = vsel %vm727, %v9969, 0
      %v10007 = vsel %vm727, %v9970, 0
      %v10010 = vsel %vm727, %v9971, 0
      %v10013 = vsel %vm727, %v9972, 0
      %v10016 = vsel %vm727, %v9973, 0
      %v10019 = vsel %vm727, %v9974, 0
      %v10022 = vsel %vm727, %v9975, 0
      %v10025 = vsel %vm727, %v9976, 0
      %v10028 = vsel %vm981, %v9978, 0
      %10030 = vmatprep.subr.bf16.mxu0 0
      %10031 = vmatpush1.bf16.msra.mxu0 %v10028
      %10032 = vmatprep.subr.bf16.mxu0 0
      %10033 = vmatpush1.bf16.msra.mxu0 0
      %10034 = vmatprep.subr.bf16.mxu0 0
      %10035 = vmatpush1.bf16.msra.mxu0 0
      %10036 = vmatprep.subr.bf16.mxu0 0
      %10037 = vmatpush1.bf16.msra.mxu0 0
      %10038 = vmatprep.subr.bf16.mxu0 0
      %10039 = vmatpush1.bf16.msra.mxu0 0
      %10040 = vmatprep.subr.bf16.mxu0 0
      %10041 = vmatpush1.bf16.msra.mxu0 0
      %10042 = vmatprep.subr.bf16.mxu0 0
      %10043 = vmatpush1.bf16.msra.mxu0 0
      %10044 = vmatprep.subr.bf16.mxu0 0
      %10045 = vmatpush1.bf16.msra.mxu0 0
      %10046 = vmatprep.subr.bf16.mxu0 0
      %10047 = vmatpush1.bf16.msra.mxu0 0
      %10048 = vmatprep.subr.bf16.mxu0 0
      %10049 = vmatpush1.bf16.msra.mxu0 0
      %10050 = vmatprep.subr.bf16.mxu0 0
      %10051 = vmatpush1.bf16.msra.mxu0 0
      %10052 = vmatprep.subr.bf16.mxu0 0
      %10053 = vmatpush1.bf16.msra.mxu0 0
      %10054 = vmatprep.subr.bf16.mxu0 0
      %10055 = vmatpush1.bf16.msra.mxu0 0
      %10056 = vmatprep.subr.bf16.mxu0 0
      %10057 = vmatpush1.bf16.msra.mxu0 0
      %10058 = vmatprep.subr.bf16.mxu0 0
      %10059 = vmatpush1.bf16.msra.mxu0 0
      %10060 = vmatprep.subr.bf16.mxu0 0
      %10061 = vmatpush1.bf16.msra.mxu0 0
      %10062 = vmatprep.mubr.bf16.mxu0 0
      %10063 = vmatmul.mubr.bf16.gmra.mrb[0].mxu0 %v9980
      %v10064 = vpop.f32.mrb[0].mxu0
      %v10065 = vadd.f32 0.0, %v10064
      %v10066 = vpop.f32.mrb[0].mxu0
      %v10067 = vpop.f32.mrb[0].mxu0
      %v10068 = vadd.f32 0.0, %v10067
      %v10069 = vpop.f32.mrb[0].mxu0
      %10070 = vmatprep.mubr.bf16.mxu0 0
      %10071 = vmatmul.mubr.bf16.gmra.mrb[0].mxu0 %v9983
      %v10072 = vpop.f32.mrb[0].mxu0
      %v10073 = vadd.f32 0.0, %v10072
      %v10074 = vpop.f32.mrb[0].mxu0
      %v10075 = vpop.f32.mrb[0].mxu0
      %v10076 = vadd.f32 0.0, %v10075
      %v10077 = vpop.f32.mrb[0].mxu0
      %10078 = vmatprep.mubr.bf16.mxu0 0
      %10079 = vmatmul.mubr.bf16.gmra.mrb[0].mxu0 %v9986
      %v10080 = vpop.f32.mrb[0].mxu0
      %v10081 = vadd.f32 0.0, %v10080
      %v10082 = vpop.f32.mrb[0].mxu0
      %v10083 = vpop.f32.mrb[0].mxu0
      %v10084 = vadd.f32 0.0, %v10083
      %v10085 = vpop.f32.mrb[0].mxu0
      %10086 = vmatprep.mubr.bf16.mxu0 0
      %10087 = vmatmul.mubr.bf16.gmra.mrb[0].mxu0 %v9989
      %v10088 = vpop.f32.mrb[0].mxu0
      %v10089 = vadd.f32 0.0, %v10088
      %v10090 = vpop.f32.mrb[0].mxu0
      %v10091 = vpop.f32.mrb[0].mxu0
      %v10092 = vadd.f32 0.0, %v10091
      %v10093 = vpop.f32.mrb[0].mxu0
      %10094 = vmatprep.mubr.bf16.mxu0 0
      %10095 = vmatmul.mubr.bf16.gmra.mrb[0].mxu0 %v9992
      %v10096 = vpop.f32.mrb[0].mxu0
      %v10097 = vadd.f32 0.0, %v10096
      %v10098 = vpop.f32.mrb[0].mxu0
      %v10099 = vpop.f32.mrb[0].mxu0
      %v10100 = vadd.f32 0.0, %v10099
      %v10101 = vpop.f32.mrb[0].mxu0
      %10102 = vmatprep.mubr.bf16.mxu0 0
      %10103 = vmatmul.mubr.bf16.gmra.mrb[0].mxu0 %v9995
      %v10104 = vpop.f32.mrb[0].mxu0
      %v10105 = vadd.f32 0.0, %v10104
      %v10106 = vpop.f32.mrb[0].mxu0
      %v10107 = vpop.f32.mrb[0].mxu0
      %v10108 = vadd.f32 0.0, %v10107
      %v10109 = vpop.f32.mrb[0].mxu0
      %10110 = vmatprep.mubr.bf16.mxu0 0
      %10111 = vmatmul.mubr.bf16.gmra.mrb[0].mxu0 %v9998
      %v10112 = vpop.f32.mrb[0].mxu0
      %v10113 = vadd.f32 0.0, %v10112
      %v10114 = vpop.f32.mrb[0].mxu0
      %v10115 = vpop.f32.mrb[0].mxu0
      %v10116 = vadd.f32 0.0, %v10115
      %v10117 = vpop.f32.mrb[0].mxu0
      %10118 = vmatprep.mubr.bf16.mxu0 0
      %10119 = vmatmul.mubr.bf16.gmra.mrb[0].mxu0 %v10001
      %v10120 = vpop.f32.mrb[0].mxu0
      %v10121 = vadd.f32 0.0, %v10120
      %v10122 = vpop.f32.mrb[0].mxu0
      %v10123 = vpop.f32.mrb[0].mxu0
      %v10124 = vadd.f32 0.0, %v10123
      %v10125 = vpop.f32.mrb[0].mxu0
      %10126 = vmatprep.mubr.bf16.mxu0 0
      %10127 = vmatmul.mubr.bf16.gmra.mrb[0].mxu0 %v10004
      %v10128 = vpop.f32.mrb[0].mxu0
      %v10129 = vadd.f32 0.0, %v10128
      %v10130 = vpop.f32.mrb[0].mxu0
      %v10131 = vpop.f32.mrb[0].mxu0
      %v10132 = vadd.f32 0.0, %v10131
      %v10133 = vpop.f32.mrb[0].mxu0
      %10134 = vmatprep.mubr.bf16.mxu0 0
      %10135 = vmatmul.mubr.bf16.gmra.mrb[0].mxu0 %v10007
      %v10136 = vpop.f32.mrb[0].mxu0
      %v10137 = vadd.f32 0.0, %v10136
      %v10138 = vpop.f32.mrb[0].mxu0
      %v10139 = vpop.f32.mrb[0].mxu0
      %v10140 = vadd.f32 0.0, %v10139
      %v10141 = vpop.f32.mrb[0].mxu0
      %10142 = vmatprep.mubr.bf16.mxu0 0
      %10143 = vmatmul.mubr.bf16.gmra.mrb[0].mxu0 %v10010
      %v10144 = vpop.f32.mrb[0].mxu0
      %v10145 = vadd.f32 0.0, %v10144
      %v10146 = vpop.f32.mrb[0].mxu0
      %v10147 = vpop.f32.mrb[0].mxu0
      %v10148 = vadd.f32 0.0, %v10147
      %v10149 = vpop.f32.mrb[0].mxu0
      %10150 = vmatprep.mubr.bf16.mxu0 0
      %10151 = vmatmul.mubr.bf16.gmra.mrb[0].mxu0 %v10013
      %v10152 = vpop.f32.mrb[0].mxu0
      %v10153 = vadd.f32 0.0, %v10152
      %v10154 = vpop.f32.mrb[0].mxu0
      %v10155 = vpop.f32.mrb[0].mxu0
      %v10156 = vadd.f32 0.0, %v10155
      %v10157 = vpop.f32.mrb[0].mxu0
      %10158 = vmatprep.mubr.bf16.mxu0 0
      %10159 = vmatmul.mubr.bf16.gmra.mrb[0].mxu0 %v10016
      %v10160 = vpop.f32.mrb[0].mxu0
      %v10161 = vadd.f32 0.0, %v10160
      %v10162 = vpop.f32.mrb[0].mxu0
      %v10163 = vpop.f32.mrb[0].mxu0
      %v10164 = vadd.f32 0.0, %v10163
      %v10165 = vpop.f32.mrb[0].mxu0
      %10166 = vmatprep.mubr.bf16.mxu0 0
      %10167 = vmatmul.mubr.bf16.gmra.mrb[0].mxu0 %v10019
      %v10168 = vpop.f32.mrb[0].mxu0
      %v10169 = vadd.f32 0.0, %v10168
      %v10170 = vpop.f32.mrb[0].mxu0
      %v10171 = vpop.f32.mrb[0].mxu0
      %v10172 = vadd.f32 0.0, %v10171
      %v10173 = vpop.f32.mrb[0].mxu0
      %10174 = vmatprep.mubr.bf16.mxu0 0
      %10175 = vmatmul.mubr.bf16.gmra.mrb[0].mxu0 %v10022
      %v10176 = vpop.f32.mrb[0].mxu0
      %v10177 = vadd.f32 0.0, %v10176
      %v10178 = vpop.f32.mrb[0].mxu0
      %v10179 = vpop.f32.mrb[0].mxu0
      %v10180 = vadd.f32 0.0, %v10179
      %v10181 = vpop.f32.mrb[0].mxu0
      %10182 = vmatprep.mubr.bf16.mxu0 0
      %10183 = vmatmul.mubr.bf16.gmra.mrb[0].mxu0 %v10025
      %v10184 = vpop.f32.mrb[0].mxu0
      %v10185 = vadd.f32 0.0, %v10184
      %v10186 = vpop.f32.mrb[0].mxu0
      %v10187 = vpop.f32.mrb[0].mxu0
      %v10188 = vadd.f32 0.0, %v10187
      %v10189 = vpop.f32.mrb[0].mxu0
      %10190 = vdwg.mxu0
      %v10191 = vadd.f32 %v9929, %v10065
      %v10192 = vadd.f32 %v9930, %v10068
      %v10193 = vadd.f32 %v9931, %v10073
      %v10194 = vadd.f32 %v9932, %v10076
      %v10195 = vadd.f32 %v9933, %v10081
      %v10196 = vadd.f32 %v9934, %v10084
      %v10197 = vadd.f32 %v9935, %v10089
      %v10198 = vadd.f32 %v9936, %v10092
      %v10199 = vadd.f32 %v9937, %v10097
      %v10200 = vadd.f32 %v9938, %v10100
      %v10201 = vadd.f32 %v9939, %v10105
      %v10202 = vadd.f32 %v9940, %v10108
      %v10203 = vadd.f32 %v9941, %v10113
      %v10204 = vadd.f32 %v9942, %v10116
      %v10205 = vadd.f32 %v9943, %v10121
      %v10206 = vadd.f32 %v9944, %v10124
      %v10207 = vadd.f32 %v9945, %v10129
      %v10208 = vadd.f32 %v9946, %v10132
      %v10209 = vadd.f32 %v9947, %v10137
      %v10210 = vadd.f32 %v9948, %v10140
      %v10211 = vadd.f32 %v9949, %v10145
      %v10212 = vadd.f32 %v9950, %v10148
      %v10213 = vadd.f32 %v9951, %v10153
      %v10214 = vadd.f32 %v9952, %v10156
      %v10215 = vadd.f32 %v9953, %v10161
      %v10216 = vadd.f32 %v9954, %v10164
      %v10217 = vadd.f32 %v9955, %v10169
      %v10218 = vadd.f32 %v9956, %v10172
      %v10219 = vadd.f32 %v9957, %v10177
      %v10220 = vadd.f32 %v9958, %v10180
      %v10221 = vadd.f32 %v9959, %v10185
      %v10222 = vadd.f32 %v9960, %v10188
      %v10223 = vld [vmem:[%s8517] sm:$0xe]
      %v10224 = vld [vmem:[%s8517 + $0xc] sm:$0xe]
      %v10225 = vld [vmem:[%s8517 + $0x18] sm:$0xe]
      %v10226 = vld [vmem:[%s8517 + $0x24] sm:$0xe]
      %v10227 = vld [vmem:[%s8517 + $0x30] sm:$0xe]
      %v10228 = vld [vmem:[%s8517 + $0x3c] sm:$0xe]
      %v10229 = vld [vmem:[%s8517 + $0x48] sm:$0xe]
      %v10230 = vld [vmem:[%s8517 + $0x54] sm:$0xe]
      %v10231 = vld [vmem:[%s8517 + $0x60] sm:$0xe]
      %v10232 = vld [vmem:[%s8517 + $0x6c] sm:$0xe]
      %v10233 = vld [vmem:[%s8517 + $0x78] sm:$0xe]
      %v10234 = vld [vmem:[%s8517 + $0x84] sm:$0xe]
      %v10235 = vld [vmem:[%s8517 + $0x90] sm:$0xe]
      %v10236 = vld [vmem:[%s8517 + $0x9c] sm:$0xe]
      %v10237 = vld [vmem:[%s8517 + $0xa8] sm:$0xe]
      %v10238 = vld [vmem:[%s8517 + $0xb4] sm:$0xe]
      %v10239 = vld [vmem:[%s8550 + $0x2] sm:$0xff]
      %v10240 = vld [vmem:[%s8550 + $0xa] sm:$0xff]
      %v10241 = vld [vmem:[%s8550 + $0x1a] sm:$0xff]
      %v10242 = vld [vmem:[%s8550 + $0x22] sm:$0xff]
      %v10243 = vld [vmem:[%s8550 + $0x32] sm:$0xff]
      %v10244 = vld [vmem:[%s8550 + $0x3a] sm:$0xff]
      %v10245 = vld [vmem:[%s8550 + $0x4a] sm:$0xff]
      %v10246 = vld [vmem:[%s8550 + $0x52] sm:$0xff]
      %v10247 = vld [vmem:[%s8550 + $0x62] sm:$0xff]
      %v10248 = vld [vmem:[%s8550 + $0x6a] sm:$0xff]
      %v10249 = vld [vmem:[%s8550 + $0x7a] sm:$0xff]
      %v10250 = vld [vmem:[%s8550 + $0x82] sm:$0xff]
      %v10251 = vld [vmem:[%s8550 + $0x92] sm:$0xff]
      %v10252 = vld [vmem:[%s8550 + $0x9a] sm:$0xff]
      %v10253 = vld [vmem:[%s8550 + $0xaa] sm:$0xff]
      %v10254 = vld [vmem:[%s8550 + $0xb2] sm:$0xff]
      %v10255 = vld [vmem:[%s8550 + $0xc2] sm:$0xff]
      %v10256 = vld [vmem:[%s8550 + $0xca] sm:$0xff]
      %v10257 = vld [vmem:[%s8550 + $0xda] sm:$0xff]
      %v10258 = vld [vmem:[%s8550 + $0xe2] sm:$0xff]
      %v10259 = vld [vmem:[%s8550 + $0xf2] sm:$0xff]
      %v10260 = vld [vmem:[%s8550 + $0xfa] sm:$0xff]
      %v10261 = vld [vmem:[%s8550 + $0x10a] sm:$0xff]
      %v10262 = vld [vmem:[%s8550 + $0x112] sm:$0xff]
      %v10263 = vld [vmem:[%s8550 + $0x122] sm:$0xff]
      %v10264 = vld [vmem:[%s8550 + $0x12a] sm:$0xff]
      %v10265 = vld [vmem:[%s8550 + $0x13a] sm:$0xff]
      %v10266 = vld [vmem:[%s8550 + $0x142] sm:$0xff]
      %v10267 = vld [vmem:[%s8550 + $0x152] sm:$0xff]
      %v10268 = vld [vmem:[%s8550 + $0x15a] sm:$0xff]
      %v10269 = vld [vmem:[%s8550 + $0x16a] sm:$0xff]
      %v10270 = vld [vmem:[%s8550 + $0x172] sm:$0xff]
      %v10319 = vrot.slane %v10223, 5
      %v10320 = vrot.slane %v10319, 4
      %v10321 = vrot.slane %v9172, 5
      %v10322 = vsel %vm5314, %v10320, %v10321
      %v10323 = vrot.slane %v10321, 4
      %v10324 = vrot.slane %v9173, 5
      %v10325 = vsel %vm5314, %v10323, %v10324
      %v10326 = vrot.slane %v10224, 5
      %v10327 = vrot.slane %v10326, 4
      %v10328 = vrot.slane %v9175, 5
      %v10329 = vsel %vm5314, %v10327, %v10328
      %v10330 = vrot.slane %v10328, 4
      %v10331 = vrot.slane %v9176, 5
      %v10332 = vsel %vm5314, %v10330, %v10331
      %v10333 = vrot.slane %v10225, 5
      %v10334 = vrot.slane %v10333, 4
      %v10335 = vrot.slane %v9178, 5
      %v10336 = vsel %vm5314, %v10334, %v10335
      %v10337 = vrot.slane %v10335, 4
      %v10338 = vrot.slane %v9179, 5
      %v10339 = vsel %vm5314, %v10337, %v10338
      %v10340 = vrot.slane %v10226, 5
      %v10341 = vrot.slane %v10340, 4
      %v10342 = vrot.slane %v9181, 5
      %v10343 = vsel %vm5314, %v10341, %v10342
      %v10344 = vrot.slane %v10342, 4
      %v10345 = vrot.slane %v9182, 5
      %v10346 = vsel %vm5314, %v10344, %v10345
      %v10347 = vrot.slane %v10227, 5
      %v10348 = vrot.slane %v10347, 4
      %v10349 = vrot.slane %v9184, 5
      %v10350 = vsel %vm5314, %v10348, %v10349
      %v10351 = vrot.slane %v10349, 4
      %v10352 = vrot.slane %v9185, 5
      %v10353 = vsel %vm5314, %v10351, %v10352
      %v10354 = vrot.slane %v10228, 5
      %v10355 = vrot.slane %v10354, 4
      %v10356 = vrot.slane %v9187, 5
      %v10357 = vsel %vm5314, %v10355, %v10356
      %v10358 = vrot.slane %v10356, 4
      %v10359 = vrot.slane %v9188, 5
      %v10360 = vsel %vm5314, %v10358, %v10359
      %v10361 = vrot.slane %v10229, 5
      %v10362 = vrot.slane %v10361, 4
      %v10363 = vrot.slane %v9190, 5
      %v10364 = vsel %vm5314, %v10362, %v10363
      %v10365 = vrot.slane %v10363, 4
      %v10366 = vrot.slane %v9191, 5
      %v10367 = vsel %vm5314, %v10365, %v10366
      %v10368 = vrot.slane %v10230, 5
      %v10369 = vrot.slane %v10368, 4
      %v10370 = vrot.slane %v9193, 5
      %v10371 = vsel %vm5314, %v10369, %v10370
      %v10372 = vrot.slane %v10370, 4
      %v10373 = vrot.slane %v9194, 5
      %v10374 = vsel %vm5314, %v10372, %v10373
      %v10375 = vrot.slane %v10231, 5
      %v10376 = vrot.slane %v10375, 4
      %v10377 = vrot.slane %v9196, 5
      %v10378 = vsel %vm5314, %v10376, %v10377
      %v10379 = vrot.slane %v10377, 4
      %v10380 = vrot.slane %v9197, 5
      %v10381 = vsel %vm5314, %v10379, %v10380
      %v10382 = vrot.slane %v10232, 5
      %v10383 = vrot.slane %v10382, 4
      %v10384 = vrot.slane %v9199, 5
      %v10385 = vsel %vm5314, %v10383, %v10384
      %v10386 = vrot.slane %v10384, 4
      %v10387 = vrot.slane %v9200, 5
      %v10388 = vsel %vm5314, %v10386, %v10387
      %v10389 = vrot.slane %v10233, 5
      %v10390 = vrot.slane %v10389, 4
      %v10391 = vrot.slane %v9202, 5
      %v10392 = vsel %vm5314, %v10390, %v10391
      %v10393 = vrot.slane %v10391, 4
      %v10394 = vrot.slane %v9203, 5
      %v10395 = vsel %vm5314, %v10393, %v10394
      %v10396 = vrot.slane %v10234, 5
      %v10397 = vrot.slane %v10396, 4
      %v10398 = vrot.slane %v9205, 5
      %v10399 = vsel %vm5314, %v10397, %v10398
      %v10400 = vrot.slane %v10398, 4
      %v10401 = vrot.slane %v9206, 5
      %v10402 = vsel %vm5314, %v10400, %v10401
      %v10403 = vrot.slane %v10235, 5
      %v10404 = vrot.slane %v10403, 4
      %v10405 = vrot.slane %v9208, 5
      %v10406 = vsel %vm5314, %v10404, %v10405
      %v10407 = vrot.slane %v10405, 4
      %v10408 = vrot.slane %v9209, 5
      %v10409 = vsel %vm5314, %v10407, %v10408
      %v10410 = vrot.slane %v10236, 5
      %v10411 = vrot.slane %v10410, 4
      %v10412 = vrot.slane %v9211, 5
      %v10413 = vsel %vm5314, %v10411, %v10412
      %v10414 = vrot.slane %v10412, 4
      %v10415 = vrot.slane %v9212, 5
      %v10416 = vsel %vm5314, %v10414, %v10415
      %v10417 = vrot.slane %v10237, 5
      %v10418 = vrot.slane %v10417, 4
      %v10419 = vrot.slane %v9214, 5
      %v10420 = vsel %vm5314, %v10418, %v10419
      %v10421 = vrot.slane %v10419, 4
      %v10422 = vrot.slane %v9215, 5
      %v10423 = vsel %vm5314, %v10421, %v10422
      %v10424 = vrot.slane %v10238, 5
      %v10425 = vrot.slane %v10424, 4
      %v10426 = vrot.slane %v9217, 5
      %v10427 = vsel %vm5314, %v10425, %v10426
      %v10428 = vrot.slane %v10426, 4
      %v10429 = vrot.slane %v9218, 5
      %v10430 = vsel %vm5314, %v10428, %v10429
      %s10463 = scalar_lea.vmem %s1, 16
      %v10464 = vld [vmem:[%s10463] sm:$0x3]
      %v10465 = vunpack.c.l.b16 %v10322
      %v10466 = vunpack.c.l.b16 %v10325
      %v10467 = vunpack.c.l.b16 %v10329
      %v10468 = vunpack.c.l.b16 %v10332
      %v10469 = vunpack.c.l.b16 %v10336
      %v10470 = vunpack.c.l.b16 %v10339
      %v10471 = vunpack.c.l.b16 %v10343
      %v10472 = vunpack.c.l.b16 %v10346
      %v10473 = vunpack.c.l.b16 %v10350
      %v10474 = vunpack.c.l.b16 %v10353
      %v10475 = vunpack.c.l.b16 %v10357
      %v10476 = vunpack.c.l.b16 %v10360
      %v10477 = vunpack.c.l.b16 %v10364
      %v10478 = vunpack.c.l.b16 %v10367
      %v10479 = vunpack.c.l.b16 %v10371
      %v10480 = vunpack.c.l.b16 %v10374
      %v10481 = vunpack.c.l.b16 %v10378
      %v10482 = vunpack.c.l.b16 %v10381
      %v10483 = vunpack.c.l.b16 %v10385
      %v10484 = vunpack.c.l.b16 %v10388
      %v10485 = vunpack.c.l.b16 %v10392
      %v10486 = vunpack.c.l.b16 %v10395
      %v10487 = vunpack.c.l.b16 %v10399
      %v10488 = vunpack.c.l.b16 %v10402
      %v10489 = vunpack.c.l.b16 %v10406
      %v10490 = vunpack.c.l.b16 %v10409
      %v10491 = vunpack.c.l.b16 %v10413
      %v10492 = vunpack.c.l.b16 %v10416
      %v10493 = vunpack.c.l.b16 %v10420
      %v10494 = vunpack.c.l.b16 %v10423
      %v10495 = vunpack.c.l.b16 %v10427
      %v10496 = vunpack.c.l.b16 %v10430
      %v10497 = vpack.c.b16 %v10466, %v10465
      %v10498 = vpack.c.b16 %v10468, %v10467
      %v10499 = vpack.c.b16 %v10470, %v10469
      %v10500 = vpack.c.b16 %v10472, %v10471
      %v10501 = vpack.c.b16 %v10474, %v10473
      %v10502 = vpack.c.b16 %v10476, %v10475
      %v10503 = vpack.c.b16 %v10478, %v10477
      %v10504 = vpack.c.b16 %v10480, %v10479
      %v10505 = vpack.c.b16 %v10482, %v10481
      %v10506 = vpack.c.b16 %v10484, %v10483
      %v10507 = vpack.c.b16 %v10486, %v10485
      %v10508 = vpack.c.b16 %v10488, %v10487
      %v10509 = vpack.c.b16 %v10490, %v10489
      %v10510 = vpack.c.b16 %v10492, %v10491
      %v10511 = vpack.c.b16 %v10494, %v10493
      %v10512 = vpack.c.b16 %v10496, %v10495
      %v10514 = vsel %vm481, %v10497, 0
      %v10517 = vsel %vm481, %v10498, 0
      %v10520 = vsel %vm481, %v10499, 0
      %v10523 = vsel %vm481, %v10500, 0
      %v10526 = vsel %vm481, %v10501, 0
      %v10529 = vsel %vm481, %v10502, 0
      %v10532 = vsel %vm481, %v10503, 0
      %v10535 = vsel %vm481, %v10504, 0
      %v10538 = vsel %vm481, %v10505, 0
      %v10541 = vsel %vm481, %v10506, 0
      %v10544 = vsel %vm481, %v10507, 0
      %v10547 = vsel %vm481, %v10508, 0
      %v10550 = vsel %vm481, %v10509, 0
      %v10553 = vsel %vm481, %v10510, 0
      %v10556 = vsel %vm481, %v10511, 0
      %v10559 = vsel %vm481, %v10512, 0
      %v10562 = vsel %vm530, %v10464, 0
      %10564 = vmatprep.subr.bf16.mxu0 0
      %10565 = vmatpush1.bf16.msra.mxu0 %v10562
      %10566 = vmatprep.subr.bf16.mxu0 0
      %10567 = vmatpush1.bf16.msra.mxu0 0
      %10568 = vmatprep.subr.bf16.mxu0 0
      %10569 = vmatpush1.bf16.msra.mxu0 0
      %10570 = vmatprep.subr.bf16.mxu0 0
      %10571 = vmatpush1.bf16.msra.mxu0 0
      %10572 = vmatprep.subr.bf16.mxu0 0
      %10573 = vmatpush1.bf16.msra.mxu0 0
      %10574 = vmatprep.subr.bf16.mxu0 0
      %10575 = vmatpush1.bf16.msra.mxu0 0
      %10576 = vmatprep.subr.bf16.mxu0 0
      %10577 = vmatpush1.bf16.msra.mxu0 0
      %10578 = vmatprep.subr.bf16.mxu0 0
      %10579 = vmatpush1.bf16.msra.mxu0 0
      %10580 = vmatprep.subr.bf16.mxu0 0
      %10581 = vmatpush1.bf16.msra.mxu0 0
      %10582 = vmatprep.subr.bf16.mxu0 0
      %10583 = vmatpush1.bf16.msra.mxu0 0
      %10584 = vmatprep.subr.bf16.mxu0 0
      %10585 = vmatpush1.bf16.msra.mxu0 0
      %10586 = vmatprep.subr.bf16.mxu0 0
      %10587 = vmatpush1.bf16.msra.mxu0 0
      %10588 = vmatprep.subr.bf16.mxu0 0
      %10589 = vmatpush1.bf16.msra.mxu0 0
      %10590 = vmatprep.subr.bf16.mxu0 0
      %10591 = vmatpush1.bf16.msra.mxu0 0
      %10592 = vmatprep.subr.bf16.mxu0 0
      %10593 = vmatpush1.bf16.msra.mxu0 0
      %10594 = vmatprep.subr.bf16.mxu0 0
      %10595 = vmatpush1.bf16.msra.mxu0 0
      %10596 = vmatprep.mubr.bf16.mxu0 0
      %10597 = vmatmul.mubr.bf16.gmra.mrb[0].mxu0 %v10514
      %v10598 = vpop.f32.mrb[0].mxu0
      %v10599 = vadd.f32 0.0, %v10598
      %v10600 = vpop.f32.mrb[0].mxu0
      %v10601 = vpop.f32.mrb[0].mxu0
      %v10602 = vadd.f32 0.0, %v10601
      %v10603 = vpop.f32.mrb[0].mxu0
      %10604 = vmatprep.mubr.bf16.mxu0 0
      %10605 = vmatmul.mubr.bf16.gmra.mrb[0].mxu0 %v10517
      %v10606 = vpop.f32.mrb[0].mxu0
      %v10607 = vadd.f32 0.0, %v10606
      %v10608 = vpop.f32.mrb[0].mxu0
      %v10609 = vpop.f32.mrb[0].mxu0
      %v10610 = vadd.f32 0.0, %v10609
      %v10611 = vpop.f32.mrb[0].mxu0
      %10612 = vmatprep.mubr.bf16.mxu0 0
      %10613 = vmatmul.mubr.bf16.gmra.mrb[0].mxu0 %v10520
      %v10614 = vpop.f32.mrb[0].mxu0
      %v10615 = vadd.f32 0.0, %v10614
      %v10616 = vpop.f32.mrb[0].mxu0
      %v10617 = vpop.f32.mrb[0].mxu0
      %v10618 = vadd.f32 0.0, %v10617
      %v10619 = vpop.f32.mrb[0].mxu0
      %10620 = vmatprep.mubr.bf16.mxu0 0
      %10621 = vmatmul.mubr.bf16.gmra.mrb[0].mxu0 %v10523
      %v10622 = vpop.f32.mrb[0].mxu0
      %v10623 = vadd.f32 0.0, %v10622
      %v10624 = vpop.f32.mrb[0].mxu0
      %v10625 = vpop.f32.mrb[0].mxu0
      %v10626 = vadd.f32 0.0, %v10625
      %v10627 = vpop.f32.mrb[0].mxu0
      %10628 = vmatprep.mubr.bf16.mxu0 0
      %10629 = vmatmul.mubr.bf16.gmra.mrb[0].mxu0 %v10526
      %v10630 = vpop.f32.mrb[0].mxu0
      %v10631 = vadd.f32 0.0, %v10630
      %v10632 = vpop.f32.mrb[0].mxu0
      %v10633 = vpop.f32.mrb[0].mxu0
      %v10634 = vadd.f32 0.0, %v10633
      %v10635 = vpop.f32.mrb[0].mxu0
      %10636 = vmatprep.mubr.bf16.mxu0 0
      %10637 = vmatmul.mubr.bf16.gmra.mrb[0].mxu0 %v10529
      %v10638 = vpop.f32.mrb[0].mxu0
      %v10639 = vadd.f32 0.0, %v10638
      %v10640 = vpop.f32.mrb[0].mxu0
      %v10641 = vpop.f32.mrb[0].mxu0
      %v10642 = vadd.f32 0.0, %v10641
      %v10643 = vpop.f32.mrb[0].mxu0
      %10644 = vmatprep.mubr.bf16.mxu0 0
      %10645 = vmatmul.mubr.bf16.gmra.mrb[0].mxu0 %v10532
      %v10646 = vpop.f32.mrb[0].mxu0
      %v10647 = vadd.f32 0.0, %v10646
      %v10648 = vpop.f32.mrb[0].mxu0
      %v10649 = vpop.f32.mrb[0].mxu0
      %v10650 = vadd.f32 0.0, %v10649
      %v10651 = vpop.f32.mrb[0].mxu0
      %10652 = vmatprep.mubr.bf16.mxu0 0
      %10653 = vmatmul.mubr.bf16.gmra.mrb[0].mxu0 %v10535
      %v10654 = vpop.f32.mrb[0].mxu0
      %v10655 = vadd.f32 0.0, %v10654
      %v10656 = vpop.f32.mrb[0].mxu0
      %v10657 = vpop.f32.mrb[0].mxu0
      %v10658 = vadd.f32 0.0, %v10657
      %v10659 = vpop.f32.mrb[0].mxu0
      %10660 = vmatprep.mubr.bf16.mxu0 0
      %10661 = vmatmul.mubr.bf16.gmra.mrb[0].mxu0 %v10538
      %v10662 = vpop.f32.mrb[0].mxu0
      %v10663 = vadd.f32 0.0, %v10662
      %v10664 = vpop.f32.mrb[0].mxu0
      %v10665 = vpop.f32.mrb[0].mxu0
      %v10666 = vadd.f32 0.0, %v10665
      %v10667 = vpop.f32.mrb[0].mxu0
      %10668 = vmatprep.mubr.bf16.mxu0 0
      %10669 = vmatmul.mubr.bf16.gmra.mrb[0].mxu0 %v10541
      %v10670 = vpop.f32.mrb[0].mxu0
      %v10671 = vadd.f32 0.0, %v10670
      %v10672 = vpop.f32.mrb[0].mxu0
      %v10673 = vpop.f32.mrb[0].mxu0
      %v10674 = vadd.f32 0.0, %v10673
      %v10675 = vpop.f32.mrb[0].mxu0
      %10676 = vmatprep.mubr.bf16.mxu0 0
      %10677 = vmatmul.mubr.bf16.gmra.mrb[0].mxu0 %v10544
      %v10678 = vpop.f32.mrb[0].mxu0
      %v10679 = vadd.f32 0.0, %v10678
      %v10680 = vpop.f32.mrb[0].mxu0
      %v10681 = vpop.f32.mrb[0].mxu0
      %v10682 = vadd.f32 0.0, %v10681
      %v10683 = vpop.f32.mrb[0].mxu0
      %10684 = vmatprep.mubr.bf16.mxu0 0
      %10685 = vmatmul.mubr.bf16.gmra.mrb[0].mxu0 %v10547
      %v10686 = vpop.f32.mrb[0].mxu0
      %v10687 = vadd.f32 0.0, %v10686
      %v10688 = vpop.f32.mrb[0].mxu0
      %v10689 = vpop.f32.mrb[0].mxu0
      %v10690 = vadd.f32 0.0, %v10689
      %v10691 = vpop.f32.mrb[0].mxu0
      %10692 = vmatprep.mubr.bf16.mxu0 0
      %10693 = vmatmul.mubr.bf16.gmra.mrb[0].mxu0 %v10550
      %v10694 = vpop.f32.mrb[0].mxu0
      %v10695 = vadd.f32 0.0, %v10694
      %v10696 = vpop.f32.mrb[0].mxu0
      %v10697 = vpop.f32.mrb[0].mxu0
      %v10698 = vadd.f32 0.0, %v10697
      %v10699 = vpop.f32.mrb[0].mxu0
      %10700 = vmatprep.mubr.bf16.mxu0 0
      %10701 = vmatmul.mubr.bf16.gmra.mrb[0].mxu0 %v10553
      %v10702 = vpop.f32.mrb[0].mxu0
      %v10703 = vadd.f32 0.0, %v10702
      %v10704 = vpop.f32.mrb[0].mxu0
      %v10705 = vpop.f32.mrb[0].mxu0
      %v10706 = vadd.f32 0.0, %v10705
      %v10707 = vpop.f32.mrb[0].mxu0
      %10708 = vmatprep.mubr.bf16.mxu0 0
      %10709 = vmatmul.mubr.bf16.gmra.mrb[0].mxu0 %v10556
      %v10710 = vpop.f32.mrb[0].mxu0
      %v10711 = vadd.f32 0.0, %v10710
      %v10712 = vpop.f32.mrb[0].mxu0
      %v10713 = vpop.f32.mrb[0].mxu0
      %v10714 = vadd.f32 0.0, %v10713
      %v10715 = vpop.f32.mrb[0].mxu0
      %10716 = vmatprep.mubr.bf16.mxu0 0
      %10717 = vmatmul.mubr.bf16.gmra.mrb[0].mxu0 %v10559
      %v10718 = vpop.f32.mrb[0].mxu0
      %v10719 = vadd.f32 0.0, %v10718
      %v10720 = vpop.f32.mrb[0].mxu0
      %v10721 = vpop.f32.mrb[0].mxu0
      %v10722 = vadd.f32 0.0, %v10721
      %v10723 = vpop.f32.mrb[0].mxu0
      %10724 = vdwg.mxu0
      %v10725 = vadd.f32 %v10191, %v10599
      %v10726 = vadd.f32 %v10192, %v10602
      %v10727 = vadd.f32 %v10193, %v10607
      %v10728 = vadd.f32 %v10194, %v10610
      %v10729 = vadd.f32 %v10195, %v10615
      %v10730 = vadd.f32 %v10196, %v10618
      %v10731 = vadd.f32 %v10197, %v10623
      %v10732 = vadd.f32 %v10198, %v10626
      %v10733 = vadd.f32 %v10199, %v10631
      %v10734 = vadd.f32 %v10200, %v10634
      %v10735 = vadd.f32 %v10201, %v10639
      %v10736 = vadd.f32 %v10202, %v10642
      %v10737 = vadd.f32 %v10203, %v10647
      %v10738 = vadd.f32 %v10204, %v10650
      %v10739 = vadd.f32 %v10205, %v10655
      %v10740 = vadd.f32 %v10206, %v10658
      %v10741 = vadd.f32 %v10207, %v10663
      %v10742 = vadd.f32 %v10208, %v10666
      %v10743 = vadd.f32 %v10209, %v10671
      %v10744 = vadd.f32 %v10210, %v10674
      %v10745 = vadd.f32 %v10211, %v10679
      %v10746 = vadd.f32 %v10212, %v10682
      %v10747 = vadd.f32 %v10213, %v10687
      %v10748 = vadd.f32 %v10214, %v10690
      %v10749 = vadd.f32 %v10215, %v10695
      %v10750 = vadd.f32 %v10216, %v10698
      %v10751 = vadd.f32 %v10217, %v10703
      %v10752 = vadd.f32 %v10218, %v10706
      %v10753 = vadd.f32 %v10219, %v10711
      %v10754 = vadd.f32 %v10220, %v10714
      %v10755 = vadd.f32 %v10221, %v10719
      %v10756 = vadd.f32 %v10222, %v10722
      %v10757 = vpack.c.bf16 %v10240, %v10239
      %v10758 = vpack.c.bf16 %v10242, %v10241
      %v10759 = vpack.c.bf16 %v10244, %v10243
      %v10760 = vpack.c.bf16 %v10246, %v10245
      %v10761 = vpack.c.bf16 %v10248, %v10247
      %v10762 = vpack.c.bf16 %v10250, %v10249
      %v10763 = vpack.c.bf16 %v10252, %v10251
      %v10764 = vpack.c.bf16 %v10254, %v10253
      %v10765 = vpack.c.bf16 %v10256, %v10255
      %v10766 = vpack.c.bf16 %v10258, %v10257
      %v10767 = vpack.c.bf16 %v10260, %v10259
      %v10768 = vpack.c.bf16 %v10262, %v10261
      %v10769 = vpack.c.bf16 %v10264, %v10263
      %v10770 = vpack.c.bf16 %v10266, %v10265
      %v10771 = vpack.c.bf16 %v10268, %v10267
      %v10772 = vpack.c.bf16 %v10270, %v10269
      %s10773 = scalar_lea.vmem %s7, 32
      %v10774 = vld [vmem:[%s10773] sm:$0xf]
      %v10776 = vsel %vm727, %v10757, 0
      %v10779 = vsel %vm727, %v10758, 0
      %v10782 = vsel %vm727, %v10759, 0
      %v10785 = vsel %vm727, %v10760, 0
      %v10788 = vsel %vm727, %v10761, 0
      %v10791 = vsel %vm727, %v10762, 0
      %v10794 = vsel %vm727, %v10763, 0
      %v10797 = vsel %vm727, %v10764, 0
      %v10800 = vsel %vm727, %v10765, 0
      %v10803 = vsel %vm727, %v10766, 0
      %v10806 = vsel %vm727, %v10767, 0
      %v10809 = vsel %vm727, %v10768, 0
      %v10812 = vsel %vm727, %v10769, 0
      %v10815 = vsel %vm727, %v10770, 0
      %v10818 = vsel %vm727, %v10771, 0
      %v10821 = vsel %vm727, %v10772, 0
      %v10824 = vsel %vm981, %v10774, 0
      %10826 = vmatprep.subr.bf16.mxu0 0
      %10827 = vmatpush1.bf16.msra.mxu0 %v10824
      %10828 = vmatprep.subr.bf16.mxu0 0
      %10829 = vmatpush1.bf16.msra.mxu0 0
      %10830 = vmatprep.subr.bf16.mxu0 0
      %10831 = vmatpush1.bf16.msra.mxu0 0
      %10832 = vmatprep.subr.bf16.mxu0 0
      %10833 = vmatpush1.bf16.msra.mxu0 0
      %10834 = vmatprep.subr.bf16.mxu0 0
      %10835 = vmatpush1.bf16.msra.mxu0 0
      %10836 = vmatprep.subr.bf16.mxu0 0
      %10837 = vmatpush1.bf16.msra.mxu0 0
      %10838 = vmatprep.subr.bf16.mxu0 0
      %10839 = vmatpush1.bf16.msra.mxu0 0
      %10840 = vmatprep.subr.bf16.mxu0 0
      %10841 = vmatpush1.bf16.msra.mxu0 0
      %10842 = vmatprep.subr.bf16.mxu0 0
      %10843 = vmatpush1.bf16.msra.mxu0 0
      %10844 = vmatprep.subr.bf16.mxu0 0
      %10845 = vmatpush1.bf16.msra.mxu0 0
      %10846 = vmatprep.subr.bf16.mxu0 0
      %10847 = vmatpush1.bf16.msra.mxu0 0
      %10848 = vmatprep.subr.bf16.mxu0 0
      %10849 = vmatpush1.bf16.msra.mxu0 0
      %10850 = vmatprep.subr.bf16.mxu0 0
      %10851 = vmatpush1.bf16.msra.mxu0 0
      %10852 = vmatprep.subr.bf16.mxu0 0
      %10853 = vmatpush1.bf16.msra.mxu0 0
      %10854 = vmatprep.subr.bf16.mxu0 0
      %10855 = vmatpush1.bf16.msra.mxu0 0
      %10856 = vmatprep.subr.bf16.mxu0 0
      %10857 = vmatpush1.bf16.msra.mxu0 0
      %10858 = vmatprep.mubr.bf16.mxu0 0
      %10859 = vmatmul.mubr.bf16.gmra.mrb[0].mxu0 %v10776
      %v10860 = vpop.f32.mrb[0].mxu0
      %v10861 = vadd.f32 0.0, %v10860
      %v10862 = vpop.f32.mrb[0].mxu0
      %v10863 = vpop.f32.mrb[0].mxu0
      %v10864 = vadd.f32 0.0, %v10863
      %v10865 = vpop.f32.mrb[0].mxu0
      %10866 = vmatprep.mubr.bf16.mxu0 0
      %10867 = vmatmul.mubr.bf16.gmra.mrb[0].mxu0 %v10779
      %v10868 = vpop.f32.mrb[0].mxu0
      %v10869 = vadd.f32 0.0, %v10868
      %v10870 = vpop.f32.mrb[0].mxu0
      %v10871 = vpop.f32.mrb[0].mxu0
      %v10872 = vadd.f32 0.0, %v10871
      %v10873 = vpop.f32.mrb[0].mxu0
      %10874 = vmatprep.mubr.bf16.mxu0 0
      %10875 = vmatmul.mubr.bf16.gmra.mrb[0].mxu0 %v10782
      %v10876 = vpop.f32.mrb[0].mxu0
      %v10877 = vadd.f32 0.0, %v10876
      %v10878 = vpop.f32.mrb[0].mxu0
      %v10879 = vpop.f32.mrb[0].mxu0
      %v10880 = vadd.f32 0.0, %v10879
      %v10881 = vpop.f32.mrb[0].mxu0
      %10882 = vmatprep.mubr.bf16.mxu0 0
      %10883 = vmatmul.mubr.bf16.gmra.mrb[0].mxu0 %v10785
      %v10884 = vpop.f32.mrb[0].mxu0
      %v10885 = vadd.f32 0.0, %v10884
      %v10886 = vpop.f32.mrb[0].mxu0
      %v10887 = vpop.f32.mrb[0].mxu0
      %v10888 = vadd.f32 0.0, %v10887
      %v10889 = vpop.f32.mrb[0].mxu0
      %10890 = vmatprep.mubr.bf16.mxu0 0
      %10891 = vmatmul.mubr.bf16.gmra.mrb[0].mxu0 %v10788
      %v10892 = vpop.f32.mrb[0].mxu0
      %v10893 = vadd.f32 0.0, %v10892
      %v10894 = vpop.f32.mrb[0].mxu0
      %v10895 = vpop.f32.mrb[0].mxu0
      %v10896 = vadd.f32 0.0, %v10895
      %v10897 = vpop.f32.mrb[0].mxu0
      %10898 = vmatprep.mubr.bf16.mxu0 0
      %10899 = vmatmul.mubr.bf16.gmra.mrb[0].mxu0 %v10791
      %v10900 = vpop.f32.mrb[0].mxu0
      %v10901 = vadd.f32 0.0, %v10900
      %v10902 = vpop.f32.mrb[0].mxu0
      %v10903 = vpop.f32.mrb[0].mxu0
      %v10904 = vadd.f32 0.0, %v10903
      %v10905 = vpop.f32.mrb[0].mxu0
      %10906 = vmatprep.mubr.bf16.mxu0 0
      %10907 = vmatmul.mubr.bf16.gmra.mrb[0].mxu0 %v10794
      %v10908 = vpop.f32.mrb[0].mxu0
      %v10909 = vadd.f32 0.0, %v10908
      %v10910 = vpop.f32.mrb[0].mxu0
      %v10911 = vpop.f32.mrb[0].mxu0
      %v10912 = vadd.f32 0.0, %v10911
      %v10913 = vpop.f32.mrb[0].mxu0
      %10914 = vmatprep.mubr.bf16.mxu0 0
      %10915 = vmatmul.mubr.bf16.gmra.mrb[0].mxu0 %v10797
      %v10916 = vpop.f32.mrb[0].mxu0
      %v10917 = vadd.f32 0.0, %v10916
      %v10918 = vpop.f32.mrb[0].mxu0
      %v10919 = vpop.f32.mrb[0].mxu0
      %v10920 = vadd.f32 0.0, %v10919
      %v10921 = vpop.f32.mrb[0].mxu0
      %10922 = vmatprep.mubr.bf16.mxu0 0
      %10923 = vmatmul.mubr.bf16.gmra.mrb[0].mxu0 %v10800
      %v10924 = vpop.f32.mrb[0].mxu0
      %v10925 = vadd.f32 0.0, %v10924
      %v10926 = vpop.f32.mrb[0].mxu0
      %v10927 = vpop.f32.mrb[0].mxu0
      %v10928 = vadd.f32 0.0, %v10927
      %v10929 = vpop.f32.mrb[0].mxu0
      %10930 = vmatprep.mubr.bf16.mxu0 0
      %10931 = vmatmul.mubr.bf16.gmra.mrb[0].mxu0 %v10803
      %v10932 = vpop.f32.mrb[0].mxu0
      %v10933 = vadd.f32 0.0, %v10932
      %v10934 = vpop.f32.mrb[0].mxu0
      %v10935 = vpop.f32.mrb[0].mxu0
      %v10936 = vadd.f32 0.0, %v10935
      %v10937 = vpop.f32.mrb[0].mxu0
      %10938 = vmatprep.mubr.bf16.mxu0 0
      %10939 = vmatmul.mubr.bf16.gmra.mrb[0].mxu0 %v10806
      %v10940 = vpop.f32.mrb[0].mxu0
      %v10941 = vadd.f32 0.0, %v10940
      %v10942 = vpop.f32.mrb[0].mxu0
      %v10943 = vpop.f32.mrb[0].mxu0
      %v10944 = vadd.f32 0.0, %v10943
      %v10945 = vpop.f32.mrb[0].mxu0
      %10946 = vmatprep.mubr.bf16.mxu0 0
      %10947 = vmatmul.mubr.bf16.gmra.mrb[0].mxu0 %v10809
      %v10948 = vpop.f32.mrb[0].mxu0
      %v10949 = vadd.f32 0.0, %v10948
      %v10950 = vpop.f32.mrb[0].mxu0
      %v10951 = vpop.f32.mrb[0].mxu0
      %v10952 = vadd.f32 0.0, %v10951
      %v10953 = vpop.f32.mrb[0].mxu0
      %10954 = vmatprep.mubr.bf16.mxu0 0
      %10955 = vmatmul.mubr.bf16.gmra.mrb[0].mxu0 %v10812
      %v10956 = vpop.f32.mrb[0].mxu0
      %v10957 = vadd.f32 0.0, %v10956
      %v10958 = vpop.f32.mrb[0].mxu0
      %v10959 = vpop.f32.mrb[0].mxu0
      %v10960 = vadd.f32 0.0, %v10959
      %v10961 = vpop.f32.mrb[0].mxu0
      %10962 = vmatprep.mubr.bf16.mxu0 0
      %10963 = vmatmul.mubr.bf16.gmra.mrb[0].mxu0 %v10815
      %v10964 = vpop.f32.mrb[0].mxu0
      %v10965 = vadd.f32 0.0, %v10964
      %v10966 = vpop.f32.mrb[0].mxu0
      %v10967 = vpop.f32.mrb[0].mxu0
      %v10968 = vadd.f32 0.0, %v10967
      %v10969 = vpop.f32.mrb[0].mxu0
      %10970 = vmatprep.mubr.bf16.mxu0 0
      %10971 = vmatmul.mubr.bf16.gmra.mrb[0].mxu0 %v10818
      %v10972 = vpop.f32.mrb[0].mxu0
      %v10973 = vadd.f32 0.0, %v10972
      %v10974 = vpop.f32.mrb[0].mxu0
      %v10975 = vpop.f32.mrb[0].mxu0
      %v10976 = vadd.f32 0.0, %v10975
      %v10977 = vpop.f32.mrb[0].mxu0
      %10978 = vmatprep.mubr.bf16.mxu0 0
      %10979 = vmatmul.mubr.bf16.gmra.mrb[0].mxu0 %v10821
      %v10980 = vpop.f32.mrb[0].mxu0
      %v10981 = vadd.f32 0.0, %v10980
      %v10982 = vpop.f32.mrb[0].mxu0
      %v10983 = vpop.f32.mrb[0].mxu0
      %v10984 = vadd.f32 0.0, %v10983
      %v10985 = vpop.f32.mrb[0].mxu0
      %10986 = vdwg.mxu0
      %v10987 = vadd.f32 %v10725, %v10861
      %v10988 = vadd.f32 %v10726, %v10864
      %v10989 = vadd.f32 %v10727, %v10869
      %v10990 = vadd.f32 %v10728, %v10872
      %v10991 = vadd.f32 %v10729, %v10877
      %v10992 = vadd.f32 %v10730, %v10880
      %v10993 = vadd.f32 %v10731, %v10885
      %v10994 = vadd.f32 %v10732, %v10888
      %v10995 = vadd.f32 %v10733, %v10893
      %v10996 = vadd.f32 %v10734, %v10896
      %v10997 = vadd.f32 %v10735, %v10901
      %v10998 = vadd.f32 %v10736, %v10904
      %v10999 = vadd.f32 %v10737, %v10909
      %v11000 = vadd.f32 %v10738, %v10912
      %v11001 = vadd.f32 %v10739, %v10917
      %v11002 = vadd.f32 %v10740, %v10920
      %v11003 = vadd.f32 %v10741, %v10925
      %v11004 = vadd.f32 %v10742, %v10928
      %v11005 = vadd.f32 %v10743, %v10933
      %v11006 = vadd.f32 %v10744, %v10936
      %v11007 = vadd.f32 %v10745, %v10941
      %v11008 = vadd.f32 %v10746, %v10944
      %v11009 = vadd.f32 %v10747, %v10949
      %v11010 = vadd.f32 %v10748, %v10952
      %v11011 = vadd.f32 %v10749, %v10957
      %v11012 = vadd.f32 %v10750, %v10960
      %v11013 = vadd.f32 %v10751, %v10965
      %v11014 = vadd.f32 %v10752, %v10968
      %v11015 = vadd.f32 %v10753, %v10973
      %v11016 = vadd.f32 %v10754, %v10976
      %v11017 = vadd.f32 %v10755, %v10981
      %v11018 = vadd.f32 %v10756, %v10984
      %v11019 = vld [vmem:[%s2] sm:$0x1]
      %v11020 = vld [vmem:[%s8] sm:$0x1]
      %v11021 = vadd.f32 %v11019, %v11020
      %v11023 = vlaneseq
      %v11024 = vshrl.u32 %v11023, 7
      %v11025 = vsub.s32 0, %v11024
      %v11026 = vrot.slane %v11021, %v11025
      %v11028 = vadd.f32 %v10987, %v11026
      %v11029 = vadd.f32 %v10988, %v11026
      %v11030 = vadd.f32 %v10989, %v11026
      %v11031 = vadd.f32 %v10990, %v11026
      %v11032 = vadd.f32 %v10991, %v11026
      %v11033 = vadd.f32 %v10992, %v11026
      %v11034 = vadd.f32 %v10993, %v11026
      %v11035 = vadd.f32 %v10994, %v11026
      %v11036 = vadd.f32 %v10995, %v11026
      %v11037 = vadd.f32 %v10996, %v11026
      %v11038 = vadd.f32 %v10997, %v11026
      %v11039 = vadd.f32 %v10998, %v11026
      %v11040 = vadd.f32 %v10999, %v11026
      %v11041 = vadd.f32 %v11000, %v11026
      %v11042 = vadd.f32 %v11001, %v11026
      %v11043 = vadd.f32 %v11002, %v11026
      %v11044 = vadd.f32 %v11003, %v11026
      %v11045 = vadd.f32 %v11004, %v11026
      %v11046 = vadd.f32 %v11005, %v11026
      %v11047 = vadd.f32 %v11006, %v11026
      %v11048 = vadd.f32 %v11007, %v11026
      %v11049 = vadd.f32 %v11008, %v11026
      %v11050 = vadd.f32 %v11009, %v11026
      %v11051 = vadd.f32 %v11010, %v11026
      %v11052 = vadd.f32 %v11011, %v11026
      %v11053 = vadd.f32 %v11012, %v11026
      %v11054 = vadd.f32 %v11013, %v11026
      %v11055 = vadd.f32 %v11014, %v11026
      %v11056 = vadd.f32 %v11015, %v11026
      %v11057 = vadd.f32 %v11016, %v11026
      %v11058 = vadd.f32 %v11017, %v11026
      %v11059 = vadd.f32 %v11018, %v11026
      %v11060 = vmax.f32 %v11028, 0.0
      %v11061 = vmax.f32 %v11029, 0.0
      %v11062 = vmax.f32 %v11030, 0.0
      %v11063 = vmax.f32 %v11031, 0.0
      %v11064 = vmax.f32 %v11032, 0.0
      %v11065 = vmax.f32 %v11033, 0.0
      %v11066 = vmax.f32 %v11034, 0.0
      %v11067 = vmax.f32 %v11035, 0.0
      %v11068 = vmax.f32 %v11036, 0.0
      %v11069 = vmax.f32 %v11037, 0.0
      %v11070 = vmax.f32 %v11038, 0.0
      %v11071 = vmax.f32 %v11039, 0.0
      %v11072 = vmax.f32 %v11040, 0.0
      %v11073 = vmax.f32 %v11041, 0.0
      %v11074 = vmax.f32 %v11042, 0.0
      %v11075 = vmax.f32 %v11043, 0.0
      %v11076 = vmax.f32 %v11044, 0.0
      %v11077 = vmax.f32 %v11045, 0.0
      %v11078 = vmax.f32 %v11046, 0.0
      %v11079 = vmax.f32 %v11047, 0.0
      %v11080 = vmax.f32 %v11048, 0.0
      %v11081 = vmax.f32 %v11049, 0.0
      %v11082 = vmax.f32 %v11050, 0.0
      %v11083 = vmax.f32 %v11051, 0.0
      %v11084 = vmax.f32 %v11052, 0.0
      %v11085 = vmax.f32 %v11053, 0.0
      %v11086 = vmax.f32 %v11054, 0.0
      %v11087 = vmax.f32 %v11055, 0.0
      %v11088 = vmax.f32 %v11056, 0.0
      %v11089 = vmax.f32 %v11057, 0.0
      %v11090 = vmax.f32 %v11058, 0.0
      %v11091 = vmax.f32 %v11059, 0.0
      %v11092 = vunpack.c.l.bf16 %v361
      %v11093 = vunpack.c.l.bf16 %v362
      %v11094 = vunpack.c.l.bf16 %v363
      %v11095 = vunpack.c.l.bf16 %v364
      %v11096 = vunpack.c.l.bf16 %v365
      %v11097 = vunpack.c.l.bf16 %v366
      %v11098 = vunpack.c.l.bf16 %v367
      %v11099 = vunpack.c.l.bf16 %v368
      %v11100 = vunpack.c.l.bf16 %v369
      %v11101 = vunpack.c.l.bf16 %v370
      %v11102 = vunpack.c.l.bf16 %v371
      %v11103 = vunpack.c.l.bf16 %v372
      %v11104 = vunpack.c.l.bf16 %v373
      %v11105 = vunpack.c.l.bf16 %v374
      %v11106 = vunpack.c.l.bf16 %v375
      %v11107 = vunpack.c.l.bf16 %v376
      %v11108 = vunpack.c.l.bf16 %v377
      %v11109 = vunpack.c.l.bf16 %v378
      %v11110 = vunpack.c.l.bf16 %v379
      %v11111 = vunpack.c.l.bf16 %v380
      %v11112 = vunpack.c.l.bf16 %v381
      %v11113 = vunpack.c.l.bf16 %v382
      %v11114 = vunpack.c.l.bf16 %v383
      %v11115 = vunpack.c.l.bf16 %v384
      %v11116 = vunpack.c.l.bf16 %v385
      %v11117 = vunpack.c.l.bf16 %v386
      %v11118 = vunpack.c.l.bf16 %v387
      %v11119 = vunpack.c.l.bf16 %v388
      %v11120 = vunpack.c.l.bf16 %v389
      %v11121 = vunpack.c.l.bf16 %v390
      %v11122 = vunpack.c.l.bf16 %v391
      %v11123 = vunpack.c.l.bf16 %v392
      %v11124 = vunpack.c.l.bf16 %v4257
      %v11125 = vunpack.c.l.bf16 %v4267
      %v11126 = vunpack.c.l.bf16 %v4281
      %v11127 = vunpack.c.l.bf16 %v4291
      %v11128 = vunpack.c.l.bf16 %v4305
      %v11129 = vunpack.c.l.bf16 %v4315
      %v11130 = vunpack.c.l.bf16 %v4329
      %v11131 = vunpack.c.l.bf16 %v4339
      %v11132 = vunpack.c.l.bf16 %v4353
      %v11133 = vunpack.c.l.bf16 %v4363
      %v11134 = vunpack.c.l.bf16 %v4377
      %v11135 = vunpack.c.l.bf16 %v4387
      %v11136 = vunpack.c.l.bf16 %v4401
      %v11137 = vunpack.c.l.bf16 %v4411
      %v11138 = vunpack.c.l.bf16 %v4425
      %v11139 = vunpack.c.l.bf16 %v4435
      %v11140 = vunpack.c.l.bf16 %v4449
      %v11141 = vunpack.c.l.bf16 %v4459
      %v11142 = vunpack.c.l.bf16 %v4473
      %v11143 = vunpack.c.l.bf16 %v4483
      %v11144 = vunpack.c.l.bf16 %v4497
      %v11145 = vunpack.c.l.bf16 %v4507
      %v11146 = vunpack.c.l.bf16 %v4521
      %v11147 = vunpack.c.l.bf16 %v4531
      %v11148 = vunpack.c.l.bf16 %v4545
      %v11149 = vunpack.c.l.bf16 %v4555
      %v11150 = vunpack.c.l.bf16 %v4569
      %v11151 = vunpack.c.l.bf16 %v4579
      %v11152 = vunpack.c.l.bf16 %v4593
      %v11153 = vunpack.c.l.bf16 %v4603
      %v11154 = vunpack.c.l.bf16 %v4617
      %v11155 = vunpack.c.l.bf16 %v4627
      %v11156 = vmax.f32 %v11092, %v11124
      %v11157 = vmax.f32 %v11093, %v11125
      %v11158 = vmax.f32 %v11094, %v11126
      %v11159 = vmax.f32 %v11095, %v11127
      %v11160 = vmax.f32 %v11096, %v11128
      %v11161 = vmax.f32 %v11097, %v11129
      %v11162 = vmax.f32 %v11098, %v11130
      %v11163 = vmax.f32 %v11099, %v11131
      %v11164 = vmax.f32 %v11100, %v11132
      %v11165 = vmax.f32 %v11101, %v11133
      %v11166 = vmax.f32 %v11102, %v11134
      %v11167 = vmax.f32 %v11103, %v11135
      %v11168 = vmax.f32 %v11104, %v11136
      %v11169 = vmax.f32 %v11105, %v11137
      %v11170 = vmax.f32 %v11106, %v11138
      %v11171 = vmax.f32 %v11107, %v11139
      %v11172 = vmax.f32 %v11108, %v11140
      %v11173 = vmax.f32 %v11109, %v11141
      %v11174 = vmax.f32 %v11110, %v11142
      %v11175 = vmax.f32 %v11111, %v11143
      %v11176 = vmax.f32 %v11112, %v11144
      %v11177 = vmax.f32 %v11113, %v11145
      %v11178 = vmax.f32 %v11114, %v11146
      %v11179 = vmax.f32 %v11115, %v11147
      %v11180 = vmax.f32 %v11116, %v11148
      %v11181 = vmax.f32 %v11117, %v11149
      %v11182 = vmax.f32 %v11118, %v11150
      %v11183 = vmax.f32 %v11119, %v11151
      %v11184 = vmax.f32 %v11120, %v11152
      %v11185 = vmax.f32 %v11121, %v11153
      %v11186 = vmax.f32 %v11122, %v11154
      %v11187 = vmax.f32 %v11123, %v11155
      %v11188 = vunpack.c.l.bf16 %v5318
      %v11189 = vunpack.c.l.bf16 %v5321
      %v11190 = vunpack.c.l.bf16 %v5325
      %v11191 = vunpack.c.l.bf16 %v5328
      %v11192 = vunpack.c.l.bf16 %v5332
      %v11193 = vunpack.c.l.bf16 %v5335
      %v11194 = vunpack.c.l.bf16 %v5339
      %v11195 = vunpack.c.l.bf16 %v5342
      %v11196 = vunpack.c.l.bf16 %v5346
      %v11197 = vunpack.c.l.bf16 %v5349
      %v11198 = vunpack.c.l.bf16 %v5353
      %v11199 = vunpack.c.l.bf16 %v5356
      %v11200 = vunpack.c.l.bf16 %v5360
      %v11201 = vunpack.c.l.bf16 %v5363
      %v11202 = vunpack.c.l.bf16 %v5367
      %v11203 = vunpack.c.l.bf16 %v5370
      %v11204 = vunpack.c.l.bf16 %v5374
      %v11205 = vunpack.c.l.bf16 %v5377
      %v11206 = vunpack.c.l.bf16 %v5381
      %v11207 = vunpack.c.l.bf16 %v5384
      %v11208 = vunpack.c.l.bf16 %v5388
      %v11209 = vunpack.c.l.bf16 %v5391
      %v11210 = vunpack.c.l.bf16 %v5395
      %v11211 = vunpack.c.l.bf16 %v5398
      %v11212 = vunpack.c.l.bf16 %v5402
      %v11213 = vunpack.c.l.bf16 %v5405
      %v11214 = vunpack.c.l.bf16 %v5409
      %v11215 = vunpack.c.l.bf16 %v5412
      %v11216 = vunpack.c.l.bf16 %v5416
      %v11217 = vunpack.c.l.bf16 %v5419
      %v11218 = vunpack.c.l.bf16 %v5423
      %v11219 = vunpack.c.l.bf16 %v5426
      %v11220 = vmax.f32 %v11156, %v11188
      %v11221 = vmax.f32 %v11157, %v11189
      %v11222 = vmax.f32 %v11158, %v11190
      %v11223 = vmax.f32 %v11159, %v11191
      %v11224 = vmax.f32 %v11160, %v11192
      %v11225 = vmax.f32 %v11161, %v11193
      %v11226 = vmax.f32 %v11162, %v11194
      %v11227 = vmax.f32 %v11163, %v11195
      %v11228 = vmax.f32 %v11164, %v11196
      %v11229 = vmax.f32 %v11165, %v11197
      %v11230 = vmax.f32 %v11166, %v11198
      %v11231 = vmax.f32 %v11167, %v11199
      %v11232 = vmax.f32 %v11168, %v11200
      %v11233 = vmax.f32 %v11169, %v11201
      %v11234 = vmax.f32 %v11170, %v11202
      %v11235 = vmax.f32 %v11171, %v11203
      %v11236 = vmax.f32 %v11172, %v11204
      %v11237 = vmax.f32 %v11173, %v11205
      %v11238 = vmax.f32 %v11174, %v11206
      %v11239 = vmax.f32 %v11175, %v11207
      %v11240 = vmax.f32 %v11176, %v11208
      %v11241 = vmax.f32 %v11177, %v11209
      %v11242 = vmax.f32 %v11178, %v11210
      %v11243 = vmax.f32 %v11179, %v11211
      %v11244 = vmax.f32 %v11180, %v11212
      %v11245 = vmax.f32 %v11181, %v11213
      %v11246 = vmax.f32 %v11182, %v11214
      %v11247 = vmax.f32 %v11183, %v11215
      %v11248 = vmax.f32 %v11184, %v11216
      %v11249 = vmax.f32 %v11185, %v11217
      %v11250 = vmax.f32 %v11186, %v11218
      %v11251 = vmax.f32 %v11187, %v11219
      %v11252 = vunpack.c.l.bf16 %v6016
      %v11253 = vunpack.c.l.bf16 %v6017
      %v11254 = vunpack.c.l.bf16 %v6018
      %v11255 = vunpack.c.l.bf16 %v6019
      %v11256 = vunpack.c.l.bf16 %v6020
      %v11257 = vunpack.c.l.bf16 %v6021
      %v11258 = vunpack.c.l.bf16 %v6022
      %v11259 = vunpack.c.l.bf16 %v6023
      %v11260 = vunpack.c.l.bf16 %v6024
      %v11261 = vunpack.c.l.bf16 %v6025
      %v11262 = vunpack.c.l.bf16 %v6026
      %v11263 = vunpack.c.l.bf16 %v6027
      %v11264 = vunpack.c.l.bf16 %v6028
      %v11265 = vunpack.c.l.bf16 %v6029
      %v11266 = vunpack.c.l.bf16 %v6030
      %v11267 = vunpack.c.l.bf16 %v6031
      %v11268 = vunpack.c.l.bf16 %v6032
      %v11269 = vunpack.c.l.bf16 %v6033
      %v11270 = vunpack.c.l.bf16 %v6034
      %v11271 = vunpack.c.l.bf16 %v6035
      %v11272 = vunpack.c.l.bf16 %v6036
      %v11273 = vunpack.c.l.bf16 %v6037
      %v11274 = vunpack.c.l.bf16 %v6038
      %v11275 = vunpack.c.l.bf16 %v6039
      %v11276 = vunpack.c.l.bf16 %v6040
      %v11277 = vunpack.c.l.bf16 %v6041
      %v11278 = vunpack.c.l.bf16 %v6042
      %v11279 = vunpack.c.l.bf16 %v6043
      %v11280 = vunpack.c.l.bf16 %v6044
      %v11281 = vunpack.c.l.bf16 %v6045
      %v11282 = vunpack.c.l.bf16 %v6046
      %v11283 = vunpack.c.l.bf16 %v6047
      %v11284 = vmax.f32 %v11220, %v11252
      %v11285 = vmax.f32 %v11221, %v11253
      %v11286 = vmax.f32 %v11222, %v11254
      %v11287 = vmax.f32 %v11223, %v11255
      %v11288 = vmax.f32 %v11224, %v11256
      %v11289 = vmax.f32 %v11225, %v11257
      %v11290 = vmax.f32 %v11226, %v11258
      %v11291 = vmax.f32 %v11227, %v11259
      %v11292 = vmax.f32 %v11228, %v11260
      %v11293 = vmax.f32 %v11229, %v11261
      %v11294 = vmax.f32 %v11230, %v11262
      %v11295 = vmax.f32 %v11231, %v11263
      %v11296 = vmax.f32 %v11232, %v11264
      %v11297 = vmax.f32 %v11233, %v11265
      %v11298 = vmax.f32 %v11234, %v11266
      %v11299 = vmax.f32 %v11235, %v11267
      %v11300 = vmax.f32 %v11236, %v11268
      %v11301 = vmax.f32 %v11237, %v11269
      %v11302 = vmax.f32 %v11238, %v11270
      %v11303 = vmax.f32 %v11239, %v11271
      %v11304 = vmax.f32 %v11240, %v11272
      %v11305 = vmax.f32 %v11241, %v11273
      %v11306 = vmax.f32 %v11242, %v11274
      %v11307 = vmax.f32 %v11243, %v11275
      %v11308 = vmax.f32 %v11244, %v11276
      %v11309 = vmax.f32 %v11245, %v11277
      %v11310 = vmax.f32 %v11246, %v11278
      %v11311 = vmax.f32 %v11247, %v11279
      %v11312 = vmax.f32 %v11248, %v11280
      %v11313 = vmax.f32 %v11249, %v11281
      %v11314 = vmax.f32 %v11250, %v11282
      %v11315 = vmax.f32 %v11251, %v11283
      %v11316 = vunpack.c.l.bf16 %v6762
      %v11317 = vunpack.c.l.bf16 %v6772
      %v11318 = vunpack.c.l.bf16 %v6786
      %v11319 = vunpack.c.l.bf16 %v6796
      %v11320 = vunpack.c.l.bf16 %v6810
      %v11321 = vunpack.c.l.bf16 %v6820
      %v11322 = vunpack.c.l.bf16 %v6834
      %v11323 = vunpack.c.l.bf16 %v6844
      %v11324 = vunpack.c.l.bf16 %v6858
      %v11325 = vunpack.c.l.bf16 %v6868
      %v11326 = vunpack.c.l.bf16 %v6882
      %v11327 = vunpack.c.l.bf16 %v6892
      %v11328 = vunpack.c.l.bf16 %v6906
      %v11329 = vunpack.c.l.bf16 %v6916
      %v11330 = vunpack.c.l.bf16 %v6930
      %v11331 = vunpack.c.l.bf16 %v6940
      %v11332 = vunpack.c.l.bf16 %v6954
      %v11333 = vunpack.c.l.bf16 %v6964
      %v11334 = vunpack.c.l.bf16 %v6978
      %v11335 = vunpack.c.l.bf16 %v6988
      %v11336 = vunpack.c.l.bf16 %v7002
      %v11337 = vunpack.c.l.bf16 %v7012
      %v11338 = vunpack.c.l.bf16 %v7026
      %v11339 = vunpack.c.l.bf16 %v7036
      %v11340 = vunpack.c.l.bf16 %v7050
      %v11341 = vunpack.c.l.bf16 %v7060
      %v11342 = vunpack.c.l.bf16 %v7074
      %v11343 = vunpack.c.l.bf16 %v7084
      %v11344 = vunpack.c.l.bf16 %v7098
      %v11345 = vunpack.c.l.bf16 %v7108
      %v11346 = vunpack.c.l.bf16 %v7122
      %v11347 = vunpack.c.l.bf16 %v7132
      %v11348 = vmax.f32 %v11284, %v11316
      %v11349 = vmax.f32 %v11285, %v11317
      %v11350 = vmax.f32 %v11286, %v11318
      %v11351 = vmax.f32 %v11287, %v11319
      %v11352 = vmax.f32 %v11288, %v11320
      %v11353 = vmax.f32 %v11289, %v11321
      %v11354 = vmax.f32 %v11290, %v11322
      %v11355 = vmax.f32 %v11291, %v11323
      %v11356 = vmax.f32 %v11292, %v11324
      %v11357 = vmax.f32 %v11293, %v11325
      %v11358 = vmax.f32 %v11294, %v11326
      %v11359 = vmax.f32 %v11295, %v11327
      %v11360 = vmax.f32 %v11296, %v11328
      %v11361 = vmax.f32 %v11297, %v11329
      %v11362 = vmax.f32 %v11298, %v11330
      %v11363 = vmax.f32 %v11299, %v11331
      %v11364 = vmax.f32 %v11300, %v11332
      %v11365 = vmax.f32 %v11301, %v11333
      %v11366 = vmax.f32 %v11302, %v11334
      %v11367 = vmax.f32 %v11303, %v11335
      %v11368 = vmax.f32 %v11304, %v11336
      %v11369 = vmax.f32 %v11305, %v11337
      %v11370 = vmax.f32 %v11306, %v11338
      %v11371 = vmax.f32 %v11307, %v11339
      %v11372 = vmax.f32 %v11308, %v11340
      %v11373 = vmax.f32 %v11309, %v11341
      %v11374 = vmax.f32 %v11310, %v11342
      %v11375 = vmax.f32 %v11311, %v11343
      %v11376 = vmax.f32 %v11312, %v11344
      %v11377 = vmax.f32 %v11313, %v11345
      %v11378 = vmax.f32 %v11314, %v11346
      %v11379 = vmax.f32 %v11315, %v11347
      %v11380 = vunpack.c.l.bf16 %v7820
      %v11381 = vunpack.c.l.bf16 %v7823
      %v11382 = vunpack.c.l.bf16 %v7827
      %v11383 = vunpack.c.l.bf16 %v7830
      %v11384 = vunpack.c.l.bf16 %v7834
      %v11385 = vunpack.c.l.bf16 %v7837
      %v11386 = vunpack.c.l.bf16 %v7841
      %v11387 = vunpack.c.l.bf16 %v7844
      %v11388 = vunpack.c.l.bf16 %v7848
      %v11389 = vunpack.c.l.bf16 %v7851
      %v11390 = vunpack.c.l.bf16 %v7855
      %v11391 = vunpack.c.l.bf16 %v7858
      %v11392 = vunpack.c.l.bf16 %v7862
      %v11393 = vunpack.c.l.bf16 %v7865
      %v11394 = vunpack.c.l.bf16 %v7869
      %v11395 = vunpack.c.l.bf16 %v7872
      %v11396 = vunpack.c.l.bf16 %v7876
      %v11397 = vunpack.c.l.bf16 %v7879
      %v11398 = vunpack.c.l.bf16 %v7883
      %v11399 = vunpack.c.l.bf16 %v7886
      %v11400 = vunpack.c.l.bf16 %v7890
      %v11401 = vunpack.c.l.bf16 %v7893
      %v11402 = vunpack.c.l.bf16 %v7897
      %v11403 = vunpack.c.l.bf16 %v7900
      %v11404 = vunpack.c.l.bf16 %v7904
      %v11405 = vunpack.c.l.bf16 %v7907
      %v11406 = vunpack.c.l.bf16 %v7911
      %v11407 = vunpack.c.l.bf16 %v7914
      %v11408 = vunpack.c.l.bf16 %v7918
      %v11409 = vunpack.c.l.bf16 %v7921
      %v11410 = vunpack.c.l.bf16 %v7925
      %v11411 = vunpack.c.l.bf16 %v7928
      %v11412 = vmax.f32 %v11348, %v11380
      %v11413 = vmax.f32 %v11349, %v11381
      %v11414 = vmax.f32 %v11350, %v11382
      %v11415 = vmax.f32 %v11351, %v11383
      %v11416 = vmax.f32 %v11352, %v11384
      %v11417 = vmax.f32 %v11353, %v11385
      %v11418 = vmax.f32 %v11354, %v11386
      %v11419 = vmax.f32 %v11355, %v11387
      %v11420 = vmax.f32 %v11356, %v11388
      %v11421 = vmax.f32 %v11357, %v11389
      %v11422 = vmax.f32 %v11358, %v11390
      %v11423 = vmax.f32 %v11359, %v11391
      %v11424 = vmax.f32 %v11360, %v11392
      %v11425 = vmax.f32 %v11361, %v11393
      %v11426 = vmax.f32 %v11362, %v11394
      %v11427 = vmax.f32 %v11363, %v11395
      %v11428 = vmax.f32 %v11364, %v11396
      %v11429 = vmax.f32 %v11365, %v11397
      %v11430 = vmax.f32 %v11366, %v11398
      %v11431 = vmax.f32 %v11367, %v11399
      %v11432 = vmax.f32 %v11368, %v11400
      %v11433 = vmax.f32 %v11369, %v11401
      %v11434 = vmax.f32 %v11370, %v11402
      %v11435 = vmax.f32 %v11371, %v11403
      %v11436 = vmax.f32 %v11372, %v11404
      %v11437 = vmax.f32 %v11373, %v11405
      %v11438 = vmax.f32 %v11374, %v11406
      %v11439 = vmax.f32 %v11375, %v11407
      %v11440 = vmax.f32 %v11376, %v11408
      %v11441 = vmax.f32 %v11377, %v11409
      %v11442 = vmax.f32 %v11378, %v11410
      %v11443 = vmax.f32 %v11379, %v11411
      %v11444 = vunpack.c.l.bf16 %v8518
      %v11445 = vunpack.c.l.bf16 %v8519
      %v11446 = vunpack.c.l.bf16 %v8520
      %v11447 = vunpack.c.l.bf16 %v8521
      %v11448 = vunpack.c.l.bf16 %v8522
      %v11449 = vunpack.c.l.bf16 %v8523
      %v11450 = vunpack.c.l.bf16 %v8524
      %v11451 = vunpack.c.l.bf16 %v8525
      %v11452 = vunpack.c.l.bf16 %v8526
      %v11453 = vunpack.c.l.bf16 %v8527
      %v11454 = vunpack.c.l.bf16 %v8528
      %v11455 = vunpack.c.l.bf16 %v8529
      %v11456 = vunpack.c.l.bf16 %v8530
      %v11457 = vunpack.c.l.bf16 %v8531
      %v11458 = vunpack.c.l.bf16 %v8532
      %v11459 = vunpack.c.l.bf16 %v8533
      %v11460 = vunpack.c.l.bf16 %v8534
      %v11461 = vunpack.c.l.bf16 %v8535
      %v11462 = vunpack.c.l.bf16 %v8536
      %v11463 = vunpack.c.l.bf16 %v8537
      %v11464 = vunpack.c.l.bf16 %v8538
      %v11465 = vunpack.c.l.bf16 %v8539
      %v11466 = vunpack.c.l.bf16 %v8540
      %v11467 = vunpack.c.l.bf16 %v8541
      %v11468 = vunpack.c.l.bf16 %v8542
      %v11469 = vunpack.c.l.bf16 %v8543
      %v11470 = vunpack.c.l.bf16 %v8544
      %v11471 = vunpack.c.l.bf16 %v8545
      %v11472 = vunpack.c.l.bf16 %v8546
      %v11473 = vunpack.c.l.bf16 %v8547
      %v11474 = vunpack.c.l.bf16 %v8548
      %v11475 = vunpack.c.l.bf16 %v8549
      %v11476 = vmax.f32 %v11412, %v11444
      %v11477 = vmax.f32 %v11413, %v11445
      %v11478 = vmax.f32 %v11414, %v11446
      %v11479 = vmax.f32 %v11415, %v11447
      %v11480 = vmax.f32 %v11416, %v11448
      %v11481 = vmax.f32 %v11417, %v11449
      %v11482 = vmax.f32 %v11418, %v11450
      %v11483 = vmax.f32 %v11419, %v11451
      %v11484 = vmax.f32 %v11420, %v11452
      %v11485 = vmax.f32 %v11421, %v11453
      %v11486 = vmax.f32 %v11422, %v11454
      %v11487 = vmax.f32 %v11423, %v11455
      %v11488 = vmax.f32 %v11424, %v11456
      %v11489 = vmax.f32 %v11425, %v11457
      %v11490 = vmax.f32 %v11426, %v11458
      %v11491 = vmax.f32 %v11427, %v11459
      %v11492 = vmax.f32 %v11428, %v11460
      %v11493 = vmax.f32 %v11429, %v11461
      %v11494 = vmax.f32 %v11430, %v11462
      %v11495 = vmax.f32 %v11431, %v11463
      %v11496 = vmax.f32 %v11432, %v11464
      %v11497 = vmax.f32 %v11433, %v11465
      %v11498 = vmax.f32 %v11434, %v11466
      %v11499 = vmax.f32 %v11435, %v11467
      %v11500 = vmax.f32 %v11436, %v11468
      %v11501 = vmax.f32 %v11437, %v11469
      %v11502 = vmax.f32 %v11438, %v11470
      %v11503 = vmax.f32 %v11439, %v11471
      %v11504 = vmax.f32 %v11440, %v11472
      %v11505 = vmax.f32 %v11441, %v11473
      %v11506 = vmax.f32 %v11442, %v11474
      %v11507 = vmax.f32 %v11443, %v11475
      %v11508 = vunpack.c.l.bf16 %v9264
      %v11509 = vunpack.c.l.bf16 %v9274
      %v11510 = vunpack.c.l.bf16 %v9288
      %v11511 = vunpack.c.l.bf16 %v9298
      %v11512 = vunpack.c.l.bf16 %v9312
      %v11513 = vunpack.c.l.bf16 %v9322
      %v11514 = vunpack.c.l.bf16 %v9336
      %v11515 = vunpack.c.l.bf16 %v9346
      %v11516 = vunpack.c.l.bf16 %v9360
      %v11517 = vunpack.c.l.bf16 %v9370
      %v11518 = vunpack.c.l.bf16 %v9384
      %v11519 = vunpack.c.l.bf16 %v9394
      %v11520 = vunpack.c.l.bf16 %v9408
      %v11521 = vunpack.c.l.bf16 %v9418
      %v11522 = vunpack.c.l.bf16 %v9432
      %v11523 = vunpack.c.l.bf16 %v9442
      %v11524 = vunpack.c.l.bf16 %v9456
      %v11525 = vunpack.c.l.bf16 %v9466
      %v11526 = vunpack.c.l.bf16 %v9480
      %v11527 = vunpack.c.l.bf16 %v9490
      %v11528 = vunpack.c.l.bf16 %v9504
      %v11529 = vunpack.c.l.bf16 %v9514
      %v11530 = vunpack.c.l.bf16 %v9528
      %v11531 = vunpack.c.l.bf16 %v9538
      %v11532 = vunpack.c.l.bf16 %v9552
      %v11533 = vunpack.c.l.bf16 %v9562
      %v11534 = vunpack.c.l.bf16 %v9576
      %v11535 = vunpack.c.l.bf16 %v9586
      %v11536 = vunpack.c.l.bf16 %v9600
      %v11537 = vunpack.c.l.bf16 %v9610
      %v11538 = vunpack.c.l.bf16 %v9624
      %v11539 = vunpack.c.l.bf16 %v9634
      %v11540 = vmax.f32 %v11476, %v11508
      %v11541 = vmax.f32 %v11477, %v11509
      %v11542 = vmax.f32 %v11478, %v11510
      %v11543 = vmax.f32 %v11479, %v11511
      %v11544 = vmax.f32 %v11480, %v11512
      %v11545 = vmax.f32 %v11481, %v11513
      %v11546 = vmax.f32 %v11482, %v11514
      %v11547 = vmax.f32 %v11483, %v11515
      %v11548 = vmax.f32 %v11484, %v11516
      %v11549 = vmax.f32 %v11485, %v11517
      %v11550 = vmax.f32 %v11486, %v11518
      %v11551 = vmax.f32 %v11487, %v11519
      %v11552 = vmax.f32 %v11488, %v11520
      %v11553 = vmax.f32 %v11489, %v11521
      %v11554 = vmax.f32 %v11490, %v11522
      %v11555 = vmax.f32 %v11491, %v11523
      %v11556 = vmax.f32 %v11492, %v11524
      %v11557 = vmax.f32 %v11493, %v11525
      %v11558 = vmax.f32 %v11494, %v11526
      %v11559 = vmax.f32 %v11495, %v11527
      %v11560 = vmax.f32 %v11496, %v11528
      %v11561 = vmax.f32 %v11497, %v11529
      %v11562 = vmax.f32 %v11498, %v11530
      %v11563 = vmax.f32 %v11499, %v11531
      %v11564 = vmax.f32 %v11500, %v11532
      %v11565 = vmax.f32 %v11501, %v11533
      %v11566 = vmax.f32 %v11502, %v11534
      %v11567 = vmax.f32 %v11503, %v11535
      %v11568 = vmax.f32 %v11504, %v11536
      %v11569 = vmax.f32 %v11505, %v11537
      %v11570 = vmax.f32 %v11506, %v11538
      %v11571 = vmax.f32 %v11507, %v11539
      %v11572 = vunpack.c.l.bf16 %v10322
      %v11573 = vunpack.c.l.bf16 %v10325
      %v11574 = vunpack.c.l.bf16 %v10329
      %v11575 = vunpack.c.l.bf16 %v10332
      %v11576 = vunpack.c.l.bf16 %v10336
      %v11577 = vunpack.c.l.bf16 %v10339
      %v11578 = vunpack.c.l.bf16 %v10343
      %v11579 = vunpack.c.l.bf16 %v10346
      %v11580 = vunpack.c.l.bf16 %v10350
      %v11581 = vunpack.c.l.bf16 %v10353
      %v11582 = vunpack.c.l.bf16 %v10357
      %v11583 = vunpack.c.l.bf16 %v10360
      %v11584 = vunpack.c.l.bf16 %v10364
      %v11585 = vunpack.c.l.bf16 %v10367
      %v11586 = vunpack.c.l.bf16 %v10371
      %v11587 = vunpack.c.l.bf16 %v10374
      %v11588 = vunpack.c.l.bf16 %v10378
      %v11589 = vunpack.c.l.bf16 %v10381
      %v11590 = vunpack.c.l.bf16 %v10385
      %v11591 = vunpack.c.l.bf16 %v10388
      %v11592 = vunpack.c.l.bf16 %v10392
      %v11593 = vunpack.c.l.bf16 %v10395
      %v11594 = vunpack.c.l.bf16 %v10399
      %v11595 = vunpack.c.l.bf16 %v10402
      %v11596 = vunpack.c.l.bf16 %v10406
      %v11597 = vunpack.c.l.bf16 %v10409
      %v11598 = vunpack.c.l.bf16 %v10413
      %v11599 = vunpack.c.l.bf16 %v10416
      %v11600 = vunpack.c.l.bf16 %v10420
      %v11601 = vunpack.c.l.bf16 %v10423
      %v11602 = vunpack.c.l.bf16 %v10427
      %v11603 = vunpack.c.l.bf16 %v10430
      %v11604 = vmax.f32 %v11540, %v11572
      %v11605 = vmax.f32 %v11541, %v11573
      %v11606 = vmax.f32 %v11542, %v11574
      %v11607 = vmax.f32 %v11543, %v11575
      %v11608 = vmax.f32 %v11544, %v11576
      %v11609 = vmax.f32 %v11545, %v11577
      %v11610 = vmax.f32 %v11546, %v11578
      %v11611 = vmax.f32 %v11547, %v11579
      %v11612 = vmax.f32 %v11548, %v11580
      %v11613 = vmax.f32 %v11549, %v11581
      %v11614 = vmax.f32 %v11550, %v11582
      %v11615 = vmax.f32 %v11551, %v11583
      %v11616 = vmax.f32 %v11552, %v11584
      %v11617 = vmax.f32 %v11553, %v11585
      %v11618 = vmax.f32 %v11554, %v11586
      %v11619 = vmax.f32 %v11555, %v11587
      %v11620 = vmax.f32 %v11556, %v11588
      %v11621 = vmax.f32 %v11557, %v11589
      %v11622 = vmax.f32 %v11558, %v11590
      %v11623 = vmax.f32 %v11559, %v11591
      %v11624 = vmax.f32 %v11560, %v11592
      %v11625 = vmax.f32 %v11561, %v11593
      %v11626 = vmax.f32 %v11562, %v11594
      %v11627 = vmax.f32 %v11563, %v11595
      %v11628 = vmax.f32 %v11564, %v11596
      %v11629 = vmax.f32 %v11565, %v11597
      %v11630 = vmax.f32 %v11566, %v11598
      %v11631 = vmax.f32 %v11567, %v11599
      %v11632 = vmax.f32 %v11568, %v11600
      %v11633 = vmax.f32 %v11569, %v11601
      %v11634 = vmax.f32 %v11570, %v11602
      %v11635 = vmax.f32 %v11571, %v11603
      %v11636 = vpack.c.bf16 %v11605, %v11604
      %v11637 = vpack.c.bf16 %v11607, %v11606
      %v11638 = vpack.c.bf16 %v11609, %v11608
      %v11639 = vpack.c.bf16 %v11611, %v11610
      %v11640 = vpack.c.bf16 %v11613, %v11612
      %v11641 = vpack.c.bf16 %v11615, %v11614
      %v11642 = vpack.c.bf16 %v11617, %v11616
      %v11643 = vpack.c.bf16 %v11619, %v11618
      %v11644 = vpack.c.bf16 %v11621, %v11620
      %v11645 = vpack.c.bf16 %v11623, %v11622
      %v11646 = vpack.c.bf16 %v11625, %v11624
      %v11647 = vpack.c.bf16 %v11627, %v11626
      %v11648 = vpack.c.bf16 %v11629, %v11628
      %v11649 = vpack.c.bf16 %v11631, %v11630
      %v11650 = vpack.c.bf16 %v11633, %v11632
      %v11651 = vpack.c.bf16 %v11635, %v11634
      %v11652 = vld [vmem:[%s9] sm:$0x3]
      %v11654 = vsel %vm481, %v11636, 0
      %v11657 = vsel %vm481, %v11637, 0
      %v11660 = vsel %vm481, %v11638, 0
      %v11663 = vsel %vm481, %v11639, 0
      %v11666 = vsel %vm481, %v11640, 0
      %v11669 = vsel %vm481, %v11641, 0
      %v11672 = vsel %vm481, %v11642, 0
      %v11675 = vsel %vm481, %v11643, 0
      %v11678 = vsel %vm481, %v11644, 0
      %v11681 = vsel %vm481, %v11645, 0
      %v11684 = vsel %vm481, %v11646, 0
      %v11687 = vsel %vm481, %v11647, 0
      %v11690 = vsel %vm481, %v11648, 0
      %v11693 = vsel %vm481, %v11649, 0
      %v11696 = vsel %vm481, %v11650, 0
      %v11699 = vsel %vm481, %v11651, 0
      %v11702 = vsel %vm530, %v11652, 0
      %11704 = vmatprep.subr.bf16.mxu0 0
      %11705 = vmatpush1.bf16.msra.mxu0 %v11702
      %11706 = vmatprep.subr.bf16.mxu0 0
      %11707 = vmatpush1.bf16.msra.mxu0 0
      %11708 = vmatprep.subr.bf16.mxu0 0
      %11709 = vmatpush1.bf16.msra.mxu0 0
      %11710 = vmatprep.subr.bf16.mxu0 0
      %11711 = vmatpush1.bf16.msra.mxu0 0
      %11712 = vmatprep.subr.bf16.mxu0 0
      %11713 = vmatpush1.bf16.msra.mxu0 0
      %11714 = vmatprep.subr.bf16.mxu0 0
      %11715 = vmatpush1.bf16.msra.mxu0 0
      %11716 = vmatprep.subr.bf16.mxu0 0
      %11717 = vmatpush1.bf16.msra.mxu0 0
      %11718 = vmatprep.subr.bf16.mxu0 0
      %11719 = vmatpush1.bf16.msra.mxu0 0
      %11720 = vmatprep.subr.bf16.mxu0 0
      %11721 = vmatpush1.bf16.msra.mxu0 0
      %11722 = vmatprep.subr.bf16.mxu0 0
      %11723 = vmatpush1.bf16.msra.mxu0 0
      %11724 = vmatprep.subr.bf16.mxu0 0
      %11725 = vmatpush1.bf16.msra.mxu0 0
      %11726 = vmatprep.subr.bf16.mxu0 0
      %11727 = vmatpush1.bf16.msra.mxu0 0
      %11728 = vmatprep.subr.bf16.mxu0 0
      %11729 = vmatpush1.bf16.msra.mxu0 0
      %11730 = vmatprep.subr.bf16.mxu0 0
      %11731 = vmatpush1.bf16.msra.mxu0 0
      %11732 = vmatprep.subr.bf16.mxu0 0
      %11733 = vmatpush1.bf16.msra.mxu0 0
      %11734 = vmatprep.subr.bf16.mxu0 0
      %11735 = vmatpush1.bf16.msra.mxu0 0
      %11736 = vmatprep.mubr.bf16.mxu0 0
      %11737 = vmatmul.mubr.bf16.gmra.mrb[0].mxu0 %v11654
      %v11738 = vpop.f32.mrb[0].mxu0
      %v11739 = vadd.f32 0.0, %v11738
      %v11740 = vpop.f32.mrb[0].mxu0
      %v11741 = vpop.f32.mrb[0].mxu0
      %v11742 = vadd.f32 0.0, %v11741
      %v11743 = vpop.f32.mrb[0].mxu0
      %11744 = vmatprep.mubr.bf16.mxu0 0
      %11745 = vmatmul.mubr.bf16.gmra.mrb[0].mxu0 %v11657
      %v11746 = vpop.f32.mrb[0].mxu0
      %v11747 = vadd.f32 0.0, %v11746
      %v11748 = vpop.f32.mrb[0].mxu0
      %v11749 = vpop.f32.mrb[0].mxu0
      %v11750 = vadd.f32 0.0, %v11749
      %v11751 = vpop.f32.mrb[0].mxu0
      %11752 = vmatprep.mubr.bf16.mxu0 0
      %11753 = vmatmul.mubr.bf16.gmra.mrb[0].mxu0 %v11660
      %v11754 = vpop.f32.mrb[0].mxu0
      %v11755 = vadd.f32 0.0, %v11754
      %v11756 = vpop.f32.mrb[0].mxu0
      %v11757 = vpop.f32.mrb[0].mxu0
      %v11758 = vadd.f32 0.0, %v11757
      %v11759 = vpop.f32.mrb[0].mxu0
      %11760 = vmatprep.mubr.bf16.mxu0 0
      %11761 = vmatmul.mubr.bf16.gmra.mrb[0].mxu0 %v11663
      %v11762 = vpop.f32.mrb[0].mxu0
      %v11763 = vadd.f32 0.0, %v11762
      %v11764 = vpop.f32.mrb[0].mxu0
      %v11765 = vpop.f32.mrb[0].mxu0
      %v11766 = vadd.f32 0.0, %v11765
      %v11767 = vpop.f32.mrb[0].mxu0
      %11768 = vmatprep.mubr.bf16.mxu0 0
      %11769 = vmatmul.mubr.bf16.gmra.mrb[0].mxu0 %v11666
      %v11770 = vpop.f32.mrb[0].mxu0
      %v11771 = vadd.f32 0.0, %v11770
      %v11772 = vpop.f32.mrb[0].mxu0
      %v11773 = vpop.f32.mrb[0].mxu0
      %v11774 = vadd.f32 0.0, %v11773
      %v11775 = vpop.f32.mrb[0].mxu0
      %11776 = vmatprep.mubr.bf16.mxu0 0
      %11777 = vmatmul.mubr.bf16.gmra.mrb[0].mxu0 %v11669
      %v11778 = vpop.f32.mrb[0].mxu0
      %v11779 = vadd.f32 0.0, %v11778
      %v11780 = vpop.f32.mrb[0].mxu0
      %v11781 = vpop.f32.mrb[0].mxu0
      %v11782 = vadd.f32 0.0, %v11781
      %v11783 = vpop.f32.mrb[0].mxu0
      %11784 = vmatprep.mubr.bf16.mxu0 0
      %11785 = vmatmul.mubr.bf16.gmra.mrb[0].mxu0 %v11672
      %v11786 = vpop.f32.mrb[0].mxu0
      %v11787 = vadd.f32 0.0, %v11786
      %v11788 = vpop.f32.mrb[0].mxu0
      %v11789 = vpop.f32.mrb[0].mxu0
      %v11790 = vadd.f32 0.0, %v11789
      %v11791 = vpop.f32.mrb[0].mxu0
      %11792 = vmatprep.mubr.bf16.mxu0 0
      %11793 = vmatmul.mubr.bf16.gmra.mrb[0].mxu0 %v11675
      %v11794 = vpop.f32.mrb[0].mxu0
      %v11795 = vadd.f32 0.0, %v11794
      %v11796 = vpop.f32.mrb[0].mxu0
      %v11797 = vpop.f32.mrb[0].mxu0
      %v11798 = vadd.f32 0.0, %v11797
      %v11799 = vpop.f32.mrb[0].mxu0
      %11800 = vmatprep.mubr.bf16.mxu0 0
      %11801 = vmatmul.mubr.bf16.gmra.mrb[0].mxu0 %v11678
      %v11802 = vpop.f32.mrb[0].mxu0
      %v11803 = vadd.f32 0.0, %v11802
      %v11804 = vpop.f32.mrb[0].mxu0
      %v11805 = vpop.f32.mrb[0].mxu0
      %v11806 = vadd.f32 0.0, %v11805
      %v11807 = vpop.f32.mrb[0].mxu0
      %11808 = vmatprep.mubr.bf16.mxu0 0
      %11809 = vmatmul.mubr.bf16.gmra.mrb[0].mxu0 %v11681
      %v11810 = vpop.f32.mrb[0].mxu0
      %v11811 = vadd.f32 0.0, %v11810
      %v11812 = vpop.f32.mrb[0].mxu0
      %v11813 = vpop.f32.mrb[0].mxu0
      %v11814 = vadd.f32 0.0, %v11813
      %v11815 = vpop.f32.mrb[0].mxu0
      %11816 = vmatprep.mubr.bf16.mxu0 0
      %11817 = vmatmul.mubr.bf16.gmra.mrb[0].mxu0 %v11684
      %v11818 = vpop.f32.mrb[0].mxu0
      %v11819 = vadd.f32 0.0, %v11818
      %v11820 = vpop.f32.mrb[0].mxu0
      %v11821 = vpop.f32.mrb[0].mxu0
      %v11822 = vadd.f32 0.0, %v11821
      %v11823 = vpop.f32.mrb[0].mxu0
      %11824 = vmatprep.mubr.bf16.mxu0 0
      %11825 = vmatmul.mubr.bf16.gmra.mrb[0].mxu0 %v11687
      %v11826 = vpop.f32.mrb[0].mxu0
      %v11827 = vadd.f32 0.0, %v11826
      %v11828 = vpop.f32.mrb[0].mxu0
      %v11829 = vpop.f32.mrb[0].mxu0
      %v11830 = vadd.f32 0.0, %v11829
      %v11831 = vpop.f32.mrb[0].mxu0
      %11832 = vmatprep.mubr.bf16.mxu0 0
      %11833 = vmatmul.mubr.bf16.gmra.mrb[0].mxu0 %v11690
      %v11834 = vpop.f32.mrb[0].mxu0
      %v11835 = vadd.f32 0.0, %v11834
      %v11836 = vpop.f32.mrb[0].mxu0
      %v11837 = vpop.f32.mrb[0].mxu0
      %v11838 = vadd.f32 0.0, %v11837
      %v11839 = vpop.f32.mrb[0].mxu0
      %11840 = vmatprep.mubr.bf16.mxu0 0
      %11841 = vmatmul.mubr.bf16.gmra.mrb[0].mxu0 %v11693
      %v11842 = vpop.f32.mrb[0].mxu0
      %v11843 = vadd.f32 0.0, %v11842
      %v11844 = vpop.f32.mrb[0].mxu0
      %v11845 = vpop.f32.mrb[0].mxu0
      %v11846 = vadd.f32 0.0, %v11845
      %v11847 = vpop.f32.mrb[0].mxu0
      %11848 = vmatprep.mubr.bf16.mxu0 0
      %11849 = vmatmul.mubr.bf16.gmra.mrb[0].mxu0 %v11696
      %v11850 = vpop.f32.mrb[0].mxu0
      %v11851 = vadd.f32 0.0, %v11850
      %v11852 = vpop.f32.mrb[0].mxu0
      %v11853 = vpop.f32.mrb[0].mxu0
      %v11854 = vadd.f32 0.0, %v11853
      %v11855 = vpop.f32.mrb[0].mxu0
      %11856 = vmatprep.mubr.bf16.mxu0 0
      %11857 = vmatmul.mubr.bf16.gmra.mrb[0].mxu0 %v11699
      %v11858 = vpop.f32.mrb[0].mxu0
      %v11859 = vadd.f32 0.0, %v11858
      %v11860 = vpop.f32.mrb[0].mxu0
      %v11861 = vpop.f32.mrb[0].mxu0
      %v11862 = vadd.f32 0.0, %v11861
      %v11863 = vpop.f32.mrb[0].mxu0
      %11864 = vdwg.mxu0
      %v11865 = vadd.f32 %v11060, %v11739
      %v11866 = vadd.f32 %v11061, %v11742
      %v11867 = vadd.f32 %v11062, %v11747
      %v11868 = vadd.f32 %v11063, %v11750
      %v11869 = vadd.f32 %v11064, %v11755
      %v11870 = vadd.f32 %v11065, %v11758
      %v11871 = vadd.f32 %v11066, %v11763
      %v11872 = vadd.f32 %v11067, %v11766
      %v11873 = vadd.f32 %v11068, %v11771
      %v11874 = vadd.f32 %v11069, %v11774
      %v11875 = vadd.f32 %v11070, %v11779
      %v11876 = vadd.f32 %v11071, %v11782
      %v11877 = vadd.f32 %v11072, %v11787
      %v11878 = vadd.f32 %v11073, %v11790
      %v11879 = vadd.f32 %v11074, %v11795
      %v11880 = vadd.f32 %v11075, %v11798
      %v11881 = vadd.f32 %v11076, %v11803
      %v11882 = vadd.f32 %v11077, %v11806
      %v11883 = vadd.f32 %v11078, %v11811
      %v11884 = vadd.f32 %v11079, %v11814
      %v11885 = vadd.f32 %v11080, %v11819
      %v11886 = vadd.f32 %v11081, %v11822
      %v11887 = vadd.f32 %v11082, %v11827
      %v11888 = vadd.f32 %v11083, %v11830
      %v11889 = vadd.f32 %v11084, %v11835
      %v11890 = vadd.f32 %v11085, %v11838
      %v11891 = vadd.f32 %v11086, %v11843
      %v11892 = vadd.f32 %v11087, %v11846
      %v11893 = vadd.f32 %v11088, %v11851
      %v11894 = vadd.f32 %v11089, %v11854
      %v11895 = vadd.f32 %v11090, %v11859
      %v11896 = vadd.f32 %v11091, %v11862
      %vm11897 = vcmask 293888
      %11898 = vst.msk [vmem:[%s359] sm:$0xff] %vm11897, %v11865
      %11899 = vst.msk [vmem:[%s359 + $0x8] sm:$0xff] %vm11897, %v11866
      %11900 = vst.msk [vmem:[%s359 + $0x10] sm:$0xff] %vm11897, %v11867
      %11901 = vst.msk [vmem:[%s359 + $0x18] sm:$0xff] %vm11897, %v11868
      %11902 = vst.msk [vmem:[%s359 + $0x20] sm:$0xff] %vm11897, %v11869
      %11903 = vst.msk [vmem:[%s359 + $0x28] sm:$0xff] %vm11897, %v11870
      %11904 = vst.msk [vmem:[%s359 + $0x30] sm:$0xff] %vm11897, %v11871
      %11905 = vst.msk [vmem:[%s359 + $0x38] sm:$0xff] %vm11897, %v11872
      %11906 = vst.msk [vmem:[%s359 + $0x40] sm:$0xff] %vm11897, %v11873
      %11907 = vst.msk [vmem:[%s359 + $0x48] sm:$0xff] %vm11897, %v11874
      %11908 = vst.msk [vmem:[%s359 + $0x50] sm:$0xff] %vm11897, %v11875
      %11909 = vst.msk [vmem:[%s359 + $0x58] sm:$0xff] %vm11897, %v11876
      %11910 = vst.msk [vmem:[%s359 + $0x60] sm:$0xff] %vm11897, %v11877
      %11911 = vst.msk [vmem:[%s359 + $0x68] sm:$0xff] %vm11897, %v11878
      %11912 = vst.msk [vmem:[%s359 + $0x70] sm:$0xff] %vm11897, %v11879
      %11913 = vst.msk [vmem:[%s359 + $0x78] sm:$0xff] %vm11897, %v11880
      %11914 = vst.msk [vmem:[%s359 + $0x80] sm:$0xff] %vm11897, %v11881
      %11915 = vst.msk [vmem:[%s359 + $0x88] sm:$0xff] %vm11897, %v11882
      %11916 = vst.msk [vmem:[%s359 + $0x90] sm:$0xff] %vm11897, %v11883
      %11917 = vst.msk [vmem:[%s359 + $0x98] sm:$0xff] %vm11897, %v11884
      %11918 = vst.msk [vmem:[%s359 + $0xa0] sm:$0xff] %vm11897, %v11885
      %11919 = vst.msk [vmem:[%s359 + $0xa8] sm:$0xff] %vm11897, %v11886
      %11920 = vst.msk [vmem:[%s359 + $0xb0] sm:$0xff] %vm11897, %v11887
      %11921 = vst.msk [vmem:[%s359 + $0xb8] sm:$0xff] %vm11897, %v11888
      %11922 = vst.msk [vmem:[%s359 + $0xc0] sm:$0xff] %vm11897, %v11889
      %11923 = vst.msk [vmem:[%s359 + $0xc8] sm:$0xff] %vm11897, %v11890
      %11924 = vst.msk [vmem:[%s359 + $0xd0] sm:$0xff] %vm11897, %v11891
      %11925 = vst.msk [vmem:[%s359 + $0xd8] sm:$0xff] %vm11897, %v11892
      %11926 = vst.msk [vmem:[%s359 + $0xe0] sm:$0xff] %vm11897, %v11893
      %11927 = vst.msk [vmem:[%s359 + $0xe8] sm:$0xff] %vm11897, %v11894
      %11928 = vst.msk [vmem:[%s359 + $0xf0] sm:$0xff] %vm11897, %v11895
      %11929 = vst.msk [vmem:[%s359 + $0xf8] sm:$0xff] %vm11897, %v11896
      %p11930 = scmp.lt.s32.totalorder %s21, 1
      %s11931 = scalar_select %p11930, %s21, 1
      %s11932 = smul.addr %s11931, 32
      %s11933 = smul.addr %s11932, 8
      %s11934 = scalar_lea.vmem %s10, %s11933
      // Predicated region
      $region61: #{reduction_a.1} parent=59 // pred_check
        %p11935 = pneg %p254
      $region62: #{reduction_a.1} parent=59 // pred_check_branch
        %11937 = sbr.rel (%p11935) target = $region64
      $region63: #{reduction_a.1} parent=59 // pred_region
        _
      $region64: #{reduction_a.1} parent=59 // pred_fallthru
        _
    $region60: #{reduction_a.1} parent=5 // pred_fallthru
      _
    %p11938 = scmp.le.s32.totalorder 2, %s16
    // Predicated region
    $region65: #{reduction_a.1} parent=5 // pred_check
      %p11939 = pneg %p11938
    $region66: #{reduction_a.1} parent=5 // pred_check_branch
      %11941 = sbr.rel (%p11939) target = $region68
    $region67: #{reduction_a.1} parent=5 // pred_region
      %s11942 = ssub.s32 %s16, 2
      // Predicated region
      $region69: #{reduction_a.1} parent=67 // pred_check
        %p11943 = pneg %p260
      $region70: #{reduction_a.1} parent=67 // pred_check_branch
        %11945 = sbr.rel (%p11943) target = $region72
      $region71: #{reduction_a.1} parent=67 // pred_region
        %p11946 = scmp.lt.s32.totalorder %s22, 1
        %s11947 = scalar_select %p11946, %s22, 1
        %s11948 = smul.addr %s11947, 32
        %s11949 = smul.addr %s11948, 8
        %s11950 = scalar_lea.vmem %s10, %s11949
      $region72: #{reduction_a.1} parent=67 // pred_fallthru
        _
    $region68: #{reduction_a.1} parent=5 // pred_fallthru
      _
  $region6: #{reduction_a.1} parent=0 // loop_footer
    %s20 = sadd.s32 1, %s16
  $region7: #{reduction_a.1} parent=0 // loop_footer_branch
    %15 = sbr.rel target = $region3
  $region8: #{reduction_a.1} parent=0 // loop_exit
    _

</llo_original>
